<compile_context>
chip_gen: v7x
topology: tpu7x:2x2x1
jax: 0.10.0
libtpu: 0.0.40
codegen_flags: <defaults>
</compile_context>

<pallas_src>
import jax
import jax.numpy as jnp
from jax.experimental import pallas as pl
from jax.experimental.pallas import tpu as pltpu

LN_EPS = 1e-5            # nn.LayerNorm default eps
SUB = 128                # points per sub-chunk; sits on the lane axis of the masked max
DOT_PREC = jax.lax.Precision.HIGHEST   # exact f32 MXU passes so kernel == JAX reference


def _dot(a, b):
    return jnp.dot(a, b, preferred_element_type=jnp.float32, precision=DOT_PREC)


def _layernorm(h, g, b):
    mu = jnp.mean(h, axis=-1, keepdims=True)
    var = jnp.mean(jnp.square(h - mu), axis=-1, keepdims=True)
    return (h - mu) * jax.lax.rsqrt(var + LN_EPS) * g + b


# ----------------------------------------------------------------------------
# Kernel 1: fused transform + scatter sum / count / max, tiled over points.
# ----------------------------------------------------------------------------
def _pool_kernel(sp_ref, x_ref, tw_ref, tb_ref, tg_ref, tbe_ref,
                 sumcnt_ref, max_ref, h_scr, hT_scr):
    t = pl.program_id(1)                       # reduction step within this split
    tn = x_ref.shape[0]
    M, C = max_ref.shape
    C_aug = sumcnt_ref.shape[1]                # C + 1 (last column carries counts)

    @pl.when(t == 0)
    def _():
        sumcnt_ref[...] = jnp.zeros_like(sumcnt_ref)
        # h is ReLU output (>= 0): zero init reproduces scatter_max AND the
        # "empty superpoint -> 0" rule exactly.  (Guard: only valid post-ReLU.)
        max_ref[...] = jnp.zeros_like(max_ref)
        # constant ones column rides the scatter-sum matmul to produce counts
        h_scr[:, C:] = jnp.ones((tn, C_aug - C), jnp.float32)

    # ---- fused per-point transform: Linear(Cin->C) + LayerNorm(C) + ReLU ----
    h = _dot(x_ref[...], tw_ref[...])
    h = jnp.maximum(_layernorm(h + tb_ref[...], tg_ref[...], tbe_ref[...]), 0.0)  # (tn, C)

    h_scr[:, :C] = h           # points-on-sublanes view, feeds the MXU scatter-sum
    hT_scr[...] = h.T          # points-on-lanes view (one XLU transpose/tile), feeds the max

    # one (M, SUB) iota per tile (not (M, tn)); reused by every sub-chunk below
    ids = jax.lax.broadcasted_iota(jnp.int32, (M, SUB), 0)

    def body(s, carry):
        run_sum, run_max = carry
        off = pl.multiple_of(s * SUB, SUB)
        # lane-dense membership mask for this 128-point sub-chunk
        maskf = (ids == sp_ref[:, pl.ds(off, SUB)]).astype(jnp.float32)        # (M, SUB)
        # scatter-sum (+ counts in the last column) in a single MXU contraction
        run_sum = run_sum + _dot(maskf, h_scr[pl.ds(off, SUB), :])             # (M, C+1)
        # scatter-max: h >= 0 so mask*h replaces the -inf select; SUB on lanes
        masked = maskf[:, None, :] * hT_scr[:, pl.ds(off, SUB)][None, :, :]    # (M, C, SUB)
        run_max = jnp.maximum(run_max, jnp.max(masked, axis=-1))               # (M, C)
        return run_sum, run_max

    run_sum, run_max = jax.lax.fori_loop(
        0, tn // SUB, body, (sumcnt_ref[...], max_ref[...]), unroll=True)
    sumcnt_ref[...] = run_sum
    max_ref[...] = run_max


# ----------------------------------------------------------------------------
# Kernel 2: merge per-split partials + AdaptiveWeightModule + channel attention
#           + output projection (all O(M*C^2), runs once).
# ----------------------------------------------------------------------------
def _heads_kernel(sumcnt_ref, max_ref,
                  aw1_ref, ab1_ref, ag_ref, abe_ref, aw2_ref, ab2_ref,
                  cw1_ref, cb1_ref, cw2_ref, cb2_ref,
                  ow_ref, ob_ref, og_ref, obe_ref,
                  o_ref):
    C = o_ref.shape[1]

    sumcnt = jnp.sum(sumcnt_ref[...], axis=0)        # (M, C+1) merge partial splits
    max_feat = jnp.max(max_ref[...], axis=0)         # (M, C)
    sum_feat = sumcnt[:, :C]
    count = sumcnt[:, C:]
    mean_feat = sum_feat / jnp.maximum(count, 1.0)   # empty superpoints -> 0

    # AdaptiveWeightModule (AdaptiveAvgPool1d over a size-1 dim = identity)
    a = _dot(mean_feat, aw1_ref[...])
    a = jnp.maximum(_layernorm(a + ab1_ref[...], ag_ref[...], abe_ref[...]), 0.0)
    logits = _dot(a, aw2_ref[...]) + ab2_ref[...]                   # (M, 3)
    logits = logits - jnp.max(logits, axis=-1, keepdims=True)
    e = jnp.exp(logits)
    w = e / jnp.sum(e, axis=-1, keepdims=True)                      # softmax(dim=1)

    pooled = (w[:, 0:1] * mean_feat
              + w[:, 1:2] * max_feat
              + w[:, 2:3] * sum_feat)                               # (M, C)

    # channel attention: Linear -> ReLU -> Linear -> Sigmoid
    ca = jnp.maximum(_dot(pooled, cw1_ref[...]) + cb1_ref[...], 0.0)
    cw = jax.nn.sigmoid(_dot(ca, cw2_ref[...]) + cb2_ref[...])
    pooled = pooled * cw

    # output projection: Linear -> LayerNorm
    out = _dot(pooled, ow_ref[...]) + ob_ref[...]
    o_ref[...] = _layernorm(out, og_ref[...], obe_ref[...])


# ----------------------------------------------------------------------------
# Wrapper
# ----------------------------------------------------------------------------
def enhanced_feature_aggregation(x, superpoints, params, num_superpoints, *,
                                 tn=1024, num_splits=2):
    """x: (N, Cin) point features; superpoints: (N,) int32 ids in [0, M)."""
    N, Cin = x.shape
    C = params["t_w"].shape[1]
    C_aug = C + 1
    M = num_superpoints
    assert tn % SUB == 0, "point tile must be a multiple of 128 lanes"

    # Pad points to a multiple of (num_splits * tn); padded ids == M fall outside every
    # one-hot row, so they are dropped from sum / count / max.
    n_pad = (-N) % (tn * num_splits)
    sp = superpoints.astype(jnp.int32)
    if n_pad:
        x = jnp.concatenate([x, jnp.zeros((n_pad, Cin), x.dtype)], axis=0)
        sp = jnp.concatenate([sp, jnp.full((n_pad,), M, jnp.int32)], axis=0)
    Np = N + n_pad
    sp2d = sp.reshape(1, Np)
    T = Np // (tn * num_splits)          # point tiles per split

    const = lambda c, t: (0, 0)
    pool_in_specs = [
        pl.BlockSpec((1, tn), lambda c, t: (0, c * T + t)),    # superpoint ids
        pl.BlockSpec((tn, Cin), lambda c, t: (c * T + t, 0)),  # point features
        pl.BlockSpec((Cin, C), const),                         # transform weights (resident)
        pl.BlockSpec((1, C), const),
        pl.BlockSpec((1, C), const),
        pl.BlockSpec((1, C), const),
    ]
    pool_out_specs = [
        pl.BlockSpec((None, M, C_aug), lambda c, t: (c, 0, 0)),  # per-split sum|count
        pl.BlockSpec((None, M, C), lambda c, t: (c, 0, 0)),      # per-split max
    ]

    sumcnt, maxp = pl.pallas_call(
        _pool_kernel,
        out_shape=(jax.ShapeDtypeStruct((num_splits, M, C_aug), jnp.float32),
                   jax.ShapeDtypeStruct((num_splits, M, C), jnp.float32)),
        grid_spec=pltpu.PrefetchScalarGridSpec(
            num_scalar_prefetch=0,
            grid=(num_splits, T),
            in_specs=pool_in_specs,
            out_specs=pool_out_specs,
            scratch_shapes=[
                pltpu.VMEM((tn, C_aug), jnp.float32),  # h with ones column (for MXU dot)
                pltpu.VMEM((C, tn), jnp.float32),      # h^T, points on lanes (for max)
            ]),
        compiler_params=pltpu.CompilerParams(
            dimension_semantics=("parallel", "arbitrary"),
            vmem_limit_bytes=48 * 1024 * 1024,
        ),
    )(sp2d, x, params["t_w"], params["t_b"], params["t_g"], params["t_be"])

    # tiny merge + heads kernel: single invocation, full-array VMEM blocks
    out = pl.pallas_call(
        _heads_kernel,
        out_shape=jax.ShapeDtypeStruct((M, C), jnp.float32),
    )(sumcnt, maxp,
      params["aw1"], params["ab1"], params["ag"], params["abe"],
      params["aw2"], params["ab2"],
      params["cw1"], params["cb1"], params["cw2"], params["cb2"],
      params["ow"], params["ob"], params["og"], params["obe"])
    return out


# ----------------------------------------------------------------------------
# Pure-JAX reference (mirrors the PyTorch module semantics)
# ----------------------------------------------------------------------------
def reference(x, superpoints, p, M):
    h = _dot(x, p["t_w"]) + p["t_b"]
    h = jnp.maximum(_layernorm(h, p["t_g"], p["t_be"]), 0.0)
    onehot = (superpoints[None, :] == jnp.arange(M)[:, None]).astype(jnp.float32)
    sum_f = _dot(onehot, h)
    cnt = onehot.sum(-1, keepdims=True)
    mean_f = sum_f / jnp.maximum(cnt, 1.0)
    max_f = jnp.where(onehot[:, :, None] > 0, h[None, :, :], -3.0e38).max(1)
    max_f = jnp.where(cnt > 0, max_f, 0.0)

    a = _dot(mean_f, p["aw1"]) + p["ab1"]
    a = jnp.maximum(_layernorm(a, p["ag"], p["abe"]), 0.0)
    w = jax.nn.softmax(_dot(a, p["aw2"]) + p["ab2"], axis=1)
    pooled = w[:, 0:1] * mean_f + w[:, 1:2] * max_f + w[:, 2:3] * sum_f

    ca = jnp.maximum(_dot(pooled, p["cw1"]) + p["cb1"], 0.0)
    cw = jax.nn.sigmoid(_dot(ca, p["cw2"]) + p["cb2"])
    pooled = pooled * cw
    out = _dot(pooled, p["ow"]) + p["ob"]
    return _layernorm(out, p["og"], p["obe"])


def make_params(key, cin, c):
    c4 = c // 4
    tn_init = lambda k, s: 0.02 * jax.random.truncated_normal(k, -2.0, 2.0, s, jnp.float32)
    ks = jax.random.split(key, 8)
    zeros = lambda s: jnp.zeros(s, jnp.float32)
    ones = lambda s: jnp.ones(s, jnp.float32)
    return {
        # transform: Linear(cin->c) + LayerNorm(c)
        "t_w": tn_init(ks[0], (cin, c)), "t_b": zeros((1, c)),
        "t_g": ones((1, c)), "t_be": zeros((1, c)),
        # AdaptiveWeightModule: Linear(c->c4) + LN(c4) + ReLU + Linear(c4->3) + Softmax
        "aw1": tn_init(ks[1], (c, c4)), "ab1": zeros((1, c4)),
        "ag": ones((1, c4)), "abe": zeros((1, c4)),
        "aw2": tn_init(ks[2], (c4, 3)), "ab2": zeros((1, 3)),
        # channel attention: Linear(c->c4) + ReLU + Linear(c4->c) + Sigmoid
        "cw1": tn_init(ks[3], (c, c4)), "cb1": zeros((1, c4)),
        "cw2": tn_init(ks[4], (c4, c)), "cb2": zeros((1, c)),
        # output projection: Linear(c->c) + LayerNorm(c)
        "ow": tn_init(ks[5], (c, c)), "ob": zeros((1, c)),
        "og": ones((1, c)), "obe": zeros((1, c)),
    }


if __name__ == "__main__":
    key = jax.random.PRNGKey(0)
    N, MEDIA, M = 5000, 32, 16       # points (ragged), channels (SPFormer media), superpoints

    k_x, k_sp, k_p = jax.random.split(key, 3)
    # backbone (spconv UNet) output features, stand-in: see TODO(synk) above
    x = jax.random.normal(k_x, (N, MEDIA), jnp.float32)
    superpoints = jax.random.randint(k_sp, (N,), 0, M, dtype=jnp.int32)
    params = make_params(k_p, MEDIA, MEDIA)

    # small tile so the demo exercises multiple grid steps, sub-chunks and both splits
    out = enhanced_feature_aggregation(x, superpoints, params, M, tn=512, num_splits=2)
    out = jax.block_until_ready(out)

    ref = reference(x, superpoints, params, M)
    assert out.shape == (M, MEDIA)
    max_err = float(jnp.max(jnp.abs(out - ref)))
    assert jnp.allclose(out, ref, rtol=1e-3, atol=1e-3), f"mismatch vs reference, max_err={max_err}"

    print("KERNEL_OK")
</pallas_src>

<mosaic_0001>
module attributes {stable_mosaic.version = 11 : i64} {
  func.func @_pool_kernel(%arg0: i32, %arg1: i32, %arg2: memref<1x512xi32, #tpu.memory_space<vmem>>, %arg3: memref<512x32xf32, #tpu.memory_space<vmem>>, %arg4: memref<32x32xf32, #tpu.memory_space<vmem>>, %arg5: memref<1x32xf32, #tpu.memory_space<vmem>>, %arg6: memref<1x32xf32, #tpu.memory_space<vmem>>, %arg7: memref<1x32xf32, #tpu.memory_space<vmem>>, %arg8: memref<1x16x33xf32, #tpu.memory_space<vmem>>, %arg9: memref<1x16x32xf32, #tpu.memory_space<vmem>>, %arg10: memref<512x33xf32, #tpu.memory_space<vmem>>, %arg11: memref<32x512xf32, #tpu.memory_space<vmem>>) attributes {dimension_semantics = [#tpu.dimension_semantics<parallel>, #tpu.dimension_semantics<arbitrary>], iteration_bounds = array<i64: 2, 5>, scalar_prefetch = 0 : i64, scratch_operands = 2 : i64, tpu.core_type = #tpu.core_type<tc>, window_params = [{transform_indices = @transform_0, window_bounds = array<i64: 1, 512>}, {transform_indices = @transform_1, window_bounds = array<i64: 512, 32>}, {pipeline_mode = #tpu.pipeline_mode<synchronous>, transform_indices = @transform_2, window_bounds = array<i64: 32, 32>}, {pipeline_mode = #tpu.pipeline_mode<synchronous>, transform_indices = @transform_3, window_bounds = array<i64: 1, 32>}, {pipeline_mode = #tpu.pipeline_mode<synchronous>, transform_indices = @transform_4, window_bounds = array<i64: 1, 32>}, {pipeline_mode = #tpu.pipeline_mode<synchronous>, transform_indices = @transform_5, window_bounds = array<i64: 1, 32>}, {transform_indices = @transform_6, window_bounds = array<i64: 1, 16, 33>}, {transform_indices = @transform_7, window_bounds = array<i64: 1, 16, 32>}]} {
    %c0_i32 = arith.constant 0 : i32
    %0 = arith.cmpi eq, %arg1, %c0_i32 : i32
    %1 = arith.extui %0 : i1 to i32
    %c0_i32_0 = arith.constant 0 : i32
    %2 = arith.cmpi ne, %1, %c0_i32_0 : i32
    scf.if %2 {
      %cst_56 = arith.constant 0.000000e+00 : f32
      %133 = vector.broadcast %cst_56 : f32 to vector<16x33xf32>
      %c0_57 = arith.constant 0 : index
      %c0_58 = arith.constant 0 : index
      %c0_59 = arith.constant 0 : index
      %134 = vector.load %arg8[%c0_57, %c0_58, %c0_59] : memref<1x16x33xf32, #tpu.memory_space<vmem>>, vector<1x16x33xf32>
      %135 = vector.shape_cast %134 : vector<1x16x33xf32> to vector<16x33xf32>
      %136 = vector.shape_cast %133 : vector<16x33xf32> to vector<1x16x33xf32>
      tpu.vector_store %arg8[%c0_57, %c0_58, %c0_59], %136 {strides = array<i32>} : memref<1x16x33xf32, #tpu.memory_space<vmem>>, vector<1x16x33xf32>,
      %cst_60 = arith.constant 0.000000e+00 : f32
      %137 = vector.broadcast %cst_60 : f32 to vector<16x32xf32>
      %c0_61 = arith.constant 0 : index
      %c0_62 = arith.constant 0 : index
      %c0_63 = arith.constant 0 : index
      %138 = vector.load %arg9[%c0_61, %c0_62, %c0_63] : memref<1x16x32xf32, #tpu.memory_space<vmem>>, vector<1x16x32xf32>
      %139 = vector.shape_cast %138 : vector<1x16x32xf32> to vector<16x32xf32>
      %140 = vector.shape_cast %137 : vector<16x32xf32> to vector<1x16x32xf32>
      tpu.vector_store %arg9[%c0_61, %c0_62, %c0_63], %140 {strides = array<i32>} : memref<1x16x32xf32, #tpu.memory_space<vmem>>, vector<1x16x32xf32>,
      %cst_64 = arith.constant 1.000000e+00 : f32
      %141 = vector.broadcast %cst_64 : f32 to vector<512x1xf32>
      %c0_65 = arith.constant 0 : index
      %c32 = arith.constant 32 : index
      %142 = vector.load %arg10[%c0_65, %c32] : memref<512x33xf32, #tpu.memory_space<vmem>>, vector<512x1xf32>
      tpu.vector_store %arg10[%c0_65, %c32], %141 {strides = array<i32>} : memref<512x33xf32, #tpu.memory_space<vmem>>, vector<512x1xf32>,
    } else {
    }
    %c0 = arith.constant 0 : index
    %c0_1 = arith.constant 0 : index
    %3 = vector.load %arg3[%c0, %c0_1] : memref<512x32xf32, #tpu.memory_space<vmem>>, vector<512x32xf32>
    %c0_2 = arith.constant 0 : index
    %c0_3 = arith.constant 0 : index
    %4 = vector.load %arg4[%c0_2, %c0_3] : memref<32x32xf32, #tpu.memory_space<vmem>>, vector<32x32xf32>
    %cst = arith.constant dense<0.000000e+00> : vector<512x32xf32>
    %5 = tpu.matmul %3, %4, %cst {dimension_numbers = #tpu.dot_dimension_numbers<[1], [0], [0], [1], [0, 0, 1, 1], [], []>, precision = #tpu.contract_precision<fp32>} : vector<512x32xf32>, vector<32x32xf32>, vector<512x32xf32> -> vector<512x32xf32>
    %c0_4 = arith.constant 0 : index
    %c0_5 = arith.constant 0 : index
    %6 = vector.load %arg5[%c0_4, %c0_5] : memref<1x32xf32, #tpu.memory_space<vmem>>, vector<1x32xf32>
    %7 = vector.broadcast %6 : vector<1x32xf32> to vector<512x32xf32>
    %8 = arith.addf %5, %7 : vector<512x32xf32>
    %c0_6 = arith.constant 0 : index
    %c0_7 = arith.constant 0 : index
    %9 = vector.load %arg6[%c0_6, %c0_7] : memref<1x32xf32, #tpu.memory_space<vmem>>, vector<1x32xf32>
    %c0_8 = arith.constant 0 : index
    %c0_9 = arith.constant 0 : index
    %10 = vector.load %arg7[%c0_8, %c0_9] : memref<1x32xf32, #tpu.memory_space<vmem>>, vector<1x32xf32>
    %cst_10 = arith.constant dense<0.000000e+00> : vector<512xf32>
    %11 = vector.multi_reduction <add>, %8, %cst_10 [1] : vector<512x32xf32> to vector<512xf32>
    %12 = vector.shape_cast %11 : vector<512xf32> to vector<512x1xf32>
    %cst_11 = arith.constant 3.200000e+01 : f32
    %13 = vector.broadcast %cst_11 : f32 to vector<512x1xf32>
    %14 = arith.divf %12, %13 : vector<512x1xf32>
    %15 = vector.broadcast %14 : vector<512x1xf32> to vector<512x32xf32>
    %16 = arith.subf %8, %15 : vector<512x32xf32>
    %17 = arith.mulf %16, %16 : vector<512x32xf32>
    %cst_12 = arith.constant dense<0.000000e+00> : vector<512xf32>
    %18 = vector.multi_reduction <add>, %17, %cst_12 [1] : vector<512x32xf32> to vector<512xf32>
    %19 = vector.shape_cast %18 : vector<512xf32> to vector<512x1xf32>
    %cst_13 = arith.constant 3.200000e+01 : f32
    %20 = vector.broadcast %cst_13 : f32 to vector<512x1xf32>
    %21 = arith.divf %19, %20 : vector<512x1xf32>
    %22 = vector.broadcast %14 : vector<512x1xf32> to vector<512x32xf32>
    %23 = arith.subf %8, %22 : vector<512x32xf32>
    %cst_14 = arith.constant 9.99999974E-6 : f32
    %24 = vector.broadcast %cst_14 : f32 to vector<512x1xf32>
    %25 = arith.addf %21, %24 : vector<512x1xf32>
    %26 = math.rsqrt %25 : vector<512x1xf32>
    %27 = vector.broadcast %26 : vector<512x1xf32> to vector<512x32xf32>
    %28 = arith.mulf %23, %27 : vector<512x32xf32>
    %29 = vector.broadcast %9 : vector<1x32xf32> to vector<512x32xf32>
    %30 = arith.mulf %28, %29 : vector<512x32xf32>
    %31 = vector.broadcast %10 : vector<1x32xf32> to vector<512x32xf32>
    %32 = arith.addf %30, %31 : vector<512x32xf32>
    %cst_15 = arith.constant 0.000000e+00 : f32
    %33 = vector.broadcast %cst_15 : f32 to vector<512x32xf32>
    %34 = arith.maximumf %32, %33 : vector<512x32xf32>
    %c0_16 = arith.constant 0 : index
    %c0_17 = arith.constant 0 : index
    %35 = vector.load %arg10[%c0_16, %c0_17] : memref<512x33xf32, #tpu.memory_space<vmem>>, vector<512x32xf32>
    tpu.vector_store %arg10[%c0_16, %c0_17], %34 {strides = array<i32>} : memref<512x33xf32, #tpu.memory_space<vmem>>, vector<512x32xf32>,
    %36 = tpu.transpose %34, [1, 0] : vector<512x32xf32> -> vector<32x512xf32>
    %c0_18 = arith.constant 0 : index
    %c0_19 = arith.constant 0 : index
    %37 = vector.load %arg11[%c0_18, %c0_19] : memref<32x512xf32, #tpu.memory_space<vmem>>, vector<32x512xf32>
    tpu.vector_store %arg11[%c0_18, %c0_19], %36 {strides = array<i32>} : memref<32x512xf32, #tpu.memory_space<vmem>>, vector<32x512xf32>,
    %38 = tpu.iota {dimensions = array<i32: 0>} : vector<16x128xi32>
    %c0_20 = arith.constant 0 : index
    %c0_21 = arith.constant 0 : index
    %c0_22 = arith.constant 0 : index
    %39 = vector.load %arg8[%c0_20, %c0_21, %c0_22] : memref<1x16x33xf32, #tpu.memory_space<vmem>>, vector<1x16x33xf32>
    %40 = vector.shape_cast %39 : vector<1x16x33xf32> to vector<16x33xf32>
    %c0_23 = arith.constant 0 : index
    %c0_24 = arith.constant 0 : index
    %c0_25 = arith.constant 0 : index
    %41 = vector.load %arg9[%c0_23, %c0_24, %c0_25] : memref<1x16x32xf32, #tpu.memory_space<vmem>>, vector<1x16x32xf32>
    %42 = vector.shape_cast %41 : vector<1x16x32xf32> to vector<16x32xf32>
    %c0_i32_26 = arith.constant 0 : i32
    %c128_i32 = arith.constant 128 : i32
    %43 = arith.muli %c0_i32_26, %c128_i32 : i32
    %44 = tpu.assume_multiple %43, 128 : i32
    %c0_27 = arith.constant 0 : index
    %45 = arith.index_cast %44 : i32 to index
    %46 = vector.load %arg2[%c0_27, %45] : memref<1x512xi32, #tpu.memory_space<vmem>>, vector<1x128xi32>
    %47 = vector.broadcast %46 : vector<1x128xi32> to vector<16x128xi32>
    %48 = arith.cmpi eq, %38, %47 : vector<16x128xi32>
    %49 = arith.extui %48 : vector<16x128xi1> to vector<16x128xi32>
    %50 = arith.sitofp %49 : vector<16x128xi32> to vector<16x128xf32>
    %51 = arith.index_cast %44 : i32 to index
    %c0_28 = arith.constant 0 : index
    %52 = vector.load %arg10[%51, %c0_28] : memref<512x33xf32, #tpu.memory_space<vmem>>, vector<128x33xf32>
    %cst_29 = arith.constant dense<0.000000e+00> : vector<16x33xf32>
    %53 = tpu.matmul %50, %52, %cst_29 {dimension_numbers = #tpu.dot_dimension_numbers<[1], [0], [0], [1], [0, 0, 1, 1], [], []>, precision = #tpu.contract_precision<fp32>} : vector<16x128xf32>, vector<128x33xf32>, vector<16x33xf32> -> vector<16x33xf32>
    %54 = arith.addf %40, %53 : vector<16x33xf32>
    %55 = vector.shape_cast %50 : vector<16x128xf32> to vector<16x1x128xf32>
    %c0_30 = arith.constant 0 : index
    %56 = arith.index_cast %44 : i32 to index
    %57 = vector.load %arg11[%c0_30, %56] : memref<32x512xf32, #tpu.memory_space<vmem>>, vector<32x128xf32>
    %58 = vector.shape_cast %57 : vector<32x128xf32> to vector<1x32x128xf32>
    %59 = vector.broadcast %55 : vector<16x1x128xf32> to vector<16x32x128xf32>
    %60 = vector.broadcast %58 : vector<1x32x128xf32> to vector<16x32x128xf32>
    %61 = arith.mulf %59, %60 : vector<16x32x128xf32>
    %cst_31 = arith.constant dense<0xFF800000> : vector<16x32xf32>
    %62 = vector.multi_reduction <maximumf>, %61, %cst_31 [2] : vector<16x32x128xf32> to vector<16x32xf32>
    %63 = arith.maximumf %42, %62 : vector<16x32xf32>
    %c1_i32 = arith.constant 1 : i32
    %c128_i32_32 = arith.constant 128 : i32
    %64 = arith.muli %c1_i32, %c128_i32_32 : i32
    %65 = tpu.assume_multiple %64, 128 : i32
    %c0_33 = arith.constant 0 : index
    %66 = arith.index_cast %65 : i32 to index
    %67 = vector.load %arg2[%c0_33, %66] : memref<1x512xi32, #tpu.memory_space<vmem>>, vector<1x128xi32>
    %68 = vector.broadcast %67 : vector<1x128xi32> to vector<16x128xi32>
    %69 = arith.cmpi eq, %38, %68 : vector<16x128xi32>
    %70 = arith.extui %69 : vector<16x128xi1> to vector<16x128xi32>
    %71 = arith.sitofp %70 : vector<16x128xi32> to vector<16x128xf32>
    %72 = arith.index_cast %65 : i32 to index
    %c0_34 = arith.constant 0 : index
    %73 = vector.load %arg10[%72, %c0_34] : memref<512x33xf32, #tpu.memory_space<vmem>>, vector<128x33xf32>
    %cst_35 = arith.constant dense<0.000000e+00> : vector<16x33xf32>
    %74 = tpu.matmul %71, %73, %cst_35 {dimension_numbers = #tpu.dot_dimension_numbers<[1], [0], [0], [1], [0, 0, 1, 1], [], []>, precision = #tpu.contract_precision<fp32>} : vector<16x128xf32>, vector<128x33xf32>, vector<16x33xf32> -> vector<16x33xf32>
    %75 = arith.addf %54, %74 : vector<16x33xf32>
    %76 = vector.shape_cast %71 : vector<16x128xf32> to vector<16x1x128xf32>
    %c0_36 = arith.constant 0 : index
    %77 = arith.index_cast %65 : i32 to index
    %78 = vector.load %arg11[%c0_36, %77] : memref<32x512xf32, #tpu.memory_space<vmem>>, vector<32x128xf32>
    %79 = vector.shape_cast %78 : vector<32x128xf32> to vector<1x32x128xf32>
    %80 = vector.broadcast %76 : vector<16x1x128xf32> to vector<16x32x128xf32>
    %81 = vector.broadcast %79 : vector<1x32x128xf32> to vector<16x32x128xf32>
    %82 = arith.mulf %80, %81 : vector<16x32x128xf32>
    %cst_37 = arith.constant dense<0xFF800000> : vector<16x32xf32>
    %83 = vector.multi_reduction <maximumf>, %82, %cst_37 [2] : vector<16x32x128xf32> to vector<16x32xf32>
    %84 = arith.maximumf %63, %83 : vector<16x32xf32>
    %c2_i32 = arith.constant 2 : i32
    %c128_i32_38 = arith.constant 128 : i32
    %85 = arith.muli %c2_i32, %c128_i32_38 : i32
    %86 = tpu.assume_multiple %85, 128 : i32
    %c0_39 = arith.constant 0 : index
    %87 = arith.index_cast %86 : i32 to index
    %88 = vector.load %arg2[%c0_39, %87] : memref<1x512xi32, #tpu.memory_space<vmem>>, vector<1x128xi32>
    %89 = vector.broadcast %88 : vector<1x128xi32> to vector<16x128xi32>
    %90 = arith.cmpi eq, %38, %89 : vector<16x128xi32>
    %91 = arith.extui %90 : vector<16x128xi1> to vector<16x128xi32>
    %92 = arith.sitofp %91 : vector<16x128xi32> to vector<16x128xf32>
    %93 = arith.index_cast %86 : i32 to index
    %c0_40 = arith.constant 0 : index
    %94 = vector.load %arg10[%93, %c0_40] : memref<512x33xf32, #tpu.memory_space<vmem>>, vector<128x33xf32>
    %cst_41 = arith.constant dense<0.000000e+00> : vector<16x33xf32>
    %95 = tpu.matmul %92, %94, %cst_41 {dimension_numbers = #tpu.dot_dimension_numbers<[1], [0], [0], [1], [0, 0, 1, 1], [], []>, precision = #tpu.contract_precision<fp32>} : vector<16x128xf32>, vector<128x33xf32>, vector<16x33xf32> -> vector<16x33xf32>
    %96 = arith.addf %75, %95 : vector<16x33xf32>
    %97 = vector.shape_cast %92 : vector<16x128xf32> to vector<16x1x128xf32>
    %c0_42 = arith.constant 0 : index
    %98 = arith.index_cast %86 : i32 to index
    %99 = vector.load %arg11[%c0_42, %98] : memref<32x512xf32, #tpu.memory_space<vmem>>, vector<32x128xf32>
    %100 = vector.shape_cast %99 : vector<32x128xf32> to vector<1x32x128xf32>
    %101 = vector.broadcast %97 : vector<16x1x128xf32> to vector<16x32x128xf32>
    %102 = vector.broadcast %100 : vector<1x32x128xf32> to vector<16x32x128xf32>
    %103 = arith.mulf %101, %102 : vector<16x32x128xf32>
    %cst_43 = arith.constant dense<0xFF800000> : vector<16x32xf32>
    %104 = vector.multi_reduction <maximumf>, %103, %cst_43 [2] : vector<16x32x128xf32> to vector<16x32xf32>
    %105 = arith.maximumf %84, %104 : vector<16x32xf32>
    %c3_i32 = arith.constant 3 : i32
    %c128_i32_44 = arith.constant 128 : i32
    %106 = arith.muli %c3_i32, %c128_i32_44 : i32
    %107 = tpu.assume_multiple %106, 128 : i32
    %c0_45 = arith.constant 0 : index
    %108 = arith.index_cast %107 : i32 to index
    %109 = vector.load %arg2[%c0_45, %108] : memref<1x512xi32, #tpu.memory_space<vmem>>, vector<1x128xi32>
    %110 = vector.broadcast %109 : vector<1x128xi32> to vector<16x128xi32>
    %111 = arith.cmpi eq, %38, %110 : vector<16x128xi32>
    %112 = arith.extui %111 : vector<16x128xi1> to vector<16x128xi32>
    %113 = arith.sitofp %112 : vector<16x128xi32> to vector<16x128xf32>
    %114 = arith.index_cast %107 : i32 to index
    %c0_46 = arith.constant 0 : index
    %115 = vector.load %arg10[%114, %c0_46] : memref<512x33xf32, #tpu.memory_space<vmem>>, vector<128x33xf32>
    %cst_47 = arith.constant dense<0.000000e+00> : vector<16x33xf32>
    %116 = tpu.matmul %113, %115, %cst_47 {dimension_numbers = #tpu.dot_dimension_numbers<[1], [0], [0], [1], [0, 0, 1, 1], [], []>, precision = #tpu.contract_precision<fp32>} : vector<16x128xf32>, vector<128x33xf32>, vector<16x33xf32> -> vector<16x33xf32>
    %117 = arith.addf %96, %116 : vector<16x33xf32>
    %118 = vector.shape_cast %113 : vector<16x128xf32> to vector<16x1x128xf32>
    %c0_48 = arith.constant 0 : index
    %119 = arith.index_cast %107 : i32 to index
    %120 = vector.load %arg11[%c0_48, %119] : memref<32x512xf32, #tpu.memory_space<vmem>>, vector<32x128xf32>
    %121 = vector.shape_cast %120 : vector<32x128xf32> to vector<1x32x128xf32>
    %122 = vector.broadcast %118 : vector<16x1x128xf32> to vector<16x32x128xf32>
    %123 = vector.broadcast %121 : vector<1x32x128xf32> to vector<16x32x128xf32>
    %124 = arith.mulf %122, %123 : vector<16x32x128xf32>
    %cst_49 = arith.constant dense<0xFF800000> : vector<16x32xf32>
    %125 = vector.multi_reduction <maximumf>, %124, %cst_49 [2] : vector<16x32x128xf32> to vector<16x32xf32>
    %126 = arith.maximumf %105, %125 : vector<16x32xf32>
    %c4_i32 = arith.constant 4 : i32
    %c0_50 = arith.constant 0 : index
    %c0_51 = arith.constant 0 : index
    %c0_52 = arith.constant 0 : index
    %127 = vector.load %arg8[%c0_50, %c0_51, %c0_52] : memref<1x16x33xf32, #tpu.memory_space<vmem>>, vector<1x16x33xf32>
    %128 = vector.shape_cast %127 : vector<1x16x33xf32> to vector<16x33xf32>
    %129 = vector.shape_cast %117 : vector<16x33xf32> to vector<1x16x33xf32>
    tpu.vector_store %arg8[%c0_50, %c0_51, %c0_52], %129 {strides = array<i32>} : memref<1x16x33xf32, #tpu.memory_space<vmem>>, vector<1x16x33xf32>,
    %c0_53 = arith.constant 0 : index
    %c0_54 = arith.constant 0 : index
    %c0_55 = arith.constant 0 : index
    %130 = vector.load %arg9[%c0_53, %c0_54, %c0_55] : memref<1x16x32xf32, #tpu.memory_space<vmem>>, vector<1x16x32xf32>
    %131 = vector.shape_cast %130 : vector<1x16x32xf32> to vector<16x32xf32>
    %132 = vector.shape_cast %126 : vector<16x32xf32> to vector<1x16x32xf32>
    tpu.vector_store %arg9[%c0_53, %c0_54, %c0_55], %132 {strides = array<i32>} : memref<1x16x32xf32, #tpu.memory_space<vmem>>, vector<1x16x32xf32>,
    return
  }
  func.func @transform_0(%arg0: i32, %arg1: i32) -> (i32, i32) {
    %c5_i32 = arith.constant 5 : i32
    %0 = arith.muli %arg0, %c5_i32 : i32
    %1 = arith.addi %0, %arg1 : i32
    %c0_i32 = arith.constant 0 : i32
    %c0_i32_0 = arith.constant 0 : i32
    return %c0_i32, %1 : i32, i32
  }
  func.func @transform_1(%arg0: i32, %arg1: i32) -> (i32, i32) {
    %c5_i32 = arith.constant 5 : i32
    %0 = arith.muli %arg0, %c5_i32 : i32
    %1 = arith.addi %0, %arg1 : i32
    %c0_i32 = arith.constant 0 : i32
    %c0_i32_0 = arith.constant 0 : i32
    return %1, %c0_i32 : i32, i32
  }
  func.func @transform_2(%arg0: i32, %arg1: i32) -> (i32, i32) {
    %c0_i32 = arith.constant 0 : i32
    %c0_i32_0 = arith.constant 0 : i32
    %c0_i32_1 = arith.constant 0 : i32
    return %c0_i32, %c0_i32_0 : i32, i32
  }
  func.func @transform_3(%arg0: i32, %arg1: i32) -> (i32, i32) {
    %c0_i32 = arith.constant 0 : i32
    %c0_i32_0 = arith.constant 0 : i32
    %c0_i32_1 = arith.constant 0 : i32
    return %c0_i32, %c0_i32_0 : i32, i32
  }
  func.func @transform_4(%arg0: i32, %arg1: i32) -> (i32, i32) {
    %c0_i32 = arith.constant 0 : i32
    %c0_i32_0 = arith.constant 0 : i32
    %c0_i32_1 = arith.constant 0 : i32
    return %c0_i32, %c0_i32_0 : i32, i32
  }
  func.func @transform_5(%arg0: i32, %arg1: i32) -> (i32, i32) {
    %c0_i32 = arith.constant 0 : i32
    %c0_i32_0 = arith.constant 0 : i32
    %c0_i32_1 = arith.constant 0 : i32
    return %c0_i32, %c0_i32_0 : i32, i32
  }
  func.func @transform_6(%arg0: i32, %arg1: i32) -> (i32, i32, i32) {
    %c0_i32 = arith.constant 0 : i32
    %c0_i32_0 = arith.constant 0 : i32
    %c0_i32_1 = arith.constant 0 : i32
    return %arg0, %c0_i32, %c0_i32_0 : i32, i32, i32
  }
  func.func @transform_7(%arg0: i32, %arg1: i32) -> (i32, i32, i32) {
    %c0_i32 = arith.constant 0 : i32
    %c0_i32_0 = arith.constant 0 : i32
    %c0_i32_1 = arith.constant 0 : i32
    return %arg0, %c0_i32, %c0_i32_0 : i32, i32, i32
  }
}

</mosaic_0001>

<llo_original>
// kernel: tpu_custom_call.1
$region0: #{tpu_custom_call.1}
  #allocation0 [shape = 'u32[]', space=smem, size = 0x4, offset = 0x4, fixed_abs, tag = 'smem constant byte address 0x4 - core index']
  #allocation1 [shape = 'u32[144,128]{1,0:T(1,128)}', space=vmem, size = 0x12000, scoped, tag = 'internal scratch']
  #allocation2 [shape = 'f32[512,33]{1,0:T(8,128)}', space=vmem, size = 0x40000, scoped, tag = 'scratch operand']
  #allocation3 [shape = 'f32[32,512]{1,0:T(8,128)}', space=vmem, size = 0x10000, scoped, tag = 'scratch operand']
  %s0 = inlined_call_operand.vmem [shape: s32[1,5120], index: 0, kind: input, shape index: {}]
  %s1 = inlined_call_operand.vmem [shape: f32[5120,32], index: 1, kind: input, shape index: {}]
  %s2 = inlined_call_operand.vmem [shape: f32[32,32], index: 2, kind: input, shape index: {}]
  %s3 = inlined_call_operand.vmem [shape: f32[1,32], index: 3, kind: input, shape index: {}]
  %s4 = inlined_call_operand.vmem [shape: f32[1,32], index: 4, kind: input, shape index: {}]
  %s5 = inlined_call_operand.vmem [shape: f32[1,32], index: 5, kind: input, shape index: {}]
  %s6 = inlined_call_operand.hbm [shape: f32[2,16,33], index: 6, kind: output, shape index: {0}]
  %s7 = inlined_call_operand.hbm [shape: f32[2,16,32], index: 7, kind: output, shape index: {1}]
  %8 = xla_tuple %s6, %s7
  %s9 = sld [smem:[#allocation0]]
  $region69: #{tpu_custom_call.1} parent=0
    _
  %s11 = ssub.s32 1, %s9
  %s12 = scalar_select 0, %s11, %s9
  $region1: #{tpu_custom_call.1} parent=0
    #allocation4 [shape = 'u8[16384]{0}', space=vmem, size = 0x4000, scoped, tag = 'output window, operand 0']
    #allocation5 [shape = 's32[2]{0}', space=sflag, size = 0x8, scoped, tag = 'scoped memory for tpu_custom_call.1']
    #allocation6 [shape = 'u8[16384]{0}', space=vmem, size = 0x4000, scoped, tag = 'output window, operand 1']
    #allocation7 [shape = 's32[2]{0}', space=sflag, size = 0x8, scoped, tag = 'scoped memory for tpu_custom_call.1']
    %13 = vsyncpa [#allocation5], 0
    %s14 = scalar_lea.sflag [#allocation5], 1
    %15 = vsyncpa %s14, 0
    %16 = vsyncpa [#allocation7], 0
    %s17 = scalar_lea.sflag [#allocation7], 1
    %18 = vsyncpa %s17, 0
    loop: start=0, step=1, limit=12
    $region2: #{tpu_custom_call.1} parent=1 // loop_pre_header
      _
    $region3: #{tpu_custom_call.1} parent=1 // loop_header
      %s20 = sphi 0, %s24
      %p21 = scmp.ge.s32.totalorder %s20, 12
      %s27 = sphi 0, %s39
      %s28 = sphi 0, %s35
      %s29 = sphi 0, %s27
      %s30 = sphi 0, %s28
      %s31 = sphi 0, %s29
      %s32 = sphi 0, %s30
      %s46 = sphi 0, %s48
      %s49 = sphi 0, %s46
      %s50 = sphi 0, %s49
      %s66 = sphi 0, %s50
      %s76 = sphi 0, %s78
      %s79 = sphi 0, %s76
      %s80 = sphi 0, %s79
      %s96 = sphi 0, %s80
      %s100 = sphi 0, %s100
      %s102 = sphi 0, %s100
      %s103 = sphi 0, %s102
      %s117 = sphi 0, %s103
      %s121 = sphi 0, %s121
      %s123 = sphi 0, %s121
      %s124 = sphi 0, %s123
      %s138 = sphi 0, %s124
      %s142 = sphi 0, %s142
      %s144 = sphi 0, %s142
      %s145 = sphi 0, %s144
      %s159 = sphi 0, %s145
      %s163 = sphi 0, %s163
      %s165 = sphi 0, %s163
      %s166 = sphi 0, %s165
      %s180 = sphi 0, %s166
      %s186 = sphi 0, %s188
      %s189 = sphi 0, %s186
      %s190 = sphi 0, %s189
      %s206 = sphi 0, %s190
      %s212 = sphi 0, %s214
      %s215 = sphi 0, %s212
      %s216 = sphi 0, %s215
      %s232 = sphi 0, %s216
    $region4: #{tpu_custom_call.1} parent=1 // loop_header_branch
      %23 = sbr.rel (%p21) target = $region8
    $region5: #{tpu_custom_call.1} parent=1 // loop_body
      %s25 = ssub.s32 %s20, 1
      %s26 = ssub.s32 %s20, 2
      %s33 = sadd.s32 1, %s28
      %p34 = scmp.ge.s32.totalorder %s33, 5
      %s35 = scalar_select %p34, 0, %s33
      %s36 = sadd.s32 1, %s27
      %s37 = scalar_select %p34, %s36, %s27
      %p38 = scmp.ge.s32.totalorder %s37, 2
      %s39 = scalar_select %p38, 0, %s37
      %s40 = smul.u32 %s27, 5
      %s41 = sadd.s32 %s40, %s28
      %s42 = smul.u32 %s39, 5
      %s43 = sadd.s32 %s42, %s35
      %s44 = ssub.s32 %s41, %s43
      %p45 = scmp.eq.s32.totalorder %s44, 0
      %s47 = sadd.s32 %s46, 1
      %s48 = scalar_select %p45, %s46, %s47
      %p51 = pneg %p45
      %p52 = scmp.eq.s32.totalorder %s20, 9
      %p53 = por %p51, %p52
      %p54 = scmp.ne.s32.totalorder %s46, %s49
      %p55 = scmp.eq.s32.totalorder %s20, 0
      %p56 = por %p54, %p55
      %p57 = scmp.ne.s32.totalorder %s46, %s49
      %p58 = scmp.eq.s32.totalorder %s25, 9
      %p59 = por %p57, %p58
      %p60 = scmp.ne.s32.totalorder %s49, %s50
      %p61 = scmp.eq.s32.totalorder %s25, 0
      %p62 = por %p60, %p61
      %p63 = scmp.ne.s32.totalorder %s49, %s50
      %p64 = scmp.eq.s32.totalorder %s26, 9
      %p65 = por %p63, %p64
      %p67 = scmp.ne.s32.totalorder %s50, %s66
      %p68 = scmp.eq.s32.totalorder %s26, 0
      %p69 = por %p67, %p68
      %s70 = smul.u32 %s27, 5
      %s71 = sadd.s32 %s70, %s28
      %s72 = smul.u32 %s39, 5
      %s73 = sadd.s32 %s72, %s35
      %s74 = ssub.s32 %s71, %s73
      %p75 = scmp.eq.s32.totalorder %s74, 0
      %s77 = sadd.s32 %s76, 1
      %s78 = scalar_select %p75, %s76, %s77
      %p81 = pneg %p75
      %p82 = scmp.eq.s32.totalorder %s20, 9
      %p83 = por %p81, %p82
      %p84 = scmp.ne.s32.totalorder %s76, %s79
      %p85 = scmp.eq.s32.totalorder %s20, 0
      %p86 = por %p84, %p85
      %p87 = scmp.ne.s32.totalorder %s76, %s79
      %p88 = scmp.eq.s32.totalorder %s25, 9
      %p89 = por %p87, %p88
      %p90 = scmp.ne.s32.totalorder %s79, %s80
      %p91 = scmp.eq.s32.totalorder %s25, 0
      %p92 = por %p90, %p91
      %p93 = scmp.ne.s32.totalorder %s79, %s80
      %p94 = scmp.eq.s32.totalorder %s26, 9
      %p95 = por %p93, %p94
      %p97 = scmp.ne.s32.totalorder %s80, %s96
      %p98 = scmp.eq.s32.totalorder %s26, 0
      %p99 = por %p97, %p98
      %s101 = sadd.s32 %s100, 1
      %p104 = scmp.eq.s32.totalorder %s20, 9
      %p105 = scmp.ne.s32.totalorder %s100, %s102
      %p106 = scmp.eq.s32.totalorder %s20, 0
      %p107 = por %p105, %p106
      %p108 = scmp.ne.s32.totalorder %s100, %s102
      %p109 = scmp.eq.s32.totalorder %s25, 9
      %p110 = por %p108, %p109
      %p111 = scmp.ne.s32.totalorder %s102, %s103
      %p112 = scmp.eq.s32.totalorder %s25, 0
      %p113 = por %p111, %p112
      %p114 = scmp.ne.s32.totalorder %s102, %s103
      %p115 = scmp.eq.s32.totalorder %s26, 9
      %p116 = por %p114, %p115
      %p118 = scmp.ne.s32.totalorder %s103, %s117
      %p119 = scmp.eq.s32.totalorder %s26, 0
      %p120 = por %p118, %p119
      %s122 = sadd.s32 %s121, 1
      %p125 = scmp.eq.s32.totalorder %s20, 9
      %p126 = scmp.ne.s32.totalorder %s121, %s123
      %p127 = scmp.eq.s32.totalorder %s20, 0
      %p128 = por %p126, %p127
      %p129 = scmp.ne.s32.totalorder %s121, %s123
      %p130 = scmp.eq.s32.totalorder %s25, 9
      %p131 = por %p129, %p130
      %p132 = scmp.ne.s32.totalorder %s123, %s124
      %p133 = scmp.eq.s32.totalorder %s25, 0
      %p134 = por %p132, %p133
      %p135 = scmp.ne.s32.totalorder %s123, %s124
      %p136 = scmp.eq.s32.totalorder %s26, 9
      %p137 = por %p135, %p136
      %p139 = scmp.ne.s32.totalorder %s124, %s138
      %p140 = scmp.eq.s32.totalorder %s26, 0
      %p141 = por %p139, %p140
      %s143 = sadd.s32 %s142, 1
      %p146 = scmp.eq.s32.totalorder %s20, 9
      %p147 = scmp.ne.s32.totalorder %s142, %s144
      %p148 = scmp.eq.s32.totalorder %s20, 0
      %p149 = por %p147, %p148
      %p150 = scmp.ne.s32.totalorder %s142, %s144
      %p151 = scmp.eq.s32.totalorder %s25, 9
      %p152 = por %p150, %p151
      %p153 = scmp.ne.s32.totalorder %s144, %s145
      %p154 = scmp.eq.s32.totalorder %s25, 0
      %p155 = por %p153, %p154
      %p156 = scmp.ne.s32.totalorder %s144, %s145
      %p157 = scmp.eq.s32.totalorder %s26, 9
      %p158 = por %p156, %p157
      %p160 = scmp.ne.s32.totalorder %s145, %s159
      %p161 = scmp.eq.s32.totalorder %s26, 0
      %p162 = por %p160, %p161
      %s164 = sadd.s32 %s163, 1
      %p167 = scmp.eq.s32.totalorder %s20, 9
      %p168 = scmp.ne.s32.totalorder %s163, %s165
      %p169 = scmp.eq.s32.totalorder %s20, 0
      %p170 = por %p168, %p169
      %p171 = scmp.ne.s32.totalorder %s163, %s165
      %p172 = scmp.eq.s32.totalorder %s25, 9
      %p173 = por %p171, %p172
      %p174 = scmp.ne.s32.totalorder %s165, %s166
      %p175 = scmp.eq.s32.totalorder %s25, 0
      %p176 = por %p174, %p175
      %p177 = scmp.ne.s32.totalorder %s165, %s166
      %p178 = scmp.eq.s32.totalorder %s26, 9
      %p179 = por %p177, %p178
      %p181 = scmp.ne.s32.totalorder %s166, %s180
      %p182 = scmp.eq.s32.totalorder %s26, 0
      %p183 = por %p181, %p182
      %s184 = ssub.s32 %s27, %s39
      %p185 = scmp.eq.s32.totalorder %s184, 0
      %s187 = sadd.s32 %s186, 1
      %s188 = scalar_select %p185, %s186, %s187
      %p191 = pneg %p185
      %p192 = scmp.eq.s32.totalorder %s20, 9
      %p193 = por %p191, %p192
      %p194 = scmp.ne.s32.totalorder %s186, %s189
      %p195 = scmp.eq.s32.totalorder %s20, 0
      %p196 = por %p194, %p195
      %p197 = scmp.ne.s32.totalorder %s186, %s189
      %p198 = scmp.eq.s32.totalorder %s25, 9
      %p199 = por %p197, %p198
      %p200 = scmp.ne.s32.totalorder %s189, %s190
      %p201 = scmp.eq.s32.totalorder %s25, 0
      %p202 = por %p200, %p201
      %p203 = scmp.ne.s32.totalorder %s189, %s190
      %p204 = scmp.eq.s32.totalorder %s26, 9
      %p205 = por %p203, %p204
      %p207 = scmp.ne.s32.totalorder %s190, %s206
      %p208 = scmp.eq.s32.totalorder %s26, 0
      %p209 = por %p207, %p208
      %s210 = ssub.s32 %s27, %s39
      %p211 = scmp.eq.s32.totalorder %s210, 0
      %s213 = sadd.s32 %s212, 1
      %s214 = scalar_select %p211, %s212, %s213
      %p217 = pneg %p211
      %p218 = scmp.eq.s32.totalorder %s20, 9
      %p219 = por %p217, %p218
      %p220 = scmp.ne.s32.totalorder %s212, %s215
      %p221 = scmp.eq.s32.totalorder %s20, 0
      %p222 = por %p220, %p221
      %p223 = scmp.ne.s32.totalorder %s212, %s215
      %p224 = scmp.eq.s32.totalorder %s25, 9
      %p225 = por %p223, %p224
      %p226 = scmp.ne.s32.totalorder %s215, %s216
      %p227 = scmp.eq.s32.totalorder %s25, 0
      %p228 = por %p226, %p227
      %p229 = scmp.ne.s32.totalorder %s215, %s216
      %p230 = scmp.eq.s32.totalorder %s26, 9
      %p231 = por %p229, %p230
      %p233 = scmp.ne.s32.totalorder %s216, %s232
      %p234 = scmp.eq.s32.totalorder %s26, 0
      %p235 = por %p233, %p234
      %p236 = scmp.le.s32.totalorder 1, %s20
      %p237 = scmp.lt.s32.totalorder %s20, 11
      %p238 = pnand %p236, %p237
      %p239 = pneg %p238
      // Predicated region
      $region9: #{tpu_custom_call.1} parent=5 // pred_check
        _
      $region10: #{tpu_custom_call.1} parent=5 // pred_check_branch
        %241 = sbr.rel (%p238) target = $region12
      $region11: #{tpu_custom_call.1} parent=5 // pred_region
        %s242 = ssub.s32 %s20, 1
        // Predicated region
        $region13: #{tpu_custom_call.1} parent=11 // pred_check
          %p243 = pneg %p113
        $region14: #{tpu_custom_call.1} parent=11 // pred_check_branch
          %245 = sbr.rel (%p243) target = $region16
        $region15: #{tpu_custom_call.1} parent=11 // pred_region
          _
        $region16: #{tpu_custom_call.1} parent=11 // pred_fallthru
          _
        // Predicated region
        $region17: #{tpu_custom_call.1} parent=11 // pred_check
          %p246 = pneg %p134
        $region18: #{tpu_custom_call.1} parent=11 // pred_check_branch
          %248 = sbr.rel (%p246) target = $region20
        $region19: #{tpu_custom_call.1} parent=11 // pred_region
          _
        $region20: #{tpu_custom_call.1} parent=11 // pred_fallthru
          _
        // Predicated region
        $region21: #{tpu_custom_call.1} parent=11 // pred_check
          %p249 = pneg %p155
        $region22: #{tpu_custom_call.1} parent=11 // pred_check_branch
          %251 = sbr.rel (%p249) target = $region24
        $region23: #{tpu_custom_call.1} parent=11 // pred_region
          _
        $region24: #{tpu_custom_call.1} parent=11 // pred_fallthru
          _
        // Predicated region
        $region25: #{tpu_custom_call.1} parent=11 // pred_check
          %p252 = pneg %p176
        $region26: #{tpu_custom_call.1} parent=11 // pred_check_branch
          %254 = sbr.rel (%p252) target = $region28
        $region27: #{tpu_custom_call.1} parent=11 // pred_region
          _
        $region28: #{tpu_custom_call.1} parent=11 // pred_fallthru
          _
      $region12: #{tpu_custom_call.1} parent=5 // pred_fallthru
        _
      %p255 = scmp.lt.s32.totalorder %s20, 10
      // Predicated region
      $region29: #{tpu_custom_call.1} parent=5 // pred_check
        %p256 = pneg %p255
      $region30: #{tpu_custom_call.1} parent=5 // pred_check_branch
        %258 = sbr.rel (%p256) target = $region32
      $region31: #{tpu_custom_call.1} parent=5 // pred_region
        // Predicated region
        $region33: #{tpu_custom_call.1} parent=31 // pred_check
          %p259 = pneg %p56
        $region34: #{tpu_custom_call.1} parent=31 // pred_check_branch
          %261 = sbr.rel (%p259) target = $region36
        $region35: #{tpu_custom_call.1} parent=31 // pred_region
          %s262 = smul.u32 %s27, 5
          %s263 = sadd.s32 %s262, %s28
          %s264 = smul.u32 4, %s263
          %p265 = scmp.lt.s32.totalorder %s264, 39
          %s266 = scalar_select %p265, %s264, 39
          %s267 = scalar_lea.vmem %s0, %s266
          %s268 = smul.u32 %s27, 5
          %s269 = sadd.s32 %s268, %s28
          %s270 = smul.u32 4, %s269
        $region36: #{tpu_custom_call.1} parent=31 // pred_fallthru
          _
        // Predicated region
        $region37: #{tpu_custom_call.1} parent=31 // pred_check
          %p271 = pneg %p86
        $region38: #{tpu_custom_call.1} parent=31 // pred_check_branch
          %273 = sbr.rel (%p271) target = $region40
        $region39: #{tpu_custom_call.1} parent=31 // pred_region
          %s274 = smul.u32 %s27, 5
          %s275 = sadd.s32 %s274, %s28
          %s276 = smul.u32 64, %s275
          %p277 = scmp.lt.s32.totalorder %s276, 639
          %s278 = scalar_select %p277, %s276, 639
          %s279 = smul.addr %s278, 8
          %s280 = scalar_lea.vmem %s1, %s279
          %s281 = smul.u32 %s27, 5
          %s282 = sadd.s32 %s281, %s28
          %s283 = smul.u32 64, %s282
        $region40: #{tpu_custom_call.1} parent=31 // pred_fallthru
          _
      $region32: #{tpu_custom_call.1} parent=5 // pred_fallthru
        _
      %p284 = scmp.le.s32.totalorder 1, %s20
      %p285 = scmp.lt.s32.totalorder %s20, 11
      %p286 = pnand %p284, %p285
      %p287 = pneg %p286
      // Predicated region
      $region41: #{tpu_custom_call.1} parent=5 // pred_check
        _
      $region42: #{tpu_custom_call.1} parent=5 // pred_check_branch
        %289 = sbr.rel (%p286) target = $region44
      $region43: #{tpu_custom_call.1} parent=5 // pred_region
        %s290 = ssub.s32 %s20, 1
        %s291 = smul.u32 %s29, 5
        %s292 = sadd.s32 %s291, %s30
        %s293 = smul.u32 4, %s292
        %p294 = scmp.lt.s32.totalorder %s293, 39
        %s295 = scalar_select %p294, %s293, 39
        %s296 = scalar_lea.vmem %s0, %s295
        %p297 = pneg %p62
        %p298 = pneg %p59
        %s299 = smul.u32 %s29, 5
        %s300 = sadd.s32 %s299, %s30
        %s301 = smul.u32 64, %s300
        %p302 = scmp.lt.s32.totalorder %s301, 639
        %s303 = scalar_select %p302, %s301, 639
        %s304 = smul.addr %s303, 8
        %s305 = scalar_lea.vmem %s1, %s304
        %p306 = pneg %p92
        %p307 = pneg %p89
        %p308 = pneg %p113
        %p309 = pneg %p110
        %p310 = pneg %p134
        %p311 = pneg %p131
        %p312 = pneg %p155
        %p313 = pneg %p152
        %p314 = pneg %p176
        %p315 = pneg %p173
        %p316 = pneg %p202
        %p317 = pneg %p199
        %s318 = sand.u32 %s189, 1
        %s319 = scalar_lea.sflag [#allocation5], %s318
        %s320 = sand.u32 %s189, 1
        %s321 = smul.addr %s320, 16
        %s322 = scalar_lea.vmem [#allocation4], %s321
        %p323 = pneg %p228
        %p324 = pneg %p225
        %s325 = sand.u32 %s215, 1
        %s326 = scalar_lea.sflag [#allocation7], %s325
        %s327 = sand.u32 %s215, 1
        %s328 = smul.addr %s327, 16
        %s329 = scalar_lea.vmem [#allocation6], %s328
        %s330 = smul.u32 %s29, 5
        %s331 = sadd.s32 %s330, %s30
        %s332 = smul.u32 4, %s331
        %p333 = scmp.lt.s32.totalorder %s332, 39
        %s334 = scalar_select %p333, %s332, 39
        %s335 = scalar_lea.vmem %s0, %s334
        %s336 = smul.u32 %s29, 5
        %s337 = sadd.s32 %s336, %s30
        %s338 = smul.u32 4, %s337
        %s339 = smul.u32 %s29, 5
        %s340 = sadd.s32 %s339, %s30
        %s341 = smul.u32 64, %s340
        %p342 = scmp.lt.s32.totalorder %s341, 639
        %s343 = scalar_select %p342, %s341, 639
        %s344 = smul.addr %s343, 8
        %s345 = scalar_lea.vmem %s1, %s344
        %s346 = smul.u32 %s29, 5
        %s347 = sadd.s32 %s346, %s30
        %s348 = smul.u32 64, %s347
        %p349 = scmp.eq.s32.totalorder %s30, 0
        // Predicated region
        $region45: #{tpu_custom_call.1} parent=43 // pred_check
          %p350 = pneg %p349
        $region46: #{tpu_custom_call.1} parent=43 // pred_check_branch
          %352 = sbr.rel (%p350) target = $region48
        $region47: #{tpu_custom_call.1} parent=43 // pred_region
          %vm353 = vcmask 269312
          %354 = vst.msk [vmem:[%s322] sm:$0xff] %vm353, 0.0
          %355 = vst.msk [vmem:[%s322 + $0x8] sm:$0xff] %vm353, 0.0
          %vm356 = vcmask 261120
          %357 = vst.msk [vmem:[%s329] sm:$0xff] %vm356, 0.0
          %358 = vst.msk [vmem:[%s329 + $0x8] sm:$0xff] %vm356, 0.0
          %vm359 = vcmask 269568
          %360 = vst.msk [vmem:[#allocation2] sm:$0xff] %vm359, 1.0
          %361 = vst.msk [vmem:[#allocation2 + $0x8] sm:$0xff] %vm359, 1.0
          %362 = vst.msk [vmem:[#allocation2 + $0x10] sm:$0xff] %vm359, 1.0
          %363 = vst.msk [vmem:[#allocation2 + $0x18] sm:$0xff] %vm359, 1.0
          %364 = vst.msk [vmem:[#allocation2 + $0x20] sm:$0xff] %vm359, 1.0
          %365 = vst.msk [vmem:[#allocation2 + $0x28] sm:$0xff] %vm359, 1.0
          %366 = vst.msk [vmem:[#allocation2 + $0x30] sm:$0xff] %vm359, 1.0
          %367 = vst.msk [vmem:[#allocation2 + $0x38] sm:$0xff] %vm359, 1.0
          %368 = vst.msk [vmem:[#allocation2 + $0x40] sm:$0xff] %vm359, 1.0
          %369 = vst.msk [vmem:[#allocation2 + $0x48] sm:$0xff] %vm359, 1.0
          %370 = vst.msk [vmem:[#allocation2 + $0x50] sm:$0xff] %vm359, 1.0
          %371 = vst.msk [vmem:[#allocation2 + $0x58] sm:$0xff] %vm359, 1.0
          %372 = vst.msk [vmem:[#allocation2 + $0x60] sm:$0xff] %vm359, 1.0
          %373 = vst.msk [vmem:[#allocation2 + $0x68] sm:$0xff] %vm359, 1.0
          %374 = vst.msk [vmem:[#allocation2 + $0x70] sm:$0xff] %vm359, 1.0
          %375 = vst.msk [vmem:[#allocation2 + $0x78] sm:$0xff] %vm359, 1.0
          %376 = vst.msk [vmem:[#allocation2 + $0x80] sm:$0xff] %vm359, 1.0
          %377 = vst.msk [vmem:[#allocation2 + $0x88] sm:$0xff] %vm359, 1.0
          %378 = vst.msk [vmem:[#allocation2 + $0x90] sm:$0xff] %vm359, 1.0
          %379 = vst.msk [vmem:[#allocation2 + $0x98] sm:$0xff] %vm359, 1.0
          %380 = vst.msk [vmem:[#allocation2 + $0xa0] sm:$0xff] %vm359, 1.0
          %381 = vst.msk [vmem:[#allocation2 + $0xa8] sm:$0xff] %vm359, 1.0
          %382 = vst.msk [vmem:[#allocation2 + $0xb0] sm:$0xff] %vm359, 1.0
          %383 = vst.msk [vmem:[#allocation2 + $0xb8] sm:$0xff] %vm359, 1.0
          %384 = vst.msk [vmem:[#allocation2 + $0xc0] sm:$0xff] %vm359, 1.0
          %385 = vst.msk [vmem:[#allocation2 + $0xc8] sm:$0xff] %vm359, 1.0
          %386 = vst.msk [vmem:[#allocation2 + $0xd0] sm:$0xff] %vm359, 1.0
          %387 = vst.msk [vmem:[#allocation2 + $0xd8] sm:$0xff] %vm359, 1.0
          %388 = vst.msk [vmem:[#allocation2 + $0xe0] sm:$0xff] %vm359, 1.0
          %389 = vst.msk [vmem:[#allocation2 + $0xe8] sm:$0xff] %vm359, 1.0
          %390 = vst.msk [vmem:[#allocation2 + $0xf0] sm:$0xff] %vm359, 1.0
          %391 = vst.msk [vmem:[#allocation2 + $0xf8] sm:$0xff] %vm359, 1.0
          %392 = vst.msk [vmem:[#allocation2 + $0x100] sm:$0xff] %vm359, 1.0
          %393 = vst.msk [vmem:[#allocation2 + $0x108] sm:$0xff] %vm359, 1.0
          %394 = vst.msk [vmem:[#allocation2 + $0x110] sm:$0xff] %vm359, 1.0
          %395 = vst.msk [vmem:[#allocation2 + $0x118] sm:$0xff] %vm359, 1.0
          %396 = vst.msk [vmem:[#allocation2 + $0x120] sm:$0xff] %vm359, 1.0
          %397 = vst.msk [vmem:[#allocation2 + $0x128] sm:$0xff] %vm359, 1.0
          %398 = vst.msk [vmem:[#allocation2 + $0x130] sm:$0xff] %vm359, 1.0
          %399 = vst.msk [vmem:[#allocation2 + $0x138] sm:$0xff] %vm359, 1.0
          %400 = vst.msk [vmem:[#allocation2 + $0x140] sm:$0xff] %vm359, 1.0
          %401 = vst.msk [vmem:[#allocation2 + $0x148] sm:$0xff] %vm359, 1.0
          %402 = vst.msk [vmem:[#allocation2 + $0x150] sm:$0xff] %vm359, 1.0
          %403 = vst.msk [vmem:[#allocation2 + $0x158] sm:$0xff] %vm359, 1.0
          %404 = vst.msk [vmem:[#allocation2 + $0x160] sm:$0xff] %vm359, 1.0
          %405 = vst.msk [vmem:[#allocation2 + $0x168] sm:$0xff] %vm359, 1.0
          %406 = vst.msk [vmem:[#allocation2 + $0x170] sm:$0xff] %vm359, 1.0
          %407 = vst.msk [vmem:[#allocation2 + $0x178] sm:$0xff] %vm359, 1.0
          %408 = vst.msk [vmem:[#allocation2 + $0x180] sm:$0xff] %vm359, 1.0
          %409 = vst.msk [vmem:[#allocation2 + $0x188] sm:$0xff] %vm359, 1.0
          %410 = vst.msk [vmem:[#allocation2 + $0x190] sm:$0xff] %vm359, 1.0
          %411 = vst.msk [vmem:[#allocation2 + $0x198] sm:$0xff] %vm359, 1.0
          %412 = vst.msk [vmem:[#allocation2 + $0x1a0] sm:$0xff] %vm359, 1.0
          %413 = vst.msk [vmem:[#allocation2 + $0x1a8] sm:$0xff] %vm359, 1.0
          %414 = vst.msk [vmem:[#allocation2 + $0x1b0] sm:$0xff] %vm359, 1.0
          %415 = vst.msk [vmem:[#allocation2 + $0x1b8] sm:$0xff] %vm359, 1.0
          %416 = vst.msk [vmem:[#allocation2 + $0x1c0] sm:$0xff] %vm359, 1.0
          %417 = vst.msk [vmem:[#allocation2 + $0x1c8] sm:$0xff] %vm359, 1.0
          %418 = vst.msk [vmem:[#allocation2 + $0x1d0] sm:$0xff] %vm359, 1.0
          %419 = vst.msk [vmem:[#allocation2 + $0x1d8] sm:$0xff] %vm359, 1.0
          %420 = vst.msk [vmem:[#allocation2 + $0x1e0] sm:$0xff] %vm359, 1.0
          %421 = vst.msk [vmem:[#allocation2 + $0x1e8] sm:$0xff] %vm359, 1.0
          %422 = vst.msk [vmem:[#allocation2 + $0x1f0] sm:$0xff] %vm359, 1.0
          %423 = vst.msk [vmem:[#allocation2 + $0x1f8] sm:$0xff] %vm359, 1.0
        $region48: #{tpu_custom_call.1} parent=43 // pred_fallthru
          _
        %v424 = vld [vmem:[%s345] sm:$0xff]
        %v425 = vld [vmem:[%s345 + $0x8] sm:$0xff]
        %v426 = vld [vmem:[%s345 + $0x10] sm:$0xff]
        %v427 = vld [vmem:[%s345 + $0x18] sm:$0xff]
        %v428 = vld [vmem:[%s345 + $0x20] sm:$0xff]
        %v429 = vld [vmem:[%s345 + $0x28] sm:$0xff]
        %v430 = vld [vmem:[%s345 + $0x30] sm:$0xff]
        %v431 = vld [vmem:[%s345 + $0x38] sm:$0xff]
        %v432 = vld [vmem:[%s345 + $0x40] sm:$0xff]
        %v433 = vld [vmem:[%s345 + $0x48] sm:$0xff]
        %v434 = vld [vmem:[%s345 + $0x50] sm:$0xff]
        %v435 = vld [vmem:[%s345 + $0x58] sm:$0xff]
        %v436 = vld [vmem:[%s345 + $0x60] sm:$0xff]
        %v437 = vld [vmem:[%s345 + $0x68] sm:$0xff]
        %v438 = vld [vmem:[%s345 + $0x70] sm:$0xff]
        %v439 = vld [vmem:[%s345 + $0x78] sm:$0xff]
        %v440 = vld [vmem:[%s345 + $0x80] sm:$0xff]
        %v441 = vld [vmem:[%s345 + $0x88] sm:$0xff]
        %v442 = vld [vmem:[%s345 + $0x90] sm:$0xff]
        %v443 = vld [vmem:[%s345 + $0x98] sm:$0xff]
        %v444 = vld [vmem:[%s345 + $0xa0] sm:$0xff]
        %v445 = vld [vmem:[%s345 + $0xa8] sm:$0xff]
        %v446 = vld [vmem:[%s345 + $0xb0] sm:$0xff]
        %v447 = vld [vmem:[%s345 + $0xb8] sm:$0xff]
        %v448 = vld [vmem:[%s345 + $0xc0] sm:$0xff]
        %v449 = vld [vmem:[%s345 + $0xc8] sm:$0xff]
        %v450 = vld [vmem:[%s345 + $0xd0] sm:$0xff]
        %v451 = vld [vmem:[%s345 + $0xd8] sm:$0xff]
        %v452 = vld [vmem:[%s345 + $0xe0] sm:$0xff]
        %v453 = vld [vmem:[%s345 + $0xe8] sm:$0xff]
        %v454 = vld [vmem:[%s345 + $0xf0] sm:$0xff]
        %v455 = vld [vmem:[%s345 + $0xf8] sm:$0xff]
        %v456 = vld [vmem:[%s345 + $0x100] sm:$0xff]
        %v457 = vld [vmem:[%s345 + $0x108] sm:$0xff]
        %v458 = vld [vmem:[%s345 + $0x110] sm:$0xff]
        %v459 = vld [vmem:[%s345 + $0x118] sm:$0xff]
        %v460 = vld [vmem:[%s345 + $0x120] sm:$0xff]
        %v461 = vld [vmem:[%s345 + $0x128] sm:$0xff]
        %v462 = vld [vmem:[%s345 + $0x130] sm:$0xff]
        %v463 = vld [vmem:[%s345 + $0x138] sm:$0xff]
        %v464 = vld [vmem:[%s345 + $0x140] sm:$0xff]
        %v465 = vld [vmem:[%s345 + $0x148] sm:$0xff]
        %v466 = vld [vmem:[%s345 + $0x150] sm:$0xff]
        %v467 = vld [vmem:[%s345 + $0x158] sm:$0xff]
        %v468 = vld [vmem:[%s345 + $0x160] sm:$0xff]
        %v469 = vld [vmem:[%s345 + $0x168] sm:$0xff]
        %v470 = vld [vmem:[%s345 + $0x170] sm:$0xff]
        %v471 = vld [vmem:[%s345 + $0x178] sm:$0xff]
        %v472 = vld [vmem:[%s345 + $0x180] sm:$0xff]
        %v473 = vld [vmem:[%s345 + $0x188] sm:$0xff]
        %v474 = vld [vmem:[%s345 + $0x190] sm:$0xff]
        %v475 = vld [vmem:[%s345 + $0x198] sm:$0xff]
        %v476 = vld [vmem:[%s345 + $0x1a0] sm:$0xff]
        %v477 = vld [vmem:[%s345 + $0x1a8] sm:$0xff]
        %v478 = vld [vmem:[%s345 + $0x1b0] sm:$0xff]
        %v479 = vld [vmem:[%s345 + $0x1b8] sm:$0xff]
        %v480 = vld [vmem:[%s345 + $0x1c0] sm:$0xff]
        %v481 = vld [vmem:[%s345 + $0x1c8] sm:$0xff]
        %v482 = vld [vmem:[%s345 + $0x1d0] sm:$0xff]
        %v483 = vld [vmem:[%s345 + $0x1d8] sm:$0xff]
        %v484 = vld [vmem:[%s345 + $0x1e0] sm:$0xff]
        %v485 = vld [vmem:[%s345 + $0x1e8] sm:$0xff]
        %v486 = vld [vmem:[%s345 + $0x1f0] sm:$0xff]
        %v487 = vld [vmem:[%s345 + $0x1f8] sm:$0xff]
        %v488 = vld [vmem:[%s2] sm:$0xff]
        %v489 = vld [vmem:[%s2 + $0x8] sm:$0xff]
        %v490 = vld [vmem:[%s2 + $0x10] sm:$0xff]
        %v491 = vld [vmem:[%s2 + $0x18] sm:$0xff]
        %v492 = vld [vmem:[%s3] sm:$0x1]
        %v494 = vlaneseq
        %v495 = vshrl.u32 %v494, 7
        %v496 = vsub.s32 0, %v495
        %v497 = vrot.slane %v492, %v496
        %vm499 = vcmask 261120
        %v501 = vsel %vm499, %v424, 0
        %v504 = vsel %vm499, %v425, 0
        %v507 = vsel %vm499, %v426, 0
        %v510 = vsel %vm499, %v427, 0
        %v513 = vsel %vm499, %v428, 0
        %v516 = vsel %vm499, %v429, 0
        %v519 = vsel %vm499, %v430, 0
        %v522 = vsel %vm499, %v431, 0
        %v525 = vsel %vm499, %v432, 0
        %v528 = vsel %vm499, %v433, 0
        %v531 = vsel %vm499, %v434, 0
        %v534 = vsel %vm499, %v435, 0
        %v537 = vsel %vm499, %v436, 0
        %v540 = vsel %vm499, %v437, 0
        %v543 = vsel %vm499, %v438, 0
        %v546 = vsel %vm499, %v439, 0
        %v549 = vsel %vm499, %v440, 0
        %v552 = vsel %vm499, %v441, 0
        %v555 = vsel %vm499, %v442, 0
        %v558 = vsel %vm499, %v443, 0
        %v561 = vsel %vm499, %v444, 0
        %v564 = vsel %vm499, %v445, 0
        %v567 = vsel %vm499, %v446, 0
        %v570 = vsel %vm499, %v447, 0
        %v573 = vsel %vm499, %v448, 0
        %v576 = vsel %vm499, %v449, 0
        %v579 = vsel %vm499, %v450, 0
        %v582 = vsel %vm499, %v451, 0
        %v585 = vsel %vm499, %v452, 0
        %v588 = vsel %vm499, %v453, 0
        %v591 = vsel %vm499, %v454, 0
        %v594 = vsel %vm499, %v455, 0
        %v597 = vsel %vm499, %v456, 0
        %v600 = vsel %vm499, %v457, 0
        %v603 = vsel %vm499, %v458, 0
        %v606 = vsel %vm499, %v459, 0
        %v609 = vsel %vm499, %v460, 0
        %v612 = vsel %vm499, %v461, 0
        %v615 = vsel %vm499, %v462, 0
        %v618 = vsel %vm499, %v463, 0
        %v621 = vsel %vm499, %v464, 0
        %v624 = vsel %vm499, %v465, 0
        %v627 = vsel %vm499, %v466, 0
        %v630 = vsel %vm499, %v467, 0
        %v633 = vsel %vm499, %v468, 0
        %v636 = vsel %vm499, %v469, 0
        %v639 = vsel %vm499, %v470, 0
        %v642 = vsel %vm499, %v471, 0
        %v645 = vsel %vm499, %v472, 0
        %v648 = vsel %vm499, %v473, 0
        %v651 = vsel %vm499, %v474, 0
        %v654 = vsel %vm499, %v475, 0
        %v657 = vsel %vm499, %v476, 0
        %v660 = vsel %vm499, %v477, 0
        %v663 = vsel %vm499, %v478, 0
        %v666 = vsel %vm499, %v479, 0
        %v669 = vsel %vm499, %v480, 0
        %v672 = vsel %vm499, %v481, 0
        %v675 = vsel %vm499, %v482, 0
        %v678 = vsel %vm499, %v483, 0
        %v681 = vsel %vm499, %v484, 0
        %v684 = vsel %vm499, %v485, 0
        %v687 = vsel %vm499, %v486, 0
        %v690 = vsel %vm499, %v487, 0
        %692 = vmatprep.subr.mxu0 0.0
        %v693 = vand.u32 %v488, 4294901760
        %694 = vmatpush1.msra.mxu0 %v693
        %695 = vmatprep.subr.mxu0 0.0
        %v696 = vand.u32 %v489, 4294901760
        %697 = vmatpush1.msra.mxu0 %v696
        %698 = vmatprep.subr.mxu0 0.0
        %v699 = vand.u32 %v490, 4294901760
        %700 = vmatpush1.msra.mxu0 %v699
        %701 = vmatprep.subr.mxu0 0.0
        %v702 = vand.u32 %v491, 4294901760
        %703 = vmatpush1.msra.mxu0 %v702
        %704 = vmatprep.subr.mxu0 0.0
        %705 = vmatpush1.msra.mxu0 0.0
        %706 = vmatprep.subr.mxu0 0.0
        %707 = vmatpush1.msra.mxu0 0.0
        %708 = vmatprep.subr.mxu0 0.0
        %709 = vmatpush1.msra.mxu0 0.0
        %710 = vmatprep.subr.mxu0 0.0
        %711 = vmatpush1.msra.mxu0 0.0
        %712 = vmatprep.subr.mxu0 0.0
        %713 = vmatpush1.msra.mxu0 0.0
        %714 = vmatprep.subr.mxu0 0.0
        %715 = vmatpush1.msra.mxu0 0.0
        %716 = vmatprep.subr.mxu0 0.0
        %717 = vmatpush1.msra.mxu0 0.0
        %718 = vmatprep.subr.mxu0 0.0
        %719 = vmatpush1.msra.mxu0 0.0
        %720 = vmatprep.subr.mxu0 0.0
        %721 = vmatpush1.msra.mxu0 0.0
        %722 = vmatprep.subr.mxu0 0.0
        %723 = vmatpush1.msra.mxu0 0.0
        %724 = vmatprep.subr.mxu0 0.0
        %725 = vmatpush1.msra.mxu0 0.0
        %726 = vmatprep.subr.mxu0 0.0
        %727 = vmatpush1.msra.mxu0 0.0
        %728 = vmatprep.subr.mxu0 0.0
        %729 = vmatpush1.msra.mxu0 0.0
        %730 = vmatprep.subr.mxu0 0.0
        %731 = vmatpush1.msra.mxu0 0.0
        %732 = vmatprep.subr.mxu0 0.0
        %733 = vmatpush1.msra.mxu0 0.0
        %734 = vmatprep.subr.mxu0 0.0
        %735 = vmatpush1.msra.mxu0 0.0
        %736 = vmatprep.subr.mxu0 0.0
        %737 = vmatpush1.msra.mxu0 0.0
        %738 = vmatprep.subr.mxu0 0.0
        %739 = vmatpush1.msra.mxu0 0.0
        %740 = vmatprep.subr.mxu0 0.0
        %741 = vmatpush1.msra.mxu0 0.0
        %742 = vmatprep.subr.mxu0 0.0
        %743 = vmatpush1.msra.mxu0 0.0
        %744 = vmatprep.subr.mxu0 0.0
        %745 = vmatpush1.msra.mxu0 0.0
        %746 = vmatprep.subr.mxu0 0.0
        %747 = vmatpush1.msra.mxu0 0.0
        %748 = vmatprep.subr.mxu0 0.0
        %749 = vmatpush1.msra.mxu0 0.0
        %750 = vmatprep.subr.mxu0 0.0
        %751 = vmatpush1.msra.mxu0 0.0
        %752 = vmatprep.subr.mxu0 0.0
        %753 = vmatpush1.msra.mxu0 0.0
        %754 = vmatprep.subr.mxu0 0.0
        %755 = vmatpush1.msra.mxu0 0.0
        %756 = vmatprep.subr.mxu0 0.0
        %757 = vmatpush1.msra.mxu0 0.0
        %758 = vmatprep.subr.mxu0 0.0
        %759 = vmatpush1.msra.mxu0 0.0
        %760 = vmatprep.mubr.f32.mxu0 0.0
        %v761 = vand.u32 %v501, 4294901760
        %v762 = vsub.f32 %v501, %v761
        %v763 = vand.u32 %v762, 4294901760
        %v764 = vsub.f32 %v762, %v763
        %v765 = vand.u32 %v764, 4294901760
        %766 = vmatmul.mubr.f32.gmra.mrb[0].mxu0 %v765
        %v767 = vpop.f32.mrb[0].mxu0
        %v768 = vadd.f32 %v497, %v767
        %v769 = vpop.f32.mrb[0].mxu0
        %770 = vmatprep.mubr.f32.mxu0 0.0
        %v771 = vand.u32 %v504, 4294901760
        %v772 = vsub.f32 %v504, %v771
        %v773 = vand.u32 %v772, 4294901760
        %v774 = vsub.f32 %v772, %v773
        %v775 = vand.u32 %v774, 4294901760
        %776 = vmatmul.mubr.f32.gmra.mrb[0].mxu0 %v775
        %v777 = vpop.f32.mrb[0].mxu0
        %v778 = vadd.f32 %v497, %v777
        %v779 = vpop.f32.mrb[0].mxu0
        %780 = vmatprep.mubr.f32.mxu0 0.0
        %v781 = vand.u32 %v507, 4294901760
        %v782 = vsub.f32 %v507, %v781
        %v783 = vand.u32 %v782, 4294901760
        %v784 = vsub.f32 %v782, %v783
        %v785 = vand.u32 %v784, 4294901760
        %786 = vmatmul.mubr.f32.gmra.mrb[0].mxu0 %v785
        %v787 = vpop.f32.mrb[0].mxu0
        %v788 = vadd.f32 %v497, %v787
        %v789 = vpop.f32.mrb[0].mxu0
        %790 = vmatprep.mubr.f32.mxu0 0.0
        %v791 = vand.u32 %v510, 4294901760
        %v792 = vsub.f32 %v510, %v791
        %v793 = vand.u32 %v792, 4294901760
        %v794 = vsub.f32 %v792, %v793
        %v795 = vand.u32 %v794, 4294901760
        %796 = vmatmul.mubr.f32.gmra.mrb[0].mxu0 %v795
        %v797 = vpop.f32.mrb[0].mxu0
        %v798 = vadd.f32 %v497, %v797
        %v799 = vpop.f32.mrb[0].mxu0
        %800 = vmatprep.mubr.f32.mxu0 0.0
        %v801 = vand.u32 %v513, 4294901760
        %v802 = vsub.f32 %v513, %v801
        %v803 = vand.u32 %v802, 4294901760
        %v804 = vsub.f32 %v802, %v803
        %v805 = vand.u32 %v804, 4294901760
        %806 = vmatmul.mubr.f32.gmra.mrb[0].mxu0 %v805
        %v807 = vpop.f32.mrb[0].mxu0
        %v808 = vadd.f32 %v497, %v807
        %v809 = vpop.f32.mrb[0].mxu0
        %810 = vmatprep.mubr.f32.mxu0 0.0
        %v811 = vand.u32 %v516, 4294901760
        %v812 = vsub.f32 %v516, %v811
        %v813 = vand.u32 %v812, 4294901760
        %v814 = vsub.f32 %v812, %v813
        %v815 = vand.u32 %v814, 4294901760
        %816 = vmatmul.mubr.f32.gmra.mrb[0].mxu0 %v815
        %v817 = vpop.f32.mrb[0].mxu0
        %v818 = vadd.f32 %v497, %v817
        %v819 = vpop.f32.mrb[0].mxu0
        %820 = vmatprep.mubr.f32.mxu0 0.0
        %v821 = vand.u32 %v519, 4294901760
        %v822 = vsub.f32 %v519, %v821
        %v823 = vand.u32 %v822, 4294901760
        %v824 = vsub.f32 %v822, %v823
        %v825 = vand.u32 %v824, 4294901760
        %826 = vmatmul.mubr.f32.gmra.mrb[0].mxu0 %v825
        %v827 = vpop.f32.mrb[0].mxu0
        %v828 = vadd.f32 %v497, %v827
        %v829 = vpop.f32.mrb[0].mxu0
        %830 = vmatprep.mubr.f32.mxu0 0.0
        %v831 = vand.u32 %v522, 4294901760
        %v832 = vsub.f32 %v522, %v831
        %v833 = vand.u32 %v832, 4294901760
        %v834 = vsub.f32 %v832, %v833
        %v835 = vand.u32 %v834, 4294901760
        %836 = vmatmul.mubr.f32.gmra.mrb[0].mxu0 %v835
        %v837 = vpop.f32.mrb[0].mxu0
        %v838 = vadd.f32 %v497, %v837
        %v839 = vpop.f32.mrb[0].mxu0
        %840 = vmatprep.mubr.f32.mxu0 0.0
        %v841 = vand.u32 %v525, 4294901760
        %v842 = vsub.f32 %v525, %v841
        %v843 = vand.u32 %v842, 4294901760
        %v844 = vsub.f32 %v842, %v843
        %v845 = vand.u32 %v844, 4294901760
        %846 = vmatmul.mubr.f32.gmra.mrb[0].mxu0 %v845
        %v847 = vpop.f32.mrb[0].mxu0
        %v848 = vadd.f32 %v497, %v847
        %v849 = vpop.f32.mrb[0].mxu0
        %850 = vmatprep.mubr.f32.mxu0 0.0
        %v851 = vand.u32 %v528, 4294901760
        %v852 = vsub.f32 %v528, %v851
        %v853 = vand.u32 %v852, 4294901760
        %v854 = vsub.f32 %v852, %v853
        %v855 = vand.u32 %v854, 4294901760
        %856 = vmatmul.mubr.f32.gmra.mrb[0].mxu0 %v855
        %v857 = vpop.f32.mrb[0].mxu0
        %v858 = vadd.f32 %v497, %v857
        %v859 = vpop.f32.mrb[0].mxu0
        %860 = vmatprep.mubr.f32.mxu0 0.0
        %v861 = vand.u32 %v531, 4294901760
        %v862 = vsub.f32 %v531, %v861
        %v863 = vand.u32 %v862, 4294901760
        %v864 = vsub.f32 %v862, %v863
        %v865 = vand.u32 %v864, 4294901760
        %866 = vmatmul.mubr.f32.gmra.mrb[0].mxu0 %v865
        %v867 = vpop.f32.mrb[0].mxu0
        %v868 = vadd.f32 %v497, %v867
        %v869 = vpop.f32.mrb[0].mxu0
        %870 = vmatprep.mubr.f32.mxu0 0.0
        %v871 = vand.u32 %v534, 4294901760
        %v872 = vsub.f32 %v534, %v871
        %v873 = vand.u32 %v872, 4294901760
        %v874 = vsub.f32 %v872, %v873
        %v875 = vand.u32 %v874, 4294901760
        %876 = vmatmul.mubr.f32.gmra.mrb[0].mxu0 %v875
        %v877 = vpop.f32.mrb[0].mxu0
        %v878 = vadd.f32 %v497, %v877
        %v879 = vpop.f32.mrb[0].mxu0
        %880 = vmatprep.mubr.f32.mxu0 0.0
        %v881 = vand.u32 %v537, 4294901760
        %v882 = vsub.f32 %v537, %v881
        %v883 = vand.u32 %v882, 4294901760
        %v884 = vsub.f32 %v882, %v883
        %v885 = vand.u32 %v884, 4294901760
        %886 = vmatmul.mubr.f32.gmra.mrb[0].mxu0 %v885
        %v887 = vpop.f32.mrb[0].mxu0
        %v888 = vadd.f32 %v497, %v887
        %v889 = vpop.f32.mrb[0].mxu0
        %890 = vmatprep.mubr.f32.mxu0 0.0
        %v891 = vand.u32 %v540, 4294901760
        %v892 = vsub.f32 %v540, %v891
        %v893 = vand.u32 %v892, 4294901760
        %v894 = vsub.f32 %v892, %v893
        %v895 = vand.u32 %v894, 4294901760
        %896 = vmatmul.mubr.f32.gmra.mrb[0].mxu0 %v895
        %v897 = vpop.f32.mrb[0].mxu0
        %v898 = vadd.f32 %v497, %v897
        %v899 = vpop.f32.mrb[0].mxu0
        %900 = vmatprep.mubr.f32.mxu0 0.0
        %v901 = vand.u32 %v543, 4294901760
        %v902 = vsub.f32 %v543, %v901
        %v903 = vand.u32 %v902, 4294901760
        %v904 = vsub.f32 %v902, %v903
        %v905 = vand.u32 %v904, 4294901760
        %906 = vmatmul.mubr.f32.gmra.mrb[0].mxu0 %v905
        %v907 = vpop.f32.mrb[0].mxu0
        %v908 = vadd.f32 %v497, %v907
        %v909 = vpop.f32.mrb[0].mxu0
        %910 = vmatprep.mubr.f32.mxu0 0.0
        %v911 = vand.u32 %v546, 4294901760
        %v912 = vsub.f32 %v546, %v911
        %v913 = vand.u32 %v912, 4294901760
        %v914 = vsub.f32 %v912, %v913
        %v915 = vand.u32 %v914, 4294901760
        %916 = vmatmul.mubr.f32.gmra.mrb[0].mxu0 %v915
        %v917 = vpop.f32.mrb[0].mxu0
        %v918 = vadd.f32 %v497, %v917
        %v919 = vpop.f32.mrb[0].mxu0
        %920 = vmatprep.mubr.f32.mxu0 0.0
        %v921 = vand.u32 %v549, 4294901760
        %v922 = vsub.f32 %v549, %v921
        %v923 = vand.u32 %v922, 4294901760
        %v924 = vsub.f32 %v922, %v923
        %v925 = vand.u32 %v924, 4294901760
        %926 = vmatmul.mubr.f32.gmra.mrb[0].mxu0 %v925
        %v927 = vpop.f32.mrb[0].mxu0
        %v928 = vadd.f32 %v497, %v927
        %v929 = vpop.f32.mrb[0].mxu0
        %930 = vmatprep.mubr.f32.mxu0 0.0
        %v931 = vand.u32 %v552, 4294901760
        %v932 = vsub.f32 %v552, %v931
        %v933 = vand.u32 %v932, 4294901760
        %v934 = vsub.f32 %v932, %v933
        %v935 = vand.u32 %v934, 4294901760
        %936 = vmatmul.mubr.f32.gmra.mrb[0].mxu0 %v935
        %v937 = vpop.f32.mrb[0].mxu0
        %v938 = vadd.f32 %v497, %v937
        %v939 = vpop.f32.mrb[0].mxu0
        %940 = vmatprep.mubr.f32.mxu0 0.0
        %v941 = vand.u32 %v555, 4294901760
        %v942 = vsub.f32 %v555, %v941
        %v943 = vand.u32 %v942, 4294901760
        %v944 = vsub.f32 %v942, %v943
        %v945 = vand.u32 %v944, 4294901760
        %946 = vmatmul.mubr.f32.gmra.mrb[0].mxu0 %v945
        %v947 = vpop.f32.mrb[0].mxu0
        %v948 = vadd.f32 %v497, %v947
        %v949 = vpop.f32.mrb[0].mxu0
        %950 = vmatprep.mubr.f32.mxu0 0.0
        %v951 = vand.u32 %v558, 4294901760
        %v952 = vsub.f32 %v558, %v951
        %v953 = vand.u32 %v952, 4294901760
        %v954 = vsub.f32 %v952, %v953
        %v955 = vand.u32 %v954, 4294901760
        %956 = vmatmul.mubr.f32.gmra.mrb[0].mxu0 %v955
        %v957 = vpop.f32.mrb[0].mxu0
        %v958 = vadd.f32 %v497, %v957
        %v959 = vpop.f32.mrb[0].mxu0
        %960 = vmatprep.mubr.f32.mxu0 0.0
        %v961 = vand.u32 %v561, 4294901760
        %v962 = vsub.f32 %v561, %v961
        %v963 = vand.u32 %v962, 4294901760
        %v964 = vsub.f32 %v962, %v963
        %v965 = vand.u32 %v964, 4294901760
        %966 = vmatmul.mubr.f32.gmra.mrb[0].mxu0 %v965
        %v967 = vpop.f32.mrb[0].mxu0
        %v968 = vadd.f32 %v497, %v967
        %v969 = vpop.f32.mrb[0].mxu0
        %970 = vmatprep.mubr.f32.mxu0 0.0
        %v971 = vand.u32 %v564, 4294901760
        %v972 = vsub.f32 %v564, %v971
        %v973 = vand.u32 %v972, 4294901760
        %v974 = vsub.f32 %v972, %v973
        %v975 = vand.u32 %v974, 4294901760
        %976 = vmatmul.mubr.f32.gmra.mrb[0].mxu0 %v975
        %v977 = vpop.f32.mrb[0].mxu0
        %v978 = vadd.f32 %v497, %v977
        %v979 = vpop.f32.mrb[0].mxu0
        %980 = vmatprep.mubr.f32.mxu0 0.0
        %v981 = vand.u32 %v567, 4294901760
        %v982 = vsub.f32 %v567, %v981
        %v983 = vand.u32 %v982, 4294901760
        %v984 = vsub.f32 %v982, %v983
        %v985 = vand.u32 %v984, 4294901760
        %986 = vmatmul.mubr.f32.gmra.mrb[0].mxu0 %v985
        %v987 = vpop.f32.mrb[0].mxu0
        %v988 = vadd.f32 %v497, %v987
        %v989 = vpop.f32.mrb[0].mxu0
        %990 = vmatprep.mubr.f32.mxu0 0.0
        %v991 = vand.u32 %v570, 4294901760
        %v992 = vsub.f32 %v570, %v991
        %v993 = vand.u32 %v992, 4294901760
        %v994 = vsub.f32 %v992, %v993
        %v995 = vand.u32 %v994, 4294901760
        %996 = vmatmul.mubr.f32.gmra.mrb[0].mxu0 %v995
        %v997 = vpop.f32.mrb[0].mxu0
        %v998 = vadd.f32 %v497, %v997
        %v999 = vpop.f32.mrb[0].mxu0
        %1000 = vmatprep.mubr.f32.mxu0 0.0
        %v1001 = vand.u32 %v573, 4294901760
        %v1002 = vsub.f32 %v573, %v1001
        %v1003 = vand.u32 %v1002, 4294901760
        %v1004 = vsub.f32 %v1002, %v1003
        %v1005 = vand.u32 %v1004, 4294901760
        %1006 = vmatmul.mubr.f32.gmra.mrb[0].mxu0 %v1005
        %v1007 = vpop.f32.mrb[0].mxu0
        %v1008 = vadd.f32 %v497, %v1007
        %v1009 = vpop.f32.mrb[0].mxu0
        %1010 = vmatprep.mubr.f32.mxu0 0.0
        %v1011 = vand.u32 %v576, 4294901760
        %v1012 = vsub.f32 %v576, %v1011
        %v1013 = vand.u32 %v1012, 4294901760
        %v1014 = vsub.f32 %v1012, %v1013
        %v1015 = vand.u32 %v1014, 4294901760
        %1016 = vmatmul.mubr.f32.gmra.mrb[0].mxu0 %v1015
        %v1017 = vpop.f32.mrb[0].mxu0
        %v1018 = vadd.f32 %v497, %v1017
        %v1019 = vpop.f32.mrb[0].mxu0
        %1020 = vmatprep.mubr.f32.mxu0 0.0
        %v1021 = vand.u32 %v579, 4294901760
        %v1022 = vsub.f32 %v579, %v1021
        %v1023 = vand.u32 %v1022, 4294901760
        %v1024 = vsub.f32 %v1022, %v1023
        %v1025 = vand.u32 %v1024, 4294901760
        %1026 = vmatmul.mubr.f32.gmra.mrb[0].mxu0 %v1025
        %v1027 = vpop.f32.mrb[0].mxu0
        %v1028 = vadd.f32 %v497, %v1027
        %v1029 = vpop.f32.mrb[0].mxu0
        %1030 = vmatprep.mubr.f32.mxu0 0.0
        %v1031 = vand.u32 %v582, 4294901760
        %v1032 = vsub.f32 %v582, %v1031
        %v1033 = vand.u32 %v1032, 4294901760
        %v1034 = vsub.f32 %v1032, %v1033
        %v1035 = vand.u32 %v1034, 4294901760
        %1036 = vmatmul.mubr.f32.gmra.mrb[0].mxu0 %v1035
        %v1037 = vpop.f32.mrb[0].mxu0
        %v1038 = vadd.f32 %v497, %v1037
        %v1039 = vpop.f32.mrb[0].mxu0
        %1040 = vmatprep.mubr.f32.mxu0 0.0
        %v1041 = vand.u32 %v585, 4294901760
        %v1042 = vsub.f32 %v585, %v1041
        %v1043 = vand.u32 %v1042, 4294901760
        %v1044 = vsub.f32 %v1042, %v1043
        %v1045 = vand.u32 %v1044, 4294901760
        %1046 = vmatmul.mubr.f32.gmra.mrb[0].mxu0 %v1045
        %v1047 = vpop.f32.mrb[0].mxu0
        %v1048 = vadd.f32 %v497, %v1047
        %v1049 = vpop.f32.mrb[0].mxu0
        %1050 = vmatprep.mubr.f32.mxu0 0.0
        %v1051 = vand.u32 %v588, 4294901760
        %v1052 = vsub.f32 %v588, %v1051
        %v1053 = vand.u32 %v1052, 4294901760
        %v1054 = vsub.f32 %v1052, %v1053
        %v1055 = vand.u32 %v1054, 4294901760
        %1056 = vmatmul.mubr.f32.gmra.mrb[0].mxu0 %v1055
        %v1057 = vpop.f32.mrb[0].mxu0
        %v1058 = vadd.f32 %v497, %v1057
        %v1059 = vpop.f32.mrb[0].mxu0
        %1060 = vmatprep.mubr.f32.mxu0 0.0
        %v1061 = vand.u32 %v591, 4294901760
        %v1062 = vsub.f32 %v591, %v1061
        %v1063 = vand.u32 %v1062, 4294901760
        %v1064 = vsub.f32 %v1062, %v1063
        %v1065 = vand.u32 %v1064, 4294901760
        %1066 = vmatmul.mubr.f32.gmra.mrb[0].mxu0 %v1065
        %v1067 = vpop.f32.mrb[0].mxu0
        %v1068 = vadd.f32 %v497, %v1067
        %v1069 = vpop.f32.mrb[0].mxu0
        %1070 = vmatprep.mubr.f32.mxu0 0.0
        %v1071 = vand.u32 %v594, 4294901760
        %v1072 = vsub.f32 %v594, %v1071
        %v1073 = vand.u32 %v1072, 4294901760
        %v1074 = vsub.f32 %v1072, %v1073
        %v1075 = vand.u32 %v1074, 4294901760
        %1076 = vmatmul.mubr.f32.gmra.mrb[0].mxu0 %v1075
        %v1077 = vpop.f32.mrb[0].mxu0
        %v1078 = vadd.f32 %v497, %v1077
        %v1079 = vpop.f32.mrb[0].mxu0
        %1080 = vmatprep.mubr.f32.mxu0 0.0
        %v1081 = vand.u32 %v597, 4294901760
        %v1082 = vsub.f32 %v597, %v1081
        %v1083 = vand.u32 %v1082, 4294901760
        %v1084 = vsub.f32 %v1082, %v1083
        %v1085 = vand.u32 %v1084, 4294901760
        %1086 = vmatmul.mubr.f32.gmra.mrb[0].mxu0 %v1085
        %v1087 = vpop.f32.mrb[0].mxu0
        %v1088 = vadd.f32 %v497, %v1087
        %v1089 = vpop.f32.mrb[0].mxu0
        %1090 = vmatprep.mubr.f32.mxu0 0.0
        %v1091 = vand.u32 %v600, 4294901760
        %v1092 = vsub.f32 %v600, %v1091
        %v1093 = vand.u32 %v1092, 4294901760
        %v1094 = vsub.f32 %v1092, %v1093
        %v1095 = vand.u32 %v1094, 4294901760
        %1096 = vmatmul.mubr.f32.gmra.mrb[0].mxu0 %v1095
        %v1097 = vpop.f32.mrb[0].mxu0
        %v1098 = vadd.f32 %v497, %v1097
        %v1099 = vpop.f32.mrb[0].mxu0
        %1100 = vmatprep.mubr.f32.mxu0 0.0
        %v1101 = vand.u32 %v603, 4294901760
        %v1102 = vsub.f32 %v603, %v1101
        %v1103 = vand.u32 %v1102, 4294901760
        %v1104 = vsub.f32 %v1102, %v1103
        %v1105 = vand.u32 %v1104, 4294901760
        %1106 = vmatmul.mubr.f32.gmra.mrb[0].mxu0 %v1105
        %v1107 = vpop.f32.mrb[0].mxu0
        %v1108 = vadd.f32 %v497, %v1107
        %v1109 = vpop.f32.mrb[0].mxu0
        %1110 = vmatprep.mubr.f32.mxu0 0.0
        %v1111 = vand.u32 %v606, 4294901760
        %v1112 = vsub.f32 %v606, %v1111
        %v1113 = vand.u32 %v1112, 4294901760
        %v1114 = vsub.f32 %v1112, %v1113
        %v1115 = vand.u32 %v1114, 4294901760
        %1116 = vmatmul.mubr.f32.gmra.mrb[0].mxu0 %v1115
        %v1117 = vpop.f32.mrb[0].mxu0
        %v1118 = vadd.f32 %v497, %v1117
        %v1119 = vpop.f32.mrb[0].mxu0
        %1120 = vmatprep.mubr.f32.mxu0 0.0
        %v1121 = vand.u32 %v609, 4294901760
        %v1122 = vsub.f32 %v609, %v1121
        %v1123 = vand.u32 %v1122, 4294901760
        %v1124 = vsub.f32 %v1122, %v1123
        %v1125 = vand.u32 %v1124, 4294901760
        %1126 = vmatmul.mubr.f32.gmra.mrb[0].mxu0 %v1125
        %v1127 = vpop.f32.mrb[0].mxu0
        %v1128 = vadd.f32 %v497, %v1127
        %v1129 = vpop.f32.mrb[0].mxu0
        %1130 = vmatprep.mubr.f32.mxu0 0.0
        %v1131 = vand.u32 %v612, 4294901760
        %v1132 = vsub.f32 %v612, %v1131
        %v1133 = vand.u32 %v1132, 4294901760
        %v1134 = vsub.f32 %v1132, %v1133
        %v1135 = vand.u32 %v1134, 4294901760
        %1136 = vmatmul.mubr.f32.gmra.mrb[0].mxu0 %v1135
        %v1137 = vpop.f32.mrb[0].mxu0
        %v1138 = vadd.f32 %v497, %v1137
        %v1139 = vpop.f32.mrb[0].mxu0
        %1140 = vmatprep.mubr.f32.mxu0 0.0
        %v1141 = vand.u32 %v615, 4294901760
        %v1142 = vsub.f32 %v615, %v1141
        %v1143 = vand.u32 %v1142, 4294901760
        %v1144 = vsub.f32 %v1142, %v1143
        %v1145 = vand.u32 %v1144, 4294901760
        %1146 = vmatmul.mubr.f32.gmra.mrb[0].mxu0 %v1145
        %v1147 = vpop.f32.mrb[0].mxu0
        %v1148 = vadd.f32 %v497, %v1147
        %v1149 = vpop.f32.mrb[0].mxu0
        %1150 = vmatprep.mubr.f32.mxu0 0.0
        %v1151 = vand.u32 %v618, 4294901760
        %v1152 = vsub.f32 %v618, %v1151
        %v1153 = vand.u32 %v1152, 4294901760
        %v1154 = vsub.f32 %v1152, %v1153
        %v1155 = vand.u32 %v1154, 4294901760
        %1156 = vmatmul.mubr.f32.gmra.mrb[0].mxu0 %v1155
        %v1157 = vpop.f32.mrb[0].mxu0
        %v1158 = vadd.f32 %v497, %v1157
        %v1159 = vpop.f32.mrb[0].mxu0
        %1160 = vmatprep.mubr.f32.mxu0 0.0
        %v1161 = vand.u32 %v621, 4294901760
        %v1162 = vsub.f32 %v621, %v1161
        %v1163 = vand.u32 %v1162, 4294901760
        %v1164 = vsub.f32 %v1162, %v1163
        %v1165 = vand.u32 %v1164, 4294901760
        %1166 = vmatmul.mubr.f32.gmra.mrb[0].mxu0 %v1165
        %v1167 = vpop.f32.mrb[0].mxu0
        %v1168 = vadd.f32 %v497, %v1167
        %v1169 = vpop.f32.mrb[0].mxu0
        %1170 = vmatprep.mubr.f32.mxu0 0.0
        %v1171 = vand.u32 %v624, 4294901760
        %v1172 = vsub.f32 %v624, %v1171
        %v1173 = vand.u32 %v1172, 4294901760
        %v1174 = vsub.f32 %v1172, %v1173
        %v1175 = vand.u32 %v1174, 4294901760
        %1176 = vmatmul.mubr.f32.gmra.mrb[0].mxu0 %v1175
        %v1177 = vpop.f32.mrb[0].mxu0
        %v1178 = vadd.f32 %v497, %v1177
        %v1179 = vpop.f32.mrb[0].mxu0
        %1180 = vmatprep.mubr.f32.mxu0 0.0
        %v1181 = vand.u32 %v627, 4294901760
        %v1182 = vsub.f32 %v627, %v1181
        %v1183 = vand.u32 %v1182, 4294901760
        %v1184 = vsub.f32 %v1182, %v1183
        %v1185 = vand.u32 %v1184, 4294901760
        %1186 = vmatmul.mubr.f32.gmra.mrb[0].mxu0 %v1185
        %v1187 = vpop.f32.mrb[0].mxu0
        %v1188 = vadd.f32 %v497, %v1187
        %v1189 = vpop.f32.mrb[0].mxu0
        %1190 = vmatprep.mubr.f32.mxu0 0.0
        %v1191 = vand.u32 %v630, 4294901760
        %v1192 = vsub.f32 %v630, %v1191
        %v1193 = vand.u32 %v1192, 4294901760
        %v1194 = vsub.f32 %v1192, %v1193
        %v1195 = vand.u32 %v1194, 4294901760
        %1196 = vmatmul.mubr.f32.gmra.mrb[0].mxu0 %v1195
        %v1197 = vpop.f32.mrb[0].mxu0
        %v1198 = vadd.f32 %v497, %v1197
        %v1199 = vpop.f32.mrb[0].mxu0
        %1200 = vmatprep.mubr.f32.mxu0 0.0
        %v1201 = vand.u32 %v633, 4294901760
        %v1202 = vsub.f32 %v633, %v1201
        %v1203 = vand.u32 %v1202, 4294901760
        %v1204 = vsub.f32 %v1202, %v1203
        %v1205 = vand.u32 %v1204, 4294901760
        %1206 = vmatmul.mubr.f32.gmra.mrb[0].mxu0 %v1205
        %v1207 = vpop.f32.mrb[0].mxu0
        %v1208 = vadd.f32 %v497, %v1207
        %v1209 = vpop.f32.mrb[0].mxu0
        %1210 = vmatprep.mubr.f32.mxu0 0.0
        %v1211 = vand.u32 %v636, 4294901760
        %v1212 = vsub.f32 %v636, %v1211
        %v1213 = vand.u32 %v1212, 4294901760
        %v1214 = vsub.f32 %v1212, %v1213
        %v1215 = vand.u32 %v1214, 4294901760
        %1216 = vmatmul.mubr.f32.gmra.mrb[0].mxu0 %v1215
        %v1217 = vpop.f32.mrb[0].mxu0
        %v1218 = vadd.f32 %v497, %v1217
        %v1219 = vpop.f32.mrb[0].mxu0
        %1220 = vmatprep.mubr.f32.mxu0 0.0
        %v1221 = vand.u32 %v639, 4294901760
        %v1222 = vsub.f32 %v639, %v1221
        %v1223 = vand.u32 %v1222, 4294901760
        %v1224 = vsub.f32 %v1222, %v1223
        %v1225 = vand.u32 %v1224, 4294901760
        %1226 = vmatmul.mubr.f32.gmra.mrb[0].mxu0 %v1225
        %v1227 = vpop.f32.mrb[0].mxu0
        %v1228 = vadd.f32 %v497, %v1227
        %v1229 = vpop.f32.mrb[0].mxu0
        %1230 = vmatprep.mubr.f32.mxu0 0.0
        %v1231 = vand.u32 %v642, 4294901760
        %v1232 = vsub.f32 %v642, %v1231
        %v1233 = vand.u32 %v1232, 4294901760
        %v1234 = vsub.f32 %v1232, %v1233
        %v1235 = vand.u32 %v1234, 4294901760
        %1236 = vmatmul.mubr.f32.gmra.mrb[0].mxu0 %v1235
        %v1237 = vpop.f32.mrb[0].mxu0
        %v1238 = vadd.f32 %v497, %v1237
        %v1239 = vpop.f32.mrb[0].mxu0
        %1240 = vmatprep.mubr.f32.mxu0 0.0
        %v1241 = vand.u32 %v645, 4294901760
        %v1242 = vsub.f32 %v645, %v1241
        %v1243 = vand.u32 %v1242, 4294901760
        %v1244 = vsub.f32 %v1242, %v1243
        %v1245 = vand.u32 %v1244, 4294901760
        %1246 = vmatmul.mubr.f32.gmra.mrb[0].mxu0 %v1245
        %v1247 = vpop.f32.mrb[0].mxu0
        %v1248 = vadd.f32 %v497, %v1247
        %v1249 = vpop.f32.mrb[0].mxu0
        %1250 = vmatprep.mubr.f32.mxu0 0.0
        %v1251 = vand.u32 %v648, 4294901760
        %v1252 = vsub.f32 %v648, %v1251
        %v1253 = vand.u32 %v1252, 4294901760
        %v1254 = vsub.f32 %v1252, %v1253
        %v1255 = vand.u32 %v1254, 4294901760
        %1256 = vmatmul.mubr.f32.gmra.mrb[0].mxu0 %v1255
        %v1257 = vpop.f32.mrb[0].mxu0
        %v1258 = vadd.f32 %v497, %v1257
        %v1259 = vpop.f32.mrb[0].mxu0
        %1260 = vmatprep.mubr.f32.mxu0 0.0
        %v1261 = vand.u32 %v651, 4294901760
        %v1262 = vsub.f32 %v651, %v1261
        %v1263 = vand.u32 %v1262, 4294901760
        %v1264 = vsub.f32 %v1262, %v1263
        %v1265 = vand.u32 %v1264, 4294901760
        %1266 = vmatmul.mubr.f32.gmra.mrb[0].mxu0 %v1265
        %v1267 = vpop.f32.mrb[0].mxu0
        %v1268 = vadd.f32 %v497, %v1267
        %v1269 = vpop.f32.mrb[0].mxu0
        %1270 = vmatprep.mubr.f32.mxu0 0.0
        %v1271 = vand.u32 %v654, 4294901760
        %v1272 = vsub.f32 %v654, %v1271
        %v1273 = vand.u32 %v1272, 4294901760
        %v1274 = vsub.f32 %v1272, %v1273
        %v1275 = vand.u32 %v1274, 4294901760
        %1276 = vmatmul.mubr.f32.gmra.mrb[0].mxu0 %v1275
        %v1277 = vpop.f32.mrb[0].mxu0
        %v1278 = vadd.f32 %v497, %v1277
        %v1279 = vpop.f32.mrb[0].mxu0
        %1280 = vmatprep.mubr.f32.mxu0 0.0
        %v1281 = vand.u32 %v657, 4294901760
        %v1282 = vsub.f32 %v657, %v1281
        %v1283 = vand.u32 %v1282, 4294901760
        %v1284 = vsub.f32 %v1282, %v1283
        %v1285 = vand.u32 %v1284, 4294901760
        %1286 = vmatmul.mubr.f32.gmra.mrb[0].mxu0 %v1285
        %v1287 = vpop.f32.mrb[0].mxu0
        %v1288 = vadd.f32 %v497, %v1287
        %v1289 = vpop.f32.mrb[0].mxu0
        %1290 = vmatprep.mubr.f32.mxu0 0.0
        %v1291 = vand.u32 %v660, 4294901760
        %v1292 = vsub.f32 %v660, %v1291
        %v1293 = vand.u32 %v1292, 4294901760
        %v1294 = vsub.f32 %v1292, %v1293
        %v1295 = vand.u32 %v1294, 4294901760
        %1296 = vmatmul.mubr.f32.gmra.mrb[0].mxu0 %v1295
        %v1297 = vpop.f32.mrb[0].mxu0
        %v1298 = vadd.f32 %v497, %v1297
        %v1299 = vpop.f32.mrb[0].mxu0
        %1300 = vmatprep.mubr.f32.mxu0 0.0
        %v1301 = vand.u32 %v663, 4294901760
        %v1302 = vsub.f32 %v663, %v1301
        %v1303 = vand.u32 %v1302, 4294901760
        %v1304 = vsub.f32 %v1302, %v1303
        %v1305 = vand.u32 %v1304, 4294901760
        %1306 = vmatmul.mubr.f32.gmra.mrb[0].mxu0 %v1305
        %v1307 = vpop.f32.mrb[0].mxu0
        %v1308 = vadd.f32 %v497, %v1307
        %v1309 = vpop.f32.mrb[0].mxu0
        %1310 = vmatprep.mubr.f32.mxu0 0.0
        %v1311 = vand.u32 %v666, 4294901760
        %v1312 = vsub.f32 %v666, %v1311
        %v1313 = vand.u32 %v1312, 4294901760
        %v1314 = vsub.f32 %v1312, %v1313
        %v1315 = vand.u32 %v1314, 4294901760
        %1316 = vmatmul.mubr.f32.gmra.mrb[0].mxu0 %v1315
        %v1317 = vpop.f32.mrb[0].mxu0
        %v1318 = vadd.f32 %v497, %v1317
        %v1319 = vpop.f32.mrb[0].mxu0
        %1320 = vmatprep.mubr.f32.mxu0 0.0
        %v1321 = vand.u32 %v669, 4294901760
        %v1322 = vsub.f32 %v669, %v1321
        %v1323 = vand.u32 %v1322, 4294901760
        %v1324 = vsub.f32 %v1322, %v1323
        %v1325 = vand.u32 %v1324, 4294901760
        %1326 = vmatmul.mubr.f32.gmra.mrb[0].mxu0 %v1325
        %v1327 = vpop.f32.mrb[0].mxu0
        %v1328 = vadd.f32 %v497, %v1327
        %v1329 = vpop.f32.mrb[0].mxu0
        %1330 = vmatprep.mubr.f32.mxu0 0.0
        %v1331 = vand.u32 %v672, 4294901760
        %v1332 = vsub.f32 %v672, %v1331
        %v1333 = vand.u32 %v1332, 4294901760
        %v1334 = vsub.f32 %v1332, %v1333
        %v1335 = vand.u32 %v1334, 4294901760
        %1336 = vmatmul.mubr.f32.gmra.mrb[0].mxu0 %v1335
        %v1337 = vpop.f32.mrb[0].mxu0
        %v1338 = vadd.f32 %v497, %v1337
        %v1339 = vpop.f32.mrb[0].mxu0
        %1340 = vmatprep.mubr.f32.mxu0 0.0
        %v1341 = vand.u32 %v675, 4294901760
        %v1342 = vsub.f32 %v675, %v1341
        %v1343 = vand.u32 %v1342, 4294901760
        %v1344 = vsub.f32 %v1342, %v1343
        %v1345 = vand.u32 %v1344, 4294901760
        %1346 = vmatmul.mubr.f32.gmra.mrb[0].mxu0 %v1345
        %v1347 = vpop.f32.mrb[0].mxu0
        %v1348 = vadd.f32 %v497, %v1347
        %v1349 = vpop.f32.mrb[0].mxu0
        %1350 = vmatprep.mubr.f32.mxu0 0.0
        %v1351 = vand.u32 %v678, 4294901760
        %v1352 = vsub.f32 %v678, %v1351
        %v1353 = vand.u32 %v1352, 4294901760
        %v1354 = vsub.f32 %v1352, %v1353
        %v1355 = vand.u32 %v1354, 4294901760
        %1356 = vmatmul.mubr.f32.gmra.mrb[0].mxu0 %v1355
        %v1357 = vpop.f32.mrb[0].mxu0
        %v1358 = vadd.f32 %v497, %v1357
        %v1359 = vpop.f32.mrb[0].mxu0
        %1360 = vmatprep.mubr.f32.mxu0 0.0
        %v1361 = vand.u32 %v681, 4294901760
        %v1362 = vsub.f32 %v681, %v1361
        %v1363 = vand.u32 %v1362, 4294901760
        %v1364 = vsub.f32 %v1362, %v1363
        %v1365 = vand.u32 %v1364, 4294901760
        %1366 = vmatmul.mubr.f32.gmra.mrb[0].mxu0 %v1365
        %v1367 = vpop.f32.mrb[0].mxu0
        %v1368 = vadd.f32 %v497, %v1367
        %v1369 = vpop.f32.mrb[0].mxu0
        %1370 = vmatprep.mubr.f32.mxu0 0.0
        %v1371 = vand.u32 %v684, 4294901760
        %v1372 = vsub.f32 %v684, %v1371
        %v1373 = vand.u32 %v1372, 4294901760
        %v1374 = vsub.f32 %v1372, %v1373
        %v1375 = vand.u32 %v1374, 4294901760
        %1376 = vmatmul.mubr.f32.gmra.mrb[0].mxu0 %v1375
        %v1377 = vpop.f32.mrb[0].mxu0
        %v1378 = vadd.f32 %v497, %v1377
        %v1379 = vpop.f32.mrb[0].mxu0
        %1380 = vmatprep.mubr.f32.mxu0 0.0
        %v1381 = vand.u32 %v687, 4294901760
        %v1382 = vsub.f32 %v687, %v1381
        %v1383 = vand.u32 %v1382, 4294901760
        %v1384 = vsub.f32 %v1382, %v1383
        %v1385 = vand.u32 %v1384, 4294901760
        %1386 = vmatmul.mubr.f32.gmra.mrb[0].mxu0 %v1385
        %v1387 = vpop.f32.mrb[0].mxu0
        %v1388 = vadd.f32 %v497, %v1387
        %v1389 = vpop.f32.mrb[0].mxu0
        %1390 = vmatprep.mubr.f32.mxu0 0.0
        %v1391 = vand.u32 %v690, 4294901760
        %v1392 = vsub.f32 %v690, %v1391
        %v1393 = vand.u32 %v1392, 4294901760
        %v1394 = vsub.f32 %v1392, %v1393
        %v1395 = vand.u32 %v1394, 4294901760
        %1396 = vmatmul.mubr.f32.gmra.mrb[0].mxu0 %v1395
        %v1397 = vpop.f32.mrb[0].mxu0
        %v1398 = vadd.f32 %v497, %v1397
        %v1399 = vpop.f32.mrb[0].mxu0
        %1400 = vdwg.mxu0
        %1401 = vmatprep.subr.mxu0 0.0
        %v1402 = vand.u32 %v488, 4294901760
        %v1403 = vsub.f32 %v488, %v1402
        %v1404 = vand.u32 %v1403, 4294901760
        %v1405 = vsub.f32 %v1403, %v1404
        %v1406 = vand.u32 %v1405, 4294901760
        %1407 = vmatpush1.msra.mxu0 %v1406
        %1408 = vmatprep.subr.mxu0 0.0
        %v1409 = vand.u32 %v489, 4294901760
        %v1410 = vsub.f32 %v489, %v1409
        %v1411 = vand.u32 %v1410, 4294901760
        %v1412 = vsub.f32 %v1410, %v1411
        %v1413 = vand.u32 %v1412, 4294901760
        %1414 = vmatpush1.msra.mxu0 %v1413
        %1415 = vmatprep.subr.mxu0 0.0
        %v1416 = vand.u32 %v490, 4294901760
        %v1417 = vsub.f32 %v490, %v1416
        %v1418 = vand.u32 %v1417, 4294901760
        %v1419 = vsub.f32 %v1417, %v1418
        %v1420 = vand.u32 %v1419, 4294901760
        %1421 = vmatpush1.msra.mxu0 %v1420
        %1422 = vmatprep.subr.mxu0 0.0
        %v1423 = vand.u32 %v491, 4294901760
        %v1424 = vsub.f32 %v491, %v1423
        %v1425 = vand.u32 %v1424, 4294901760
        %v1426 = vsub.f32 %v1424, %v1425
        %v1427 = vand.u32 %v1426, 4294901760
        %1428 = vmatpush1.msra.mxu0 %v1427
        %1429 = vmatprep.subr.mxu0 0.0
        %1430 = vmatpush1.msra.mxu0 0.0
        %1431 = vmatprep.subr.mxu0 0.0
        %1432 = vmatpush1.msra.mxu0 0.0
        %1433 = vmatprep.subr.mxu0 0.0
        %1434 = vmatpush1.msra.mxu0 0.0
        %1435 = vmatprep.subr.mxu0 0.0
        %1436 = vmatpush1.msra.mxu0 0.0
        %1437 = vmatprep.subr.mxu0 0.0
        %1438 = vmatpush1.msra.mxu0 0.0
        %1439 = vmatprep.subr.mxu0 0.0
        %1440 = vmatpush1.msra.mxu0 0.0
        %1441 = vmatprep.subr.mxu0 0.0
        %1442 = vmatpush1.msra.mxu0 0.0
        %1443 = vmatprep.subr.mxu0 0.0
        %1444 = vmatpush1.msra.mxu0 0.0
        %1445 = vmatprep.subr.mxu0 0.0
        %1446 = vmatpush1.msra.mxu0 0.0
        %1447 = vmatprep.subr.mxu0 0.0
        %1448 = vmatpush1.msra.mxu0 0.0
        %1449 = vmatprep.subr.mxu0 0.0
        %1450 = vmatpush1.msra.mxu0 0.0
        %1451 = vmatprep.subr.mxu0 0.0
        %1452 = vmatpush1.msra.mxu0 0.0
        %1453 = vmatprep.subr.mxu0 0.0
        %1454 = vmatpush1.msra.mxu0 0.0
        %1455 = vmatprep.subr.mxu0 0.0
        %1456 = vmatpush1.msra.mxu0 0.0
        %1457 = vmatprep.subr.mxu0 0.0
        %1458 = vmatpush1.msra.mxu0 0.0
        %1459 = vmatprep.subr.mxu0 0.0
        %1460 = vmatpush1.msra.mxu0 0.0
        %1461 = vmatprep.subr.mxu0 0.0
        %1462 = vmatpush1.msra.mxu0 0.0
        %1463 = vmatprep.subr.mxu0 0.0
        %1464 = vmatpush1.msra.mxu0 0.0
        %1465 = vmatprep.subr.mxu0 0.0
        %1466 = vmatpush1.msra.mxu0 0.0
        %1467 = vmatprep.subr.mxu0 0.0
        %1468 = vmatpush1.msra.mxu0 0.0
        %1469 = vmatprep.subr.mxu0 0.0
        %1470 = vmatpush1.msra.mxu0 0.0
        %1471 = vmatprep.subr.mxu0 0.0
        %1472 = vmatpush1.msra.mxu0 0.0
        %1473 = vmatprep.subr.mxu0 0.0
        %1474 = vmatpush1.msra.mxu0 0.0
        %1475 = vmatprep.subr.mxu0 0.0
        %1476 = vmatpush1.msra.mxu0 0.0
        %1477 = vmatprep.subr.mxu0 0.0
        %1478 = vmatpush1.msra.mxu0 0.0
        %1479 = vmatprep.subr.mxu0 0.0
        %1480 = vmatpush1.msra.mxu0 0.0
        %1481 = vmatprep.subr.mxu0 0.0
        %1482 = vmatpush1.msra.mxu0 0.0
        %1483 = vmatprep.subr.mxu0 0.0
        %1484 = vmatpush1.msra.mxu0 0.0
        %1485 = vmatprep.mubr.f32.mxu0 0.0
        %v1486 = vand.u32 %v501, 4294901760
        %1487 = vmatmul.mubr.f32.gmra.mrb[0].mxu0 %v1486
        %v1488 = vpop.f32.mrb[0].mxu0
        %v1489 = vadd.f32 %v768, %v1488
        %v1490 = vpop.f32.mrb[0].mxu0
        %1491 = vmatprep.mubr.f32.mxu0 0.0
        %v1492 = vand.u32 %v504, 4294901760
        %1493 = vmatmul.mubr.f32.gmra.mrb[0].mxu0 %v1492
        %v1494 = vpop.f32.mrb[0].mxu0
        %v1495 = vadd.f32 %v778, %v1494
        %v1496 = vpop.f32.mrb[0].mxu0
        %1497 = vmatprep.mubr.f32.mxu0 0.0
        %v1498 = vand.u32 %v507, 4294901760
        %1499 = vmatmul.mubr.f32.gmra.mrb[0].mxu0 %v1498
        %v1500 = vpop.f32.mrb[0].mxu0
        %v1501 = vadd.f32 %v788, %v1500
        %v1502 = vpop.f32.mrb[0].mxu0
        %1503 = vmatprep.mubr.f32.mxu0 0.0
        %v1504 = vand.u32 %v510, 4294901760
        %1505 = vmatmul.mubr.f32.gmra.mrb[0].mxu0 %v1504
        %v1506 = vpop.f32.mrb[0].mxu0
        %v1507 = vadd.f32 %v798, %v1506
        %v1508 = vpop.f32.mrb[0].mxu0
        %1509 = vmatprep.mubr.f32.mxu0 0.0
        %v1510 = vand.u32 %v513, 4294901760
        %1511 = vmatmul.mubr.f32.gmra.mrb[0].mxu0 %v1510
        %v1512 = vpop.f32.mrb[0].mxu0
        %v1513 = vadd.f32 %v808, %v1512
        %v1514 = vpop.f32.mrb[0].mxu0
        %1515 = vmatprep.mubr.f32.mxu0 0.0
        %v1516 = vand.u32 %v516, 4294901760
        %1517 = vmatmul.mubr.f32.gmra.mrb[0].mxu0 %v1516
        %v1518 = vpop.f32.mrb[0].mxu0
        %v1519 = vadd.f32 %v818, %v1518
        %v1520 = vpop.f32.mrb[0].mxu0
        %1521 = vmatprep.mubr.f32.mxu0 0.0
        %v1522 = vand.u32 %v519, 4294901760
        %1523 = vmatmul.mubr.f32.gmra.mrb[0].mxu0 %v1522
        %v1524 = vpop.f32.mrb[0].mxu0
        %v1525 = vadd.f32 %v828, %v1524
        %v1526 = vpop.f32.mrb[0].mxu0
        %1527 = vmatprep.mubr.f32.mxu0 0.0
        %v1528 = vand.u32 %v522, 4294901760
        %1529 = vmatmul.mubr.f32.gmra.mrb[0].mxu0 %v1528
        %v1530 = vpop.f32.mrb[0].mxu0
        %v1531 = vadd.f32 %v838, %v1530
        %v1532 = vpop.f32.mrb[0].mxu0
        %1533 = vmatprep.mubr.f32.mxu0 0.0
        %v1534 = vand.u32 %v525, 4294901760
        %1535 = vmatmul.mubr.f32.gmra.mrb[0].mxu0 %v1534
        %v1536 = vpop.f32.mrb[0].mxu0
        %v1537 = vadd.f32 %v848, %v1536
        %v1538 = vpop.f32.mrb[0].mxu0
        %1539 = vmatprep.mubr.f32.mxu0 0.0
        %v1540 = vand.u32 %v528, 4294901760
        %1541 = vmatmul.mubr.f32.gmra.mrb[0].mxu0 %v1540
        %v1542 = vpop.f32.mrb[0].mxu0
        %v1543 = vadd.f32 %v858, %v1542
        %v1544 = vpop.f32.mrb[0].mxu0
        %1545 = vmatprep.mubr.f32.mxu0 0.0
        %v1546 = vand.u32 %v531, 4294901760
        %1547 = vmatmul.mubr.f32.gmra.mrb[0].mxu0 %v1546
        %v1548 = vpop.f32.mrb[0].mxu0
        %v1549 = vadd.f32 %v868, %v1548
        %v1550 = vpop.f32.mrb[0].mxu0
        %1551 = vmatprep.mubr.f32.mxu0 0.0
        %v1552 = vand.u32 %v534, 4294901760
        %1553 = vmatmul.mubr.f32.gmra.mrb[0].mxu0 %v1552
        %v1554 = vpop.f32.mrb[0].mxu0
        %v1555 = vadd.f32 %v878, %v1554
        %v1556 = vpop.f32.mrb[0].mxu0
        %1557 = vmatprep.mubr.f32.mxu0 0.0
        %v1558 = vand.u32 %v537, 4294901760
        %1559 = vmatmul.mubr.f32.gmra.mrb[0].mxu0 %v1558
        %v1560 = vpop.f32.mrb[0].mxu0
        %v1561 = vadd.f32 %v888, %v1560
        %v1562 = vpop.f32.mrb[0].mxu0
        %1563 = vmatprep.mubr.f32.mxu0 0.0
        %v1564 = vand.u32 %v540, 4294901760
        %1565 = vmatmul.mubr.f32.gmra.mrb[0].mxu0 %v1564
        %v1566 = vpop.f32.mrb[0].mxu0
        %v1567 = vadd.f32 %v898, %v1566
        %v1568 = vpop.f32.mrb[0].mxu0
        %1569 = vmatprep.mubr.f32.mxu0 0.0
        %v1570 = vand.u32 %v543, 4294901760
        %1571 = vmatmul.mubr.f32.gmra.mrb[0].mxu0 %v1570
        %v1572 = vpop.f32.mrb[0].mxu0
        %v1573 = vadd.f32 %v908, %v1572
        %v1574 = vpop.f32.mrb[0].mxu0
        %1575 = vmatprep.mubr.f32.mxu0 0.0
        %v1576 = vand.u32 %v546, 4294901760
        %1577 = vmatmul.mubr.f32.gmra.mrb[0].mxu0 %v1576
        %v1578 = vpop.f32.mrb[0].mxu0
        %v1579 = vadd.f32 %v918, %v1578
        %v1580 = vpop.f32.mrb[0].mxu0
        %1581 = vmatprep.mubr.f32.mxu0 0.0
        %v1582 = vand.u32 %v549, 4294901760
        %1583 = vmatmul.mubr.f32.gmra.mrb[0].mxu0 %v1582
        %v1584 = vpop.f32.mrb[0].mxu0
        %v1585 = vadd.f32 %v928, %v1584
        %v1586 = vpop.f32.mrb[0].mxu0
        %1587 = vmatprep.mubr.f32.mxu0 0.0
        %v1588 = vand.u32 %v552, 4294901760
        %1589 = vmatmul.mubr.f32.gmra.mrb[0].mxu0 %v1588
        %v1590 = vpop.f32.mrb[0].mxu0
        %v1591 = vadd.f32 %v938, %v1590
        %v1592 = vpop.f32.mrb[0].mxu0
        %1593 = vmatprep.mubr.f32.mxu0 0.0
        %v1594 = vand.u32 %v555, 4294901760
        %1595 = vmatmul.mubr.f32.gmra.mrb[0].mxu0 %v1594
        %v1596 = vpop.f32.mrb[0].mxu0
        %v1597 = vadd.f32 %v948, %v1596
        %v1598 = vpop.f32.mrb[0].mxu0
        %1599 = vmatprep.mubr.f32.mxu0 0.0
        %v1600 = vand.u32 %v558, 4294901760
        %1601 = vmatmul.mubr.f32.gmra.mrb[0].mxu0 %v1600
        %v1602 = vpop.f32.mrb[0].mxu0
        %v1603 = vadd.f32 %v958, %v1602
        %v1604 = vpop.f32.mrb[0].mxu0
        %1605 = vmatprep.mubr.f32.mxu0 0.0
        %v1606 = vand.u32 %v561, 4294901760
        %1607 = vmatmul.mubr.f32.gmra.mrb[0].mxu0 %v1606
        %v1608 = vpop.f32.mrb[0].mxu0
        %v1609 = vadd.f32 %v968, %v1608
        %v1610 = vpop.f32.mrb[0].mxu0
        %1611 = vmatprep.mubr.f32.mxu0 0.0
        %v1612 = vand.u32 %v564, 4294901760
        %1613 = vmatmul.mubr.f32.gmra.mrb[0].mxu0 %v1612
        %v1614 = vpop.f32.mrb[0].mxu0
        %v1615 = vadd.f32 %v978, %v1614
        %v1616 = vpop.f32.mrb[0].mxu0
        %1617 = vmatprep.mubr.f32.mxu0 0.0
        %v1618 = vand.u32 %v567, 4294901760
        %1619 = vmatmul.mubr.f32.gmra.mrb[0].mxu0 %v1618
        %v1620 = vpop.f32.mrb[0].mxu0
        %v1621 = vadd.f32 %v988, %v1620
        %v1622 = vpop.f32.mrb[0].mxu0
        %1623 = vmatprep.mubr.f32.mxu0 0.0
        %v1624 = vand.u32 %v570, 4294901760
        %1625 = vmatmul.mubr.f32.gmra.mrb[0].mxu0 %v1624
        %v1626 = vpop.f32.mrb[0].mxu0
        %v1627 = vadd.f32 %v998, %v1626
        %v1628 = vpop.f32.mrb[0].mxu0
        %1629 = vmatprep.mubr.f32.mxu0 0.0
        %v1630 = vand.u32 %v573, 4294901760
        %1631 = vmatmul.mubr.f32.gmra.mrb[0].mxu0 %v1630
        %v1632 = vpop.f32.mrb[0].mxu0
        %v1633 = vadd.f32 %v1008, %v1632
        %v1634 = vpop.f32.mrb[0].mxu0
        %1635 = vmatprep.mubr.f32.mxu0 0.0
        %v1636 = vand.u32 %v576, 4294901760
        %1637 = vmatmul.mubr.f32.gmra.mrb[0].mxu0 %v1636
        %v1638 = vpop.f32.mrb[0].mxu0
        %v1639 = vadd.f32 %v1018, %v1638
        %v1640 = vpop.f32.mrb[0].mxu0
        %1641 = vmatprep.mubr.f32.mxu0 0.0
        %v1642 = vand.u32 %v579, 4294901760
        %1643 = vmatmul.mubr.f32.gmra.mrb[0].mxu0 %v1642
        %v1644 = vpop.f32.mrb[0].mxu0
        %v1645 = vadd.f32 %v1028, %v1644
        %v1646 = vpop.f32.mrb[0].mxu0
        %1647 = vmatprep.mubr.f32.mxu0 0.0
        %v1648 = vand.u32 %v582, 4294901760
        %1649 = vmatmul.mubr.f32.gmra.mrb[0].mxu0 %v1648
        %v1650 = vpop.f32.mrb[0].mxu0
        %v1651 = vadd.f32 %v1038, %v1650
        %v1652 = vpop.f32.mrb[0].mxu0
        %1653 = vmatprep.mubr.f32.mxu0 0.0
        %v1654 = vand.u32 %v585, 4294901760
        %1655 = vmatmul.mubr.f32.gmra.mrb[0].mxu0 %v1654
        %v1656 = vpop.f32.mrb[0].mxu0
        %v1657 = vadd.f32 %v1048, %v1656
        %v1658 = vpop.f32.mrb[0].mxu0
        %1659 = vmatprep.mubr.f32.mxu0 0.0
        %v1660 = vand.u32 %v588, 4294901760
        %1661 = vmatmul.mubr.f32.gmra.mrb[0].mxu0 %v1660
        %v1662 = vpop.f32.mrb[0].mxu0
        %v1663 = vadd.f32 %v1058, %v1662
        %v1664 = vpop.f32.mrb[0].mxu0
        %1665 = vmatprep.mubr.f32.mxu0 0.0
        %v1666 = vand.u32 %v591, 4294901760
        %1667 = vmatmul.mubr.f32.gmra.mrb[0].mxu0 %v1666
        %v1668 = vpop.f32.mrb[0].mxu0
        %v1669 = vadd.f32 %v1068, %v1668
        %v1670 = vpop.f32.mrb[0].mxu0
        %1671 = vmatprep.mubr.f32.mxu0 0.0
        %v1672 = vand.u32 %v594, 4294901760
        %1673 = vmatmul.mubr.f32.gmra.mrb[0].mxu0 %v1672
        %v1674 = vpop.f32.mrb[0].mxu0
        %v1675 = vadd.f32 %v1078, %v1674
        %v1676 = vpop.f32.mrb[0].mxu0
        %1677 = vmatprep.mubr.f32.mxu0 0.0
        %v1678 = vand.u32 %v597, 4294901760
        %1679 = vmatmul.mubr.f32.gmra.mrb[0].mxu0 %v1678
        %v1680 = vpop.f32.mrb[0].mxu0
        %v1681 = vadd.f32 %v1088, %v1680
        %v1682 = vpop.f32.mrb[0].mxu0
        %1683 = vmatprep.mubr.f32.mxu0 0.0
        %v1684 = vand.u32 %v600, 4294901760
        %1685 = vmatmul.mubr.f32.gmra.mrb[0].mxu0 %v1684
        %v1686 = vpop.f32.mrb[0].mxu0
        %v1687 = vadd.f32 %v1098, %v1686
        %v1688 = vpop.f32.mrb[0].mxu0
        %1689 = vmatprep.mubr.f32.mxu0 0.0
        %v1690 = vand.u32 %v603, 4294901760
        %1691 = vmatmul.mubr.f32.gmra.mrb[0].mxu0 %v1690
        %v1692 = vpop.f32.mrb[0].mxu0
        %v1693 = vadd.f32 %v1108, %v1692
        %v1694 = vpop.f32.mrb[0].mxu0
        %1695 = vmatprep.mubr.f32.mxu0 0.0
        %v1696 = vand.u32 %v606, 4294901760
        %1697 = vmatmul.mubr.f32.gmra.mrb[0].mxu0 %v1696
        %v1698 = vpop.f32.mrb[0].mxu0
        %v1699 = vadd.f32 %v1118, %v1698
        %v1700 = vpop.f32.mrb[0].mxu0
        %1701 = vmatprep.mubr.f32.mxu0 0.0
        %v1702 = vand.u32 %v609, 4294901760
        %1703 = vmatmul.mubr.f32.gmra.mrb[0].mxu0 %v1702
        %v1704 = vpop.f32.mrb[0].mxu0
        %v1705 = vadd.f32 %v1128, %v1704
        %v1706 = vpop.f32.mrb[0].mxu0
        %1707 = vmatprep.mubr.f32.mxu0 0.0
        %v1708 = vand.u32 %v612, 4294901760
        %1709 = vmatmul.mubr.f32.gmra.mrb[0].mxu0 %v1708
        %v1710 = vpop.f32.mrb[0].mxu0
        %v1711 = vadd.f32 %v1138, %v1710
        %v1712 = vpop.f32.mrb[0].mxu0
        %1713 = vmatprep.mubr.f32.mxu0 0.0
        %v1714 = vand.u32 %v615, 4294901760
        %1715 = vmatmul.mubr.f32.gmra.mrb[0].mxu0 %v1714
        %v1716 = vpop.f32.mrb[0].mxu0
        %v1717 = vadd.f32 %v1148, %v1716
        %v1718 = vpop.f32.mrb[0].mxu0
        %1719 = vmatprep.mubr.f32.mxu0 0.0
        %v1720 = vand.u32 %v618, 4294901760
        %1721 = vmatmul.mubr.f32.gmra.mrb[0].mxu0 %v1720
        %v1722 = vpop.f32.mrb[0].mxu0
        %v1723 = vadd.f32 %v1158, %v1722
        %v1724 = vpop.f32.mrb[0].mxu0
        %1725 = vmatprep.mubr.f32.mxu0 0.0
        %v1726 = vand.u32 %v621, 4294901760
        %1727 = vmatmul.mubr.f32.gmra.mrb[0].mxu0 %v1726
        %v1728 = vpop.f32.mrb[0].mxu0
        %v1729 = vadd.f32 %v1168, %v1728
        %v1730 = vpop.f32.mrb[0].mxu0
        %1731 = vmatprep.mubr.f32.mxu0 0.0
        %v1732 = vand.u32 %v624, 4294901760
        %1733 = vmatmul.mubr.f32.gmra.mrb[0].mxu0 %v1732
        %v1734 = vpop.f32.mrb[0].mxu0
        %v1735 = vadd.f32 %v1178, %v1734
        %v1736 = vpop.f32.mrb[0].mxu0
        %1737 = vmatprep.mubr.f32.mxu0 0.0
        %v1738 = vand.u32 %v627, 4294901760
        %1739 = vmatmul.mubr.f32.gmra.mrb[0].mxu0 %v1738
        %v1740 = vpop.f32.mrb[0].mxu0
        %v1741 = vadd.f32 %v1188, %v1740
        %v1742 = vpop.f32.mrb[0].mxu0
        %1743 = vmatprep.mubr.f32.mxu0 0.0
        %v1744 = vand.u32 %v630, 4294901760
        %1745 = vmatmul.mubr.f32.gmra.mrb[0].mxu0 %v1744
        %v1746 = vpop.f32.mrb[0].mxu0
        %v1747 = vadd.f32 %v1198, %v1746
        %v1748 = vpop.f32.mrb[0].mxu0
        %1749 = vmatprep.mubr.f32.mxu0 0.0
        %v1750 = vand.u32 %v633, 4294901760
        %1751 = vmatmul.mubr.f32.gmra.mrb[0].mxu0 %v1750
        %v1752 = vpop.f32.mrb[0].mxu0
        %v1753 = vadd.f32 %v1208, %v1752
        %v1754 = vpop.f32.mrb[0].mxu0
        %1755 = vmatprep.mubr.f32.mxu0 0.0
        %v1756 = vand.u32 %v636, 4294901760
        %1757 = vmatmul.mubr.f32.gmra.mrb[0].mxu0 %v1756
        %v1758 = vpop.f32.mrb[0].mxu0
        %v1759 = vadd.f32 %v1218, %v1758
        %v1760 = vpop.f32.mrb[0].mxu0
        %1761 = vmatprep.mubr.f32.mxu0 0.0
        %v1762 = vand.u32 %v639, 4294901760
        %1763 = vmatmul.mubr.f32.gmra.mrb[0].mxu0 %v1762
        %v1764 = vpop.f32.mrb[0].mxu0
        %v1765 = vadd.f32 %v1228, %v1764
        %v1766 = vpop.f32.mrb[0].mxu0
        %1767 = vmatprep.mubr.f32.mxu0 0.0
        %v1768 = vand.u32 %v642, 4294901760
        %1769 = vmatmul.mubr.f32.gmra.mrb[0].mxu0 %v1768
        %v1770 = vpop.f32.mrb[0].mxu0
        %v1771 = vadd.f32 %v1238, %v1770
        %v1772 = vpop.f32.mrb[0].mxu0
        %1773 = vmatprep.mubr.f32.mxu0 0.0
        %v1774 = vand.u32 %v645, 4294901760
        %1775 = vmatmul.mubr.f32.gmra.mrb[0].mxu0 %v1774
        %v1776 = vpop.f32.mrb[0].mxu0
        %v1777 = vadd.f32 %v1248, %v1776
        %v1778 = vpop.f32.mrb[0].mxu0
        %1779 = vmatprep.mubr.f32.mxu0 0.0
        %v1780 = vand.u32 %v648, 4294901760
        %1781 = vmatmul.mubr.f32.gmra.mrb[0].mxu0 %v1780
        %v1782 = vpop.f32.mrb[0].mxu0
        %v1783 = vadd.f32 %v1258, %v1782
        %v1784 = vpop.f32.mrb[0].mxu0
        %1785 = vmatprep.mubr.f32.mxu0 0.0
        %v1786 = vand.u32 %v651, 4294901760
        %1787 = vmatmul.mubr.f32.gmra.mrb[0].mxu0 %v1786
        %v1788 = vpop.f32.mrb[0].mxu0
        %v1789 = vadd.f32 %v1268, %v1788
        %v1790 = vpop.f32.mrb[0].mxu0
        %1791 = vmatprep.mubr.f32.mxu0 0.0
        %v1792 = vand.u32 %v654, 4294901760
        %1793 = vmatmul.mubr.f32.gmra.mrb[0].mxu0 %v1792
        %v1794 = vpop.f32.mrb[0].mxu0
        %v1795 = vadd.f32 %v1278, %v1794
        %v1796 = vpop.f32.mrb[0].mxu0
        %1797 = vmatprep.mubr.f32.mxu0 0.0
        %v1798 = vand.u32 %v657, 4294901760
        %1799 = vmatmul.mubr.f32.gmra.mrb[0].mxu0 %v1798
        %v1800 = vpop.f32.mrb[0].mxu0
        %v1801 = vadd.f32 %v1288, %v1800
        %v1802 = vpop.f32.mrb[0].mxu0
        %1803 = vmatprep.mubr.f32.mxu0 0.0
        %v1804 = vand.u32 %v660, 4294901760
        %1805 = vmatmul.mubr.f32.gmra.mrb[0].mxu0 %v1804
        %v1806 = vpop.f32.mrb[0].mxu0
        %v1807 = vadd.f32 %v1298, %v1806
        %v1808 = vpop.f32.mrb[0].mxu0
        %1809 = vmatprep.mubr.f32.mxu0 0.0
        %v1810 = vand.u32 %v663, 4294901760
        %1811 = vmatmul.mubr.f32.gmra.mrb[0].mxu0 %v1810
        %v1812 = vpop.f32.mrb[0].mxu0
        %v1813 = vadd.f32 %v1308, %v1812
        %v1814 = vpop.f32.mrb[0].mxu0
        %1815 = vmatprep.mubr.f32.mxu0 0.0
        %v1816 = vand.u32 %v666, 4294901760
        %1817 = vmatmul.mubr.f32.gmra.mrb[0].mxu0 %v1816
        %v1818 = vpop.f32.mrb[0].mxu0
        %v1819 = vadd.f32 %v1318, %v1818
        %v1820 = vpop.f32.mrb[0].mxu0
        %1821 = vmatprep.mubr.f32.mxu0 0.0
        %v1822 = vand.u32 %v669, 4294901760
        %1823 = vmatmul.mubr.f32.gmra.mrb[0].mxu0 %v1822
        %v1824 = vpop.f32.mrb[0].mxu0
        %v1825 = vadd.f32 %v1328, %v1824
        %v1826 = vpop.f32.mrb[0].mxu0
        %1827 = vmatprep.mubr.f32.mxu0 0.0
        %v1828 = vand.u32 %v672, 4294901760
        %1829 = vmatmul.mubr.f32.gmra.mrb[0].mxu0 %v1828
        %v1830 = vpop.f32.mrb[0].mxu0
        %v1831 = vadd.f32 %v1338, %v1830
        %v1832 = vpop.f32.mrb[0].mxu0
        %1833 = vmatprep.mubr.f32.mxu0 0.0
        %v1834 = vand.u32 %v675, 4294901760
        %1835 = vmatmul.mubr.f32.gmra.mrb[0].mxu0 %v1834
        %v1836 = vpop.f32.mrb[0].mxu0
        %v1837 = vadd.f32 %v1348, %v1836
        %v1838 = vpop.f32.mrb[0].mxu0
        %1839 = vmatprep.mubr.f32.mxu0 0.0
        %v1840 = vand.u32 %v678, 4294901760
        %1841 = vmatmul.mubr.f32.gmra.mrb[0].mxu0 %v1840
        %v1842 = vpop.f32.mrb[0].mxu0
        %v1843 = vadd.f32 %v1358, %v1842
        %v1844 = vpop.f32.mrb[0].mxu0
        %1845 = vmatprep.mubr.f32.mxu0 0.0
        %v1846 = vand.u32 %v681, 4294901760
        %1847 = vmatmul.mubr.f32.gmra.mrb[0].mxu0 %v1846
        %v1848 = vpop.f32.mrb[0].mxu0
        %v1849 = vadd.f32 %v1368, %v1848
        %v1850 = vpop.f32.mrb[0].mxu0
        %1851 = vmatprep.mubr.f32.mxu0 0.0
        %v1852 = vand.u32 %v684, 4294901760
        %1853 = vmatmul.mubr.f32.gmra.mrb[0].mxu0 %v1852
        %v1854 = vpop.f32.mrb[0].mxu0
        %v1855 = vadd.f32 %v1378, %v1854
        %v1856 = vpop.f32.mrb[0].mxu0
        %1857 = vmatprep.mubr.f32.mxu0 0.0
        %v1858 = vand.u32 %v687, 4294901760
        %1859 = vmatmul.mubr.f32.gmra.mrb[0].mxu0 %v1858
        %v1860 = vpop.f32.mrb[0].mxu0
        %v1861 = vadd.f32 %v1388, %v1860
        %v1862 = vpop.f32.mrb[0].mxu0
        %1863 = vmatprep.mubr.f32.mxu0 0.0
        %v1864 = vand.u32 %v690, 4294901760
        %1865 = vmatmul.mubr.f32.gmra.mrb[0].mxu0 %v1864
        %v1866 = vpop.f32.mrb[0].mxu0
        %v1867 = vadd.f32 %v1398, %v1866
        %v1868 = vpop.f32.mrb[0].mxu0
        %1869 = vdwg.mxu0
        %1870 = vmatprep.subr.mxu0 0.0
        %v1871 = vand.u32 %v488, 4294901760
        %v1872 = vsub.f32 %v488, %v1871
        %1873 = vmatpush1.msra.mxu0 %v1872
        %1874 = vmatprep.subr.mxu0 0.0
        %v1875 = vand.u32 %v489, 4294901760
        %v1876 = vsub.f32 %v489, %v1875
        %1877 = vmatpush1.msra.mxu0 %v1876
        %1878 = vmatprep.subr.mxu0 0.0
        %v1879 = vand.u32 %v490, 4294901760
        %v1880 = vsub.f32 %v490, %v1879
        %1881 = vmatpush1.msra.mxu0 %v1880
        %1882 = vmatprep.subr.mxu0 0.0
        %v1883 = vand.u32 %v491, 4294901760
        %v1884 = vsub.f32 %v491, %v1883
        %1885 = vmatpush1.msra.mxu0 %v1884
        %1886 = vmatprep.subr.mxu0 0.0
        %1887 = vmatpush1.msra.mxu0 0.0
        %1888 = vmatprep.subr.mxu0 0.0
        %1889 = vmatpush1.msra.mxu0 0.0
        %1890 = vmatprep.subr.mxu0 0.0
        %1891 = vmatpush1.msra.mxu0 0.0
        %1892 = vmatprep.subr.mxu0 0.0
        %1893 = vmatpush1.msra.mxu0 0.0
        %1894 = vmatprep.subr.mxu0 0.0
        %1895 = vmatpush1.msra.mxu0 0.0
        %1896 = vmatprep.subr.mxu0 0.0
        %1897 = vmatpush1.msra.mxu0 0.0
        %1898 = vmatprep.subr.mxu0 0.0
        %1899 = vmatpush1.msra.mxu0 0.0
        %1900 = vmatprep.subr.mxu0 0.0
        %1901 = vmatpush1.msra.mxu0 0.0
        %1902 = vmatprep.subr.mxu0 0.0
        %1903 = vmatpush1.msra.mxu0 0.0
        %1904 = vmatprep.subr.mxu0 0.0
        %1905 = vmatpush1.msra.mxu0 0.0
        %1906 = vmatprep.subr.mxu0 0.0
        %1907 = vmatpush1.msra.mxu0 0.0
        %1908 = vmatprep.subr.mxu0 0.0
        %1909 = vmatpush1.msra.mxu0 0.0
        %1910 = vmatprep.subr.mxu0 0.0
        %1911 = vmatpush1.msra.mxu0 0.0
        %1912 = vmatprep.subr.mxu0 0.0
        %1913 = vmatpush1.msra.mxu0 0.0
        %1914 = vmatprep.subr.mxu0 0.0
        %1915 = vmatpush1.msra.mxu0 0.0
        %1916 = vmatprep.subr.mxu0 0.0
        %1917 = vmatpush1.msra.mxu0 0.0
        %1918 = vmatprep.subr.mxu0 0.0
        %1919 = vmatpush1.msra.mxu0 0.0
        %1920 = vmatprep.subr.mxu0 0.0
        %1921 = vmatpush1.msra.mxu0 0.0
        %1922 = vmatprep.subr.mxu0 0.0
        %1923 = vmatpush1.msra.mxu0 0.0
        %1924 = vmatprep.subr.mxu0 0.0
        %1925 = vmatpush1.msra.mxu0 0.0
        %1926 = vmatprep.subr.mxu0 0.0
        %1927 = vmatpush1.msra.mxu0 0.0
        %1928 = vmatprep.subr.mxu0 0.0
        %1929 = vmatpush1.msra.mxu0 0.0
        %1930 = vmatprep.subr.mxu0 0.0
        %1931 = vmatpush1.msra.mxu0 0.0
        %1932 = vmatprep.subr.mxu0 0.0
        %1933 = vmatpush1.msra.mxu0 0.0
        %1934 = vmatprep.subr.mxu0 0.0
        %1935 = vmatpush1.msra.mxu0 0.0
        %1936 = vmatprep.subr.mxu0 0.0
        %1937 = vmatpush1.msra.mxu0 0.0
        %1938 = vmatprep.subr.mxu0 0.0
        %1939 = vmatpush1.msra.mxu0 0.0
        %1940 = vmatprep.subr.mxu0 0.0
        %1941 = vmatpush1.msra.mxu0 0.0
        %1942 = vmatprep.mubr.f32.mxu0 0.0
        %v1943 = vand.u32 %v501, 4294901760
        %v1944 = vsub.f32 %v501, %v1943
        %1945 = vmatmul.mubr.f32.gmra.mrb[0].mxu0 %v1944
        %v1946 = vpop.f32.mrb[0].mxu0
        %v1947 = vadd.f32 %v1489, %v1946
        %v1948 = vpop.f32.mrb[0].mxu0
        %1949 = vmatprep.mubr.f32.mxu0 0.0
        %v1950 = vand.u32 %v504, 4294901760
        %v1951 = vsub.f32 %v504, %v1950
        %1952 = vmatmul.mubr.f32.gmra.mrb[0].mxu0 %v1951
        %v1953 = vpop.f32.mrb[0].mxu0
        %v1954 = vadd.f32 %v1495, %v1953
        %v1955 = vpop.f32.mrb[0].mxu0
        %1956 = vmatprep.mubr.f32.mxu0 0.0
        %v1957 = vand.u32 %v507, 4294901760
        %v1958 = vsub.f32 %v507, %v1957
        %1959 = vmatmul.mubr.f32.gmra.mrb[0].mxu0 %v1958
        %v1960 = vpop.f32.mrb[0].mxu0
        %v1961 = vadd.f32 %v1501, %v1960
        %v1962 = vpop.f32.mrb[0].mxu0
        %1963 = vmatprep.mubr.f32.mxu0 0.0
        %v1964 = vand.u32 %v510, 4294901760
        %v1965 = vsub.f32 %v510, %v1964
        %1966 = vmatmul.mubr.f32.gmra.mrb[0].mxu0 %v1965
        %v1967 = vpop.f32.mrb[0].mxu0
        %v1968 = vadd.f32 %v1507, %v1967
        %v1969 = vpop.f32.mrb[0].mxu0
        %1970 = vmatprep.mubr.f32.mxu0 0.0
        %v1971 = vand.u32 %v513, 4294901760
        %v1972 = vsub.f32 %v513, %v1971
        %1973 = vmatmul.mubr.f32.gmra.mrb[0].mxu0 %v1972
        %v1974 = vpop.f32.mrb[0].mxu0
        %v1975 = vadd.f32 %v1513, %v1974
        %v1976 = vpop.f32.mrb[0].mxu0
        %1977 = vmatprep.mubr.f32.mxu0 0.0
        %v1978 = vand.u32 %v516, 4294901760
        %v1979 = vsub.f32 %v516, %v1978
        %1980 = vmatmul.mubr.f32.gmra.mrb[0].mxu0 %v1979
        %v1981 = vpop.f32.mrb[0].mxu0
        %v1982 = vadd.f32 %v1519, %v1981
        %v1983 = vpop.f32.mrb[0].mxu0
        %1984 = vmatprep.mubr.f32.mxu0 0.0
        %v1985 = vand.u32 %v519, 4294901760
        %v1986 = vsub.f32 %v519, %v1985
        %1987 = vmatmul.mubr.f32.gmra.mrb[0].mxu0 %v1986
        %v1988 = vpop.f32.mrb[0].mxu0
        %v1989 = vadd.f32 %v1525, %v1988
        %v1990 = vpop.f32.mrb[0].mxu0
        %1991 = vmatprep.mubr.f32.mxu0 0.0
        %v1992 = vand.u32 %v522, 4294901760
        %v1993 = vsub.f32 %v522, %v1992
        %1994 = vmatmul.mubr.f32.gmra.mrb[0].mxu0 %v1993
        %v1995 = vpop.f32.mrb[0].mxu0
        %v1996 = vadd.f32 %v1531, %v1995
        %v1997 = vpop.f32.mrb[0].mxu0
        %1998 = vmatprep.mubr.f32.mxu0 0.0
        %v1999 = vand.u32 %v525, 4294901760
        %v2000 = vsub.f32 %v525, %v1999
        %2001 = vmatmul.mubr.f32.gmra.mrb[0].mxu0 %v2000
        %v2002 = vpop.f32.mrb[0].mxu0
        %v2003 = vadd.f32 %v1537, %v2002
        %v2004 = vpop.f32.mrb[0].mxu0
        %2005 = vmatprep.mubr.f32.mxu0 0.0
        %v2006 = vand.u32 %v528, 4294901760
        %v2007 = vsub.f32 %v528, %v2006
        %2008 = vmatmul.mubr.f32.gmra.mrb[0].mxu0 %v2007
        %v2009 = vpop.f32.mrb[0].mxu0
        %v2010 = vadd.f32 %v1543, %v2009
        %v2011 = vpop.f32.mrb[0].mxu0
        %2012 = vmatprep.mubr.f32.mxu0 0.0
        %v2013 = vand.u32 %v531, 4294901760
        %v2014 = vsub.f32 %v531, %v2013
        %2015 = vmatmul.mubr.f32.gmra.mrb[0].mxu0 %v2014
        %v2016 = vpop.f32.mrb[0].mxu0
        %v2017 = vadd.f32 %v1549, %v2016
        %v2018 = vpop.f32.mrb[0].mxu0
        %2019 = vmatprep.mubr.f32.mxu0 0.0
        %v2020 = vand.u32 %v534, 4294901760
        %v2021 = vsub.f32 %v534, %v2020
        %2022 = vmatmul.mubr.f32.gmra.mrb[0].mxu0 %v2021
        %v2023 = vpop.f32.mrb[0].mxu0
        %v2024 = vadd.f32 %v1555, %v2023
        %v2025 = vpop.f32.mrb[0].mxu0
        %2026 = vmatprep.mubr.f32.mxu0 0.0
        %v2027 = vand.u32 %v537, 4294901760
        %v2028 = vsub.f32 %v537, %v2027
        %2029 = vmatmul.mubr.f32.gmra.mrb[0].mxu0 %v2028
        %v2030 = vpop.f32.mrb[0].mxu0
        %v2031 = vadd.f32 %v1561, %v2030
        %v2032 = vpop.f32.mrb[0].mxu0
        %2033 = vmatprep.mubr.f32.mxu0 0.0
        %v2034 = vand.u32 %v540, 4294901760
        %v2035 = vsub.f32 %v540, %v2034
        %2036 = vmatmul.mubr.f32.gmra.mrb[0].mxu0 %v2035
        %v2037 = vpop.f32.mrb[0].mxu0
        %v2038 = vadd.f32 %v1567, %v2037
        %v2039 = vpop.f32.mrb[0].mxu0
        %2040 = vmatprep.mubr.f32.mxu0 0.0
        %v2041 = vand.u32 %v543, 4294901760
        %v2042 = vsub.f32 %v543, %v2041
        %2043 = vmatmul.mubr.f32.gmra.mrb[0].mxu0 %v2042
        %v2044 = vpop.f32.mrb[0].mxu0
        %v2045 = vadd.f32 %v1573, %v2044
        %v2046 = vpop.f32.mrb[0].mxu0
        %2047 = vmatprep.mubr.f32.mxu0 0.0
        %v2048 = vand.u32 %v546, 4294901760
        %v2049 = vsub.f32 %v546, %v2048
        %2050 = vmatmul.mubr.f32.gmra.mrb[0].mxu0 %v2049
        %v2051 = vpop.f32.mrb[0].mxu0
        %v2052 = vadd.f32 %v1579, %v2051
        %v2053 = vpop.f32.mrb[0].mxu0
        %2054 = vmatprep.mubr.f32.mxu0 0.0
        %v2055 = vand.u32 %v549, 4294901760
        %v2056 = vsub.f32 %v549, %v2055
        %2057 = vmatmul.mubr.f32.gmra.mrb[0].mxu0 %v2056
        %v2058 = vpop.f32.mrb[0].mxu0
        %v2059 = vadd.f32 %v1585, %v2058
        %v2060 = vpop.f32.mrb[0].mxu0
        %2061 = vmatprep.mubr.f32.mxu0 0.0
        %v2062 = vand.u32 %v552, 4294901760
        %v2063 = vsub.f32 %v552, %v2062
        %2064 = vmatmul.mubr.f32.gmra.mrb[0].mxu0 %v2063
        %v2065 = vpop.f32.mrb[0].mxu0
        %v2066 = vadd.f32 %v1591, %v2065
        %v2067 = vpop.f32.mrb[0].mxu0
        %2068 = vmatprep.mubr.f32.mxu0 0.0
        %v2069 = vand.u32 %v555, 4294901760
        %v2070 = vsub.f32 %v555, %v2069
        %2071 = vmatmul.mubr.f32.gmra.mrb[0].mxu0 %v2070
        %v2072 = vpop.f32.mrb[0].mxu0
        %v2073 = vadd.f32 %v1597, %v2072
        %v2074 = vpop.f32.mrb[0].mxu0
        %2075 = vmatprep.mubr.f32.mxu0 0.0
        %v2076 = vand.u32 %v558, 4294901760
        %v2077 = vsub.f32 %v558, %v2076
        %2078 = vmatmul.mubr.f32.gmra.mrb[0].mxu0 %v2077
        %v2079 = vpop.f32.mrb[0].mxu0
        %v2080 = vadd.f32 %v1603, %v2079
        %v2081 = vpop.f32.mrb[0].mxu0
        %2082 = vmatprep.mubr.f32.mxu0 0.0
        %v2083 = vand.u32 %v561, 4294901760
        %v2084 = vsub.f32 %v561, %v2083
        %2085 = vmatmul.mubr.f32.gmra.mrb[0].mxu0 %v2084
        %v2086 = vpop.f32.mrb[0].mxu0
        %v2087 = vadd.f32 %v1609, %v2086
        %v2088 = vpop.f32.mrb[0].mxu0
        %2089 = vmatprep.mubr.f32.mxu0 0.0
        %v2090 = vand.u32 %v564, 4294901760
        %v2091 = vsub.f32 %v564, %v2090
        %2092 = vmatmul.mubr.f32.gmra.mrb[0].mxu0 %v2091
        %v2093 = vpop.f32.mrb[0].mxu0
        %v2094 = vadd.f32 %v1615, %v2093
        %v2095 = vpop.f32.mrb[0].mxu0
        %2096 = vmatprep.mubr.f32.mxu0 0.0
        %v2097 = vand.u32 %v567, 4294901760
        %v2098 = vsub.f32 %v567, %v2097
        %2099 = vmatmul.mubr.f32.gmra.mrb[0].mxu0 %v2098
        %v2100 = vpop.f32.mrb[0].mxu0
        %v2101 = vadd.f32 %v1621, %v2100
        %v2102 = vpop.f32.mrb[0].mxu0
        %2103 = vmatprep.mubr.f32.mxu0 0.0
        %v2104 = vand.u32 %v570, 4294901760
        %v2105 = vsub.f32 %v570, %v2104
        %2106 = vmatmul.mubr.f32.gmra.mrb[0].mxu0 %v2105
        %v2107 = vpop.f32.mrb[0].mxu0
        %v2108 = vadd.f32 %v1627, %v2107
        %v2109 = vpop.f32.mrb[0].mxu0
        %2110 = vmatprep.mubr.f32.mxu0 0.0
        %v2111 = vand.u32 %v573, 4294901760
        %v2112 = vsub.f32 %v573, %v2111
        %2113 = vmatmul.mubr.f32.gmra.mrb[0].mxu0 %v2112
        %v2114 = vpop.f32.mrb[0].mxu0
        %v2115 = vadd.f32 %v1633, %v2114
        %v2116 = vpop.f32.mrb[0].mxu0
        %2117 = vmatprep.mubr.f32.mxu0 0.0
        %v2118 = vand.u32 %v576, 4294901760
        %v2119 = vsub.f32 %v576, %v2118
        %2120 = vmatmul.mubr.f32.gmra.mrb[0].mxu0 %v2119
        %v2121 = vpop.f32.mrb[0].mxu0
        %v2122 = vadd.f32 %v1639, %v2121
        %v2123 = vpop.f32.mrb[0].mxu0
        %2124 = vmatprep.mubr.f32.mxu0 0.0
        %v2125 = vand.u32 %v579, 4294901760
        %v2126 = vsub.f32 %v579, %v2125
        %2127 = vmatmul.mubr.f32.gmra.mrb[0].mxu0 %v2126
        %v2128 = vpop.f32.mrb[0].mxu0
        %v2129 = vadd.f32 %v1645, %v2128
        %v2130 = vpop.f32.mrb[0].mxu0
        %2131 = vmatprep.mubr.f32.mxu0 0.0
        %v2132 = vand.u32 %v582, 4294901760
        %v2133 = vsub.f32 %v582, %v2132
        %2134 = vmatmul.mubr.f32.gmra.mrb[0].mxu0 %v2133
        %v2135 = vpop.f32.mrb[0].mxu0
        %v2136 = vadd.f32 %v1651, %v2135
        %v2137 = vpop.f32.mrb[0].mxu0
        %2138 = vmatprep.mubr.f32.mxu0 0.0
        %v2139 = vand.u32 %v585, 4294901760
        %v2140 = vsub.f32 %v585, %v2139
        %2141 = vmatmul.mubr.f32.gmra.mrb[0].mxu0 %v2140
        %v2142 = vpop.f32.mrb[0].mxu0
        %v2143 = vadd.f32 %v1657, %v2142
        %v2144 = vpop.f32.mrb[0].mxu0
        %2145 = vmatprep.mubr.f32.mxu0 0.0
        %v2146 = vand.u32 %v588, 4294901760
        %v2147 = vsub.f32 %v588, %v2146
        %2148 = vmatmul.mubr.f32.gmra.mrb[0].mxu0 %v2147
        %v2149 = vpop.f32.mrb[0].mxu0
        %v2150 = vadd.f32 %v1663, %v2149
        %v2151 = vpop.f32.mrb[0].mxu0
        %2152 = vmatprep.mubr.f32.mxu0 0.0
        %v2153 = vand.u32 %v591, 4294901760
        %v2154 = vsub.f32 %v591, %v2153
        %2155 = vmatmul.mubr.f32.gmra.mrb[0].mxu0 %v2154
        %v2156 = vpop.f32.mrb[0].mxu0
        %v2157 = vadd.f32 %v1669, %v2156
        %v2158 = vpop.f32.mrb[0].mxu0
        %2159 = vmatprep.mubr.f32.mxu0 0.0
        %v2160 = vand.u32 %v594, 4294901760
        %v2161 = vsub.f32 %v594, %v2160
        %2162 = vmatmul.mubr.f32.gmra.mrb[0].mxu0 %v2161
        %v2163 = vpop.f32.mrb[0].mxu0
        %v2164 = vadd.f32 %v1675, %v2163
        %v2165 = vpop.f32.mrb[0].mxu0
        %2166 = vmatprep.mubr.f32.mxu0 0.0
        %v2167 = vand.u32 %v597, 4294901760
        %v2168 = vsub.f32 %v597, %v2167
        %2169 = vmatmul.mubr.f32.gmra.mrb[0].mxu0 %v2168
        %v2170 = vpop.f32.mrb[0].mxu0
        %v2171 = vadd.f32 %v1681, %v2170
        %v2172 = vpop.f32.mrb[0].mxu0
        %2173 = vmatprep.mubr.f32.mxu0 0.0
        %v2174 = vand.u32 %v600, 4294901760
        %v2175 = vsub.f32 %v600, %v2174
        %2176 = vmatmul.mubr.f32.gmra.mrb[0].mxu0 %v2175
        %v2177 = vpop.f32.mrb[0].mxu0
        %v2178 = vadd.f32 %v1687, %v2177
        %v2179 = vpop.f32.mrb[0].mxu0
        %2180 = vmatprep.mubr.f32.mxu0 0.0
        %v2181 = vand.u32 %v603, 4294901760
        %v2182 = vsub.f32 %v603, %v2181
        %2183 = vmatmul.mubr.f32.gmra.mrb[0].mxu0 %v2182
        %v2184 = vpop.f32.mrb[0].mxu0
        %v2185 = vadd.f32 %v1693, %v2184
        %v2186 = vpop.f32.mrb[0].mxu0
        %2187 = vmatprep.mubr.f32.mxu0 0.0
        %v2188 = vand.u32 %v606, 4294901760
        %v2189 = vsub.f32 %v606, %v2188
        %2190 = vmatmul.mubr.f32.gmra.mrb[0].mxu0 %v2189
        %v2191 = vpop.f32.mrb[0].mxu0
        %v2192 = vadd.f32 %v1699, %v2191
        %v2193 = vpop.f32.mrb[0].mxu0
        %2194 = vmatprep.mubr.f32.mxu0 0.0
        %v2195 = vand.u32 %v609, 4294901760
        %v2196 = vsub.f32 %v609, %v2195
        %2197 = vmatmul.mubr.f32.gmra.mrb[0].mxu0 %v2196
        %v2198 = vpop.f32.mrb[0].mxu0
        %v2199 = vadd.f32 %v1705, %v2198
        %v2200 = vpop.f32.mrb[0].mxu0
        %2201 = vmatprep.mubr.f32.mxu0 0.0
        %v2202 = vand.u32 %v612, 4294901760
        %v2203 = vsub.f32 %v612, %v2202
        %2204 = vmatmul.mubr.f32.gmra.mrb[0].mxu0 %v2203
        %v2205 = vpop.f32.mrb[0].mxu0
        %v2206 = vadd.f32 %v1711, %v2205
        %v2207 = vpop.f32.mrb[0].mxu0
        %2208 = vmatprep.mubr.f32.mxu0 0.0
        %v2209 = vand.u32 %v615, 4294901760
        %v2210 = vsub.f32 %v615, %v2209
        %2211 = vmatmul.mubr.f32.gmra.mrb[0].mxu0 %v2210
        %v2212 = vpop.f32.mrb[0].mxu0
        %v2213 = vadd.f32 %v1717, %v2212
        %v2214 = vpop.f32.mrb[0].mxu0
        %2215 = vmatprep.mubr.f32.mxu0 0.0
        %v2216 = vand.u32 %v618, 4294901760
        %v2217 = vsub.f32 %v618, %v2216
        %2218 = vmatmul.mubr.f32.gmra.mrb[0].mxu0 %v2217
        %v2219 = vpop.f32.mrb[0].mxu0
        %v2220 = vadd.f32 %v1723, %v2219
        %v2221 = vpop.f32.mrb[0].mxu0
        %2222 = vmatprep.mubr.f32.mxu0 0.0
        %v2223 = vand.u32 %v621, 4294901760
        %v2224 = vsub.f32 %v621, %v2223
        %2225 = vmatmul.mubr.f32.gmra.mrb[0].mxu0 %v2224
        %v2226 = vpop.f32.mrb[0].mxu0
        %v2227 = vadd.f32 %v1729, %v2226
        %v2228 = vpop.f32.mrb[0].mxu0
        %2229 = vmatprep.mubr.f32.mxu0 0.0
        %v2230 = vand.u32 %v624, 4294901760
        %v2231 = vsub.f32 %v624, %v2230
        %2232 = vmatmul.mubr.f32.gmra.mrb[0].mxu0 %v2231
        %v2233 = vpop.f32.mrb[0].mxu0
        %v2234 = vadd.f32 %v1735, %v2233
        %v2235 = vpop.f32.mrb[0].mxu0
        %2236 = vmatprep.mubr.f32.mxu0 0.0
        %v2237 = vand.u32 %v627, 4294901760
        %v2238 = vsub.f32 %v627, %v2237
        %2239 = vmatmul.mubr.f32.gmra.mrb[0].mxu0 %v2238
        %v2240 = vpop.f32.mrb[0].mxu0
        %v2241 = vadd.f32 %v1741, %v2240
        %v2242 = vpop.f32.mrb[0].mxu0
        %2243 = vmatprep.mubr.f32.mxu0 0.0
        %v2244 = vand.u32 %v630, 4294901760
        %v2245 = vsub.f32 %v630, %v2244
        %2246 = vmatmul.mubr.f32.gmra.mrb[0].mxu0 %v2245
        %v2247 = vpop.f32.mrb[0].mxu0
        %v2248 = vadd.f32 %v1747, %v2247
        %v2249 = vpop.f32.mrb[0].mxu0
        %2250 = vmatprep.mubr.f32.mxu0 0.0
        %v2251 = vand.u32 %v633, 4294901760
        %v2252 = vsub.f32 %v633, %v2251
        %2253 = vmatmul.mubr.f32.gmra.mrb[0].mxu0 %v2252
        %v2254 = vpop.f32.mrb[0].mxu0
        %v2255 = vadd.f32 %v1753, %v2254
        %v2256 = vpop.f32.mrb[0].mxu0
        %2257 = vmatprep.mubr.f32.mxu0 0.0
        %v2258 = vand.u32 %v636, 4294901760
        %v2259 = vsub.f32 %v636, %v2258
        %2260 = vmatmul.mubr.f32.gmra.mrb[0].mxu0 %v2259
        %v2261 = vpop.f32.mrb[0].mxu0
        %v2262 = vadd.f32 %v1759, %v2261
        %v2263 = vpop.f32.mrb[0].mxu0
        %2264 = vmatprep.mubr.f32.mxu0 0.0
        %v2265 = vand.u32 %v639, 4294901760
        %v2266 = vsub.f32 %v639, %v2265
        %2267 = vmatmul.mubr.f32.gmra.mrb[0].mxu0 %v2266
        %v2268 = vpop.f32.mrb[0].mxu0
        %v2269 = vadd.f32 %v1765, %v2268
        %v2270 = vpop.f32.mrb[0].mxu0
        %2271 = vmatprep.mubr.f32.mxu0 0.0
        %v2272 = vand.u32 %v642, 4294901760
        %v2273 = vsub.f32 %v642, %v2272
        %2274 = vmatmul.mubr.f32.gmra.mrb[0].mxu0 %v2273
        %v2275 = vpop.f32.mrb[0].mxu0
        %v2276 = vadd.f32 %v1771, %v2275
        %v2277 = vpop.f32.mrb[0].mxu0
        %2278 = vmatprep.mubr.f32.mxu0 0.0
        %v2279 = vand.u32 %v645, 4294901760
        %v2280 = vsub.f32 %v645, %v2279
        %2281 = vmatmul.mubr.f32.gmra.mrb[0].mxu0 %v2280
        %v2282 = vpop.f32.mrb[0].mxu0
        %v2283 = vadd.f32 %v1777, %v2282
        %v2284 = vpop.f32.mrb[0].mxu0
        %2285 = vmatprep.mubr.f32.mxu0 0.0
        %v2286 = vand.u32 %v648, 4294901760
        %v2287 = vsub.f32 %v648, %v2286
        %2288 = vmatmul.mubr.f32.gmra.mrb[0].mxu0 %v2287
        %v2289 = vpop.f32.mrb[0].mxu0
        %v2290 = vadd.f32 %v1783, %v2289
        %v2291 = vpop.f32.mrb[0].mxu0
        %2292 = vmatprep.mubr.f32.mxu0 0.0
        %v2293 = vand.u32 %v651, 4294901760
        %v2294 = vsub.f32 %v651, %v2293
        %2295 = vmatmul.mubr.f32.gmra.mrb[0].mxu0 %v2294
        %v2296 = vpop.f32.mrb[0].mxu0
        %v2297 = vadd.f32 %v1789, %v2296
        %v2298 = vpop.f32.mrb[0].mxu0
        %2299 = vmatprep.mubr.f32.mxu0 0.0
        %v2300 = vand.u32 %v654, 4294901760
        %v2301 = vsub.f32 %v654, %v2300
        %2302 = vmatmul.mubr.f32.gmra.mrb[0].mxu0 %v2301
        %v2303 = vpop.f32.mrb[0].mxu0
        %v2304 = vadd.f32 %v1795, %v2303
        %v2305 = vpop.f32.mrb[0].mxu0
        %2306 = vmatprep.mubr.f32.mxu0 0.0
        %v2307 = vand.u32 %v657, 4294901760
        %v2308 = vsub.f32 %v657, %v2307
        %2309 = vmatmul.mubr.f32.gmra.mrb[0].mxu0 %v2308
        %v2310 = vpop.f32.mrb[0].mxu0
        %v2311 = vadd.f32 %v1801, %v2310
        %v2312 = vpop.f32.mrb[0].mxu0
        %2313 = vmatprep.mubr.f32.mxu0 0.0
        %v2314 = vand.u32 %v660, 4294901760
        %v2315 = vsub.f32 %v660, %v2314
        %2316 = vmatmul.mubr.f32.gmra.mrb[0].mxu0 %v2315
        %v2317 = vpop.f32.mrb[0].mxu0
        %v2318 = vadd.f32 %v1807, %v2317
        %v2319 = vpop.f32.mrb[0].mxu0
        %2320 = vmatprep.mubr.f32.mxu0 0.0
        %v2321 = vand.u32 %v663, 4294901760
        %v2322 = vsub.f32 %v663, %v2321
        %2323 = vmatmul.mubr.f32.gmra.mrb[0].mxu0 %v2322
        %v2324 = vpop.f32.mrb[0].mxu0
        %v2325 = vadd.f32 %v1813, %v2324
        %v2326 = vpop.f32.mrb[0].mxu0
        %2327 = vmatprep.mubr.f32.mxu0 0.0
        %v2328 = vand.u32 %v666, 4294901760
        %v2329 = vsub.f32 %v666, %v2328
        %2330 = vmatmul.mubr.f32.gmra.mrb[0].mxu0 %v2329
        %v2331 = vpop.f32.mrb[0].mxu0
        %v2332 = vadd.f32 %v1819, %v2331
        %v2333 = vpop.f32.mrb[0].mxu0
        %2334 = vmatprep.mubr.f32.mxu0 0.0
        %v2335 = vand.u32 %v669, 4294901760
        %v2336 = vsub.f32 %v669, %v2335
        %2337 = vmatmul.mubr.f32.gmra.mrb[0].mxu0 %v2336
        %v2338 = vpop.f32.mrb[0].mxu0
        %v2339 = vadd.f32 %v1825, %v2338
        %v2340 = vpop.f32.mrb[0].mxu0
        %2341 = vmatprep.mubr.f32.mxu0 0.0
        %v2342 = vand.u32 %v672, 4294901760
        %v2343 = vsub.f32 %v672, %v2342
        %2344 = vmatmul.mubr.f32.gmra.mrb[0].mxu0 %v2343
        %v2345 = vpop.f32.mrb[0].mxu0
        %v2346 = vadd.f32 %v1831, %v2345
        %v2347 = vpop.f32.mrb[0].mxu0
        %2348 = vmatprep.mubr.f32.mxu0 0.0
        %v2349 = vand.u32 %v675, 4294901760
        %v2350 = vsub.f32 %v675, %v2349
        %2351 = vmatmul.mubr.f32.gmra.mrb[0].mxu0 %v2350
        %v2352 = vpop.f32.mrb[0].mxu0
        %v2353 = vadd.f32 %v1837, %v2352
        %v2354 = vpop.f32.mrb[0].mxu0
        %2355 = vmatprep.mubr.f32.mxu0 0.0
        %v2356 = vand.u32 %v678, 4294901760
        %v2357 = vsub.f32 %v678, %v2356
        %2358 = vmatmul.mubr.f32.gmra.mrb[0].mxu0 %v2357
        %v2359 = vpop.f32.mrb[0].mxu0
        %v2360 = vadd.f32 %v1843, %v2359
        %v2361 = vpop.f32.mrb[0].mxu0
        %2362 = vmatprep.mubr.f32.mxu0 0.0
        %v2363 = vand.u32 %v681, 4294901760
        %v2364 = vsub.f32 %v681, %v2363
        %2365 = vmatmul.mubr.f32.gmra.mrb[0].mxu0 %v2364
        %v2366 = vpop.f32.mrb[0].mxu0
        %v2367 = vadd.f32 %v1849, %v2366
        %v2368 = vpop.f32.mrb[0].mxu0
        %2369 = vmatprep.mubr.f32.mxu0 0.0
        %v2370 = vand.u32 %v684, 4294901760
        %v2371 = vsub.f32 %v684, %v2370
        %2372 = vmatmul.mubr.f32.gmra.mrb[0].mxu0 %v2371
        %v2373 = vpop.f32.mrb[0].mxu0
        %v2374 = vadd.f32 %v1855, %v2373
        %v2375 = vpop.f32.mrb[0].mxu0
        %2376 = vmatprep.mubr.f32.mxu0 0.0
        %v2377 = vand.u32 %v687, 4294901760
        %v2378 = vsub.f32 %v687, %v2377
        %2379 = vmatmul.mubr.f32.gmra.mrb[0].mxu0 %v2378
        %v2380 = vpop.f32.mrb[0].mxu0
        %v2381 = vadd.f32 %v1861, %v2380
        %v2382 = vpop.f32.mrb[0].mxu0
        %2383 = vmatprep.mubr.f32.mxu0 0.0
        %v2384 = vand.u32 %v690, 4294901760
        %v2385 = vsub.f32 %v690, %v2384
        %2386 = vmatmul.mubr.f32.gmra.mrb[0].mxu0 %v2385
        %v2387 = vpop.f32.mrb[0].mxu0
        %v2388 = vadd.f32 %v1867, %v2387
        %v2389 = vpop.f32.mrb[0].mxu0
        %2390 = vdwg.mxu0
        %2391 = vmatprep.subr.mxu0 0.0
        %v2392 = vand.u32 %v488, 4294901760
        %2393 = vmatpush1.msra.mxu0 %v2392
        %2394 = vmatprep.subr.mxu0 0.0
        %v2395 = vand.u32 %v489, 4294901760
        %2396 = vmatpush1.msra.mxu0 %v2395
        %2397 = vmatprep.subr.mxu0 0.0
        %v2398 = vand.u32 %v490, 4294901760
        %2399 = vmatpush1.msra.mxu0 %v2398
        %2400 = vmatprep.subr.mxu0 0.0
        %v2401 = vand.u32 %v491, 4294901760
        %2402 = vmatpush1.msra.mxu0 %v2401
        %2403 = vmatprep.subr.mxu0 0.0
        %2404 = vmatpush1.msra.mxu0 0.0
        %2405 = vmatprep.subr.mxu0 0.0
        %2406 = vmatpush1.msra.mxu0 0.0
        %2407 = vmatprep.subr.mxu0 0.0
        %2408 = vmatpush1.msra.mxu0 0.0
        %2409 = vmatprep.subr.mxu0 0.0
        %2410 = vmatpush1.msra.mxu0 0.0
        %2411 = vmatprep.subr.mxu0 0.0
        %2412 = vmatpush1.msra.mxu0 0.0
        %2413 = vmatprep.subr.mxu0 0.0
        %2414 = vmatpush1.msra.mxu0 0.0
        %2415 = vmatprep.subr.mxu0 0.0
        %2416 = vmatpush1.msra.mxu0 0.0
        %2417 = vmatprep.subr.mxu0 0.0
        %2418 = vmatpush1.msra.mxu0 0.0
        %2419 = vmatprep.subr.mxu0 0.0
        %2420 = vmatpush1.msra.mxu0 0.0
        %2421 = vmatprep.subr.mxu0 0.0
        %2422 = vmatpush1.msra.mxu0 0.0
        %2423 = vmatprep.subr.mxu0 0.0
        %2424 = vmatpush1.msra.mxu0 0.0
        %2425 = vmatprep.subr.mxu0 0.0
        %2426 = vmatpush1.msra.mxu0 0.0
        %2427 = vmatprep.subr.mxu0 0.0
        %2428 = vmatpush1.msra.mxu0 0.0
        %2429 = vmatprep.subr.mxu0 0.0
        %2430 = vmatpush1.msra.mxu0 0.0
        %2431 = vmatprep.subr.mxu0 0.0
        %2432 = vmatpush1.msra.mxu0 0.0
        %2433 = vmatprep.subr.mxu0 0.0
        %2434 = vmatpush1.msra.mxu0 0.0
        %2435 = vmatprep.subr.mxu0 0.0
        %2436 = vmatpush1.msra.mxu0 0.0
        %2437 = vmatprep.subr.mxu0 0.0
        %2438 = vmatpush1.msra.mxu0 0.0
        %2439 = vmatprep.subr.mxu0 0.0
        %2440 = vmatpush1.msra.mxu0 0.0
        %2441 = vmatprep.subr.mxu0 0.0
        %2442 = vmatpush1.msra.mxu0 0.0
        %2443 = vmatprep.subr.mxu0 0.0
        %2444 = vmatpush1.msra.mxu0 0.0
        %2445 = vmatprep.subr.mxu0 0.0
        %2446 = vmatpush1.msra.mxu0 0.0
        %2447 = vmatprep.subr.mxu0 0.0
        %2448 = vmatpush1.msra.mxu0 0.0
        %2449 = vmatprep.subr.mxu0 0.0
        %2450 = vmatpush1.msra.mxu0 0.0
        %2451 = vmatprep.subr.mxu0 0.0
        %2452 = vmatpush1.msra.mxu0 0.0
        %2453 = vmatprep.subr.mxu0 0.0
        %2454 = vmatpush1.msra.mxu0 0.0
        %2455 = vmatprep.subr.mxu0 0.0
        %2456 = vmatpush1.msra.mxu0 0.0
        %2457 = vmatprep.subr.mxu0 0.0
        %2458 = vmatpush1.msra.mxu0 0.0
        %2459 = vmatprep.mubr.f32.mxu0 0.0
        %v2460 = vand.u32 %v501, 4294901760
        %v2461 = vsub.f32 %v501, %v2460
        %v2462 = vand.u32 %v2461, 4294901760
        %2463 = vmatmul.mubr.f32.gmra.mrb[0].mxu0 %v2462
        %v2464 = vpop.f32.mrb[0].mxu0
        %v2465 = vadd.f32 %v1947, %v2464
        %v2466 = vpop.f32.mrb[0].mxu0
        %2467 = vmatprep.mubr.f32.mxu0 0.0
        %v2468 = vand.u32 %v504, 4294901760
        %v2469 = vsub.f32 %v504, %v2468
        %v2470 = vand.u32 %v2469, 4294901760
        %2471 = vmatmul.mubr.f32.gmra.mrb[0].mxu0 %v2470
        %v2472 = vpop.f32.mrb[0].mxu0
        %v2473 = vadd.f32 %v1954, %v2472
        %v2474 = vpop.f32.mrb[0].mxu0
        %2475 = vmatprep.mubr.f32.mxu0 0.0
        %v2476 = vand.u32 %v507, 4294901760
        %v2477 = vsub.f32 %v507, %v2476
        %v2478 = vand.u32 %v2477, 4294901760
        %2479 = vmatmul.mubr.f32.gmra.mrb[0].mxu0 %v2478
        %v2480 = vpop.f32.mrb[0].mxu0
        %v2481 = vadd.f32 %v1961, %v2480
        %v2482 = vpop.f32.mrb[0].mxu0
        %2483 = vmatprep.mubr.f32.mxu0 0.0
        %v2484 = vand.u32 %v510, 4294901760
        %v2485 = vsub.f32 %v510, %v2484
        %v2486 = vand.u32 %v2485, 4294901760
        %2487 = vmatmul.mubr.f32.gmra.mrb[0].mxu0 %v2486
        %v2488 = vpop.f32.mrb[0].mxu0
        %v2489 = vadd.f32 %v1968, %v2488
        %v2490 = vpop.f32.mrb[0].mxu0
        %2491 = vmatprep.mubr.f32.mxu0 0.0
        %v2492 = vand.u32 %v513, 4294901760
        %v2493 = vsub.f32 %v513, %v2492
        %v2494 = vand.u32 %v2493, 4294901760
        %2495 = vmatmul.mubr.f32.gmra.mrb[0].mxu0 %v2494
        %v2496 = vpop.f32.mrb[0].mxu0
        %v2497 = vadd.f32 %v1975, %v2496
        %v2498 = vpop.f32.mrb[0].mxu0
        %2499 = vmatprep.mubr.f32.mxu0 0.0
        %v2500 = vand.u32 %v516, 4294901760
        %v2501 = vsub.f32 %v516, %v2500
        %v2502 = vand.u32 %v2501, 4294901760
        %2503 = vmatmul.mubr.f32.gmra.mrb[0].mxu0 %v2502
        %v2504 = vpop.f32.mrb[0].mxu0
        %v2505 = vadd.f32 %v1982, %v2504
        %v2506 = vpop.f32.mrb[0].mxu0
        %2507 = vmatprep.mubr.f32.mxu0 0.0
        %v2508 = vand.u32 %v519, 4294901760
        %v2509 = vsub.f32 %v519, %v2508
        %v2510 = vand.u32 %v2509, 4294901760
        %2511 = vmatmul.mubr.f32.gmra.mrb[0].mxu0 %v2510
        %v2512 = vpop.f32.mrb[0].mxu0
        %v2513 = vadd.f32 %v1989, %v2512
        %v2514 = vpop.f32.mrb[0].mxu0
        %2515 = vmatprep.mubr.f32.mxu0 0.0
        %v2516 = vand.u32 %v522, 4294901760
        %v2517 = vsub.f32 %v522, %v2516
        %v2518 = vand.u32 %v2517, 4294901760
        %2519 = vmatmul.mubr.f32.gmra.mrb[0].mxu0 %v2518
        %v2520 = vpop.f32.mrb[0].mxu0
        %v2521 = vadd.f32 %v1996, %v2520
        %v2522 = vpop.f32.mrb[0].mxu0
        %2523 = vmatprep.mubr.f32.mxu0 0.0
        %v2524 = vand.u32 %v525, 4294901760
        %v2525 = vsub.f32 %v525, %v2524
        %v2526 = vand.u32 %v2525, 4294901760
        %2527 = vmatmul.mubr.f32.gmra.mrb[0].mxu0 %v2526
        %v2528 = vpop.f32.mrb[0].mxu0
        %v2529 = vadd.f32 %v2003, %v2528
        %v2530 = vpop.f32.mrb[0].mxu0
        %2531 = vmatprep.mubr.f32.mxu0 0.0
        %v2532 = vand.u32 %v528, 4294901760
        %v2533 = vsub.f32 %v528, %v2532
        %v2534 = vand.u32 %v2533, 4294901760
        %2535 = vmatmul.mubr.f32.gmra.mrb[0].mxu0 %v2534
        %v2536 = vpop.f32.mrb[0].mxu0
        %v2537 = vadd.f32 %v2010, %v2536
        %v2538 = vpop.f32.mrb[0].mxu0
        %2539 = vmatprep.mubr.f32.mxu0 0.0
        %v2540 = vand.u32 %v531, 4294901760
        %v2541 = vsub.f32 %v531, %v2540
        %v2542 = vand.u32 %v2541, 4294901760
        %2543 = vmatmul.mubr.f32.gmra.mrb[0].mxu0 %v2542
        %v2544 = vpop.f32.mrb[0].mxu0
        %v2545 = vadd.f32 %v2017, %v2544
        %v2546 = vpop.f32.mrb[0].mxu0
        %2547 = vmatprep.mubr.f32.mxu0 0.0
        %v2548 = vand.u32 %v534, 4294901760
        %v2549 = vsub.f32 %v534, %v2548
        %v2550 = vand.u32 %v2549, 4294901760
        %2551 = vmatmul.mubr.f32.gmra.mrb[0].mxu0 %v2550
        %v2552 = vpop.f32.mrb[0].mxu0
        %v2553 = vadd.f32 %v2024, %v2552
        %v2554 = vpop.f32.mrb[0].mxu0
        %2555 = vmatprep.mubr.f32.mxu0 0.0
        %v2556 = vand.u32 %v537, 4294901760
        %v2557 = vsub.f32 %v537, %v2556
        %v2558 = vand.u32 %v2557, 4294901760
        %2559 = vmatmul.mubr.f32.gmra.mrb[0].mxu0 %v2558
        %v2560 = vpop.f32.mrb[0].mxu0
        %v2561 = vadd.f32 %v2031, %v2560
        %v2562 = vpop.f32.mrb[0].mxu0
        %2563 = vmatprep.mubr.f32.mxu0 0.0
        %v2564 = vand.u32 %v540, 4294901760
        %v2565 = vsub.f32 %v540, %v2564
        %v2566 = vand.u32 %v2565, 4294901760
        %2567 = vmatmul.mubr.f32.gmra.mrb[0].mxu0 %v2566
        %v2568 = vpop.f32.mrb[0].mxu0
        %v2569 = vadd.f32 %v2038, %v2568
        %v2570 = vpop.f32.mrb[0].mxu0
        %2571 = vmatprep.mubr.f32.mxu0 0.0
        %v2572 = vand.u32 %v543, 4294901760
        %v2573 = vsub.f32 %v543, %v2572
        %v2574 = vand.u32 %v2573, 4294901760
        %2575 = vmatmul.mubr.f32.gmra.mrb[0].mxu0 %v2574
        %v2576 = vpop.f32.mrb[0].mxu0
        %v2577 = vadd.f32 %v2045, %v2576
        %v2578 = vpop.f32.mrb[0].mxu0
        %2579 = vmatprep.mubr.f32.mxu0 0.0
        %v2580 = vand.u32 %v546, 4294901760
        %v2581 = vsub.f32 %v546, %v2580
        %v2582 = vand.u32 %v2581, 4294901760
        %2583 = vmatmul.mubr.f32.gmra.mrb[0].mxu0 %v2582
        %v2584 = vpop.f32.mrb[0].mxu0
        %v2585 = vadd.f32 %v2052, %v2584
        %v2586 = vpop.f32.mrb[0].mxu0
        %2587 = vmatprep.mubr.f32.mxu0 0.0
        %v2588 = vand.u32 %v549, 4294901760
        %v2589 = vsub.f32 %v549, %v2588
        %v2590 = vand.u32 %v2589, 4294901760
        %2591 = vmatmul.mubr.f32.gmra.mrb[0].mxu0 %v2590
        %v2592 = vpop.f32.mrb[0].mxu0
        %v2593 = vadd.f32 %v2059, %v2592
        %v2594 = vpop.f32.mrb[0].mxu0
        %2595 = vmatprep.mubr.f32.mxu0 0.0
        %v2596 = vand.u32 %v552, 4294901760
        %v2597 = vsub.f32 %v552, %v2596
        %v2598 = vand.u32 %v2597, 4294901760
        %2599 = vmatmul.mubr.f32.gmra.mrb[0].mxu0 %v2598
        %v2600 = vpop.f32.mrb[0].mxu0
        %v2601 = vadd.f32 %v2066, %v2600
        %v2602 = vpop.f32.mrb[0].mxu0
        %2603 = vmatprep.mubr.f32.mxu0 0.0
        %v2604 = vand.u32 %v555, 4294901760
        %v2605 = vsub.f32 %v555, %v2604
        %v2606 = vand.u32 %v2605, 4294901760
        %2607 = vmatmul.mubr.f32.gmra.mrb[0].mxu0 %v2606
        %v2608 = vpop.f32.mrb[0].mxu0
        %v2609 = vadd.f32 %v2073, %v2608
        %v2610 = vpop.f32.mrb[0].mxu0
        %2611 = vmatprep.mubr.f32.mxu0 0.0
        %v2612 = vand.u32 %v558, 4294901760
        %v2613 = vsub.f32 %v558, %v2612
        %v2614 = vand.u32 %v2613, 4294901760
        %2615 = vmatmul.mubr.f32.gmra.mrb[0].mxu0 %v2614
        %v2616 = vpop.f32.mrb[0].mxu0
        %v2617 = vadd.f32 %v2080, %v2616
        %v2618 = vpop.f32.mrb[0].mxu0
        %2619 = vmatprep.mubr.f32.mxu0 0.0
        %v2620 = vand.u32 %v561, 4294901760
        %v2621 = vsub.f32 %v561, %v2620
        %v2622 = vand.u32 %v2621, 4294901760
        %2623 = vmatmul.mubr.f32.gmra.mrb[0].mxu0 %v2622
        %v2624 = vpop.f32.mrb[0].mxu0
        %v2625 = vadd.f32 %v2087, %v2624
        %v2626 = vpop.f32.mrb[0].mxu0
        %2627 = vmatprep.mubr.f32.mxu0 0.0
        %v2628 = vand.u32 %v564, 4294901760
        %v2629 = vsub.f32 %v564, %v2628
        %v2630 = vand.u32 %v2629, 4294901760
        %2631 = vmatmul.mubr.f32.gmra.mrb[0].mxu0 %v2630
        %v2632 = vpop.f32.mrb[0].mxu0
        %v2633 = vadd.f32 %v2094, %v2632
        %v2634 = vpop.f32.mrb[0].mxu0
        %2635 = vmatprep.mubr.f32.mxu0 0.0
        %v2636 = vand.u32 %v567, 4294901760
        %v2637 = vsub.f32 %v567, %v2636
        %v2638 = vand.u32 %v2637, 4294901760
        %2639 = vmatmul.mubr.f32.gmra.mrb[0].mxu0 %v2638
        %v2640 = vpop.f32.mrb[0].mxu0
        %v2641 = vadd.f32 %v2101, %v2640
        %v2642 = vpop.f32.mrb[0].mxu0
        %2643 = vmatprep.mubr.f32.mxu0 0.0
        %v2644 = vand.u32 %v570, 4294901760
        %v2645 = vsub.f32 %v570, %v2644
        %v2646 = vand.u32 %v2645, 4294901760
        %2647 = vmatmul.mubr.f32.gmra.mrb[0].mxu0 %v2646
        %v2648 = vpop.f32.mrb[0].mxu0
        %v2649 = vadd.f32 %v2108, %v2648
        %v2650 = vpop.f32.mrb[0].mxu0
        %2651 = vmatprep.mubr.f32.mxu0 0.0
        %v2652 = vand.u32 %v573, 4294901760
        %v2653 = vsub.f32 %v573, %v2652
        %v2654 = vand.u32 %v2653, 4294901760
        %2655 = vmatmul.mubr.f32.gmra.mrb[0].mxu0 %v2654
        %v2656 = vpop.f32.mrb[0].mxu0
        %v2657 = vadd.f32 %v2115, %v2656
        %v2658 = vpop.f32.mrb[0].mxu0
        %2659 = vmatprep.mubr.f32.mxu0 0.0
        %v2660 = vand.u32 %v576, 4294901760
        %v2661 = vsub.f32 %v576, %v2660
        %v2662 = vand.u32 %v2661, 4294901760
        %2663 = vmatmul.mubr.f32.gmra.mrb[0].mxu0 %v2662
        %v2664 = vpop.f32.mrb[0].mxu0
        %v2665 = vadd.f32 %v2122, %v2664
        %v2666 = vpop.f32.mrb[0].mxu0
        %2667 = vmatprep.mubr.f32.mxu0 0.0
        %v2668 = vand.u32 %v579, 4294901760
        %v2669 = vsub.f32 %v579, %v2668
        %v2670 = vand.u32 %v2669, 4294901760
        %2671 = vmatmul.mubr.f32.gmra.mrb[0].mxu0 %v2670
        %v2672 = vpop.f32.mrb[0].mxu0
        %v2673 = vadd.f32 %v2129, %v2672
        %v2674 = vpop.f32.mrb[0].mxu0
        %2675 = vmatprep.mubr.f32.mxu0 0.0
        %v2676 = vand.u32 %v582, 4294901760
        %v2677 = vsub.f32 %v582, %v2676
        %v2678 = vand.u32 %v2677, 4294901760
        %2679 = vmatmul.mubr.f32.gmra.mrb[0].mxu0 %v2678
        %v2680 = vpop.f32.mrb[0].mxu0
        %v2681 = vadd.f32 %v2136, %v2680
        %v2682 = vpop.f32.mrb[0].mxu0
        %2683 = vmatprep.mubr.f32.mxu0 0.0
        %v2684 = vand.u32 %v585, 4294901760
        %v2685 = vsub.f32 %v585, %v2684
        %v2686 = vand.u32 %v2685, 4294901760
        %2687 = vmatmul.mubr.f32.gmra.mrb[0].mxu0 %v2686
        %v2688 = vpop.f32.mrb[0].mxu0
        %v2689 = vadd.f32 %v2143, %v2688
        %v2690 = vpop.f32.mrb[0].mxu0
        %2691 = vmatprep.mubr.f32.mxu0 0.0
        %v2692 = vand.u32 %v588, 4294901760
        %v2693 = vsub.f32 %v588, %v2692
        %v2694 = vand.u32 %v2693, 4294901760
        %2695 = vmatmul.mubr.f32.gmra.mrb[0].mxu0 %v2694
        %v2696 = vpop.f32.mrb[0].mxu0
        %v2697 = vadd.f32 %v2150, %v2696
        %v2698 = vpop.f32.mrb[0].mxu0
        %2699 = vmatprep.mubr.f32.mxu0 0.0
        %v2700 = vand.u32 %v591, 4294901760
        %v2701 = vsub.f32 %v591, %v2700
        %v2702 = vand.u32 %v2701, 4294901760
        %2703 = vmatmul.mubr.f32.gmra.mrb[0].mxu0 %v2702
        %v2704 = vpop.f32.mrb[0].mxu0
        %v2705 = vadd.f32 %v2157, %v2704
        %v2706 = vpop.f32.mrb[0].mxu0
        %2707 = vmatprep.mubr.f32.mxu0 0.0
        %v2708 = vand.u32 %v594, 4294901760
        %v2709 = vsub.f32 %v594, %v2708
        %v2710 = vand.u32 %v2709, 4294901760
        %2711 = vmatmul.mubr.f32.gmra.mrb[0].mxu0 %v2710
        %v2712 = vpop.f32.mrb[0].mxu0
        %v2713 = vadd.f32 %v2164, %v2712
        %v2714 = vpop.f32.mrb[0].mxu0
        %2715 = vmatprep.mubr.f32.mxu0 0.0
        %v2716 = vand.u32 %v597, 4294901760
        %v2717 = vsub.f32 %v597, %v2716
        %v2718 = vand.u32 %v2717, 4294901760
        %2719 = vmatmul.mubr.f32.gmra.mrb[0].mxu0 %v2718
        %v2720 = vpop.f32.mrb[0].mxu0
        %v2721 = vadd.f32 %v2171, %v2720
        %v2722 = vpop.f32.mrb[0].mxu0
        %2723 = vmatprep.mubr.f32.mxu0 0.0
        %v2724 = vand.u32 %v600, 4294901760
        %v2725 = vsub.f32 %v600, %v2724
        %v2726 = vand.u32 %v2725, 4294901760
        %2727 = vmatmul.mubr.f32.gmra.mrb[0].mxu0 %v2726
        %v2728 = vpop.f32.mrb[0].mxu0
        %v2729 = vadd.f32 %v2178, %v2728
        %v2730 = vpop.f32.mrb[0].mxu0
        %2731 = vmatprep.mubr.f32.mxu0 0.0
        %v2732 = vand.u32 %v603, 4294901760
        %v2733 = vsub.f32 %v603, %v2732
        %v2734 = vand.u32 %v2733, 4294901760
        %2735 = vmatmul.mubr.f32.gmra.mrb[0].mxu0 %v2734
        %v2736 = vpop.f32.mrb[0].mxu0
        %v2737 = vadd.f32 %v2185, %v2736
        %v2738 = vpop.f32.mrb[0].mxu0
        %2739 = vmatprep.mubr.f32.mxu0 0.0
        %v2740 = vand.u32 %v606, 4294901760
        %v2741 = vsub.f32 %v606, %v2740
        %v2742 = vand.u32 %v2741, 4294901760
        %2743 = vmatmul.mubr.f32.gmra.mrb[0].mxu0 %v2742
        %v2744 = vpop.f32.mrb[0].mxu0
        %v2745 = vadd.f32 %v2192, %v2744
        %v2746 = vpop.f32.mrb[0].mxu0
        %2747 = vmatprep.mubr.f32.mxu0 0.0
        %v2748 = vand.u32 %v609, 4294901760
        %v2749 = vsub.f32 %v609, %v2748
        %v2750 = vand.u32 %v2749, 4294901760
        %2751 = vmatmul.mubr.f32.gmra.mrb[0].mxu0 %v2750
        %v2752 = vpop.f32.mrb[0].mxu0
        %v2753 = vadd.f32 %v2199, %v2752
        %v2754 = vpop.f32.mrb[0].mxu0
        %2755 = vmatprep.mubr.f32.mxu0 0.0
        %v2756 = vand.u32 %v612, 4294901760
        %v2757 = vsub.f32 %v612, %v2756
        %v2758 = vand.u32 %v2757, 4294901760
        %2759 = vmatmul.mubr.f32.gmra.mrb[0].mxu0 %v2758
        %v2760 = vpop.f32.mrb[0].mxu0
        %v2761 = vadd.f32 %v2206, %v2760
        %v2762 = vpop.f32.mrb[0].mxu0
        %2763 = vmatprep.mubr.f32.mxu0 0.0
        %v2764 = vand.u32 %v615, 4294901760
        %v2765 = vsub.f32 %v615, %v2764
        %v2766 = vand.u32 %v2765, 4294901760
        %2767 = vmatmul.mubr.f32.gmra.mrb[0].mxu0 %v2766
        %v2768 = vpop.f32.mrb[0].mxu0
        %v2769 = vadd.f32 %v2213, %v2768
        %v2770 = vpop.f32.mrb[0].mxu0
        %2771 = vmatprep.mubr.f32.mxu0 0.0
        %v2772 = vand.u32 %v618, 4294901760
        %v2773 = vsub.f32 %v618, %v2772
        %v2774 = vand.u32 %v2773, 4294901760
        %2775 = vmatmul.mubr.f32.gmra.mrb[0].mxu0 %v2774
        %v2776 = vpop.f32.mrb[0].mxu0
        %v2777 = vadd.f32 %v2220, %v2776
        %v2778 = vpop.f32.mrb[0].mxu0
        %2779 = vmatprep.mubr.f32.mxu0 0.0
        %v2780 = vand.u32 %v621, 4294901760
        %v2781 = vsub.f32 %v621, %v2780
        %v2782 = vand.u32 %v2781, 4294901760
        %2783 = vmatmul.mubr.f32.gmra.mrb[0].mxu0 %v2782
        %v2784 = vpop.f32.mrb[0].mxu0
        %v2785 = vadd.f32 %v2227, %v2784
        %v2786 = vpop.f32.mrb[0].mxu0
        %2787 = vmatprep.mubr.f32.mxu0 0.0
        %v2788 = vand.u32 %v624, 4294901760
        %v2789 = vsub.f32 %v624, %v2788
        %v2790 = vand.u32 %v2789, 4294901760
        %2791 = vmatmul.mubr.f32.gmra.mrb[0].mxu0 %v2790
        %v2792 = vpop.f32.mrb[0].mxu0
        %v2793 = vadd.f32 %v2234, %v2792
        %v2794 = vpop.f32.mrb[0].mxu0
        %2795 = vmatprep.mubr.f32.mxu0 0.0
        %v2796 = vand.u32 %v627, 4294901760
        %v2797 = vsub.f32 %v627, %v2796
        %v2798 = vand.u32 %v2797, 4294901760
        %2799 = vmatmul.mubr.f32.gmra.mrb[0].mxu0 %v2798
        %v2800 = vpop.f32.mrb[0].mxu0
        %v2801 = vadd.f32 %v2241, %v2800
        %v2802 = vpop.f32.mrb[0].mxu0
        %2803 = vmatprep.mubr.f32.mxu0 0.0
        %v2804 = vand.u32 %v630, 4294901760
        %v2805 = vsub.f32 %v630, %v2804
        %v2806 = vand.u32 %v2805, 4294901760
        %2807 = vmatmul.mubr.f32.gmra.mrb[0].mxu0 %v2806
        %v2808 = vpop.f32.mrb[0].mxu0
        %v2809 = vadd.f32 %v2248, %v2808
        %v2810 = vpop.f32.mrb[0].mxu0
        %2811 = vmatprep.mubr.f32.mxu0 0.0
        %v2812 = vand.u32 %v633, 4294901760
        %v2813 = vsub.f32 %v633, %v2812
        %v2814 = vand.u32 %v2813, 4294901760
        %2815 = vmatmul.mubr.f32.gmra.mrb[0].mxu0 %v2814
        %v2816 = vpop.f32.mrb[0].mxu0
        %v2817 = vadd.f32 %v2255, %v2816
        %v2818 = vpop.f32.mrb[0].mxu0
        %2819 = vmatprep.mubr.f32.mxu0 0.0
        %v2820 = vand.u32 %v636, 4294901760
        %v2821 = vsub.f32 %v636, %v2820
        %v2822 = vand.u32 %v2821, 4294901760
        %2823 = vmatmul.mubr.f32.gmra.mrb[0].mxu0 %v2822
        %v2824 = vpop.f32.mrb[0].mxu0
        %v2825 = vadd.f32 %v2262, %v2824
        %v2826 = vpop.f32.mrb[0].mxu0
        %2827 = vmatprep.mubr.f32.mxu0 0.0
        %v2828 = vand.u32 %v639, 4294901760
        %v2829 = vsub.f32 %v639, %v2828
        %v2830 = vand.u32 %v2829, 4294901760
        %2831 = vmatmul.mubr.f32.gmra.mrb[0].mxu0 %v2830
        %v2832 = vpop.f32.mrb[0].mxu0
        %v2833 = vadd.f32 %v2269, %v2832
        %v2834 = vpop.f32.mrb[0].mxu0
        %2835 = vmatprep.mubr.f32.mxu0 0.0
        %v2836 = vand.u32 %v642, 4294901760
        %v2837 = vsub.f32 %v642, %v2836
        %v2838 = vand.u32 %v2837, 4294901760
        %2839 = vmatmul.mubr.f32.gmra.mrb[0].mxu0 %v2838
        %v2840 = vpop.f32.mrb[0].mxu0
        %v2841 = vadd.f32 %v2276, %v2840
        %v2842 = vpop.f32.mrb[0].mxu0
        %2843 = vmatprep.mubr.f32.mxu0 0.0
        %v2844 = vand.u32 %v645, 4294901760
        %v2845 = vsub.f32 %v645, %v2844
        %v2846 = vand.u32 %v2845, 4294901760
        %2847 = vmatmul.mubr.f32.gmra.mrb[0].mxu0 %v2846
        %v2848 = vpop.f32.mrb[0].mxu0
        %v2849 = vadd.f32 %v2283, %v2848
        %v2850 = vpop.f32.mrb[0].mxu0
        %2851 = vmatprep.mubr.f32.mxu0 0.0
        %v2852 = vand.u32 %v648, 4294901760
        %v2853 = vsub.f32 %v648, %v2852
        %v2854 = vand.u32 %v2853, 4294901760
        %2855 = vmatmul.mubr.f32.gmra.mrb[0].mxu0 %v2854
        %v2856 = vpop.f32.mrb[0].mxu0
        %v2857 = vadd.f32 %v2290, %v2856
        %v2858 = vpop.f32.mrb[0].mxu0
        %2859 = vmatprep.mubr.f32.mxu0 0.0
        %v2860 = vand.u32 %v651, 4294901760
        %v2861 = vsub.f32 %v651, %v2860
        %v2862 = vand.u32 %v2861, 4294901760
        %2863 = vmatmul.mubr.f32.gmra.mrb[0].mxu0 %v2862
        %v2864 = vpop.f32.mrb[0].mxu0
        %v2865 = vadd.f32 %v2297, %v2864
        %v2866 = vpop.f32.mrb[0].mxu0
        %2867 = vmatprep.mubr.f32.mxu0 0.0
        %v2868 = vand.u32 %v654, 4294901760
        %v2869 = vsub.f32 %v654, %v2868
        %v2870 = vand.u32 %v2869, 4294901760
        %2871 = vmatmul.mubr.f32.gmra.mrb[0].mxu0 %v2870
        %v2872 = vpop.f32.mrb[0].mxu0
        %v2873 = vadd.f32 %v2304, %v2872
        %v2874 = vpop.f32.mrb[0].mxu0
        %2875 = vmatprep.mubr.f32.mxu0 0.0
        %v2876 = vand.u32 %v657, 4294901760
        %v2877 = vsub.f32 %v657, %v2876
        %v2878 = vand.u32 %v2877, 4294901760
        %2879 = vmatmul.mubr.f32.gmra.mrb[0].mxu0 %v2878
        %v2880 = vpop.f32.mrb[0].mxu0
        %v2881 = vadd.f32 %v2311, %v2880
        %v2882 = vpop.f32.mrb[0].mxu0
        %2883 = vmatprep.mubr.f32.mxu0 0.0
        %v2884 = vand.u32 %v660, 4294901760
        %v2885 = vsub.f32 %v660, %v2884
        %v2886 = vand.u32 %v2885, 4294901760
        %2887 = vmatmul.mubr.f32.gmra.mrb[0].mxu0 %v2886
        %v2888 = vpop.f32.mrb[0].mxu0
        %v2889 = vadd.f32 %v2318, %v2888
        %v2890 = vpop.f32.mrb[0].mxu0
        %2891 = vmatprep.mubr.f32.mxu0 0.0
        %v2892 = vand.u32 %v663, 4294901760
        %v2893 = vsub.f32 %v663, %v2892
        %v2894 = vand.u32 %v2893, 4294901760
        %2895 = vmatmul.mubr.f32.gmra.mrb[0].mxu0 %v2894
        %v2896 = vpop.f32.mrb[0].mxu0
        %v2897 = vadd.f32 %v2325, %v2896
        %v2898 = vpop.f32.mrb[0].mxu0
        %2899 = vmatprep.mubr.f32.mxu0 0.0
        %v2900 = vand.u32 %v666, 4294901760
        %v2901 = vsub.f32 %v666, %v2900
        %v2902 = vand.u32 %v2901, 4294901760
        %2903 = vmatmul.mubr.f32.gmra.mrb[0].mxu0 %v2902
        %v2904 = vpop.f32.mrb[0].mxu0
        %v2905 = vadd.f32 %v2332, %v2904
        %v2906 = vpop.f32.mrb[0].mxu0
        %2907 = vmatprep.mubr.f32.mxu0 0.0
        %v2908 = vand.u32 %v669, 4294901760
        %v2909 = vsub.f32 %v669, %v2908
        %v2910 = vand.u32 %v2909, 4294901760
        %2911 = vmatmul.mubr.f32.gmra.mrb[0].mxu0 %v2910
        %v2912 = vpop.f32.mrb[0].mxu0
        %v2913 = vadd.f32 %v2339, %v2912
        %v2914 = vpop.f32.mrb[0].mxu0
        %2915 = vmatprep.mubr.f32.mxu0 0.0
        %v2916 = vand.u32 %v672, 4294901760
        %v2917 = vsub.f32 %v672, %v2916
        %v2918 = vand.u32 %v2917, 4294901760
        %2919 = vmatmul.mubr.f32.gmra.mrb[0].mxu0 %v2918
        %v2920 = vpop.f32.mrb[0].mxu0
        %v2921 = vadd.f32 %v2346, %v2920
        %v2922 = vpop.f32.mrb[0].mxu0
        %2923 = vmatprep.mubr.f32.mxu0 0.0
        %v2924 = vand.u32 %v675, 4294901760
        %v2925 = vsub.f32 %v675, %v2924
        %v2926 = vand.u32 %v2925, 4294901760
        %2927 = vmatmul.mubr.f32.gmra.mrb[0].mxu0 %v2926
        %v2928 = vpop.f32.mrb[0].mxu0
        %v2929 = vadd.f32 %v2353, %v2928
        %v2930 = vpop.f32.mrb[0].mxu0
        %2931 = vmatprep.mubr.f32.mxu0 0.0
        %v2932 = vand.u32 %v678, 4294901760
        %v2933 = vsub.f32 %v678, %v2932
        %v2934 = vand.u32 %v2933, 4294901760
        %2935 = vmatmul.mubr.f32.gmra.mrb[0].mxu0 %v2934
        %v2936 = vpop.f32.mrb[0].mxu0
        %v2937 = vadd.f32 %v2360, %v2936
        %v2938 = vpop.f32.mrb[0].mxu0
        %2939 = vmatprep.mubr.f32.mxu0 0.0
        %v2940 = vand.u32 %v681, 4294901760
        %v2941 = vsub.f32 %v681, %v2940
        %v2942 = vand.u32 %v2941, 4294901760
        %2943 = vmatmul.mubr.f32.gmra.mrb[0].mxu0 %v2942
        %v2944 = vpop.f32.mrb[0].mxu0
        %v2945 = vadd.f32 %v2367, %v2944
        %v2946 = vpop.f32.mrb[0].mxu0
        %2947 = vmatprep.mubr.f32.mxu0 0.0
        %v2948 = vand.u32 %v684, 4294901760
        %v2949 = vsub.f32 %v684, %v2948
        %v2950 = vand.u32 %v2949, 4294901760
        %2951 = vmatmul.mubr.f32.gmra.mrb[0].mxu0 %v2950
        %v2952 = vpop.f32.mrb[0].mxu0
        %v2953 = vadd.f32 %v2374, %v2952
        %v2954 = vpop.f32.mrb[0].mxu0
        %2955 = vmatprep.mubr.f32.mxu0 0.0
        %v2956 = vand.u32 %v687, 4294901760
        %v2957 = vsub.f32 %v687, %v2956
        %v2958 = vand.u32 %v2957, 4294901760
        %2959 = vmatmul.mubr.f32.gmra.mrb[0].mxu0 %v2958
        %v2960 = vpop.f32.mrb[0].mxu0
        %v2961 = vadd.f32 %v2381, %v2960
        %v2962 = vpop.f32.mrb[0].mxu0
        %2963 = vmatprep.mubr.f32.mxu0 0.0
        %v2964 = vand.u32 %v690, 4294901760
        %v2965 = vsub.f32 %v690, %v2964
        %v2966 = vand.u32 %v2965, 4294901760
        %2967 = vmatmul.mubr.f32.gmra.mrb[0].mxu0 %v2966
        %v2968 = vpop.f32.mrb[0].mxu0
        %v2969 = vadd.f32 %v2388, %v2968
        %v2970 = vpop.f32.mrb[0].mxu0
        %2971 = vdwg.mxu0
        %2972 = vmatprep.subr.mxu0 0.0
        %v2973 = vand.u32 %v488, 4294901760
        %v2974 = vsub.f32 %v488, %v2973
        %v2975 = vand.u32 %v2974, 4294901760
        %2976 = vmatpush1.msra.mxu0 %v2975
        %2977 = vmatprep.subr.mxu0 0.0
        %v2978 = vand.u32 %v489, 4294901760
        %v2979 = vsub.f32 %v489, %v2978
        %v2980 = vand.u32 %v2979, 4294901760
        %2981 = vmatpush1.msra.mxu0 %v2980
        %2982 = vmatprep.subr.mxu0 0.0
        %v2983 = vand.u32 %v490, 4294901760
        %v2984 = vsub.f32 %v490, %v2983
        %v2985 = vand.u32 %v2984, 4294901760
        %2986 = vmatpush1.msra.mxu0 %v2985
        %2987 = vmatprep.subr.mxu0 0.0
        %v2988 = vand.u32 %v491, 4294901760
        %v2989 = vsub.f32 %v491, %v2988
        %v2990 = vand.u32 %v2989, 4294901760
        %2991 = vmatpush1.msra.mxu0 %v2990
        %2992 = vmatprep.subr.mxu0 0.0
        %2993 = vmatpush1.msra.mxu0 0.0
        %2994 = vmatprep.subr.mxu0 0.0
        %2995 = vmatpush1.msra.mxu0 0.0
        %2996 = vmatprep.subr.mxu0 0.0
        %2997 = vmatpush1.msra.mxu0 0.0
        %2998 = vmatprep.subr.mxu0 0.0
        %2999 = vmatpush1.msra.mxu0 0.0
        %3000 = vmatprep.subr.mxu0 0.0
        %3001 = vmatpush1.msra.mxu0 0.0
        %3002 = vmatprep.subr.mxu0 0.0
        %3003 = vmatpush1.msra.mxu0 0.0
        %3004 = vmatprep.subr.mxu0 0.0
        %3005 = vmatpush1.msra.mxu0 0.0
        %3006 = vmatprep.subr.mxu0 0.0
        %3007 = vmatpush1.msra.mxu0 0.0
        %3008 = vmatprep.subr.mxu0 0.0
        %3009 = vmatpush1.msra.mxu0 0.0
        %3010 = vmatprep.subr.mxu0 0.0
        %3011 = vmatpush1.msra.mxu0 0.0
        %3012 = vmatprep.subr.mxu0 0.0
        %3013 = vmatpush1.msra.mxu0 0.0
        %3014 = vmatprep.subr.mxu0 0.0
        %3015 = vmatpush1.msra.mxu0 0.0
        %3016 = vmatprep.subr.mxu0 0.0
        %3017 = vmatpush1.msra.mxu0 0.0
        %3018 = vmatprep.subr.mxu0 0.0
        %3019 = vmatpush1.msra.mxu0 0.0
        %3020 = vmatprep.subr.mxu0 0.0
        %3021 = vmatpush1.msra.mxu0 0.0
        %3022 = vmatprep.subr.mxu0 0.0
        %3023 = vmatpush1.msra.mxu0 0.0
        %3024 = vmatprep.subr.mxu0 0.0
        %3025 = vmatpush1.msra.mxu0 0.0
        %3026 = vmatprep.subr.mxu0 0.0
        %3027 = vmatpush1.msra.mxu0 0.0
        %3028 = vmatprep.subr.mxu0 0.0
        %3029 = vmatpush1.msra.mxu0 0.0
        %3030 = vmatprep.subr.mxu0 0.0
        %3031 = vmatpush1.msra.mxu0 0.0
        %3032 = vmatprep.subr.mxu0 0.0
        %3033 = vmatpush1.msra.mxu0 0.0
        %3034 = vmatprep.subr.mxu0 0.0
        %3035 = vmatpush1.msra.mxu0 0.0
        %3036 = vmatprep.subr.mxu0 0.0
        %3037 = vmatpush1.msra.mxu0 0.0
        %3038 = vmatprep.subr.mxu0 0.0
        %3039 = vmatpush1.msra.mxu0 0.0
        %3040 = vmatprep.subr.mxu0 0.0
        %3041 = vmatpush1.msra.mxu0 0.0
        %3042 = vmatprep.subr.mxu0 0.0
        %3043 = vmatpush1.msra.mxu0 0.0
        %3044 = vmatprep.subr.mxu0 0.0
        %3045 = vmatpush1.msra.mxu0 0.0
        %3046 = vmatprep.subr.mxu0 0.0
        %3047 = vmatpush1.msra.mxu0 0.0
        %3048 = vmatprep.mubr.f32.mxu0 0.0
        %v3049 = vand.u32 %v501, 4294901760
        %3050 = vmatmul.mubr.f32.gmra.mrb[0].mxu0 %v3049
        %v3051 = vpop.f32.mrb[0].mxu0
        %v3052 = vadd.f32 %v2465, %v3051
        %v3053 = vpop.f32.mrb[0].mxu0
        %3054 = vmatprep.mubr.f32.mxu0 0.0
        %v3055 = vand.u32 %v504, 4294901760
        %3056 = vmatmul.mubr.f32.gmra.mrb[0].mxu0 %v3055
        %v3057 = vpop.f32.mrb[0].mxu0
        %v3058 = vadd.f32 %v2473, %v3057
        %v3059 = vpop.f32.mrb[0].mxu0
        %3060 = vmatprep.mubr.f32.mxu0 0.0
        %v3061 = vand.u32 %v507, 4294901760
        %3062 = vmatmul.mubr.f32.gmra.mrb[0].mxu0 %v3061
        %v3063 = vpop.f32.mrb[0].mxu0
        %v3064 = vadd.f32 %v2481, %v3063
        %v3065 = vpop.f32.mrb[0].mxu0
        %3066 = vmatprep.mubr.f32.mxu0 0.0
        %v3067 = vand.u32 %v510, 4294901760
        %3068 = vmatmul.mubr.f32.gmra.mrb[0].mxu0 %v3067
        %v3069 = vpop.f32.mrb[0].mxu0
        %v3070 = vadd.f32 %v2489, %v3069
        %v3071 = vpop.f32.mrb[0].mxu0
        %3072 = vmatprep.mubr.f32.mxu0 0.0
        %v3073 = vand.u32 %v513, 4294901760
        %3074 = vmatmul.mubr.f32.gmra.mrb[0].mxu0 %v3073
        %v3075 = vpop.f32.mrb[0].mxu0
        %v3076 = vadd.f32 %v2497, %v3075
        %v3077 = vpop.f32.mrb[0].mxu0
        %3078 = vmatprep.mubr.f32.mxu0 0.0
        %v3079 = vand.u32 %v516, 4294901760
        %3080 = vmatmul.mubr.f32.gmra.mrb[0].mxu0 %v3079
        %v3081 = vpop.f32.mrb[0].mxu0
        %v3082 = vadd.f32 %v2505, %v3081
        %v3083 = vpop.f32.mrb[0].mxu0
        %3084 = vmatprep.mubr.f32.mxu0 0.0
        %v3085 = vand.u32 %v519, 4294901760
        %3086 = vmatmul.mubr.f32.gmra.mrb[0].mxu0 %v3085
        %v3087 = vpop.f32.mrb[0].mxu0
        %v3088 = vadd.f32 %v2513, %v3087
        %v3089 = vpop.f32.mrb[0].mxu0
        %3090 = vmatprep.mubr.f32.mxu0 0.0
        %v3091 = vand.u32 %v522, 4294901760
        %3092 = vmatmul.mubr.f32.gmra.mrb[0].mxu0 %v3091
        %v3093 = vpop.f32.mrb[0].mxu0
        %v3094 = vadd.f32 %v2521, %v3093
        %v3095 = vpop.f32.mrb[0].mxu0
        %3096 = vmatprep.mubr.f32.mxu0 0.0
        %v3097 = vand.u32 %v525, 4294901760
        %3098 = vmatmul.mubr.f32.gmra.mrb[0].mxu0 %v3097
        %v3099 = vpop.f32.mrb[0].mxu0
        %v3100 = vadd.f32 %v2529, %v3099
        %v3101 = vpop.f32.mrb[0].mxu0
        %3102 = vmatprep.mubr.f32.mxu0 0.0
        %v3103 = vand.u32 %v528, 4294901760
        %3104 = vmatmul.mubr.f32.gmra.mrb[0].mxu0 %v3103
        %v3105 = vpop.f32.mrb[0].mxu0
        %v3106 = vadd.f32 %v2537, %v3105
        %v3107 = vpop.f32.mrb[0].mxu0
        %3108 = vmatprep.mubr.f32.mxu0 0.0
        %v3109 = vand.u32 %v531, 4294901760
        %3110 = vmatmul.mubr.f32.gmra.mrb[0].mxu0 %v3109
        %v3111 = vpop.f32.mrb[0].mxu0
        %v3112 = vadd.f32 %v2545, %v3111
        %v3113 = vpop.f32.mrb[0].mxu0
        %3114 = vmatprep.mubr.f32.mxu0 0.0
        %v3115 = vand.u32 %v534, 4294901760
        %3116 = vmatmul.mubr.f32.gmra.mrb[0].mxu0 %v3115
        %v3117 = vpop.f32.mrb[0].mxu0
        %v3118 = vadd.f32 %v2553, %v3117
        %v3119 = vpop.f32.mrb[0].mxu0
        %3120 = vmatprep.mubr.f32.mxu0 0.0
        %v3121 = vand.u32 %v537, 4294901760
        %3122 = vmatmul.mubr.f32.gmra.mrb[0].mxu0 %v3121
        %v3123 = vpop.f32.mrb[0].mxu0
        %v3124 = vadd.f32 %v2561, %v3123
        %v3125 = vpop.f32.mrb[0].mxu0
        %3126 = vmatprep.mubr.f32.mxu0 0.0
        %v3127 = vand.u32 %v540, 4294901760
        %3128 = vmatmul.mubr.f32.gmra.mrb[0].mxu0 %v3127
        %v3129 = vpop.f32.mrb[0].mxu0
        %v3130 = vadd.f32 %v2569, %v3129
        %v3131 = vpop.f32.mrb[0].mxu0
        %3132 = vmatprep.mubr.f32.mxu0 0.0
        %v3133 = vand.u32 %v543, 4294901760
        %3134 = vmatmul.mubr.f32.gmra.mrb[0].mxu0 %v3133
        %v3135 = vpop.f32.mrb[0].mxu0
        %v3136 = vadd.f32 %v2577, %v3135
        %v3137 = vpop.f32.mrb[0].mxu0
        %3138 = vmatprep.mubr.f32.mxu0 0.0
        %v3139 = vand.u32 %v546, 4294901760
        %3140 = vmatmul.mubr.f32.gmra.mrb[0].mxu0 %v3139
        %v3141 = vpop.f32.mrb[0].mxu0
        %v3142 = vadd.f32 %v2585, %v3141
        %v3143 = vpop.f32.mrb[0].mxu0
        %3144 = vmatprep.mubr.f32.mxu0 0.0
        %v3145 = vand.u32 %v549, 4294901760
        %3146 = vmatmul.mubr.f32.gmra.mrb[0].mxu0 %v3145
        %v3147 = vpop.f32.mrb[0].mxu0
        %v3148 = vadd.f32 %v2593, %v3147
        %v3149 = vpop.f32.mrb[0].mxu0
        %3150 = vmatprep.mubr.f32.mxu0 0.0
        %v3151 = vand.u32 %v552, 4294901760
        %3152 = vmatmul.mubr.f32.gmra.mrb[0].mxu0 %v3151
        %v3153 = vpop.f32.mrb[0].mxu0
        %v3154 = vadd.f32 %v2601, %v3153
        %v3155 = vpop.f32.mrb[0].mxu0
        %3156 = vmatprep.mubr.f32.mxu0 0.0
        %v3157 = vand.u32 %v555, 4294901760
        %3158 = vmatmul.mubr.f32.gmra.mrb[0].mxu0 %v3157
        %v3159 = vpop.f32.mrb[0].mxu0
        %v3160 = vadd.f32 %v2609, %v3159
        %v3161 = vpop.f32.mrb[0].mxu0
        %3162 = vmatprep.mubr.f32.mxu0 0.0
        %v3163 = vand.u32 %v558, 4294901760
        %3164 = vmatmul.mubr.f32.gmra.mrb[0].mxu0 %v3163
        %v3165 = vpop.f32.mrb[0].mxu0
        %v3166 = vadd.f32 %v2617, %v3165
        %v3167 = vpop.f32.mrb[0].mxu0
        %3168 = vmatprep.mubr.f32.mxu0 0.0
        %v3169 = vand.u32 %v561, 4294901760
        %3170 = vmatmul.mubr.f32.gmra.mrb[0].mxu0 %v3169
        %v3171 = vpop.f32.mrb[0].mxu0
        %v3172 = vadd.f32 %v2625, %v3171
        %v3173 = vpop.f32.mrb[0].mxu0
        %3174 = vmatprep.mubr.f32.mxu0 0.0
        %v3175 = vand.u32 %v564, 4294901760
        %3176 = vmatmul.mubr.f32.gmra.mrb[0].mxu0 %v3175
        %v3177 = vpop.f32.mrb[0].mxu0
        %v3178 = vadd.f32 %v2633, %v3177
        %v3179 = vpop.f32.mrb[0].mxu0
        %3180 = vmatprep.mubr.f32.mxu0 0.0
        %v3181 = vand.u32 %v567, 4294901760
        %3182 = vmatmul.mubr.f32.gmra.mrb[0].mxu0 %v3181
        %v3183 = vpop.f32.mrb[0].mxu0
        %v3184 = vadd.f32 %v2641, %v3183
        %v3185 = vpop.f32.mrb[0].mxu0
        %3186 = vmatprep.mubr.f32.mxu0 0.0
        %v3187 = vand.u32 %v570, 4294901760
        %3188 = vmatmul.mubr.f32.gmra.mrb[0].mxu0 %v3187
        %v3189 = vpop.f32.mrb[0].mxu0
        %v3190 = vadd.f32 %v2649, %v3189
        %v3191 = vpop.f32.mrb[0].mxu0
        %3192 = vmatprep.mubr.f32.mxu0 0.0
        %v3193 = vand.u32 %v573, 4294901760
        %3194 = vmatmul.mubr.f32.gmra.mrb[0].mxu0 %v3193
        %v3195 = vpop.f32.mrb[0].mxu0
        %v3196 = vadd.f32 %v2657, %v3195
        %v3197 = vpop.f32.mrb[0].mxu0
        %3198 = vmatprep.mubr.f32.mxu0 0.0
        %v3199 = vand.u32 %v576, 4294901760
        %3200 = vmatmul.mubr.f32.gmra.mrb[0].mxu0 %v3199
        %v3201 = vpop.f32.mrb[0].mxu0
        %v3202 = vadd.f32 %v2665, %v3201
        %v3203 = vpop.f32.mrb[0].mxu0
        %3204 = vmatprep.mubr.f32.mxu0 0.0
        %v3205 = vand.u32 %v579, 4294901760
        %3206 = vmatmul.mubr.f32.gmra.mrb[0].mxu0 %v3205
        %v3207 = vpop.f32.mrb[0].mxu0
        %v3208 = vadd.f32 %v2673, %v3207
        %v3209 = vpop.f32.mrb[0].mxu0
        %3210 = vmatprep.mubr.f32.mxu0 0.0
        %v3211 = vand.u32 %v582, 4294901760
        %3212 = vmatmul.mubr.f32.gmra.mrb[0].mxu0 %v3211
        %v3213 = vpop.f32.mrb[0].mxu0
        %v3214 = vadd.f32 %v2681, %v3213
        %v3215 = vpop.f32.mrb[0].mxu0
        %3216 = vmatprep.mubr.f32.mxu0 0.0
        %v3217 = vand.u32 %v585, 4294901760
        %3218 = vmatmul.mubr.f32.gmra.mrb[0].mxu0 %v3217
        %v3219 = vpop.f32.mrb[0].mxu0
        %v3220 = vadd.f32 %v2689, %v3219
        %v3221 = vpop.f32.mrb[0].mxu0
        %3222 = vmatprep.mubr.f32.mxu0 0.0
        %v3223 = vand.u32 %v588, 4294901760
        %3224 = vmatmul.mubr.f32.gmra.mrb[0].mxu0 %v3223
        %v3225 = vpop.f32.mrb[0].mxu0
        %v3226 = vadd.f32 %v2697, %v3225
        %v3227 = vpop.f32.mrb[0].mxu0
        %3228 = vmatprep.mubr.f32.mxu0 0.0
        %v3229 = vand.u32 %v591, 4294901760
        %3230 = vmatmul.mubr.f32.gmra.mrb[0].mxu0 %v3229
        %v3231 = vpop.f32.mrb[0].mxu0
        %v3232 = vadd.f32 %v2705, %v3231
        %v3233 = vpop.f32.mrb[0].mxu0
        %3234 = vmatprep.mubr.f32.mxu0 0.0
        %v3235 = vand.u32 %v594, 4294901760
        %3236 = vmatmul.mubr.f32.gmra.mrb[0].mxu0 %v3235
        %v3237 = vpop.f32.mrb[0].mxu0
        %v3238 = vadd.f32 %v2713, %v3237
        %v3239 = vpop.f32.mrb[0].mxu0
        %3240 = vmatprep.mubr.f32.mxu0 0.0
        %v3241 = vand.u32 %v597, 4294901760
        %3242 = vmatmul.mubr.f32.gmra.mrb[0].mxu0 %v3241
        %v3243 = vpop.f32.mrb[0].mxu0
        %v3244 = vadd.f32 %v2721, %v3243
        %v3245 = vpop.f32.mrb[0].mxu0
        %3246 = vmatprep.mubr.f32.mxu0 0.0
        %v3247 = vand.u32 %v600, 4294901760
        %3248 = vmatmul.mubr.f32.gmra.mrb[0].mxu0 %v3247
        %v3249 = vpop.f32.mrb[0].mxu0
        %v3250 = vadd.f32 %v2729, %v3249
        %v3251 = vpop.f32.mrb[0].mxu0
        %3252 = vmatprep.mubr.f32.mxu0 0.0
        %v3253 = vand.u32 %v603, 4294901760
        %3254 = vmatmul.mubr.f32.gmra.mrb[0].mxu0 %v3253
        %v3255 = vpop.f32.mrb[0].mxu0
        %v3256 = vadd.f32 %v2737, %v3255
        %v3257 = vpop.f32.mrb[0].mxu0
        %3258 = vmatprep.mubr.f32.mxu0 0.0
        %v3259 = vand.u32 %v606, 4294901760
        %3260 = vmatmul.mubr.f32.gmra.mrb[0].mxu0 %v3259
        %v3261 = vpop.f32.mrb[0].mxu0
        %v3262 = vadd.f32 %v2745, %v3261
        %v3263 = vpop.f32.mrb[0].mxu0
        %3264 = vmatprep.mubr.f32.mxu0 0.0
        %v3265 = vand.u32 %v609, 4294901760
        %3266 = vmatmul.mubr.f32.gmra.mrb[0].mxu0 %v3265
        %v3267 = vpop.f32.mrb[0].mxu0
        %v3268 = vadd.f32 %v2753, %v3267
        %v3269 = vpop.f32.mrb[0].mxu0
        %3270 = vmatprep.mubr.f32.mxu0 0.0
        %v3271 = vand.u32 %v612, 4294901760
        %3272 = vmatmul.mubr.f32.gmra.mrb[0].mxu0 %v3271
        %v3273 = vpop.f32.mrb[0].mxu0
        %v3274 = vadd.f32 %v2761, %v3273
        %v3275 = vpop.f32.mrb[0].mxu0
        %3276 = vmatprep.mubr.f32.mxu0 0.0
        %v3277 = vand.u32 %v615, 4294901760
        %3278 = vmatmul.mubr.f32.gmra.mrb[0].mxu0 %v3277
        %v3279 = vpop.f32.mrb[0].mxu0
        %v3280 = vadd.f32 %v2769, %v3279
        %v3281 = vpop.f32.mrb[0].mxu0
        %3282 = vmatprep.mubr.f32.mxu0 0.0
        %v3283 = vand.u32 %v618, 4294901760
        %3284 = vmatmul.mubr.f32.gmra.mrb[0].mxu0 %v3283
        %v3285 = vpop.f32.mrb[0].mxu0
        %v3286 = vadd.f32 %v2777, %v3285
        %v3287 = vpop.f32.mrb[0].mxu0
        %3288 = vmatprep.mubr.f32.mxu0 0.0
        %v3289 = vand.u32 %v621, 4294901760
        %3290 = vmatmul.mubr.f32.gmra.mrb[0].mxu0 %v3289
        %v3291 = vpop.f32.mrb[0].mxu0
        %v3292 = vadd.f32 %v2785, %v3291
        %v3293 = vpop.f32.mrb[0].mxu0
        %3294 = vmatprep.mubr.f32.mxu0 0.0
        %v3295 = vand.u32 %v624, 4294901760
        %3296 = vmatmul.mubr.f32.gmra.mrb[0].mxu0 %v3295
        %v3297 = vpop.f32.mrb[0].mxu0
        %v3298 = vadd.f32 %v2793, %v3297
        %v3299 = vpop.f32.mrb[0].mxu0
        %3300 = vmatprep.mubr.f32.mxu0 0.0
        %v3301 = vand.u32 %v627, 4294901760
        %3302 = vmatmul.mubr.f32.gmra.mrb[0].mxu0 %v3301
        %v3303 = vpop.f32.mrb[0].mxu0
        %v3304 = vadd.f32 %v2801, %v3303
        %v3305 = vpop.f32.mrb[0].mxu0
        %3306 = vmatprep.mubr.f32.mxu0 0.0
        %v3307 = vand.u32 %v630, 4294901760
        %3308 = vmatmul.mubr.f32.gmra.mrb[0].mxu0 %v3307
        %v3309 = vpop.f32.mrb[0].mxu0
        %v3310 = vadd.f32 %v2809, %v3309
        %v3311 = vpop.f32.mrb[0].mxu0
        %3312 = vmatprep.mubr.f32.mxu0 0.0
        %v3313 = vand.u32 %v633, 4294901760
        %3314 = vmatmul.mubr.f32.gmra.mrb[0].mxu0 %v3313
        %v3315 = vpop.f32.mrb[0].mxu0
        %v3316 = vadd.f32 %v2817, %v3315
        %v3317 = vpop.f32.mrb[0].mxu0
        %3318 = vmatprep.mubr.f32.mxu0 0.0
        %v3319 = vand.u32 %v636, 4294901760
        %3320 = vmatmul.mubr.f32.gmra.mrb[0].mxu0 %v3319
        %v3321 = vpop.f32.mrb[0].mxu0
        %v3322 = vadd.f32 %v2825, %v3321
        %v3323 = vpop.f32.mrb[0].mxu0
        %3324 = vmatprep.mubr.f32.mxu0 0.0
        %v3325 = vand.u32 %v639, 4294901760
        %3326 = vmatmul.mubr.f32.gmra.mrb[0].mxu0 %v3325
        %v3327 = vpop.f32.mrb[0].mxu0
        %v3328 = vadd.f32 %v2833, %v3327
        %v3329 = vpop.f32.mrb[0].mxu0
        %3330 = vmatprep.mubr.f32.mxu0 0.0
        %v3331 = vand.u32 %v642, 4294901760
        %3332 = vmatmul.mubr.f32.gmra.mrb[0].mxu0 %v3331
        %v3333 = vpop.f32.mrb[0].mxu0
        %v3334 = vadd.f32 %v2841, %v3333
        %v3335 = vpop.f32.mrb[0].mxu0
        %3336 = vmatprep.mubr.f32.mxu0 0.0
        %v3337 = vand.u32 %v645, 4294901760
        %3338 = vmatmul.mubr.f32.gmra.mrb[0].mxu0 %v3337
        %v3339 = vpop.f32.mrb[0].mxu0
        %v3340 = vadd.f32 %v2849, %v3339
        %v3341 = vpop.f32.mrb[0].mxu0
        %3342 = vmatprep.mubr.f32.mxu0 0.0
        %v3343 = vand.u32 %v648, 4294901760
        %3344 = vmatmul.mubr.f32.gmra.mrb[0].mxu0 %v3343
        %v3345 = vpop.f32.mrb[0].mxu0
        %v3346 = vadd.f32 %v2857, %v3345
        %v3347 = vpop.f32.mrb[0].mxu0
        %3348 = vmatprep.mubr.f32.mxu0 0.0
        %v3349 = vand.u32 %v651, 4294901760
        %3350 = vmatmul.mubr.f32.gmra.mrb[0].mxu0 %v3349
        %v3351 = vpop.f32.mrb[0].mxu0
        %v3352 = vadd.f32 %v2865, %v3351
        %v3353 = vpop.f32.mrb[0].mxu0
        %3354 = vmatprep.mubr.f32.mxu0 0.0
        %v3355 = vand.u32 %v654, 4294901760
        %3356 = vmatmul.mubr.f32.gmra.mrb[0].mxu0 %v3355
        %v3357 = vpop.f32.mrb[0].mxu0
        %v3358 = vadd.f32 %v2873, %v3357
        %v3359 = vpop.f32.mrb[0].mxu0
        %3360 = vmatprep.mubr.f32.mxu0 0.0
        %v3361 = vand.u32 %v657, 4294901760
        %3362 = vmatmul.mubr.f32.gmra.mrb[0].mxu0 %v3361
        %v3363 = vpop.f32.mrb[0].mxu0
        %v3364 = vadd.f32 %v2881, %v3363
        %v3365 = vpop.f32.mrb[0].mxu0
        %3366 = vmatprep.mubr.f32.mxu0 0.0
        %v3367 = vand.u32 %v660, 4294901760
        %3368 = vmatmul.mubr.f32.gmra.mrb[0].mxu0 %v3367
        %v3369 = vpop.f32.mrb[0].mxu0
        %v3370 = vadd.f32 %v2889, %v3369
        %v3371 = vpop.f32.mrb[0].mxu0
        %3372 = vmatprep.mubr.f32.mxu0 0.0
        %v3373 = vand.u32 %v663, 4294901760
        %3374 = vmatmul.mubr.f32.gmra.mrb[0].mxu0 %v3373
        %v3375 = vpop.f32.mrb[0].mxu0
        %v3376 = vadd.f32 %v2897, %v3375
        %v3377 = vpop.f32.mrb[0].mxu0
        %3378 = vmatprep.mubr.f32.mxu0 0.0
        %v3379 = vand.u32 %v666, 4294901760
        %3380 = vmatmul.mubr.f32.gmra.mrb[0].mxu0 %v3379
        %v3381 = vpop.f32.mrb[0].mxu0
        %v3382 = vadd.f32 %v2905, %v3381
        %v3383 = vpop.f32.mrb[0].mxu0
        %3384 = vmatprep.mubr.f32.mxu0 0.0
        %v3385 = vand.u32 %v669, 4294901760
        %3386 = vmatmul.mubr.f32.gmra.mrb[0].mxu0 %v3385
        %v3387 = vpop.f32.mrb[0].mxu0
        %v3388 = vadd.f32 %v2913, %v3387
        %v3389 = vpop.f32.mrb[0].mxu0
        %3390 = vmatprep.mubr.f32.mxu0 0.0
        %v3391 = vand.u32 %v672, 4294901760
        %3392 = vmatmul.mubr.f32.gmra.mrb[0].mxu0 %v3391
        %v3393 = vpop.f32.mrb[0].mxu0
        %v3394 = vadd.f32 %v2921, %v3393
        %v3395 = vpop.f32.mrb[0].mxu0
        %3396 = vmatprep.mubr.f32.mxu0 0.0
        %v3397 = vand.u32 %v675, 4294901760
        %3398 = vmatmul.mubr.f32.gmra.mrb[0].mxu0 %v3397
        %v3399 = vpop.f32.mrb[0].mxu0
        %v3400 = vadd.f32 %v2929, %v3399
        %v3401 = vpop.f32.mrb[0].mxu0
        %3402 = vmatprep.mubr.f32.mxu0 0.0
        %v3403 = vand.u32 %v678, 4294901760
        %3404 = vmatmul.mubr.f32.gmra.mrb[0].mxu0 %v3403
        %v3405 = vpop.f32.mrb[0].mxu0
        %v3406 = vadd.f32 %v2937, %v3405
        %v3407 = vpop.f32.mrb[0].mxu0
        %3408 = vmatprep.mubr.f32.mxu0 0.0
        %v3409 = vand.u32 %v681, 4294901760
        %3410 = vmatmul.mubr.f32.gmra.mrb[0].mxu0 %v3409
        %v3411 = vpop.f32.mrb[0].mxu0
        %v3412 = vadd.f32 %v2945, %v3411
        %v3413 = vpop.f32.mrb[0].mxu0
        %3414 = vmatprep.mubr.f32.mxu0 0.0
        %v3415 = vand.u32 %v684, 4294901760
        %3416 = vmatmul.mubr.f32.gmra.mrb[0].mxu0 %v3415
        %v3417 = vpop.f32.mrb[0].mxu0
        %v3418 = vadd.f32 %v2953, %v3417
        %v3419 = vpop.f32.mrb[0].mxu0
        %3420 = vmatprep.mubr.f32.mxu0 0.0
        %v3421 = vand.u32 %v687, 4294901760
        %3422 = vmatmul.mubr.f32.gmra.mrb[0].mxu0 %v3421
        %v3423 = vpop.f32.mrb[0].mxu0
        %v3424 = vadd.f32 %v2961, %v3423
        %v3425 = vpop.f32.mrb[0].mxu0
        %3426 = vmatprep.mubr.f32.mxu0 0.0
        %v3427 = vand.u32 %v690, 4294901760
        %3428 = vmatmul.mubr.f32.gmra.mrb[0].mxu0 %v3427
        %v3429 = vpop.f32.mrb[0].mxu0
        %v3430 = vadd.f32 %v2969, %v3429
        %v3431 = vpop.f32.mrb[0].mxu0
        %3432 = vdwg.mxu0
        %3433 = vmatprep.subr.mxu0 0.0
        %v3434 = vand.u32 %v488, 4294901760
        %3435 = vmatpush1.msra.mxu0 %v3434
        %3436 = vmatprep.subr.mxu0 0.0
        %v3437 = vand.u32 %v489, 4294901760
        %3438 = vmatpush1.msra.mxu0 %v3437
        %3439 = vmatprep.subr.mxu0 0.0
        %v3440 = vand.u32 %v490, 4294901760
        %3441 = vmatpush1.msra.mxu0 %v3440
        %3442 = vmatprep.subr.mxu0 0.0
        %v3443 = vand.u32 %v491, 4294901760
        %3444 = vmatpush1.msra.mxu0 %v3443
        %3445 = vmatprep.subr.mxu0 0.0
        %3446 = vmatpush1.msra.mxu0 0.0
        %3447 = vmatprep.subr.mxu0 0.0
        %3448 = vmatpush1.msra.mxu0 0.0
        %3449 = vmatprep.subr.mxu0 0.0
        %3450 = vmatpush1.msra.mxu0 0.0
        %3451 = vmatprep.subr.mxu0 0.0
        %3452 = vmatpush1.msra.mxu0 0.0
        %3453 = vmatprep.subr.mxu0 0.0
        %3454 = vmatpush1.msra.mxu0 0.0
        %3455 = vmatprep.subr.mxu0 0.0
        %3456 = vmatpush1.msra.mxu0 0.0
        %3457 = vmatprep.subr.mxu0 0.0
        %3458 = vmatpush1.msra.mxu0 0.0
        %3459 = vmatprep.subr.mxu0 0.0
        %3460 = vmatpush1.msra.mxu0 0.0
        %3461 = vmatprep.subr.mxu0 0.0
        %3462 = vmatpush1.msra.mxu0 0.0
        %3463 = vmatprep.subr.mxu0 0.0
        %3464 = vmatpush1.msra.mxu0 0.0
        %3465 = vmatprep.subr.mxu0 0.0
        %3466 = vmatpush1.msra.mxu0 0.0
        %3467 = vmatprep.subr.mxu0 0.0
        %3468 = vmatpush1.msra.mxu0 0.0
        %3469 = vmatprep.subr.mxu0 0.0
        %3470 = vmatpush1.msra.mxu0 0.0
        %3471 = vmatprep.subr.mxu0 0.0
        %3472 = vmatpush1.msra.mxu0 0.0
        %3473 = vmatprep.subr.mxu0 0.0
        %3474 = vmatpush1.msra.mxu0 0.0
        %3475 = vmatprep.subr.mxu0 0.0
        %3476 = vmatpush1.msra.mxu0 0.0
        %3477 = vmatprep.subr.mxu0 0.0
        %3478 = vmatpush1.msra.mxu0 0.0
        %3479 = vmatprep.subr.mxu0 0.0
        %3480 = vmatpush1.msra.mxu0 0.0
        %3481 = vmatprep.subr.mxu0 0.0
        %3482 = vmatpush1.msra.mxu0 0.0
        %3483 = vmatprep.subr.mxu0 0.0
        %3484 = vmatpush1.msra.mxu0 0.0
        %3485 = vmatprep.subr.mxu0 0.0
        %3486 = vmatpush1.msra.mxu0 0.0
        %3487 = vmatprep.subr.mxu0 0.0
        %3488 = vmatpush1.msra.mxu0 0.0
        %3489 = vmatprep.subr.mxu0 0.0
        %3490 = vmatpush1.msra.mxu0 0.0
        %3491 = vmatprep.subr.mxu0 0.0
        %3492 = vmatpush1.msra.mxu0 0.0
        %3493 = vmatprep.subr.mxu0 0.0
        %3494 = vmatpush1.msra.mxu0 0.0
        %3495 = vmatprep.subr.mxu0 0.0
        %3496 = vmatpush1.msra.mxu0 0.0
        %3497 = vmatprep.subr.mxu0 0.0
        %3498 = vmatpush1.msra.mxu0 0.0
        %3499 = vmatprep.subr.mxu0 0.0
        %3500 = vmatpush1.msra.mxu0 0.0
        %3501 = vmatprep.mubr.f32.mxu0 0.0
        %v3502 = vand.u32 %v501, 4294901760
        %3503 = vmatmul.mubr.f32.gmra.mrb[0].mxu0 %v3502
        %v3504 = vpop.f32.mrb[0].mxu0
        %v3505 = vadd.f32 %v3052, %v3504
        %v3506 = vpop.f32.mrb[0].mxu0
        %3507 = vmatprep.mubr.f32.mxu0 0.0
        %v3508 = vand.u32 %v504, 4294901760
        %3509 = vmatmul.mubr.f32.gmra.mrb[0].mxu0 %v3508
        %v3510 = vpop.f32.mrb[0].mxu0
        %v3511 = vadd.f32 %v3058, %v3510
        %v3512 = vpop.f32.mrb[0].mxu0
        %3513 = vmatprep.mubr.f32.mxu0 0.0
        %v3514 = vand.u32 %v507, 4294901760
        %3515 = vmatmul.mubr.f32.gmra.mrb[0].mxu0 %v3514
        %v3516 = vpop.f32.mrb[0].mxu0
        %v3517 = vadd.f32 %v3064, %v3516
        %v3518 = vpop.f32.mrb[0].mxu0
        %3519 = vmatprep.mubr.f32.mxu0 0.0
        %v3520 = vand.u32 %v510, 4294901760
        %3521 = vmatmul.mubr.f32.gmra.mrb[0].mxu0 %v3520
        %v3522 = vpop.f32.mrb[0].mxu0
        %v3523 = vadd.f32 %v3070, %v3522
        %v3524 = vpop.f32.mrb[0].mxu0
        %3525 = vmatprep.mubr.f32.mxu0 0.0
        %v3526 = vand.u32 %v513, 4294901760
        %3527 = vmatmul.mubr.f32.gmra.mrb[0].mxu0 %v3526
        %v3528 = vpop.f32.mrb[0].mxu0
        %v3529 = vadd.f32 %v3076, %v3528
        %v3530 = vpop.f32.mrb[0].mxu0
        %3531 = vmatprep.mubr.f32.mxu0 0.0
        %v3532 = vand.u32 %v516, 4294901760
        %3533 = vmatmul.mubr.f32.gmra.mrb[0].mxu0 %v3532
        %v3534 = vpop.f32.mrb[0].mxu0
        %v3535 = vadd.f32 %v3082, %v3534
        %v3536 = vpop.f32.mrb[0].mxu0
        %3537 = vmatprep.mubr.f32.mxu0 0.0
        %v3538 = vand.u32 %v519, 4294901760
        %3539 = vmatmul.mubr.f32.gmra.mrb[0].mxu0 %v3538
        %v3540 = vpop.f32.mrb[0].mxu0
        %v3541 = vadd.f32 %v3088, %v3540
        %v3542 = vpop.f32.mrb[0].mxu0
        %3543 = vmatprep.mubr.f32.mxu0 0.0
        %v3544 = vand.u32 %v522, 4294901760
        %3545 = vmatmul.mubr.f32.gmra.mrb[0].mxu0 %v3544
        %v3546 = vpop.f32.mrb[0].mxu0
        %v3547 = vadd.f32 %v3094, %v3546
        %v3548 = vpop.f32.mrb[0].mxu0
        %3549 = vmatprep.mubr.f32.mxu0 0.0
        %v3550 = vand.u32 %v525, 4294901760
        %3551 = vmatmul.mubr.f32.gmra.mrb[0].mxu0 %v3550
        %v3552 = vpop.f32.mrb[0].mxu0
        %v3553 = vadd.f32 %v3100, %v3552
        %v3554 = vpop.f32.mrb[0].mxu0
        %3555 = vmatprep.mubr.f32.mxu0 0.0
        %v3556 = vand.u32 %v528, 4294901760
        %3557 = vmatmul.mubr.f32.gmra.mrb[0].mxu0 %v3556
        %v3558 = vpop.f32.mrb[0].mxu0
        %v3559 = vadd.f32 %v3106, %v3558
        %v3560 = vpop.f32.mrb[0].mxu0
        %3561 = vmatprep.mubr.f32.mxu0 0.0
        %v3562 = vand.u32 %v531, 4294901760
        %3563 = vmatmul.mubr.f32.gmra.mrb[0].mxu0 %v3562
        %v3564 = vpop.f32.mrb[0].mxu0
        %v3565 = vadd.f32 %v3112, %v3564
        %v3566 = vpop.f32.mrb[0].mxu0
        %3567 = vmatprep.mubr.f32.mxu0 0.0
        %v3568 = vand.u32 %v534, 4294901760
        %3569 = vmatmul.mubr.f32.gmra.mrb[0].mxu0 %v3568
        %v3570 = vpop.f32.mrb[0].mxu0
        %v3571 = vadd.f32 %v3118, %v3570
        %v3572 = vpop.f32.mrb[0].mxu0
        %3573 = vmatprep.mubr.f32.mxu0 0.0
        %v3574 = vand.u32 %v537, 4294901760
        %3575 = vmatmul.mubr.f32.gmra.mrb[0].mxu0 %v3574
        %v3576 = vpop.f32.mrb[0].mxu0
        %v3577 = vadd.f32 %v3124, %v3576
        %v3578 = vpop.f32.mrb[0].mxu0
        %3579 = vmatprep.mubr.f32.mxu0 0.0
        %v3580 = vand.u32 %v540, 4294901760
        %3581 = vmatmul.mubr.f32.gmra.mrb[0].mxu0 %v3580
        %v3582 = vpop.f32.mrb[0].mxu0
        %v3583 = vadd.f32 %v3130, %v3582
        %v3584 = vpop.f32.mrb[0].mxu0
        %3585 = vmatprep.mubr.f32.mxu0 0.0
        %v3586 = vand.u32 %v543, 4294901760
        %3587 = vmatmul.mubr.f32.gmra.mrb[0].mxu0 %v3586
        %v3588 = vpop.f32.mrb[0].mxu0
        %v3589 = vadd.f32 %v3136, %v3588
        %v3590 = vpop.f32.mrb[0].mxu0
        %3591 = vmatprep.mubr.f32.mxu0 0.0
        %v3592 = vand.u32 %v546, 4294901760
        %3593 = vmatmul.mubr.f32.gmra.mrb[0].mxu0 %v3592
        %v3594 = vpop.f32.mrb[0].mxu0
        %v3595 = vadd.f32 %v3142, %v3594
        %v3596 = vpop.f32.mrb[0].mxu0
        %3597 = vmatprep.mubr.f32.mxu0 0.0
        %v3598 = vand.u32 %v549, 4294901760
        %3599 = vmatmul.mubr.f32.gmra.mrb[0].mxu0 %v3598
        %v3600 = vpop.f32.mrb[0].mxu0
        %v3601 = vadd.f32 %v3148, %v3600
        %v3602 = vpop.f32.mrb[0].mxu0
        %3603 = vmatprep.mubr.f32.mxu0 0.0
        %v3604 = vand.u32 %v552, 4294901760
        %3605 = vmatmul.mubr.f32.gmra.mrb[0].mxu0 %v3604
        %v3606 = vpop.f32.mrb[0].mxu0
        %v3607 = vadd.f32 %v3154, %v3606
        %v3608 = vpop.f32.mrb[0].mxu0
        %3609 = vmatprep.mubr.f32.mxu0 0.0
        %v3610 = vand.u32 %v555, 4294901760
        %3611 = vmatmul.mubr.f32.gmra.mrb[0].mxu0 %v3610
        %v3612 = vpop.f32.mrb[0].mxu0
        %v3613 = vadd.f32 %v3160, %v3612
        %v3614 = vpop.f32.mrb[0].mxu0
        %3615 = vmatprep.mubr.f32.mxu0 0.0
        %v3616 = vand.u32 %v558, 4294901760
        %3617 = vmatmul.mubr.f32.gmra.mrb[0].mxu0 %v3616
        %v3618 = vpop.f32.mrb[0].mxu0
        %v3619 = vadd.f32 %v3166, %v3618
        %v3620 = vpop.f32.mrb[0].mxu0
        %3621 = vmatprep.mubr.f32.mxu0 0.0
        %v3622 = vand.u32 %v561, 4294901760
        %3623 = vmatmul.mubr.f32.gmra.mrb[0].mxu0 %v3622
        %v3624 = vpop.f32.mrb[0].mxu0
        %v3625 = vadd.f32 %v3172, %v3624
        %v3626 = vpop.f32.mrb[0].mxu0
        %3627 = vmatprep.mubr.f32.mxu0 0.0
        %v3628 = vand.u32 %v564, 4294901760
        %3629 = vmatmul.mubr.f32.gmra.mrb[0].mxu0 %v3628
        %v3630 = vpop.f32.mrb[0].mxu0
        %v3631 = vadd.f32 %v3178, %v3630
        %v3632 = vpop.f32.mrb[0].mxu0
        %3633 = vmatprep.mubr.f32.mxu0 0.0
        %v3634 = vand.u32 %v567, 4294901760
        %3635 = vmatmul.mubr.f32.gmra.mrb[0].mxu0 %v3634
        %v3636 = vpop.f32.mrb[0].mxu0
        %v3637 = vadd.f32 %v3184, %v3636
        %v3638 = vpop.f32.mrb[0].mxu0
        %3639 = vmatprep.mubr.f32.mxu0 0.0
        %v3640 = vand.u32 %v570, 4294901760
        %3641 = vmatmul.mubr.f32.gmra.mrb[0].mxu0 %v3640
        %v3642 = vpop.f32.mrb[0].mxu0
        %v3643 = vadd.f32 %v3190, %v3642
        %v3644 = vpop.f32.mrb[0].mxu0
        %3645 = vmatprep.mubr.f32.mxu0 0.0
        %v3646 = vand.u32 %v573, 4294901760
        %3647 = vmatmul.mubr.f32.gmra.mrb[0].mxu0 %v3646
        %v3648 = vpop.f32.mrb[0].mxu0
        %v3649 = vadd.f32 %v3196, %v3648
        %v3650 = vpop.f32.mrb[0].mxu0
        %3651 = vmatprep.mubr.f32.mxu0 0.0
        %v3652 = vand.u32 %v576, 4294901760
        %3653 = vmatmul.mubr.f32.gmra.mrb[0].mxu0 %v3652
        %v3654 = vpop.f32.mrb[0].mxu0
        %v3655 = vadd.f32 %v3202, %v3654
        %v3656 = vpop.f32.mrb[0].mxu0
        %3657 = vmatprep.mubr.f32.mxu0 0.0
        %v3658 = vand.u32 %v579, 4294901760
        %3659 = vmatmul.mubr.f32.gmra.mrb[0].mxu0 %v3658
        %v3660 = vpop.f32.mrb[0].mxu0
        %v3661 = vadd.f32 %v3208, %v3660
        %v3662 = vpop.f32.mrb[0].mxu0
        %3663 = vmatprep.mubr.f32.mxu0 0.0
        %v3664 = vand.u32 %v582, 4294901760
        %3665 = vmatmul.mubr.f32.gmra.mrb[0].mxu0 %v3664
        %v3666 = vpop.f32.mrb[0].mxu0
        %v3667 = vadd.f32 %v3214, %v3666
        %v3668 = vpop.f32.mrb[0].mxu0
        %3669 = vmatprep.mubr.f32.mxu0 0.0
        %v3670 = vand.u32 %v585, 4294901760
        %3671 = vmatmul.mubr.f32.gmra.mrb[0].mxu0 %v3670
        %v3672 = vpop.f32.mrb[0].mxu0
        %v3673 = vadd.f32 %v3220, %v3672
        %v3674 = vpop.f32.mrb[0].mxu0
        %3675 = vmatprep.mubr.f32.mxu0 0.0
        %v3676 = vand.u32 %v588, 4294901760
        %3677 = vmatmul.mubr.f32.gmra.mrb[0].mxu0 %v3676
        %v3678 = vpop.f32.mrb[0].mxu0
        %v3679 = vadd.f32 %v3226, %v3678
        %v3680 = vpop.f32.mrb[0].mxu0
        %3681 = vmatprep.mubr.f32.mxu0 0.0
        %v3682 = vand.u32 %v591, 4294901760
        %3683 = vmatmul.mubr.f32.gmra.mrb[0].mxu0 %v3682
        %v3684 = vpop.f32.mrb[0].mxu0
        %v3685 = vadd.f32 %v3232, %v3684
        %v3686 = vpop.f32.mrb[0].mxu0
        %3687 = vmatprep.mubr.f32.mxu0 0.0
        %v3688 = vand.u32 %v594, 4294901760
        %3689 = vmatmul.mubr.f32.gmra.mrb[0].mxu0 %v3688
        %v3690 = vpop.f32.mrb[0].mxu0
        %v3691 = vadd.f32 %v3238, %v3690
        %v3692 = vpop.f32.mrb[0].mxu0
        %3693 = vmatprep.mubr.f32.mxu0 0.0
        %v3694 = vand.u32 %v597, 4294901760
        %3695 = vmatmul.mubr.f32.gmra.mrb[0].mxu0 %v3694
        %v3696 = vpop.f32.mrb[0].mxu0
        %v3697 = vadd.f32 %v3244, %v3696
        %v3698 = vpop.f32.mrb[0].mxu0
        %3699 = vmatprep.mubr.f32.mxu0 0.0
        %v3700 = vand.u32 %v600, 4294901760
        %3701 = vmatmul.mubr.f32.gmra.mrb[0].mxu0 %v3700
        %v3702 = vpop.f32.mrb[0].mxu0
        %v3703 = vadd.f32 %v3250, %v3702
        %v3704 = vpop.f32.mrb[0].mxu0
        %3705 = vmatprep.mubr.f32.mxu0 0.0
        %v3706 = vand.u32 %v603, 4294901760
        %3707 = vmatmul.mubr.f32.gmra.mrb[0].mxu0 %v3706
        %v3708 = vpop.f32.mrb[0].mxu0
        %v3709 = vadd.f32 %v3256, %v3708
        %v3710 = vpop.f32.mrb[0].mxu0
        %3711 = vmatprep.mubr.f32.mxu0 0.0
        %v3712 = vand.u32 %v606, 4294901760
        %3713 = vmatmul.mubr.f32.gmra.mrb[0].mxu0 %v3712
        %v3714 = vpop.f32.mrb[0].mxu0
        %v3715 = vadd.f32 %v3262, %v3714
        %v3716 = vpop.f32.mrb[0].mxu0
        %3717 = vmatprep.mubr.f32.mxu0 0.0
        %v3718 = vand.u32 %v609, 4294901760
        %3719 = vmatmul.mubr.f32.gmra.mrb[0].mxu0 %v3718
        %v3720 = vpop.f32.mrb[0].mxu0
        %v3721 = vadd.f32 %v3268, %v3720
        %v3722 = vpop.f32.mrb[0].mxu0
        %3723 = vmatprep.mubr.f32.mxu0 0.0
        %v3724 = vand.u32 %v612, 4294901760
        %3725 = vmatmul.mubr.f32.gmra.mrb[0].mxu0 %v3724
        %v3726 = vpop.f32.mrb[0].mxu0
        %v3727 = vadd.f32 %v3274, %v3726
        %v3728 = vpop.f32.mrb[0].mxu0
        %3729 = vmatprep.mubr.f32.mxu0 0.0
        %v3730 = vand.u32 %v615, 4294901760
        %3731 = vmatmul.mubr.f32.gmra.mrb[0].mxu0 %v3730
        %v3732 = vpop.f32.mrb[0].mxu0
        %v3733 = vadd.f32 %v3280, %v3732
        %v3734 = vpop.f32.mrb[0].mxu0
        %3735 = vmatprep.mubr.f32.mxu0 0.0
        %v3736 = vand.u32 %v618, 4294901760
        %3737 = vmatmul.mubr.f32.gmra.mrb[0].mxu0 %v3736
        %v3738 = vpop.f32.mrb[0].mxu0
        %v3739 = vadd.f32 %v3286, %v3738
        %v3740 = vpop.f32.mrb[0].mxu0
        %3741 = vmatprep.mubr.f32.mxu0 0.0
        %v3742 = vand.u32 %v621, 4294901760
        %3743 = vmatmul.mubr.f32.gmra.mrb[0].mxu0 %v3742
        %v3744 = vpop.f32.mrb[0].mxu0
        %v3745 = vadd.f32 %v3292, %v3744
        %v3746 = vpop.f32.mrb[0].mxu0
        %3747 = vmatprep.mubr.f32.mxu0 0.0
        %v3748 = vand.u32 %v624, 4294901760
        %3749 = vmatmul.mubr.f32.gmra.mrb[0].mxu0 %v3748
        %v3750 = vpop.f32.mrb[0].mxu0
        %v3751 = vadd.f32 %v3298, %v3750
        %v3752 = vpop.f32.mrb[0].mxu0
        %3753 = vmatprep.mubr.f32.mxu0 0.0
        %v3754 = vand.u32 %v627, 4294901760
        %3755 = vmatmul.mubr.f32.gmra.mrb[0].mxu0 %v3754
        %v3756 = vpop.f32.mrb[0].mxu0
        %v3757 = vadd.f32 %v3304, %v3756
        %v3758 = vpop.f32.mrb[0].mxu0
        %3759 = vmatprep.mubr.f32.mxu0 0.0
        %v3760 = vand.u32 %v630, 4294901760
        %3761 = vmatmul.mubr.f32.gmra.mrb[0].mxu0 %v3760
        %v3762 = vpop.f32.mrb[0].mxu0
        %v3763 = vadd.f32 %v3310, %v3762
        %v3764 = vpop.f32.mrb[0].mxu0
        %3765 = vmatprep.mubr.f32.mxu0 0.0
        %v3766 = vand.u32 %v633, 4294901760
        %3767 = vmatmul.mubr.f32.gmra.mrb[0].mxu0 %v3766
        %v3768 = vpop.f32.mrb[0].mxu0
        %v3769 = vadd.f32 %v3316, %v3768
        %v3770 = vpop.f32.mrb[0].mxu0
        %3771 = vmatprep.mubr.f32.mxu0 0.0
        %v3772 = vand.u32 %v636, 4294901760
        %3773 = vmatmul.mubr.f32.gmra.mrb[0].mxu0 %v3772
        %v3774 = vpop.f32.mrb[0].mxu0
        %v3775 = vadd.f32 %v3322, %v3774
        %v3776 = vpop.f32.mrb[0].mxu0
        %3777 = vmatprep.mubr.f32.mxu0 0.0
        %v3778 = vand.u32 %v639, 4294901760
        %3779 = vmatmul.mubr.f32.gmra.mrb[0].mxu0 %v3778
        %v3780 = vpop.f32.mrb[0].mxu0
        %v3781 = vadd.f32 %v3328, %v3780
        %v3782 = vpop.f32.mrb[0].mxu0
        %3783 = vmatprep.mubr.f32.mxu0 0.0
        %v3784 = vand.u32 %v642, 4294901760
        %3785 = vmatmul.mubr.f32.gmra.mrb[0].mxu0 %v3784
        %v3786 = vpop.f32.mrb[0].mxu0
        %v3787 = vadd.f32 %v3334, %v3786
        %v3788 = vpop.f32.mrb[0].mxu0
        %3789 = vmatprep.mubr.f32.mxu0 0.0
        %v3790 = vand.u32 %v645, 4294901760
        %3791 = vmatmul.mubr.f32.gmra.mrb[0].mxu0 %v3790
        %v3792 = vpop.f32.mrb[0].mxu0
        %v3793 = vadd.f32 %v3340, %v3792
        %v3794 = vpop.f32.mrb[0].mxu0
        %3795 = vmatprep.mubr.f32.mxu0 0.0
        %v3796 = vand.u32 %v648, 4294901760
        %3797 = vmatmul.mubr.f32.gmra.mrb[0].mxu0 %v3796
        %v3798 = vpop.f32.mrb[0].mxu0
        %v3799 = vadd.f32 %v3346, %v3798
        %v3800 = vpop.f32.mrb[0].mxu0
        %3801 = vmatprep.mubr.f32.mxu0 0.0
        %v3802 = vand.u32 %v651, 4294901760
        %3803 = vmatmul.mubr.f32.gmra.mrb[0].mxu0 %v3802
        %v3804 = vpop.f32.mrb[0].mxu0
        %v3805 = vadd.f32 %v3352, %v3804
        %v3806 = vpop.f32.mrb[0].mxu0
        %3807 = vmatprep.mubr.f32.mxu0 0.0
        %v3808 = vand.u32 %v654, 4294901760
        %3809 = vmatmul.mubr.f32.gmra.mrb[0].mxu0 %v3808
        %v3810 = vpop.f32.mrb[0].mxu0
        %v3811 = vadd.f32 %v3358, %v3810
        %v3812 = vpop.f32.mrb[0].mxu0
        %3813 = vmatprep.mubr.f32.mxu0 0.0
        %v3814 = vand.u32 %v657, 4294901760
        %3815 = vmatmul.mubr.f32.gmra.mrb[0].mxu0 %v3814
        %v3816 = vpop.f32.mrb[0].mxu0
        %v3817 = vadd.f32 %v3364, %v3816
        %v3818 = vpop.f32.mrb[0].mxu0
        %3819 = vmatprep.mubr.f32.mxu0 0.0
        %v3820 = vand.u32 %v660, 4294901760
        %3821 = vmatmul.mubr.f32.gmra.mrb[0].mxu0 %v3820
        %v3822 = vpop.f32.mrb[0].mxu0
        %v3823 = vadd.f32 %v3370, %v3822
        %v3824 = vpop.f32.mrb[0].mxu0
        %3825 = vmatprep.mubr.f32.mxu0 0.0
        %v3826 = vand.u32 %v663, 4294901760
        %3827 = vmatmul.mubr.f32.gmra.mrb[0].mxu0 %v3826
        %v3828 = vpop.f32.mrb[0].mxu0
        %v3829 = vadd.f32 %v3376, %v3828
        %v3830 = vpop.f32.mrb[0].mxu0
        %3831 = vmatprep.mubr.f32.mxu0 0.0
        %v3832 = vand.u32 %v666, 4294901760
        %3833 = vmatmul.mubr.f32.gmra.mrb[0].mxu0 %v3832
        %v3834 = vpop.f32.mrb[0].mxu0
        %v3835 = vadd.f32 %v3382, %v3834
        %v3836 = vpop.f32.mrb[0].mxu0
        %3837 = vmatprep.mubr.f32.mxu0 0.0
        %v3838 = vand.u32 %v669, 4294901760
        %3839 = vmatmul.mubr.f32.gmra.mrb[0].mxu0 %v3838
        %v3840 = vpop.f32.mrb[0].mxu0
        %v3841 = vadd.f32 %v3388, %v3840
        %v3842 = vpop.f32.mrb[0].mxu0
        %3843 = vmatprep.mubr.f32.mxu0 0.0
        %v3844 = vand.u32 %v672, 4294901760
        %3845 = vmatmul.mubr.f32.gmra.mrb[0].mxu0 %v3844
        %v3846 = vpop.f32.mrb[0].mxu0
        %v3847 = vadd.f32 %v3394, %v3846
        %v3848 = vpop.f32.mrb[0].mxu0
        %3849 = vmatprep.mubr.f32.mxu0 0.0
        %v3850 = vand.u32 %v675, 4294901760
        %3851 = vmatmul.mubr.f32.gmra.mrb[0].mxu0 %v3850
        %v3852 = vpop.f32.mrb[0].mxu0
        %v3853 = vadd.f32 %v3400, %v3852
        %v3854 = vpop.f32.mrb[0].mxu0
        %3855 = vmatprep.mubr.f32.mxu0 0.0
        %v3856 = vand.u32 %v678, 4294901760
        %3857 = vmatmul.mubr.f32.gmra.mrb[0].mxu0 %v3856
        %v3858 = vpop.f32.mrb[0].mxu0
        %v3859 = vadd.f32 %v3406, %v3858
        %v3860 = vpop.f32.mrb[0].mxu0
        %3861 = vmatprep.mubr.f32.mxu0 0.0
        %v3862 = vand.u32 %v681, 4294901760
        %3863 = vmatmul.mubr.f32.gmra.mrb[0].mxu0 %v3862
        %v3864 = vpop.f32.mrb[0].mxu0
        %v3865 = vadd.f32 %v3412, %v3864
        %v3866 = vpop.f32.mrb[0].mxu0
        %3867 = vmatprep.mubr.f32.mxu0 0.0
        %v3868 = vand.u32 %v684, 4294901760
        %3869 = vmatmul.mubr.f32.gmra.mrb[0].mxu0 %v3868
        %v3870 = vpop.f32.mrb[0].mxu0
        %v3871 = vadd.f32 %v3418, %v3870
        %v3872 = vpop.f32.mrb[0].mxu0
        %3873 = vmatprep.mubr.f32.mxu0 0.0
        %v3874 = vand.u32 %v687, 4294901760
        %3875 = vmatmul.mubr.f32.gmra.mrb[0].mxu0 %v3874
        %v3876 = vpop.f32.mrb[0].mxu0
        %v3877 = vadd.f32 %v3424, %v3876
        %v3878 = vpop.f32.mrb[0].mxu0
        %3879 = vmatprep.mubr.f32.mxu0 0.0
        %v3880 = vand.u32 %v690, 4294901760
        %3881 = vmatmul.mubr.f32.gmra.mrb[0].mxu0 %v3880
        %v3882 = vpop.f32.mrb[0].mxu0
        %v3883 = vadd.f32 %v3430, %v3882
        %v3884 = vpop.f32.mrb[0].mxu0
        %3885 = vdwg.mxu0
        %v3886 = vld [vmem:[%s4] sm:$0x1]
        %v3887 = vld [vmem:[%s5] sm:$0x1]
        %v3888 = vsel %vm499, %v3505, 0.0
        %3889 = vadd.xlane.f32.xlu0 %v3888
        %v3890 = vpop.xlane.xlu0 %3889
        %v3891 = vsel %vm499, %v3511, 0.0
        %3892 = vadd.xlane.f32.xlu0 %v3891
        %v3893 = vpop.xlane.xlu0 %3892
        %v3894 = vsel %vm499, %v3517, 0.0
        %3895 = vadd.xlane.f32.xlu0 %v3894
        %v3896 = vpop.xlane.xlu0 %3895
        %v3897 = vsel %vm499, %v3523, 0.0
        %3898 = vadd.xlane.f32.xlu0 %v3897
        %v3899 = vpop.xlane.xlu0 %3898
        %v3900 = vsel %vm499, %v3529, 0.0
        %3901 = vadd.xlane.f32.xlu0 %v3900
        %v3902 = vpop.xlane.xlu0 %3901
        %v3903 = vsel %vm499, %v3535, 0.0
        %3904 = vadd.xlane.f32.xlu0 %v3903
        %v3905 = vpop.xlane.xlu0 %3904
        %v3906 = vsel %vm499, %v3541, 0.0
        %3907 = vadd.xlane.f32.xlu0 %v3906
        %v3908 = vpop.xlane.xlu0 %3907
        %v3909 = vsel %vm499, %v3547, 0.0
        %3910 = vadd.xlane.f32.xlu0 %v3909
        %v3911 = vpop.xlane.xlu0 %3910
        %v3912 = vsel %vm499, %v3553, 0.0
        %3913 = vadd.xlane.f32.xlu0 %v3912
        %v3914 = vpop.xlane.xlu0 %3913
        %v3915 = vsel %vm499, %v3559, 0.0
        %3916 = vadd.xlane.f32.xlu0 %v3915
        %v3917 = vpop.xlane.xlu0 %3916
        %v3918 = vsel %vm499, %v3565, 0.0
        %3919 = vadd.xlane.f32.xlu0 %v3918
        %v3920 = vpop.xlane.xlu0 %3919
        %v3921 = vsel %vm499, %v3571, 0.0
        %3922 = vadd.xlane.f32.xlu0 %v3921
        %v3923 = vpop.xlane.xlu0 %3922
        %v3924 = vsel %vm499, %v3577, 0.0
        %3925 = vadd.xlane.f32.xlu0 %v3924
        %v3926 = vpop.xlane.xlu0 %3925
        %v3927 = vsel %vm499, %v3583, 0.0
        %3928 = vadd.xlane.f32.xlu0 %v3927
        %v3929 = vpop.xlane.xlu0 %3928
        %v3930 = vsel %vm499, %v3589, 0.0
        %3931 = vadd.xlane.f32.xlu0 %v3930
        %v3932 = vpop.xlane.xlu0 %3931
        %v3933 = vsel %vm499, %v3595, 0.0
        %3934 = vadd.xlane.f32.xlu0 %v3933
        %v3935 = vpop.xlane.xlu0 %3934
        %v3936 = vsel %vm499, %v3601, 0.0
        %3937 = vadd.xlane.f32.xlu0 %v3936
        %v3938 = vpop.xlane.xlu0 %3937
        %v3939 = vsel %vm499, %v3607, 0.0
        %3940 = vadd.xlane.f32.xlu0 %v3939
        %v3941 = vpop.xlane.xlu0 %3940
        %v3942 = vsel %vm499, %v3613, 0.0
        %3943 = vadd.xlane.f32.xlu0 %v3942
        %v3944 = vpop.xlane.xlu0 %3943
        %v3945 = vsel %vm499, %v3619, 0.0
        %3946 = vadd.xlane.f32.xlu0 %v3945
        %v3947 = vpop.xlane.xlu0 %3946
        %v3948 = vsel %vm499, %v3625, 0.0
        %3949 = vadd.xlane.f32.xlu0 %v3948
        %v3950 = vpop.xlane.xlu0 %3949
        %v3951 = vsel %vm499, %v3631, 0.0
        %3952 = vadd.xlane.f32.xlu0 %v3951
        %v3953 = vpop.xlane.xlu0 %3952
        %v3954 = vsel %vm499, %v3637, 0.0
        %3955 = vadd.xlane.f32.xlu0 %v3954
        %v3956 = vpop.xlane.xlu0 %3955
        %v3957 = vsel %vm499, %v3643, 0.0
        %3958 = vadd.xlane.f32.xlu0 %v3957
        %v3959 = vpop.xlane.xlu0 %3958
        %v3960 = vsel %vm499, %v3649, 0.0
        %3961 = vadd.xlane.f32.xlu0 %v3960
        %v3962 = vpop.xlane.xlu0 %3961
        %v3963 = vsel %vm499, %v3655, 0.0
        %3964 = vadd.xlane.f32.xlu0 %v3963
        %v3965 = vpop.xlane.xlu0 %3964
        %v3966 = vsel %vm499, %v3661, 0.0
        %3967 = vadd.xlane.f32.xlu0 %v3966
        %v3968 = vpop.xlane.xlu0 %3967
        %v3969 = vsel %vm499, %v3667, 0.0
        %3970 = vadd.xlane.f32.xlu0 %v3969
        %v3971 = vpop.xlane.xlu0 %3970
        %v3972 = vsel %vm499, %v3673, 0.0
        %3973 = vadd.xlane.f32.xlu0 %v3972
        %v3974 = vpop.xlane.xlu0 %3973
        %v3975 = vsel %vm499, %v3679, 0.0
        %3976 = vadd.xlane.f32.xlu0 %v3975
        %v3977 = vpop.xlane.xlu0 %3976
        %v3978 = vsel %vm499, %v3685, 0.0
        %3979 = vadd.xlane.f32.xlu0 %v3978
        %v3980 = vpop.xlane.xlu0 %3979
        %v3981 = vsel %vm499, %v3691, 0.0
        %3982 = vadd.xlane.f32.xlu0 %v3981
        %v3983 = vpop.xlane.xlu0 %3982
        %v3984 = vsel %vm499, %v3697, 0.0
        %3985 = vadd.xlane.f32.xlu0 %v3984
        %v3986 = vpop.xlane.xlu0 %3985
        %v3987 = vsel %vm499, %v3703, 0.0
        %3988 = vadd.xlane.f32.xlu0 %v3987
        %v3989 = vpop.xlane.xlu0 %3988
        %v3990 = vsel %vm499, %v3709, 0.0
        %3991 = vadd.xlane.f32.xlu0 %v3990
        %v3992 = vpop.xlane.xlu0 %3991
        %v3993 = vsel %vm499, %v3715, 0.0
        %3994 = vadd.xlane.f32.xlu0 %v3993
        %v3995 = vpop.xlane.xlu0 %3994
        %v3996 = vsel %vm499, %v3721, 0.0
        %3997 = vadd.xlane.f32.xlu0 %v3996
        %v3998 = vpop.xlane.xlu0 %3997
        %v3999 = vsel %vm499, %v3727, 0.0
        %4000 = vadd.xlane.f32.xlu0 %v3999
        %v4001 = vpop.xlane.xlu0 %4000
        %v4002 = vsel %vm499, %v3733, 0.0
        %4003 = vadd.xlane.f32.xlu0 %v4002
        %v4004 = vpop.xlane.xlu0 %4003
        %v4005 = vsel %vm499, %v3739, 0.0
        %4006 = vadd.xlane.f32.xlu0 %v4005
        %v4007 = vpop.xlane.xlu0 %4006
        %v4008 = vsel %vm499, %v3745, 0.0
        %4009 = vadd.xlane.f32.xlu0 %v4008
        %v4010 = vpop.xlane.xlu0 %4009
        %v4011 = vsel %vm499, %v3751, 0.0
        %4012 = vadd.xlane.f32.xlu0 %v4011
        %v4013 = vpop.xlane.xlu0 %4012
        %v4014 = vsel %vm499, %v3757, 0.0
        %4015 = vadd.xlane.f32.xlu0 %v4014
        %v4016 = vpop.xlane.xlu0 %4015
        %v4017 = vsel %vm499, %v3763, 0.0
        %4018 = vadd.xlane.f32.xlu0 %v4017
        %v4019 = vpop.xlane.xlu0 %4018
        %v4020 = vsel %vm499, %v3769, 0.0
        %4021 = vadd.xlane.f32.xlu0 %v4020
        %v4022 = vpop.xlane.xlu0 %4021
        %v4023 = vsel %vm499, %v3775, 0.0
        %4024 = vadd.xlane.f32.xlu0 %v4023
        %v4025 = vpop.xlane.xlu0 %4024
        %v4026 = vsel %vm499, %v3781, 0.0
        %4027 = vadd.xlane.f32.xlu0 %v4026
        %v4028 = vpop.xlane.xlu0 %4027
        %v4029 = vsel %vm499, %v3787, 0.0
        %4030 = vadd.xlane.f32.xlu0 %v4029
        %v4031 = vpop.xlane.xlu0 %4030
        %v4032 = vsel %vm499, %v3793, 0.0
        %4033 = vadd.xlane.f32.xlu0 %v4032
        %v4034 = vpop.xlane.xlu0 %4033
        %v4035 = vsel %vm499, %v3799, 0.0
        %4036 = vadd.xlane.f32.xlu0 %v4035
        %v4037 = vpop.xlane.xlu0 %4036
        %v4038 = vsel %vm499, %v3805, 0.0
        %4039 = vadd.xlane.f32.xlu0 %v4038
        %v4040 = vpop.xlane.xlu0 %4039
        %v4041 = vsel %vm499, %v3811, 0.0
        %4042 = vadd.xlane.f32.xlu0 %v4041
        %v4043 = vpop.xlane.xlu0 %4042
        %v4044 = vsel %vm499, %v3817, 0.0
        %4045 = vadd.xlane.f32.xlu0 %v4044
        %v4046 = vpop.xlane.xlu0 %4045
        %v4047 = vsel %vm499, %v3823, 0.0
        %4048 = vadd.xlane.f32.xlu0 %v4047
        %v4049 = vpop.xlane.xlu0 %4048
        %v4050 = vsel %vm499, %v3829, 0.0
        %4051 = vadd.xlane.f32.xlu0 %v4050
        %v4052 = vpop.xlane.xlu0 %4051
        %v4053 = vsel %vm499, %v3835, 0.0
        %4054 = vadd.xlane.f32.xlu0 %v4053
        %v4055 = vpop.xlane.xlu0 %4054
        %v4056 = vsel %vm499, %v3841, 0.0
        %4057 = vadd.xlane.f32.xlu0 %v4056
        %v4058 = vpop.xlane.xlu0 %4057
        %v4059 = vsel %vm499, %v3847, 0.0
        %4060 = vadd.xlane.f32.xlu0 %v4059
        %v4061 = vpop.xlane.xlu0 %4060
        %v4062 = vsel %vm499, %v3853, 0.0
        %4063 = vadd.xlane.f32.xlu0 %v4062
        %v4064 = vpop.xlane.xlu0 %4063
        %v4065 = vsel %vm499, %v3859, 0.0
        %4066 = vadd.xlane.f32.xlu0 %v4065
        %v4067 = vpop.xlane.xlu0 %4066
        %v4068 = vsel %vm499, %v3865, 0.0
        %4069 = vadd.xlane.f32.xlu0 %v4068
        %v4070 = vpop.xlane.xlu0 %4069
        %v4071 = vsel %vm499, %v3871, 0.0
        %4072 = vadd.xlane.f32.xlu0 %v4071
        %v4073 = vpop.xlane.xlu0 %4072
        %v4074 = vsel %vm499, %v3877, 0.0
        %4075 = vadd.xlane.f32.xlu0 %v4074
        %v4076 = vpop.xlane.xlu0 %4075
        %v4077 = vsel %vm499, %v3883, 0.0
        %4078 = vadd.xlane.f32.xlu0 %v4077
        %v4079 = vpop.xlane.xlu0 %4078
        %v4080 = vrcp.pop 32.0
        %v4081 = vmul.f32 %v3890, %v4080
        %v4082 = vmul.f32 %v3893, %v4080
        %v4083 = vmul.f32 %v3896, %v4080
        %v4084 = vmul.f32 %v3899, %v4080
        %v4085 = vmul.f32 %v3902, %v4080
        %v4086 = vmul.f32 %v3905, %v4080
        %v4087 = vmul.f32 %v3908, %v4080
        %v4088 = vmul.f32 %v3911, %v4080
        %v4089 = vmul.f32 %v3914, %v4080
        %v4090 = vmul.f32 %v3917, %v4080
        %v4091 = vmul.f32 %v3920, %v4080
        %v4092 = vmul.f32 %v3923, %v4080
        %v4093 = vmul.f32 %v3926, %v4080
        %v4094 = vmul.f32 %v3929, %v4080
        %v4095 = vmul.f32 %v3932, %v4080
        %v4096 = vmul.f32 %v3935, %v4080
        %v4097 = vmul.f32 %v3938, %v4080
        %v4098 = vmul.f32 %v3941, %v4080
        %v4099 = vmul.f32 %v3944, %v4080
        %v4100 = vmul.f32 %v3947, %v4080
        %v4101 = vmul.f32 %v3950, %v4080
        %v4102 = vmul.f32 %v3953, %v4080
        %v4103 = vmul.f32 %v3956, %v4080
        %v4104 = vmul.f32 %v3959, %v4080
        %v4105 = vmul.f32 %v3962, %v4080
        %v4106 = vmul.f32 %v3965, %v4080
        %v4107 = vmul.f32 %v3968, %v4080
        %v4108 = vmul.f32 %v3971, %v4080
        %v4109 = vmul.f32 %v3974, %v4080
        %v4110 = vmul.f32 %v3977, %v4080
        %v4111 = vmul.f32 %v3980, %v4080
        %v4112 = vmul.f32 %v3983, %v4080
        %v4113 = vmul.f32 %v3986, %v4080
        %v4114 = vmul.f32 %v3989, %v4080
        %v4115 = vmul.f32 %v3992, %v4080
        %v4116 = vmul.f32 %v3995, %v4080
        %v4117 = vmul.f32 %v3998, %v4080
        %v4118 = vmul.f32 %v4001, %v4080
        %v4119 = vmul.f32 %v4004, %v4080
        %v4120 = vmul.f32 %v4007, %v4080
        %v4121 = vmul.f32 %v4010, %v4080
        %v4122 = vmul.f32 %v4013, %v4080
        %v4123 = vmul.f32 %v4016, %v4080
        %v4124 = vmul.f32 %v4019, %v4080
        %v4125 = vmul.f32 %v4022, %v4080
        %v4126 = vmul.f32 %v4025, %v4080
        %v4127 = vmul.f32 %v4028, %v4080
        %v4128 = vmul.f32 %v4031, %v4080
        %v4129 = vmul.f32 %v4034, %v4080
        %v4130 = vmul.f32 %v4037, %v4080
        %v4131 = vmul.f32 %v4040, %v4080
        %v4132 = vmul.f32 %v4043, %v4080
        %v4133 = vmul.f32 %v4046, %v4080
        %v4134 = vmul.f32 %v4049, %v4080
        %v4135 = vmul.f32 %v4052, %v4080
        %v4136 = vmul.f32 %v4055, %v4080
        %v4137 = vmul.f32 %v4058, %v4080
        %v4138 = vmul.f32 %v4061, %v4080
        %v4139 = vmul.f32 %v4064, %v4080
        %v4140 = vmul.f32 %v4067, %v4080
        %v4141 = vmul.f32 %v4070, %v4080
        %v4142 = vmul.f32 %v4073, %v4080
        %v4143 = vmul.f32 %v4076, %v4080
        %v4144 = vmul.f32 %v4079, %v4080
        %v4145 = vsub.f32 %v3505, %v4081
        %v4146 = vsub.f32 %v3511, %v4082
        %v4147 = vsub.f32 %v3517, %v4083
        %v4148 = vsub.f32 %v3523, %v4084
        %v4149 = vsub.f32 %v3529, %v4085
        %v4150 = vsub.f32 %v3535, %v4086
        %v4151 = vsub.f32 %v3541, %v4087
        %v4152 = vsub.f32 %v3547, %v4088
        %v4153 = vsub.f32 %v3553, %v4089
        %v4154 = vsub.f32 %v3559, %v4090
        %v4155 = vsub.f32 %v3565, %v4091
        %v4156 = vsub.f32 %v3571, %v4092
        %v4157 = vsub.f32 %v3577, %v4093
        %v4158 = vsub.f32 %v3583, %v4094
        %v4159 = vsub.f32 %v3589, %v4095
        %v4160 = vsub.f32 %v3595, %v4096
        %v4161 = vsub.f32 %v3601, %v4097
        %v4162 = vsub.f32 %v3607, %v4098
        %v4163 = vsub.f32 %v3613, %v4099
        %v4164 = vsub.f32 %v3619, %v4100
        %v4165 = vsub.f32 %v3625, %v4101
        %v4166 = vsub.f32 %v3631, %v4102
        %v4167 = vsub.f32 %v3637, %v4103
        %v4168 = vsub.f32 %v3643, %v4104
        %v4169 = vsub.f32 %v3649, %v4105
        %v4170 = vsub.f32 %v3655, %v4106
        %v4171 = vsub.f32 %v3661, %v4107
        %v4172 = vsub.f32 %v3667, %v4108
        %v4173 = vsub.f32 %v3673, %v4109
        %v4174 = vsub.f32 %v3679, %v4110
        %v4175 = vsub.f32 %v3685, %v4111
        %v4176 = vsub.f32 %v3691, %v4112
        %v4177 = vsub.f32 %v3697, %v4113
        %v4178 = vsub.f32 %v3703, %v4114
        %v4179 = vsub.f32 %v3709, %v4115
        %v4180 = vsub.f32 %v3715, %v4116
        %v4181 = vsub.f32 %v3721, %v4117
        %v4182 = vsub.f32 %v3727, %v4118
        %v4183 = vsub.f32 %v3733, %v4119
        %v4184 = vsub.f32 %v3739, %v4120
        %v4185 = vsub.f32 %v3745, %v4121
        %v4186 = vsub.f32 %v3751, %v4122
        %v4187 = vsub.f32 %v3757, %v4123
        %v4188 = vsub.f32 %v3763, %v4124
        %v4189 = vsub.f32 %v3769, %v4125
        %v4190 = vsub.f32 %v3775, %v4126
        %v4191 = vsub.f32 %v3781, %v4127
        %v4192 = vsub.f32 %v3787, %v4128
        %v4193 = vsub.f32 %v3793, %v4129
        %v4194 = vsub.f32 %v3799, %v4130
        %v4195 = vsub.f32 %v3805, %v4131
        %v4196 = vsub.f32 %v3811, %v4132
        %v4197 = vsub.f32 %v3817, %v4133
        %v4198 = vsub.f32 %v3823, %v4134
        %v4199 = vsub.f32 %v3829, %v4135
        %v4200 = vsub.f32 %v3835, %v4136
        %v4201 = vsub.f32 %v3841, %v4137
        %v4202 = vsub.f32 %v3847, %v4138
        %v4203 = vsub.f32 %v3853, %v4139
        %v4204 = vsub.f32 %v3859, %v4140
        %v4205 = vsub.f32 %v3865, %v4141
        %v4206 = vsub.f32 %v3871, %v4142
        %v4207 = vsub.f32 %v3877, %v4143
        %v4208 = vsub.f32 %v3883, %v4144
        %v4209 = vmul.f32 %v4145, %v4145
        %v4210 = vmul.f32 %v4146, %v4146
        %v4211 = vmul.f32 %v4147, %v4147
        %v4212 = vmul.f32 %v4148, %v4148
        %v4213 = vmul.f32 %v4149, %v4149
        %v4214 = vmul.f32 %v4150, %v4150
        %v4215 = vmul.f32 %v4151, %v4151
        %v4216 = vmul.f32 %v4152, %v4152
        %v4217 = vmul.f32 %v4153, %v4153
        %v4218 = vmul.f32 %v4154, %v4154
        %v4219 = vmul.f32 %v4155, %v4155
        %v4220 = vmul.f32 %v4156, %v4156
        %v4221 = vmul.f32 %v4157, %v4157
        %v4222 = vmul.f32 %v4158, %v4158
        %v4223 = vmul.f32 %v4159, %v4159
        %v4224 = vmul.f32 %v4160, %v4160
        %v4225 = vmul.f32 %v4161, %v4161
        %v4226 = vmul.f32 %v4162, %v4162
        %v4227 = vmul.f32 %v4163, %v4163
        %v4228 = vmul.f32 %v4164, %v4164
        %v4229 = vmul.f32 %v4165, %v4165
        %v4230 = vmul.f32 %v4166, %v4166
        %v4231 = vmul.f32 %v4167, %v4167
        %v4232 = vmul.f32 %v4168, %v4168
        %v4233 = vmul.f32 %v4169, %v4169
        %v4234 = vmul.f32 %v4170, %v4170
        %v4235 = vmul.f32 %v4171, %v4171
        %v4236 = vmul.f32 %v4172, %v4172
        %v4237 = vmul.f32 %v4173, %v4173
        %v4238 = vmul.f32 %v4174, %v4174
        %v4239 = vmul.f32 %v4175, %v4175
        %v4240 = vmul.f32 %v4176, %v4176
        %v4241 = vmul.f32 %v4177, %v4177
        %v4242 = vmul.f32 %v4178, %v4178
        %v4243 = vmul.f32 %v4179, %v4179
        %v4244 = vmul.f32 %v4180, %v4180
        %v4245 = vmul.f32 %v4181, %v4181
        %v4246 = vmul.f32 %v4182, %v4182
        %v4247 = vmul.f32 %v4183, %v4183
        %v4248 = vmul.f32 %v4184, %v4184
        %v4249 = vmul.f32 %v4185, %v4185
        %v4250 = vmul.f32 %v4186, %v4186
        %v4251 = vmul.f32 %v4187, %v4187
        %v4252 = vmul.f32 %v4188, %v4188
        %v4253 = vmul.f32 %v4189, %v4189
        %v4254 = vmul.f32 %v4190, %v4190
        %v4255 = vmul.f32 %v4191, %v4191
        %v4256 = vmul.f32 %v4192, %v4192
        %v4257 = vmul.f32 %v4193, %v4193
        %v4258 = vmul.f32 %v4194, %v4194
        %v4259 = vmul.f32 %v4195, %v4195
        %v4260 = vmul.f32 %v4196, %v4196
        %v4261 = vmul.f32 %v4197, %v4197
        %v4262 = vmul.f32 %v4198, %v4198
        %v4263 = vmul.f32 %v4199, %v4199
        %v4264 = vmul.f32 %v4200, %v4200
        %v4265 = vmul.f32 %v4201, %v4201
        %v4266 = vmul.f32 %v4202, %v4202
        %v4267 = vmul.f32 %v4203, %v4203
        %v4268 = vmul.f32 %v4204, %v4204
        %v4269 = vmul.f32 %v4205, %v4205
        %v4270 = vmul.f32 %v4206, %v4206
        %v4271 = vmul.f32 %v4207, %v4207
        %v4272 = vmul.f32 %v4208, %v4208
        %v4273 = vsel %vm499, %v4209, 0.0
        %4274 = vadd.xlane.f32.xlu0 %v4273
        %v4275 = vpop.xlane.xlu0 %4274
        %v4276 = vsel %vm499, %v4210, 0.0
        %4277 = vadd.xlane.f32.xlu0 %v4276
        %v4278 = vpop.xlane.xlu0 %4277
        %v4279 = vsel %vm499, %v4211, 0.0
        %4280 = vadd.xlane.f32.xlu0 %v4279
        %v4281 = vpop.xlane.xlu0 %4280
        %v4282 = vsel %vm499, %v4212, 0.0
        %4283 = vadd.xlane.f32.xlu0 %v4282
        %v4284 = vpop.xlane.xlu0 %4283
        %v4285 = vsel %vm499, %v4213, 0.0
        %4286 = vadd.xlane.f32.xlu0 %v4285
        %v4287 = vpop.xlane.xlu0 %4286
        %v4288 = vsel %vm499, %v4214, 0.0
        %4289 = vadd.xlane.f32.xlu0 %v4288
        %v4290 = vpop.xlane.xlu0 %4289
        %v4291 = vsel %vm499, %v4215, 0.0
        %4292 = vadd.xlane.f32.xlu0 %v4291
        %v4293 = vpop.xlane.xlu0 %4292
        %v4294 = vsel %vm499, %v4216, 0.0
        %4295 = vadd.xlane.f32.xlu0 %v4294
        %v4296 = vpop.xlane.xlu0 %4295
        %v4297 = vsel %vm499, %v4217, 0.0
        %4298 = vadd.xlane.f32.xlu0 %v4297
        %v4299 = vpop.xlane.xlu0 %4298
        %v4300 = vsel %vm499, %v4218, 0.0
        %4301 = vadd.xlane.f32.xlu0 %v4300
        %v4302 = vpop.xlane.xlu0 %4301
        %v4303 = vsel %vm499, %v4219, 0.0
        %4304 = vadd.xlane.f32.xlu0 %v4303
        %v4305 = vpop.xlane.xlu0 %4304
        %v4306 = vsel %vm499, %v4220, 0.0
        %4307 = vadd.xlane.f32.xlu0 %v4306
        %v4308 = vpop.xlane.xlu0 %4307
        %v4309 = vsel %vm499, %v4221, 0.0
        %4310 = vadd.xlane.f32.xlu0 %v4309
        %v4311 = vpop.xlane.xlu0 %4310
        %v4312 = vsel %vm499, %v4222, 0.0
        %4313 = vadd.xlane.f32.xlu0 %v4312
        %v4314 = vpop.xlane.xlu0 %4313
        %v4315 = vsel %vm499, %v4223, 0.0
        %4316 = vadd.xlane.f32.xlu0 %v4315
        %v4317 = vpop.xlane.xlu0 %4316
        %v4318 = vsel %vm499, %v4224, 0.0
        %4319 = vadd.xlane.f32.xlu0 %v4318
        %v4320 = vpop.xlane.xlu0 %4319
        %v4321 = vsel %vm499, %v4225, 0.0
        %4322 = vadd.xlane.f32.xlu0 %v4321
        %v4323 = vpop.xlane.xlu0 %4322
        %v4324 = vsel %vm499, %v4226, 0.0
        %4325 = vadd.xlane.f32.xlu0 %v4324
        %v4326 = vpop.xlane.xlu0 %4325
        %v4327 = vsel %vm499, %v4227, 0.0
        %4328 = vadd.xlane.f32.xlu0 %v4327
        %v4329 = vpop.xlane.xlu0 %4328
        %v4330 = vsel %vm499, %v4228, 0.0
        %4331 = vadd.xlane.f32.xlu0 %v4330
        %v4332 = vpop.xlane.xlu0 %4331
        %v4333 = vsel %vm499, %v4229, 0.0
        %4334 = vadd.xlane.f32.xlu0 %v4333
        %v4335 = vpop.xlane.xlu0 %4334
        %v4336 = vsel %vm499, %v4230, 0.0
        %4337 = vadd.xlane.f32.xlu0 %v4336
        %v4338 = vpop.xlane.xlu0 %4337
        %v4339 = vsel %vm499, %v4231, 0.0
        %4340 = vadd.xlane.f32.xlu0 %v4339
        %v4341 = vpop.xlane.xlu0 %4340
        %v4342 = vsel %vm499, %v4232, 0.0
        %4343 = vadd.xlane.f32.xlu0 %v4342
        %v4344 = vpop.xlane.xlu0 %4343
        %v4345 = vsel %vm499, %v4233, 0.0
        %4346 = vadd.xlane.f32.xlu0 %v4345
        %v4347 = vpop.xlane.xlu0 %4346
        %v4348 = vsel %vm499, %v4234, 0.0
        %4349 = vadd.xlane.f32.xlu0 %v4348
        %v4350 = vpop.xlane.xlu0 %4349
        %v4351 = vsel %vm499, %v4235, 0.0
        %4352 = vadd.xlane.f32.xlu0 %v4351
        %v4353 = vpop.xlane.xlu0 %4352
        %v4354 = vsel %vm499, %v4236, 0.0
        %4355 = vadd.xlane.f32.xlu0 %v4354
        %v4356 = vpop.xlane.xlu0 %4355
        %v4357 = vsel %vm499, %v4237, 0.0
        %4358 = vadd.xlane.f32.xlu0 %v4357
        %v4359 = vpop.xlane.xlu0 %4358
        %v4360 = vsel %vm499, %v4238, 0.0
        %4361 = vadd.xlane.f32.xlu0 %v4360
        %v4362 = vpop.xlane.xlu0 %4361
        %v4363 = vsel %vm499, %v4239, 0.0
        %4364 = vadd.xlane.f32.xlu0 %v4363
        %v4365 = vpop.xlane.xlu0 %4364
        %v4366 = vsel %vm499, %v4240, 0.0
        %4367 = vadd.xlane.f32.xlu0 %v4366
        %v4368 = vpop.xlane.xlu0 %4367
        %v4369 = vsel %vm499, %v4241, 0.0
        %4370 = vadd.xlane.f32.xlu0 %v4369
        %v4371 = vpop.xlane.xlu0 %4370
        %v4372 = vsel %vm499, %v4242, 0.0
        %4373 = vadd.xlane.f32.xlu0 %v4372
        %v4374 = vpop.xlane.xlu0 %4373
        %v4375 = vsel %vm499, %v4243, 0.0
        %4376 = vadd.xlane.f32.xlu0 %v4375
        %v4377 = vpop.xlane.xlu0 %4376
        %v4378 = vsel %vm499, %v4244, 0.0
        %4379 = vadd.xlane.f32.xlu0 %v4378
        %v4380 = vpop.xlane.xlu0 %4379
        %v4381 = vsel %vm499, %v4245, 0.0
        %4382 = vadd.xlane.f32.xlu0 %v4381
        %v4383 = vpop.xlane.xlu0 %4382
        %v4384 = vsel %vm499, %v4246, 0.0
        %4385 = vadd.xlane.f32.xlu0 %v4384
        %v4386 = vpop.xlane.xlu0 %4385
        %v4387 = vsel %vm499, %v4247, 0.0
        %4388 = vadd.xlane.f32.xlu0 %v4387
        %v4389 = vpop.xlane.xlu0 %4388
        %v4390 = vsel %vm499, %v4248, 0.0
        %4391 = vadd.xlane.f32.xlu0 %v4390
        %v4392 = vpop.xlane.xlu0 %4391
        %v4393 = vsel %vm499, %v4249, 0.0
        %4394 = vadd.xlane.f32.xlu0 %v4393
        %v4395 = vpop.xlane.xlu0 %4394
        %v4396 = vsel %vm499, %v4250, 0.0
        %4397 = vadd.xlane.f32.xlu0 %v4396
        %v4398 = vpop.xlane.xlu0 %4397
        %v4399 = vsel %vm499, %v4251, 0.0
        %4400 = vadd.xlane.f32.xlu0 %v4399
        %v4401 = vpop.xlane.xlu0 %4400
        %v4402 = vsel %vm499, %v4252, 0.0
        %4403 = vadd.xlane.f32.xlu0 %v4402
        %v4404 = vpop.xlane.xlu0 %4403
        %v4405 = vsel %vm499, %v4253, 0.0
        %4406 = vadd.xlane.f32.xlu0 %v4405
        %v4407 = vpop.xlane.xlu0 %4406
        %v4408 = vsel %vm499, %v4254, 0.0
        %4409 = vadd.xlane.f32.xlu0 %v4408
        %v4410 = vpop.xlane.xlu0 %4409
        %v4411 = vsel %vm499, %v4255, 0.0
        %4412 = vadd.xlane.f32.xlu0 %v4411
        %v4413 = vpop.xlane.xlu0 %4412
        %v4414 = vsel %vm499, %v4256, 0.0
        %4415 = vadd.xlane.f32.xlu0 %v4414
        %v4416 = vpop.xlane.xlu0 %4415
        %v4417 = vsel %vm499, %v4257, 0.0
        %4418 = vadd.xlane.f32.xlu0 %v4417
        %v4419 = vpop.xlane.xlu0 %4418
        %v4420 = vsel %vm499, %v4258, 0.0
        %4421 = vadd.xlane.f32.xlu0 %v4420
        %v4422 = vpop.xlane.xlu0 %4421
        %v4423 = vsel %vm499, %v4259, 0.0
        %4424 = vadd.xlane.f32.xlu0 %v4423
        %v4425 = vpop.xlane.xlu0 %4424
        %v4426 = vsel %vm499, %v4260, 0.0
        %4427 = vadd.xlane.f32.xlu0 %v4426
        %v4428 = vpop.xlane.xlu0 %4427
        %v4429 = vsel %vm499, %v4261, 0.0
        %4430 = vadd.xlane.f32.xlu0 %v4429
        %v4431 = vpop.xlane.xlu0 %4430
        %v4432 = vsel %vm499, %v4262, 0.0
        %4433 = vadd.xlane.f32.xlu0 %v4432
        %v4434 = vpop.xlane.xlu0 %4433
        %v4435 = vsel %vm499, %v4263, 0.0
        %4436 = vadd.xlane.f32.xlu0 %v4435
        %v4437 = vpop.xlane.xlu0 %4436
        %v4438 = vsel %vm499, %v4264, 0.0
        %4439 = vadd.xlane.f32.xlu0 %v4438
        %v4440 = vpop.xlane.xlu0 %4439
        %v4441 = vsel %vm499, %v4265, 0.0
        %4442 = vadd.xlane.f32.xlu0 %v4441
        %v4443 = vpop.xlane.xlu0 %4442
        %v4444 = vsel %vm499, %v4266, 0.0
        %4445 = vadd.xlane.f32.xlu0 %v4444
        %v4446 = vpop.xlane.xlu0 %4445
        %v4447 = vsel %vm499, %v4267, 0.0
        %4448 = vadd.xlane.f32.xlu0 %v4447
        %v4449 = vpop.xlane.xlu0 %4448
        %v4450 = vsel %vm499, %v4268, 0.0
        %4451 = vadd.xlane.f32.xlu0 %v4450
        %v4452 = vpop.xlane.xlu0 %4451
        %v4453 = vsel %vm499, %v4269, 0.0
        %4454 = vadd.xlane.f32.xlu0 %v4453
        %v4455 = vpop.xlane.xlu0 %4454
        %v4456 = vsel %vm499, %v4270, 0.0
        %4457 = vadd.xlane.f32.xlu0 %v4456
        %v4458 = vpop.xlane.xlu0 %4457
        %v4459 = vsel %vm499, %v4271, 0.0
        %4460 = vadd.xlane.f32.xlu0 %v4459
        %v4461 = vpop.xlane.xlu0 %4460
        %v4462 = vsel %vm499, %v4272, 0.0
        %4463 = vadd.xlane.f32.xlu0 %v4462
        %v4464 = vpop.xlane.xlu0 %4463
        %v4465 = vmul.f32 %v4275, %v4080
        %v4466 = vmul.f32 %v4278, %v4080
        %v4467 = vmul.f32 %v4281, %v4080
        %v4468 = vmul.f32 %v4284, %v4080
        %v4469 = vmul.f32 %v4287, %v4080
        %v4470 = vmul.f32 %v4290, %v4080
        %v4471 = vmul.f32 %v4293, %v4080
        %v4472 = vmul.f32 %v4296, %v4080
        %v4473 = vmul.f32 %v4299, %v4080
        %v4474 = vmul.f32 %v4302, %v4080
        %v4475 = vmul.f32 %v4305, %v4080
        %v4476 = vmul.f32 %v4308, %v4080
        %v4477 = vmul.f32 %v4311, %v4080
        %v4478 = vmul.f32 %v4314, %v4080
        %v4479 = vmul.f32 %v4317, %v4080
        %v4480 = vmul.f32 %v4320, %v4080
        %v4481 = vmul.f32 %v4323, %v4080
        %v4482 = vmul.f32 %v4326, %v4080
        %v4483 = vmul.f32 %v4329, %v4080
        %v4484 = vmul.f32 %v4332, %v4080
        %v4485 = vmul.f32 %v4335, %v4080
        %v4486 = vmul.f32 %v4338, %v4080
        %v4487 = vmul.f32 %v4341, %v4080
        %v4488 = vmul.f32 %v4344, %v4080
        %v4489 = vmul.f32 %v4347, %v4080
        %v4490 = vmul.f32 %v4350, %v4080
        %v4491 = vmul.f32 %v4353, %v4080
        %v4492 = vmul.f32 %v4356, %v4080
        %v4493 = vmul.f32 %v4359, %v4080
        %v4494 = vmul.f32 %v4362, %v4080
        %v4495 = vmul.f32 %v4365, %v4080
        %v4496 = vmul.f32 %v4368, %v4080
        %v4497 = vmul.f32 %v4371, %v4080
        %v4498 = vmul.f32 %v4374, %v4080
        %v4499 = vmul.f32 %v4377, %v4080
        %v4500 = vmul.f32 %v4380, %v4080
        %v4501 = vmul.f32 %v4383, %v4080
        %v4502 = vmul.f32 %v4386, %v4080
        %v4503 = vmul.f32 %v4389, %v4080
        %v4504 = vmul.f32 %v4392, %v4080
        %v4505 = vmul.f32 %v4395, %v4080
        %v4506 = vmul.f32 %v4398, %v4080
        %v4507 = vmul.f32 %v4401, %v4080
        %v4508 = vmul.f32 %v4404, %v4080
        %v4509 = vmul.f32 %v4407, %v4080
        %v4510 = vmul.f32 %v4410, %v4080
        %v4511 = vmul.f32 %v4413, %v4080
        %v4512 = vmul.f32 %v4416, %v4080
        %v4513 = vmul.f32 %v4419, %v4080
        %v4514 = vmul.f32 %v4422, %v4080
        %v4515 = vmul.f32 %v4425, %v4080
        %v4516 = vmul.f32 %v4428, %v4080
        %v4517 = vmul.f32 %v4431, %v4080
        %v4518 = vmul.f32 %v4434, %v4080
        %v4519 = vmul.f32 %v4437, %v4080
        %v4520 = vmul.f32 %v4440, %v4080
        %v4521 = vmul.f32 %v4443, %v4080
        %v4522 = vmul.f32 %v4446, %v4080
        %v4523 = vmul.f32 %v4449, %v4080
        %v4524 = vmul.f32 %v4452, %v4080
        %v4525 = vmul.f32 %v4455, %v4080
        %v4526 = vmul.f32 %v4458, %v4080
        %v4527 = vmul.f32 %v4461, %v4080
        %v4528 = vmul.f32 %v4464, %v4080
        %v4529 = vadd.f32 %v4465, 1e-05
        %v4530 = vadd.f32 %v4466, 1e-05
        %v4531 = vadd.f32 %v4467, 1e-05
        %v4532 = vadd.f32 %v4468, 1e-05
        %v4533 = vadd.f32 %v4469, 1e-05
        %v4534 = vadd.f32 %v4470, 1e-05
        %v4535 = vadd.f32 %v4471, 1e-05
        %v4536 = vadd.f32 %v4472, 1e-05
        %v4537 = vadd.f32 %v4473, 1e-05
        %v4538 = vadd.f32 %v4474, 1e-05
        %v4539 = vadd.f32 %v4475, 1e-05
        %v4540 = vadd.f32 %v4476, 1e-05
        %v4541 = vadd.f32 %v4477, 1e-05
        %v4542 = vadd.f32 %v4478, 1e-05
        %v4543 = vadd.f32 %v4479, 1e-05
        %v4544 = vadd.f32 %v4480, 1e-05
        %v4545 = vadd.f32 %v4481, 1e-05
        %v4546 = vadd.f32 %v4482, 1e-05
        %v4547 = vadd.f32 %v4483, 1e-05
        %v4548 = vadd.f32 %v4484, 1e-05
        %v4549 = vadd.f32 %v4485, 1e-05
        %v4550 = vadd.f32 %v4486, 1e-05
        %v4551 = vadd.f32 %v4487, 1e-05
        %v4552 = vadd.f32 %v4488, 1e-05
        %v4553 = vadd.f32 %v4489, 1e-05
        %v4554 = vadd.f32 %v4490, 1e-05
        %v4555 = vadd.f32 %v4491, 1e-05
        %v4556 = vadd.f32 %v4492, 1e-05
        %v4557 = vadd.f32 %v4493, 1e-05
        %v4558 = vadd.f32 %v4494, 1e-05
        %v4559 = vadd.f32 %v4495, 1e-05
        %v4560 = vadd.f32 %v4496, 1e-05
        %v4561 = vadd.f32 %v4497, 1e-05
        %v4562 = vadd.f32 %v4498, 1e-05
        %v4563 = vadd.f32 %v4499, 1e-05
        %v4564 = vadd.f32 %v4500, 1e-05
        %v4565 = vadd.f32 %v4501, 1e-05
        %v4566 = vadd.f32 %v4502, 1e-05
        %v4567 = vadd.f32 %v4503, 1e-05
        %v4568 = vadd.f32 %v4504, 1e-05
        %v4569 = vadd.f32 %v4505, 1e-05
        %v4570 = vadd.f32 %v4506, 1e-05
        %v4571 = vadd.f32 %v4507, 1e-05
        %v4572 = vadd.f32 %v4508, 1e-05
        %v4573 = vadd.f32 %v4509, 1e-05
        %v4574 = vadd.f32 %v4510, 1e-05
        %v4575 = vadd.f32 %v4511, 1e-05
        %v4576 = vadd.f32 %v4512, 1e-05
        %v4577 = vadd.f32 %v4513, 1e-05
        %v4578 = vadd.f32 %v4514, 1e-05
        %v4579 = vadd.f32 %v4515, 1e-05
        %v4580 = vadd.f32 %v4516, 1e-05
        %v4581 = vadd.f32 %v4517, 1e-05
        %v4582 = vadd.f32 %v4518, 1e-05
        %v4583 = vadd.f32 %v4519, 1e-05
        %v4584 = vadd.f32 %v4520, 1e-05
        %v4585 = vadd.f32 %v4521, 1e-05
        %v4586 = vadd.f32 %v4522, 1e-05
        %v4587 = vadd.f32 %v4523, 1e-05
        %v4588 = vadd.f32 %v4524, 1e-05
        %v4589 = vadd.f32 %v4525, 1e-05
        %v4590 = vadd.f32 %v4526, 1e-05
        %v4591 = vadd.f32 %v4527, 1e-05
        %v4592 = vadd.f32 %v4528, 1e-05
        %v4593 = vrsqrt.pop %v4529
        %v4594 = vrsqrt.pop %v4530
        %v4595 = vrsqrt.pop %v4531
        %v4596 = vrsqrt.pop %v4532
        %v4597 = vrsqrt.pop %v4533
        %v4598 = vrsqrt.pop %v4534
        %v4599 = vrsqrt.pop %v4535
        %v4600 = vrsqrt.pop %v4536
        %v4601 = vrsqrt.pop %v4537
        %v4602 = vrsqrt.pop %v4538
        %v4603 = vrsqrt.pop %v4539
        %v4604 = vrsqrt.pop %v4540
        %v4605 = vrsqrt.pop %v4541
        %v4606 = vrsqrt.pop %v4542
        %v4607 = vrsqrt.pop %v4543
        %v4608 = vrsqrt.pop %v4544
        %v4609 = vrsqrt.pop %v4545
        %v4610 = vrsqrt.pop %v4546
        %v4611 = vrsqrt.pop %v4547
        %v4612 = vrsqrt.pop %v4548
        %v4613 = vrsqrt.pop %v4549
        %v4614 = vrsqrt.pop %v4550
        %v4615 = vrsqrt.pop %v4551
        %v4616 = vrsqrt.pop %v4552
        %v4617 = vrsqrt.pop %v4553
        %v4618 = vrsqrt.pop %v4554
        %v4619 = vrsqrt.pop %v4555
        %v4620 = vrsqrt.pop %v4556
        %v4621 = vrsqrt.pop %v4557
        %v4622 = vrsqrt.pop %v4558
        %v4623 = vrsqrt.pop %v4559
        %v4624 = vrsqrt.pop %v4560
        %v4625 = vrsqrt.pop %v4561
        %v4626 = vrsqrt.pop %v4562
        %v4627 = vrsqrt.pop %v4563
        %v4628 = vrsqrt.pop %v4564
        %v4629 = vrsqrt.pop %v4565
        %v4630 = vrsqrt.pop %v4566
        %v4631 = vrsqrt.pop %v4567
        %v4632 = vrsqrt.pop %v4568
        %v4633 = vrsqrt.pop %v4569
        %v4634 = vrsqrt.pop %v4570
        %v4635 = vrsqrt.pop %v4571
        %v4636 = vrsqrt.pop %v4572
        %v4637 = vrsqrt.pop %v4573
        %v4638 = vrsqrt.pop %v4574
        %v4639 = vrsqrt.pop %v4575
        %v4640 = vrsqrt.pop %v4576
        %v4641 = vrsqrt.pop %v4577
        %v4642 = vrsqrt.pop %v4578
        %v4643 = vrsqrt.pop %v4579
        %v4644 = vrsqrt.pop %v4580
        %v4645 = vrsqrt.pop %v4581
        %v4646 = vrsqrt.pop %v4582
        %v4647 = vrsqrt.pop %v4583
        %v4648 = vrsqrt.pop %v4584
        %v4649 = vrsqrt.pop %v4585
        %v4650 = vrsqrt.pop %v4586
        %v4651 = vrsqrt.pop %v4587
        %v4652 = vrsqrt.pop %v4588
        %v4653 = vrsqrt.pop %v4589
        %v4654 = vrsqrt.pop %v4590
        %v4655 = vrsqrt.pop %v4591
        %v4656 = vrsqrt.pop %v4592
        %v4657 = vmul.f32 %v4145, %v4593
        %v4658 = vmul.f32 %v4146, %v4594
        %v4659 = vmul.f32 %v4147, %v4595
        %v4660 = vmul.f32 %v4148, %v4596
        %v4661 = vmul.f32 %v4149, %v4597
        %v4662 = vmul.f32 %v4150, %v4598
        %v4663 = vmul.f32 %v4151, %v4599
        %v4664 = vmul.f32 %v4152, %v4600
        %v4665 = vmul.f32 %v4153, %v4601
        %v4666 = vmul.f32 %v4154, %v4602
        %v4667 = vmul.f32 %v4155, %v4603
        %v4668 = vmul.f32 %v4156, %v4604
        %v4669 = vmul.f32 %v4157, %v4605
        %v4670 = vmul.f32 %v4158, %v4606
        %v4671 = vmul.f32 %v4159, %v4607
        %v4672 = vmul.f32 %v4160, %v4608
        %v4673 = vmul.f32 %v4161, %v4609
        %v4674 = vmul.f32 %v4162, %v4610
        %v4675 = vmul.f32 %v4163, %v4611
        %v4676 = vmul.f32 %v4164, %v4612
        %v4677 = vmul.f32 %v4165, %v4613
        %v4678 = vmul.f32 %v4166, %v4614
        %v4679 = vmul.f32 %v4167, %v4615
        %v4680 = vmul.f32 %v4168, %v4616
        %v4681 = vmul.f32 %v4169, %v4617
        %v4682 = vmul.f32 %v4170, %v4618
        %v4683 = vmul.f32 %v4171, %v4619
        %v4684 = vmul.f32 %v4172, %v4620
        %v4685 = vmul.f32 %v4173, %v4621
        %v4686 = vmul.f32 %v4174, %v4622
        %v4687 = vmul.f32 %v4175, %v4623
        %v4688 = vmul.f32 %v4176, %v4624
        %v4689 = vmul.f32 %v4177, %v4625
        %v4690 = vmul.f32 %v4178, %v4626
        %v4691 = vmul.f32 %v4179, %v4627
        %v4692 = vmul.f32 %v4180, %v4628
        %v4693 = vmul.f32 %v4181, %v4629
        %v4694 = vmul.f32 %v4182, %v4630
        %v4695 = vmul.f32 %v4183, %v4631
        %v4696 = vmul.f32 %v4184, %v4632
        %v4697 = vmul.f32 %v4185, %v4633
        %v4698 = vmul.f32 %v4186, %v4634
        %v4699 = vmul.f32 %v4187, %v4635
        %v4700 = vmul.f32 %v4188, %v4636
        %v4701 = vmul.f32 %v4189, %v4637
        %v4702 = vmul.f32 %v4190, %v4638
        %v4703 = vmul.f32 %v4191, %v4639
        %v4704 = vmul.f32 %v4192, %v4640
        %v4705 = vmul.f32 %v4193, %v4641
        %v4706 = vmul.f32 %v4194, %v4642
        %v4707 = vmul.f32 %v4195, %v4643
        %v4708 = vmul.f32 %v4196, %v4644
        %v4709 = vmul.f32 %v4197, %v4645
        %v4710 = vmul.f32 %v4198, %v4646
        %v4711 = vmul.f32 %v4199, %v4647
        %v4712 = vmul.f32 %v4200, %v4648
        %v4713 = vmul.f32 %v4201, %v4649
        %v4714 = vmul.f32 %v4202, %v4650
        %v4715 = vmul.f32 %v4203, %v4651
        %v4716 = vmul.f32 %v4204, %v4652
        %v4717 = vmul.f32 %v4205, %v4653
        %v4718 = vmul.f32 %v4206, %v4654
        %v4719 = vmul.f32 %v4207, %v4655
        %v4720 = vmul.f32 %v4208, %v4656
        %v4722 = vlaneseq
        %v4723 = vshrl.u32 %v4722, 7
        %v4724 = vsub.s32 0, %v4723
        %v4725 = vrot.slane %v3886, %v4724
        %v4727 = vmul.f32 %v4657, %v4725
        %v4728 = vmul.f32 %v4658, %v4725
        %v4729 = vmul.f32 %v4659, %v4725
        %v4730 = vmul.f32 %v4660, %v4725
        %v4731 = vmul.f32 %v4661, %v4725
        %v4732 = vmul.f32 %v4662, %v4725
        %v4733 = vmul.f32 %v4663, %v4725
        %v4734 = vmul.f32 %v4664, %v4725
        %v4735 = vmul.f32 %v4665, %v4725
        %v4736 = vmul.f32 %v4666, %v4725
        %v4737 = vmul.f32 %v4667, %v4725
        %v4738 = vmul.f32 %v4668, %v4725
        %v4739 = vmul.f32 %v4669, %v4725
        %v4740 = vmul.f32 %v4670, %v4725
        %v4741 = vmul.f32 %v4671, %v4725
        %v4742 = vmul.f32 %v4672, %v4725
        %v4743 = vmul.f32 %v4673, %v4725
        %v4744 = vmul.f32 %v4674, %v4725
        %v4745 = vmul.f32 %v4675, %v4725
        %v4746 = vmul.f32 %v4676, %v4725
        %v4747 = vmul.f32 %v4677, %v4725
        %v4748 = vmul.f32 %v4678, %v4725
        %v4749 = vmul.f32 %v4679, %v4725
        %v4750 = vmul.f32 %v4680, %v4725
        %v4751 = vmul.f32 %v4681, %v4725
        %v4752 = vmul.f32 %v4682, %v4725
        %v4753 = vmul.f32 %v4683, %v4725
        %v4754 = vmul.f32 %v4684, %v4725
        %v4755 = vmul.f32 %v4685, %v4725
        %v4756 = vmul.f32 %v4686, %v4725
        %v4757 = vmul.f32 %v4687, %v4725
        %v4758 = vmul.f32 %v4688, %v4725
        %v4759 = vmul.f32 %v4689, %v4725
        %v4760 = vmul.f32 %v4690, %v4725
        %v4761 = vmul.f32 %v4691, %v4725
        %v4762 = vmul.f32 %v4692, %v4725
        %v4763 = vmul.f32 %v4693, %v4725
        %v4764 = vmul.f32 %v4694, %v4725
        %v4765 = vmul.f32 %v4695, %v4725
        %v4766 = vmul.f32 %v4696, %v4725
        %v4767 = vmul.f32 %v4697, %v4725
        %v4768 = vmul.f32 %v4698, %v4725
        %v4769 = vmul.f32 %v4699, %v4725
        %v4770 = vmul.f32 %v4700, %v4725
        %v4771 = vmul.f32 %v4701, %v4725
        %v4772 = vmul.f32 %v4702, %v4725
        %v4773 = vmul.f32 %v4703, %v4725
        %v4774 = vmul.f32 %v4704, %v4725
        %v4775 = vmul.f32 %v4705, %v4725
        %v4776 = vmul.f32 %v4706, %v4725
        %v4777 = vmul.f32 %v4707, %v4725
        %v4778 = vmul.f32 %v4708, %v4725
        %v4779 = vmul.f32 %v4709, %v4725
        %v4780 = vmul.f32 %v4710, %v4725
        %v4781 = vmul.f32 %v4711, %v4725
        %v4782 = vmul.f32 %v4712, %v4725
        %v4783 = vmul.f32 %v4713, %v4725
        %v4784 = vmul.f32 %v4714, %v4725
        %v4785 = vmul.f32 %v4715, %v4725
        %v4786 = vmul.f32 %v4716, %v4725
        %v4787 = vmul.f32 %v4717, %v4725
        %v4788 = vmul.f32 %v4718, %v4725
        %v4789 = vmul.f32 %v4719, %v4725
        %v4790 = vmul.f32 %v4720, %v4725
        %v4792 = vlaneseq
        %v4793 = vshrl.u32 %v4792, 7
        %v4794 = vsub.s32 0, %v4793
        %v4795 = vrot.slane %v3887, %v4794
        %v4797 = vadd.f32 %v4727, %v4795
        %v4798 = vadd.f32 %v4728, %v4795
        %v4799 = vadd.f32 %v4729, %v4795
        %v4800 = vadd.f32 %v4730, %v4795
        %v4801 = vadd.f32 %v4731, %v4795
        %v4802 = vadd.f32 %v4732, %v4795
        %v4803 = vadd.f32 %v4733, %v4795
        %v4804 = vadd.f32 %v4734, %v4795
        %v4805 = vadd.f32 %v4735, %v4795
        %v4806 = vadd.f32 %v4736, %v4795
        %v4807 = vadd.f32 %v4737, %v4795
        %v4808 = vadd.f32 %v4738, %v4795
        %v4809 = vadd.f32 %v4739, %v4795
        %v4810 = vadd.f32 %v4740, %v4795
        %v4811 = vadd.f32 %v4741, %v4795
        %v4812 = vadd.f32 %v4742, %v4795
        %v4813 = vadd.f32 %v4743, %v4795
        %v4814 = vadd.f32 %v4744, %v4795
        %v4815 = vadd.f32 %v4745, %v4795
        %v4816 = vadd.f32 %v4746, %v4795
        %v4817 = vadd.f32 %v4747, %v4795
        %v4818 = vadd.f32 %v4748, %v4795
        %v4819 = vadd.f32 %v4749, %v4795
        %v4820 = vadd.f32 %v4750, %v4795
        %v4821 = vadd.f32 %v4751, %v4795
        %v4822 = vadd.f32 %v4752, %v4795
        %v4823 = vadd.f32 %v4753, %v4795
        %v4824 = vadd.f32 %v4754, %v4795
        %v4825 = vadd.f32 %v4755, %v4795
        %v4826 = vadd.f32 %v4756, %v4795
        %v4827 = vadd.f32 %v4757, %v4795
        %v4828 = vadd.f32 %v4758, %v4795
        %v4829 = vadd.f32 %v4759, %v4795
        %v4830 = vadd.f32 %v4760, %v4795
        %v4831 = vadd.f32 %v4761, %v4795
        %v4832 = vadd.f32 %v4762, %v4795
        %v4833 = vadd.f32 %v4763, %v4795
        %v4834 = vadd.f32 %v4764, %v4795
        %v4835 = vadd.f32 %v4765, %v4795
        %v4836 = vadd.f32 %v4766, %v4795
        %v4837 = vadd.f32 %v4767, %v4795
        %v4838 = vadd.f32 %v4768, %v4795
        %v4839 = vadd.f32 %v4769, %v4795
        %v4840 = vadd.f32 %v4770, %v4795
        %v4841 = vadd.f32 %v4771, %v4795
        %v4842 = vadd.f32 %v4772, %v4795
        %v4843 = vadd.f32 %v4773, %v4795
        %v4844 = vadd.f32 %v4774, %v4795
        %v4845 = vadd.f32 %v4775, %v4795
        %v4846 = vadd.f32 %v4776, %v4795
        %v4847 = vadd.f32 %v4777, %v4795
        %v4848 = vadd.f32 %v4778, %v4795
        %v4849 = vadd.f32 %v4779, %v4795
        %v4850 = vadd.f32 %v4780, %v4795
        %v4851 = vadd.f32 %v4781, %v4795
        %v4852 = vadd.f32 %v4782, %v4795
        %v4853 = vadd.f32 %v4783, %v4795
        %v4854 = vadd.f32 %v4784, %v4795
        %v4855 = vadd.f32 %v4785, %v4795
        %v4856 = vadd.f32 %v4786, %v4795
        %v4857 = vadd.f32 %v4787, %v4795
        %v4858 = vadd.f32 %v4788, %v4795
        %v4859 = vadd.f32 %v4789, %v4795
        %v4860 = vadd.f32 %v4790, %v4795
        %v4861 = vmax.f32 %v4797, 0.0
        %v4862 = vmax.f32 %v4798, 0.0
        %v4863 = vmax.f32 %v4799, 0.0
        %v4864 = vmax.f32 %v4800, 0.0
        %v4865 = vmax.f32 %v4801, 0.0
        %v4866 = vmax.f32 %v4802, 0.0
        %v4867 = vmax.f32 %v4803, 0.0
        %v4868 = vmax.f32 %v4804, 0.0
        %v4869 = vmax.f32 %v4805, 0.0
        %v4870 = vmax.f32 %v4806, 0.0
        %v4871 = vmax.f32 %v4807, 0.0
        %v4872 = vmax.f32 %v4808, 0.0
        %v4873 = vmax.f32 %v4809, 0.0
        %v4874 = vmax.f32 %v4810, 0.0
        %v4875 = vmax.f32 %v4811, 0.0
        %v4876 = vmax.f32 %v4812, 0.0
        %v4877 = vmax.f32 %v4813, 0.0
        %v4878 = vmax.f32 %v4814, 0.0
        %v4879 = vmax.f32 %v4815, 0.0
        %v4880 = vmax.f32 %v4816, 0.0
        %v4881 = vmax.f32 %v4817, 0.0
        %v4882 = vmax.f32 %v4818, 0.0
        %v4883 = vmax.f32 %v4819, 0.0
        %v4884 = vmax.f32 %v4820, 0.0
        %v4885 = vmax.f32 %v4821, 0.0
        %v4886 = vmax.f32 %v4822, 0.0
        %v4887 = vmax.f32 %v4823, 0.0
        %v4888 = vmax.f32 %v4824, 0.0
        %v4889 = vmax.f32 %v4825, 0.0
        %v4890 = vmax.f32 %v4826, 0.0
        %v4891 = vmax.f32 %v4827, 0.0
        %v4892 = vmax.f32 %v4828, 0.0
        %v4893 = vmax.f32 %v4829, 0.0
        %v4894 = vmax.f32 %v4830, 0.0
        %v4895 = vmax.f32 %v4831, 0.0
        %v4896 = vmax.f32 %v4832, 0.0
        %v4897 = vmax.f32 %v4833, 0.0
        %v4898 = vmax.f32 %v4834, 0.0
        %v4899 = vmax.f32 %v4835, 0.0
        %v4900 = vmax.f32 %v4836, 0.0
        %v4901 = vmax.f32 %v4837, 0.0
        %v4902 = vmax.f32 %v4838, 0.0
        %v4903 = vmax.f32 %v4839, 0.0
        %v4904 = vmax.f32 %v4840, 0.0
        %v4905 = vmax.f32 %v4841, 0.0
        %v4906 = vmax.f32 %v4842, 0.0
        %v4907 = vmax.f32 %v4843, 0.0
        %v4908 = vmax.f32 %v4844, 0.0
        %v4909 = vmax.f32 %v4845, 0.0
        %v4910 = vmax.f32 %v4846, 0.0
        %v4911 = vmax.f32 %v4847, 0.0
        %v4912 = vmax.f32 %v4848, 0.0
        %v4913 = vmax.f32 %v4849, 0.0
        %v4914 = vmax.f32 %v4850, 0.0
        %v4915 = vmax.f32 %v4851, 0.0
        %v4916 = vmax.f32 %v4852, 0.0
        %v4917 = vmax.f32 %v4853, 0.0
        %v4918 = vmax.f32 %v4854, 0.0
        %v4919 = vmax.f32 %v4855, 0.0
        %v4920 = vmax.f32 %v4856, 0.0
        %v4921 = vmax.f32 %v4857, 0.0
        %v4922 = vmax.f32 %v4858, 0.0
        %v4923 = vmax.f32 %v4859, 0.0
        %v4924 = vmax.f32 %v4860, 0.0
        %4925 = vst.msk [vmem:[#allocation2] sm:$0xff] %vm499, %v4861
        %4926 = vst.msk [vmem:[#allocation2 + $0x8] sm:$0xff] %vm499, %v4862
        %4927 = vst.msk [vmem:[#allocation2 + $0x10] sm:$0xff] %vm499, %v4863
        %4928 = vst.msk [vmem:[#allocation2 + $0x18] sm:$0xff] %vm499, %v4864
        %4929 = vst.msk [vmem:[#allocation2 + $0x20] sm:$0xff] %vm499, %v4865
        %4930 = vst.msk [vmem:[#allocation2 + $0x28] sm:$0xff] %vm499, %v4866
        %4931 = vst.msk [vmem:[#allocation2 + $0x30] sm:$0xff] %vm499, %v4867
        %4932 = vst.msk [vmem:[#allocation2 + $0x38] sm:$0xff] %vm499, %v4868
        %4933 = vst.msk [vmem:[#allocation2 + $0x40] sm:$0xff] %vm499, %v4869
        %4934 = vst.msk [vmem:[#allocation2 + $0x48] sm:$0xff] %vm499, %v4870
        %4935 = vst.msk [vmem:[#allocation2 + $0x50] sm:$0xff] %vm499, %v4871
        %4936 = vst.msk [vmem:[#allocation2 + $0x58] sm:$0xff] %vm499, %v4872
        %4937 = vst.msk [vmem:[#allocation2 + $0x60] sm:$0xff] %vm499, %v4873
        %4938 = vst.msk [vmem:[#allocation2 + $0x68] sm:$0xff] %vm499, %v4874
        %4939 = vst.msk [vmem:[#allocation2 + $0x70] sm:$0xff] %vm499, %v4875
        %4940 = vst.msk [vmem:[#allocation2 + $0x78] sm:$0xff] %vm499, %v4876
        %4941 = vst.msk [vmem:[#allocation2 + $0x80] sm:$0xff] %vm499, %v4877
        %4942 = vst.msk [vmem:[#allocation2 + $0x88] sm:$0xff] %vm499, %v4878
        %4943 = vst.msk [vmem:[#allocation2 + $0x90] sm:$0xff] %vm499, %v4879
        %4944 = vst.msk [vmem:[#allocation2 + $0x98] sm:$0xff] %vm499, %v4880
        %4945 = vst.msk [vmem:[#allocation2 + $0xa0] sm:$0xff] %vm499, %v4881
        %4946 = vst.msk [vmem:[#allocation2 + $0xa8] sm:$0xff] %vm499, %v4882
        %4947 = vst.msk [vmem:[#allocation2 + $0xb0] sm:$0xff] %vm499, %v4883
        %4948 = vst.msk [vmem:[#allocation2 + $0xb8] sm:$0xff] %vm499, %v4884
        %4949 = vst.msk [vmem:[#allocation2 + $0xc0] sm:$0xff] %vm499, %v4885
        %4950 = vst.msk [vmem:[#allocation2 + $0xc8] sm:$0xff] %vm499, %v4886
        %4951 = vst.msk [vmem:[#allocation2 + $0xd0] sm:$0xff] %vm499, %v4887
        %4952 = vst.msk [vmem:[#allocation2 + $0xd8] sm:$0xff] %vm499, %v4888
        %4953 = vst.msk [vmem:[#allocation2 + $0xe0] sm:$0xff] %vm499, %v4889
        %4954 = vst.msk [vmem:[#allocation2 + $0xe8] sm:$0xff] %vm499, %v4890
        %4955 = vst.msk [vmem:[#allocation2 + $0xf0] sm:$0xff] %vm499, %v4891
        %4956 = vst.msk [vmem:[#allocation2 + $0xf8] sm:$0xff] %vm499, %v4892
        %4957 = vst.msk [vmem:[#allocation2 + $0x100] sm:$0xff] %vm499, %v4893
        %4958 = vst.msk [vmem:[#allocation2 + $0x108] sm:$0xff] %vm499, %v4894
        %4959 = vst.msk [vmem:[#allocation2 + $0x110] sm:$0xff] %vm499, %v4895
        %4960 = vst.msk [vmem:[#allocation2 + $0x118] sm:$0xff] %vm499, %v4896
        %4961 = vst.msk [vmem:[#allocation2 + $0x120] sm:$0xff] %vm499, %v4897
        %4962 = vst.msk [vmem:[#allocation2 + $0x128] sm:$0xff] %vm499, %v4898
        %4963 = vst.msk [vmem:[#allocation2 + $0x130] sm:$0xff] %vm499, %v4899
        %4964 = vst.msk [vmem:[#allocation2 + $0x138] sm:$0xff] %vm499, %v4900
        %4965 = vst.msk [vmem:[#allocation2 + $0x140] sm:$0xff] %vm499, %v4901
        %4966 = vst.msk [vmem:[#allocation2 + $0x148] sm:$0xff] %vm499, %v4902
        %4967 = vst.msk [vmem:[#allocation2 + $0x150] sm:$0xff] %vm499, %v4903
        %4968 = vst.msk [vmem:[#allocation2 + $0x158] sm:$0xff] %vm499, %v4904
        %4969 = vst.msk [vmem:[#allocation2 + $0x160] sm:$0xff] %vm499, %v4905
        %4970 = vst.msk [vmem:[#allocation2 + $0x168] sm:$0xff] %vm499, %v4906
        %4971 = vst.msk [vmem:[#allocation2 + $0x170] sm:$0xff] %vm499, %v4907
        %4972 = vst.msk [vmem:[#allocation2 + $0x178] sm:$0xff] %vm499, %v4908
        %4973 = vst.msk [vmem:[#allocation2 + $0x180] sm:$0xff] %vm499, %v4909
        %4974 = vst.msk [vmem:[#allocation2 + $0x188] sm:$0xff] %vm499, %v4910
        %4975 = vst.msk [vmem:[#allocation2 + $0x190] sm:$0xff] %vm499, %v4911
        %4976 = vst.msk [vmem:[#allocation2 + $0x198] sm:$0xff] %vm499, %v4912
        %4977 = vst.msk [vmem:[#allocation2 + $0x1a0] sm:$0xff] %vm499, %v4913
        %4978 = vst.msk [vmem:[#allocation2 + $0x1a8] sm:$0xff] %vm499, %v4914
        %4979 = vst.msk [vmem:[#allocation2 + $0x1b0] sm:$0xff] %vm499, %v4915
        %4980 = vst.msk [vmem:[#allocation2 + $0x1b8] sm:$0xff] %vm499, %v4916
        %4981 = vst.msk [vmem:[#allocation2 + $0x1c0] sm:$0xff] %vm499, %v4917
        %4982 = vst.msk [vmem:[#allocation2 + $0x1c8] sm:$0xff] %vm499, %v4918
        %4983 = vst.msk [vmem:[#allocation2 + $0x1d0] sm:$0xff] %vm499, %v4919
        %4984 = vst.msk [vmem:[#allocation2 + $0x1d8] sm:$0xff] %vm499, %v4920
        %4985 = vst.msk [vmem:[#allocation2 + $0x1e0] sm:$0xff] %vm499, %v4921
        %4986 = vst.msk [vmem:[#allocation2 + $0x1e8] sm:$0xff] %vm499, %v4922
        %4987 = vst.msk [vmem:[#allocation2 + $0x1f0] sm:$0xff] %vm499, %v4923
        %4988 = vst.msk [vmem:[#allocation2 + $0x1f8] sm:$0xff] %vm499, %v4924
        %4989 = vxpose.xlu0.b32.start [1/16] %v4861, 128
        %4990 = vxpose.xlu0.b32.cont [2/16] %v4862, 128
        %4991 = vxpose.xlu0.b32.cont [3/16] %v4863, 128
        %4992 = vxpose.xlu0.b32.cont [4/16] %v4864, 128
        %4993 = vxpose.xlu0.b32.cont [5/16] %v4865, 128
        %4994 = vxpose.xlu0.b32.cont [6/16] %v4866, 128
        %4995 = vxpose.xlu0.b32.cont [7/16] %v4867, 128
        %4996 = vxpose.xlu0.b32.cont [8/16] %v4868, 128
        %4997 = vxpose.xlu0.b32.cont [9/16] %v4869, 128
        %4998 = vxpose.xlu0.b32.cont [10/16] %v4870, 128
        %4999 = vxpose.xlu0.b32.cont [11/16] %v4871, 128
        %5000 = vxpose.xlu0.b32.cont [12/16] %v4872, 128
        %5001 = vxpose.xlu0.b32.cont [13/16] %v4873, 128
        %5002 = vxpose.xlu0.b32.cont [14/16] %v4874, 128
        %5003 = vxpose.xlu0.b32.cont [15/16] %v4875, 128
        %5004 = vxpose.xlu0.b32.end [16/16] %v4876, 128
        %v5005 = vpop.trf.xlu0
        %v5006 = vpop.trf.xlu0
        %v5007 = vpop.trf.xlu0
        %v5008 = vpop.trf.xlu0
        %v5009 = vpop.trf.xlu0
        %v5010 = vpop.trf.xlu0
        %v5011 = vpop.trf.xlu0
        %v5012 = vpop.trf.xlu0
        %v5013 = vpop.trf.xlu0
        %v5014 = vpop.trf.xlu0
        %v5015 = vpop.trf.xlu0
        %v5016 = vpop.trf.xlu0
        %v5017 = vpop.trf.xlu0
        %v5018 = vpop.trf.xlu0
        %v5019 = vpop.trf.xlu0
        %v5020 = vpop.trf.xlu0
        %5021 = vxpose.xlu0.b32.start [1/16] %v4877, 128
        %5022 = vxpose.xlu0.b32.cont [2/16] %v4878, 128
        %5023 = vxpose.xlu0.b32.cont [3/16] %v4879, 128
        %5024 = vxpose.xlu0.b32.cont [4/16] %v4880, 128
        %5025 = vxpose.xlu0.b32.cont [5/16] %v4881, 128
        %5026 = vxpose.xlu0.b32.cont [6/16] %v4882, 128
        %5027 = vxpose.xlu0.b32.cont [7/16] %v4883, 128
        %5028 = vxpose.xlu0.b32.cont [8/16] %v4884, 128
        %5029 = vxpose.xlu0.b32.cont [9/16] %v4885, 128
        %5030 = vxpose.xlu0.b32.cont [10/16] %v4886, 128
        %5031 = vxpose.xlu0.b32.cont [11/16] %v4887, 128
        %5032 = vxpose.xlu0.b32.cont [12/16] %v4888, 128
        %5033 = vxpose.xlu0.b32.cont [13/16] %v4889, 128
        %5034 = vxpose.xlu0.b32.cont [14/16] %v4890, 128
        %5035 = vxpose.xlu0.b32.cont [15/16] %v4891, 128
        %5036 = vxpose.xlu0.b32.end [16/16] %v4892, 128
        %v5037 = vpop.trf.xlu0
        %v5038 = vpop.trf.xlu0
        %v5039 = vpop.trf.xlu0
        %v5040 = vpop.trf.xlu0
        %v5041 = vpop.trf.xlu0
        %v5042 = vpop.trf.xlu0
        %v5043 = vpop.trf.xlu0
        %v5044 = vpop.trf.xlu0
        %v5045 = vpop.trf.xlu0
        %v5046 = vpop.trf.xlu0
        %v5047 = vpop.trf.xlu0
        %v5048 = vpop.trf.xlu0
        %v5049 = vpop.trf.xlu0
        %v5050 = vpop.trf.xlu0
        %v5051 = vpop.trf.xlu0
        %v5052 = vpop.trf.xlu0
        %5053 = vxpose.xlu0.b32.start [1/16] %v4893, 128
        %5054 = vxpose.xlu0.b32.cont [2/16] %v4894, 128
        %5055 = vxpose.xlu0.b32.cont [3/16] %v4895, 128
        %5056 = vxpose.xlu0.b32.cont [4/16] %v4896, 128
        %5057 = vxpose.xlu0.b32.cont [5/16] %v4897, 128
        %5058 = vxpose.xlu0.b32.cont [6/16] %v4898, 128
        %5059 = vxpose.xlu0.b32.cont [7/16] %v4899, 128
        %5060 = vxpose.xlu0.b32.cont [8/16] %v4900, 128
        %5061 = vxpose.xlu0.b32.cont [9/16] %v4901, 128
        %5062 = vxpose.xlu0.b32.cont [10/16] %v4902, 128
        %5063 = vxpose.xlu0.b32.cont [11/16] %v4903, 128
        %5064 = vxpose.xlu0.b32.cont [12/16] %v4904, 128
        %5065 = vxpose.xlu0.b32.cont [13/16] %v4905, 128
        %5066 = vxpose.xlu0.b32.cont [14/16] %v4906, 128
        %5067 = vxpose.xlu0.b32.cont [15/16] %v4907, 128
        %5068 = vxpose.xlu0.b32.end [16/16] %v4908, 128
        %v5069 = vpop.trf.xlu0
        %v5070 = vpop.trf.xlu0
        %v5071 = vpop.trf.xlu0
        %v5072 = vpop.trf.xlu0
        %v5073 = vpop.trf.xlu0
        %v5074 = vpop.trf.xlu0
        %v5075 = vpop.trf.xlu0
        %v5076 = vpop.trf.xlu0
        %v5077 = vpop.trf.xlu0
        %v5078 = vpop.trf.xlu0
        %v5079 = vpop.trf.xlu0
        %v5080 = vpop.trf.xlu0
        %v5081 = vpop.trf.xlu0
        %v5082 = vpop.trf.xlu0
        %v5083 = vpop.trf.xlu0
        %v5084 = vpop.trf.xlu0
        %5085 = vxpose.xlu0.b32.start [1/16] %v4909, 128
        %5086 = vxpose.xlu0.b32.cont [2/16] %v4910, 128
        %5087 = vxpose.xlu0.b32.cont [3/16] %v4911, 128
        %5088 = vxpose.xlu0.b32.cont [4/16] %v4912, 128
        %5089 = vxpose.xlu0.b32.cont [5/16] %v4913, 128
        %5090 = vxpose.xlu0.b32.cont [6/16] %v4914, 128
        %5091 = vxpose.xlu0.b32.cont [7/16] %v4915, 128
        %5092 = vxpose.xlu0.b32.cont [8/16] %v4916, 128
        %5093 = vxpose.xlu0.b32.cont [9/16] %v4917, 128
        %5094 = vxpose.xlu0.b32.cont [10/16] %v4918, 128
        %5095 = vxpose.xlu0.b32.cont [11/16] %v4919, 128
        %5096 = vxpose.xlu0.b32.cont [12/16] %v4920, 128
        %5097 = vxpose.xlu0.b32.cont [13/16] %v4921, 128
        %5098 = vxpose.xlu0.b32.cont [14/16] %v4922, 128
        %5099 = vxpose.xlu0.b32.cont [15/16] %v4923, 128
        %5100 = vxpose.xlu0.b32.end [16/16] %v4924, 128
        %v5101 = vpop.trf.xlu0
        %v5102 = vpop.trf.xlu0
        %v5103 = vpop.trf.xlu0
        %v5104 = vpop.trf.xlu0
        %v5105 = vpop.trf.xlu0
        %v5106 = vpop.trf.xlu0
        %v5107 = vpop.trf.xlu0
        %v5108 = vpop.trf.xlu0
        %v5109 = vpop.trf.xlu0
        %v5110 = vpop.trf.xlu0
        %v5111 = vpop.trf.xlu0
        %v5112 = vpop.trf.xlu0
        %v5113 = vpop.trf.xlu0
        %v5114 = vpop.trf.xlu0
        %v5115 = vpop.trf.xlu0
        %v5116 = vpop.trf.xlu0
        %5117 = vst [vmem:[#allocation3] sm:$0xff] %v5005
        %5118 = vst [vmem:[#allocation3 + $0x8] sm:$0xff] %v5037
        %5119 = vst [vmem:[#allocation3 + $0x10] sm:$0xff] %v5069
        %5120 = vst [vmem:[#allocation3 + $0x18] sm:$0xff] %v5101
        %5121 = vst [vmem:[#allocation3 + $0x20] sm:$0xff] %v5006
        %5122 = vst [vmem:[#allocation3 + $0x28] sm:$0xff] %v5038
        %5123 = vst [vmem:[#allocation3 + $0x30] sm:$0xff] %v5070
        %5124 = vst [vmem:[#allocation3 + $0x38] sm:$0xff] %v5102
        %5125 = vst [vmem:[#allocation3 + $0x40] sm:$0xff] %v5007
        %5126 = vst [vmem:[#allocation3 + $0x48] sm:$0xff] %v5039
        %5127 = vst [vmem:[#allocation3 + $0x50] sm:$0xff] %v5071
        %5128 = vst [vmem:[#allocation3 + $0x58] sm:$0xff] %v5103
        %5129 = vst [vmem:[#allocation3 + $0x60] sm:$0xff] %v5008
        %5130 = vst [vmem:[#allocation3 + $0x68] sm:$0xff] %v5040
        %5131 = vst [vmem:[#allocation3 + $0x70] sm:$0xff] %v5072
        %5132 = vst [vmem:[#allocation3 + $0x78] sm:$0xff] %v5104
        %v5133 = vlaneseq
        %v5134 = vshrl.u32 %v5133, 7
        %v5135 = vadd.s32 %v5134, 8
        %v5136 = vld [vmem:[%s322] sm:$0xff]
        %v5137 = vld [vmem:[%s322 + $0x8] sm:$0xff]
        %v5138 = vld [vmem:[%s329] sm:$0xff]
        %v5139 = vld [vmem:[%s329 + $0x8] sm:$0xff]
        %v5140 = vld [vmem:[%s335] sm:$0x1]
        %v5141 = vlaneseq
        %v5142 = vshrl.u32 %v5141, 7
        %v5143 = vsub.s32 0, %v5142
        %v5144 = vrot.slane %v5140, %v5143
        %vm5145 = vcmp.eq.s32.totalorder %v5134, %v5144
        %vm5146 = vcmp.eq.s32.totalorder %v5135, %v5144
        %v5147 = vsel %vm5145, 1, 0
        %v5148 = vsel %vm5146, 1, 0
        %v5149 = vcvt.s32.f32 %v5147
        %v5150 = vcvt.s32.f32 %v5148
        %v5151 = vld [vmem:[#allocation2] sm:$0xff]
        %v5152 = vld [vmem:[#allocation2 + $0x8] sm:$0xff]
        %v5153 = vld [vmem:[#allocation2 + $0x10] sm:$0xff]
        %v5154 = vld [vmem:[#allocation2 + $0x18] sm:$0xff]
        %v5155 = vld [vmem:[#allocation2 + $0x20] sm:$0xff]
        %v5156 = vld [vmem:[#allocation2 + $0x28] sm:$0xff]
        %v5157 = vld [vmem:[#allocation2 + $0x30] sm:$0xff]
        %v5158 = vld [vmem:[#allocation2 + $0x38] sm:$0xff]
        %v5159 = vld [vmem:[#allocation2 + $0x40] sm:$0xff]
        %v5160 = vld [vmem:[#allocation2 + $0x48] sm:$0xff]
        %v5161 = vld [vmem:[#allocation2 + $0x50] sm:$0xff]
        %v5162 = vld [vmem:[#allocation2 + $0x58] sm:$0xff]
        %v5163 = vld [vmem:[#allocation2 + $0x60] sm:$0xff]
        %v5164 = vld [vmem:[#allocation2 + $0x68] sm:$0xff]
        %v5165 = vld [vmem:[#allocation2 + $0x70] sm:$0xff]
        %v5166 = vld [vmem:[#allocation2 + $0x78] sm:$0xff]
        %5167 = vmatprep.subr.mxu0 0.0
        %v5168 = vand.u32 %v5151, 4294901760
        %5169 = vmatpush1.msra.mxu0 %v5168
        %5170 = vmatprep.subr.mxu0 0.0
        %v5171 = vand.u32 %v5152, 4294901760
        %5172 = vmatpush1.msra.mxu0 %v5171
        %5173 = vmatprep.subr.mxu0 0.0
        %v5174 = vand.u32 %v5153, 4294901760
        %5175 = vmatpush1.msra.mxu0 %v5174
        %5176 = vmatprep.subr.mxu0 0.0
        %v5177 = vand.u32 %v5154, 4294901760
        %5178 = vmatpush1.msra.mxu0 %v5177
        %5179 = vmatprep.subr.mxu0 0.0
        %v5180 = vand.u32 %v5155, 4294901760
        %5181 = vmatpush1.msra.mxu0 %v5180
        %5182 = vmatprep.subr.mxu0 0.0
        %v5183 = vand.u32 %v5156, 4294901760
        %5184 = vmatpush1.msra.mxu0 %v5183
        %5185 = vmatprep.subr.mxu0 0.0
        %v5186 = vand.u32 %v5157, 4294901760
        %5187 = vmatpush1.msra.mxu0 %v5186
        %5188 = vmatprep.subr.mxu0 0.0
        %v5189 = vand.u32 %v5158, 4294901760
        %5190 = vmatpush1.msra.mxu0 %v5189
        %5191 = vmatprep.subr.mxu0 0.0
        %v5192 = vand.u32 %v5159, 4294901760
        %5193 = vmatpush1.msra.mxu0 %v5192
        %5194 = vmatprep.subr.mxu0 0.0
        %v5195 = vand.u32 %v5160, 4294901760
        %5196 = vmatpush1.msra.mxu0 %v5195
        %5197 = vmatprep.subr.mxu0 0.0
        %v5198 = vand.u32 %v5161, 4294901760
        %5199 = vmatpush1.msra.mxu0 %v5198
        %5200 = vmatprep.subr.mxu0 0.0
        %v5201 = vand.u32 %v5162, 4294901760
        %5202 = vmatpush1.msra.mxu0 %v5201
        %5203 = vmatprep.subr.mxu0 0.0
        %v5204 = vand.u32 %v5163, 4294901760
        %5205 = vmatpush1.msra.mxu0 %v5204
        %5206 = vmatprep.subr.mxu0 0.0
        %v5207 = vand.u32 %v5164, 4294901760
        %5208 = vmatpush1.msra.mxu0 %v5207
        %5209 = vmatprep.subr.mxu0 0.0
        %v5210 = vand.u32 %v5165, 4294901760
        %5211 = vmatpush1.msra.mxu0 %v5210
        %5212 = vmatprep.subr.mxu0 0.0
        %v5213 = vand.u32 %v5166, 4294901760
        %5214 = vmatpush1.msra.mxu0 %v5213
        %5215 = vmatprep.subr.mxu0 0.0
        %5216 = vmatpush1.msra.mxu0 0.0
        %5217 = vmatprep.subr.mxu0 0.0
        %5218 = vmatpush1.msra.mxu0 0.0
        %5219 = vmatprep.subr.mxu0 0.0
        %5220 = vmatpush1.msra.mxu0 0.0
        %5221 = vmatprep.subr.mxu0 0.0
        %5222 = vmatpush1.msra.mxu0 0.0
        %5223 = vmatprep.subr.mxu0 0.0
        %5224 = vmatpush1.msra.mxu0 0.0
        %5225 = vmatprep.subr.mxu0 0.0
        %5226 = vmatpush1.msra.mxu0 0.0
        %5227 = vmatprep.subr.mxu0 0.0
        %5228 = vmatpush1.msra.mxu0 0.0
        %5229 = vmatprep.subr.mxu0 0.0
        %5230 = vmatpush1.msra.mxu0 0.0
        %5231 = vmatprep.subr.mxu0 0.0
        %5232 = vmatpush1.msra.mxu0 0.0
        %5233 = vmatprep.subr.mxu0 0.0
        %5234 = vmatpush1.msra.mxu0 0.0
        %5235 = vmatprep.subr.mxu0 0.0
        %5236 = vmatpush1.msra.mxu0 0.0
        %5237 = vmatprep.subr.mxu0 0.0
        %5238 = vmatpush1.msra.mxu0 0.0
        %5239 = vmatprep.subr.mxu0 0.0
        %5240 = vmatpush1.msra.mxu0 0.0
        %5241 = vmatprep.subr.mxu0 0.0
        %5242 = vmatpush1.msra.mxu0 0.0
        %5243 = vmatprep.subr.mxu0 0.0
        %5244 = vmatpush1.msra.mxu0 0.0
        %5245 = vmatprep.subr.mxu0 0.0
        %5246 = vmatpush1.msra.mxu0 0.0
        %5247 = vmatprep.mubr.f32.mxu0 0.0
        %v5248 = vand.u32 %v5149, 4294901760
        %v5249 = vsub.f32 %v5149, %v5248
        %v5250 = vand.u32 %v5249, 4294901760
        %v5251 = vsub.f32 %v5249, %v5250
        %v5252 = vand.u32 %v5251, 4294901760
        %5253 = vmatmul.mubr.f32.gmra.mrb[0].mxu0 %v5252
        %v5254 = vpop.f32.mrb[0].mxu0
        %v5255 = vadd.f32 0.0, %v5254
        %v5256 = vpop.f32.mrb[0].mxu0
        %5257 = vmatprep.mubr.f32.mxu0 0.0
        %v5258 = vand.u32 %v5150, 4294901760
        %v5259 = vsub.f32 %v5150, %v5258
        %v5260 = vand.u32 %v5259, 4294901760
        %v5261 = vsub.f32 %v5259, %v5260
        %v5262 = vand.u32 %v5261, 4294901760
        %5263 = vmatmul.mubr.f32.gmra.mrb[0].mxu0 %v5262
        %v5264 = vpop.f32.mrb[0].mxu0
        %v5265 = vadd.f32 0.0, %v5264
        %v5266 = vpop.f32.mrb[0].mxu0
        %5267 = vdwg.mxu0
        %5268 = vmatprep.subr.mxu0 0.0
        %v5269 = vand.u32 %v5151, 4294901760
        %v5270 = vsub.f32 %v5151, %v5269
        %v5271 = vand.u32 %v5270, 4294901760
        %v5272 = vsub.f32 %v5270, %v5271
        %v5273 = vand.u32 %v5272, 4294901760
        %5274 = vmatpush1.msra.mxu0 %v5273
        %5275 = vmatprep.subr.mxu0 0.0
        %v5276 = vand.u32 %v5152, 4294901760
        %v5277 = vsub.f32 %v5152, %v5276
        %v5278 = vand.u32 %v5277, 4294901760
        %v5279 = vsub.f32 %v5277, %v5278
        %v5280 = vand.u32 %v5279, 4294901760
        %5281 = vmatpush1.msra.mxu0 %v5280
        %5282 = vmatprep.subr.mxu0 0.0
        %v5283 = vand.u32 %v5153, 4294901760
        %v5284 = vsub.f32 %v5153, %v5283
        %v5285 = vand.u32 %v5284, 4294901760
        %v5286 = vsub.f32 %v5284, %v5285
        %v5287 = vand.u32 %v5286, 4294901760
        %5288 = vmatpush1.msra.mxu0 %v5287
        %5289 = vmatprep.subr.mxu0 0.0
        %v5290 = vand.u32 %v5154, 4294901760
        %v5291 = vsub.f32 %v5154, %v5290
        %v5292 = vand.u32 %v5291, 4294901760
        %v5293 = vsub.f32 %v5291, %v5292
        %v5294 = vand.u32 %v5293, 4294901760
        %5295 = vmatpush1.msra.mxu0 %v5294
        %5296 = vmatprep.subr.mxu0 0.0
        %v5297 = vand.u32 %v5155, 4294901760
        %v5298 = vsub.f32 %v5155, %v5297
        %v5299 = vand.u32 %v5298, 4294901760
        %v5300 = vsub.f32 %v5298, %v5299
        %v5301 = vand.u32 %v5300, 4294901760
        %5302 = vmatpush1.msra.mxu0 %v5301
        %5303 = vmatprep.subr.mxu0 0.0
        %v5304 = vand.u32 %v5156, 4294901760
        %v5305 = vsub.f32 %v5156, %v5304
        %v5306 = vand.u32 %v5305, 4294901760
        %v5307 = vsub.f32 %v5305, %v5306
        %v5308 = vand.u32 %v5307, 4294901760
        %5309 = vmatpush1.msra.mxu0 %v5308
        %5310 = vmatprep.subr.mxu0 0.0
        %v5311 = vand.u32 %v5157, 4294901760
        %v5312 = vsub.f32 %v5157, %v5311
        %v5313 = vand.u32 %v5312, 4294901760
        %v5314 = vsub.f32 %v5312, %v5313
        %v5315 = vand.u32 %v5314, 4294901760
        %5316 = vmatpush1.msra.mxu0 %v5315
        %5317 = vmatprep.subr.mxu0 0.0
        %v5318 = vand.u32 %v5158, 4294901760
        %v5319 = vsub.f32 %v5158, %v5318
        %v5320 = vand.u32 %v5319, 4294901760
        %v5321 = vsub.f32 %v5319, %v5320
        %v5322 = vand.u32 %v5321, 4294901760
        %5323 = vmatpush1.msra.mxu0 %v5322
        %5324 = vmatprep.subr.mxu0 0.0
        %v5325 = vand.u32 %v5159, 4294901760
        %v5326 = vsub.f32 %v5159, %v5325
        %v5327 = vand.u32 %v5326, 4294901760
        %v5328 = vsub.f32 %v5326, %v5327
        %v5329 = vand.u32 %v5328, 4294901760
        %5330 = vmatpush1.msra.mxu0 %v5329
        %5331 = vmatprep.subr.mxu0 0.0
        %v5332 = vand.u32 %v5160, 4294901760
        %v5333 = vsub.f32 %v5160, %v5332
        %v5334 = vand.u32 %v5333, 4294901760
        %v5335 = vsub.f32 %v5333, %v5334
        %v5336 = vand.u32 %v5335, 4294901760
        %5337 = vmatpush1.msra.mxu0 %v5336
        %5338 = vmatprep.subr.mxu0 0.0
        %v5339 = vand.u32 %v5161, 4294901760
        %v5340 = vsub.f32 %v5161, %v5339
        %v5341 = vand.u32 %v5340, 4294901760
        %v5342 = vsub.f32 %v5340, %v5341
        %v5343 = vand.u32 %v5342, 4294901760
        %5344 = vmatpush1.msra.mxu0 %v5343
        %5345 = vmatprep.subr.mxu0 0.0
        %v5346 = vand.u32 %v5162, 4294901760
        %v5347 = vsub.f32 %v5162, %v5346
        %v5348 = vand.u32 %v5347, 4294901760
        %v5349 = vsub.f32 %v5347, %v5348
        %v5350 = vand.u32 %v5349, 4294901760
        %5351 = vmatpush1.msra.mxu0 %v5350
        %5352 = vmatprep.subr.mxu0 0.0
        %v5353 = vand.u32 %v5163, 4294901760
        %v5354 = vsub.f32 %v5163, %v5353
        %v5355 = vand.u32 %v5354, 4294901760
        %v5356 = vsub.f32 %v5354, %v5355
        %v5357 = vand.u32 %v5356, 4294901760
        %5358 = vmatpush1.msra.mxu0 %v5357
        %5359 = vmatprep.subr.mxu0 0.0
        %v5360 = vand.u32 %v5164, 4294901760
        %v5361 = vsub.f32 %v5164, %v5360
        %v5362 = vand.u32 %v5361, 4294901760
        %v5363 = vsub.f32 %v5361, %v5362
        %v5364 = vand.u32 %v5363, 4294901760
        %5365 = vmatpush1.msra.mxu0 %v5364
        %5366 = vmatprep.subr.mxu0 0.0
        %v5367 = vand.u32 %v5165, 4294901760
        %v5368 = vsub.f32 %v5165, %v5367
        %v5369 = vand.u32 %v5368, 4294901760
        %v5370 = vsub.f32 %v5368, %v5369
        %v5371 = vand.u32 %v5370, 4294901760
        %5372 = vmatpush1.msra.mxu0 %v5371
        %5373 = vmatprep.subr.mxu0 0.0
        %v5374 = vand.u32 %v5166, 4294901760
        %v5375 = vsub.f32 %v5166, %v5374
        %v5376 = vand.u32 %v5375, 4294901760
        %v5377 = vsub.f32 %v5375, %v5376
        %v5378 = vand.u32 %v5377, 4294901760
        %5379 = vmatpush1.msra.mxu0 %v5378
        %5380 = vmatprep.subr.mxu0 0.0
        %5381 = vmatpush1.msra.mxu0 0.0
        %5382 = vmatprep.subr.mxu0 0.0
        %5383 = vmatpush1.msra.mxu0 0.0
        %5384 = vmatprep.subr.mxu0 0.0
        %5385 = vmatpush1.msra.mxu0 0.0
        %5386 = vmatprep.subr.mxu0 0.0
        %5387 = vmatpush1.msra.mxu0 0.0
        %5388 = vmatprep.subr.mxu0 0.0
        %5389 = vmatpush1.msra.mxu0 0.0
        %5390 = vmatprep.subr.mxu0 0.0
        %5391 = vmatpush1.msra.mxu0 0.0
        %5392 = vmatprep.subr.mxu0 0.0
        %5393 = vmatpush1.msra.mxu0 0.0
        %5394 = vmatprep.subr.mxu0 0.0
        %5395 = vmatpush1.msra.mxu0 0.0
        %5396 = vmatprep.subr.mxu0 0.0
        %5397 = vmatpush1.msra.mxu0 0.0
        %5398 = vmatprep.subr.mxu0 0.0
        %5399 = vmatpush1.msra.mxu0 0.0
        %5400 = vmatprep.subr.mxu0 0.0
        %5401 = vmatpush1.msra.mxu0 0.0
        %5402 = vmatprep.subr.mxu0 0.0
        %5403 = vmatpush1.msra.mxu0 0.0
        %5404 = vmatprep.subr.mxu0 0.0
        %5405 = vmatpush1.msra.mxu0 0.0
        %5406 = vmatprep.subr.mxu0 0.0
        %5407 = vmatpush1.msra.mxu0 0.0
        %5408 = vmatprep.subr.mxu0 0.0
        %5409 = vmatpush1.msra.mxu0 0.0
        %5410 = vmatprep.subr.mxu0 0.0
        %5411 = vmatpush1.msra.mxu0 0.0
        %5412 = vmatprep.mubr.f32.mxu0 0.0
        %v5413 = vand.u32 %v5149, 4294901760
        %5414 = vmatmul.mubr.f32.gmra.mrb[0].mxu0 %v5413
        %v5415 = vpop.f32.mrb[0].mxu0
        %v5416 = vadd.f32 %v5255, %v5415
        %v5417 = vpop.f32.mrb[0].mxu0
        %5418 = vmatprep.mubr.f32.mxu0 0.0
        %v5419 = vand.u32 %v5150, 4294901760
        %5420 = vmatmul.mubr.f32.gmra.mrb[0].mxu0 %v5419
        %v5421 = vpop.f32.mrb[0].mxu0
        %v5422 = vadd.f32 %v5265, %v5421
        %v5423 = vpop.f32.mrb[0].mxu0
        %5424 = vdwg.mxu0
        %5425 = vmatprep.subr.mxu0 0.0
        %v5426 = vand.u32 %v5151, 4294901760
        %v5427 = vsub.f32 %v5151, %v5426
        %5428 = vmatpush1.msra.mxu0 %v5427
        %5429 = vmatprep.subr.mxu0 0.0
        %v5430 = vand.u32 %v5152, 4294901760
        %v5431 = vsub.f32 %v5152, %v5430
        %5432 = vmatpush1.msra.mxu0 %v5431
        %5433 = vmatprep.subr.mxu0 0.0
        %v5434 = vand.u32 %v5153, 4294901760
        %v5435 = vsub.f32 %v5153, %v5434
        %5436 = vmatpush1.msra.mxu0 %v5435
        %5437 = vmatprep.subr.mxu0 0.0
        %v5438 = vand.u32 %v5154, 4294901760
        %v5439 = vsub.f32 %v5154, %v5438
        %5440 = vmatpush1.msra.mxu0 %v5439
        %5441 = vmatprep.subr.mxu0 0.0
        %v5442 = vand.u32 %v5155, 4294901760
        %v5443 = vsub.f32 %v5155, %v5442
        %5444 = vmatpush1.msra.mxu0 %v5443
        %5445 = vmatprep.subr.mxu0 0.0
        %v5446 = vand.u32 %v5156, 4294901760
        %v5447 = vsub.f32 %v5156, %v5446
        %5448 = vmatpush1.msra.mxu0 %v5447
        %5449 = vmatprep.subr.mxu0 0.0
        %v5450 = vand.u32 %v5157, 4294901760
        %v5451 = vsub.f32 %v5157, %v5450
        %5452 = vmatpush1.msra.mxu0 %v5451
        %5453 = vmatprep.subr.mxu0 0.0
        %v5454 = vand.u32 %v5158, 4294901760
        %v5455 = vsub.f32 %v5158, %v5454
        %5456 = vmatpush1.msra.mxu0 %v5455
        %5457 = vmatprep.subr.mxu0 0.0
        %v5458 = vand.u32 %v5159, 4294901760
        %v5459 = vsub.f32 %v5159, %v5458
        %5460 = vmatpush1.msra.mxu0 %v5459
        %5461 = vmatprep.subr.mxu0 0.0
        %v5462 = vand.u32 %v5160, 4294901760
        %v5463 = vsub.f32 %v5160, %v5462
        %5464 = vmatpush1.msra.mxu0 %v5463
        %5465 = vmatprep.subr.mxu0 0.0
        %v5466 = vand.u32 %v5161, 4294901760
        %v5467 = vsub.f32 %v5161, %v5466
        %5468 = vmatpush1.msra.mxu0 %v5467
        %5469 = vmatprep.subr.mxu0 0.0
        %v5470 = vand.u32 %v5162, 4294901760
        %v5471 = vsub.f32 %v5162, %v5470
        %5472 = vmatpush1.msra.mxu0 %v5471
        %5473 = vmatprep.subr.mxu0 0.0
        %v5474 = vand.u32 %v5163, 4294901760
        %v5475 = vsub.f32 %v5163, %v5474
        %5476 = vmatpush1.msra.mxu0 %v5475
        %5477 = vmatprep.subr.mxu0 0.0
        %v5478 = vand.u32 %v5164, 4294901760
        %v5479 = vsub.f32 %v5164, %v5478
        %5480 = vmatpush1.msra.mxu0 %v5479
        %5481 = vmatprep.subr.mxu0 0.0
        %v5482 = vand.u32 %v5165, 4294901760
        %v5483 = vsub.f32 %v5165, %v5482
        %5484 = vmatpush1.msra.mxu0 %v5483
        %5485 = vmatprep.subr.mxu0 0.0
        %v5486 = vand.u32 %v5166, 4294901760
        %v5487 = vsub.f32 %v5166, %v5486
        %5488 = vmatpush1.msra.mxu0 %v5487
        %5489 = vmatprep.subr.mxu0 0.0
        %5490 = vmatpush1.msra.mxu0 0.0
        %5491 = vmatprep.subr.mxu0 0.0
        %5492 = vmatpush1.msra.mxu0 0.0
        %5493 = vmatprep.subr.mxu0 0.0
        %5494 = vmatpush1.msra.mxu0 0.0
        %5495 = vmatprep.subr.mxu0 0.0
        %5496 = vmatpush1.msra.mxu0 0.0
        %5497 = vmatprep.subr.mxu0 0.0
        %5498 = vmatpush1.msra.mxu0 0.0
        %5499 = vmatprep.subr.mxu0 0.0
        %5500 = vmatpush1.msra.mxu0 0.0
        %5501 = vmatprep.subr.mxu0 0.0
        %5502 = vmatpush1.msra.mxu0 0.0
        %5503 = vmatprep.subr.mxu0 0.0
        %5504 = vmatpush1.msra.mxu0 0.0
        %5505 = vmatprep.subr.mxu0 0.0
        %5506 = vmatpush1.msra.mxu0 0.0
        %5507 = vmatprep.subr.mxu0 0.0
        %5508 = vmatpush1.msra.mxu0 0.0
        %5509 = vmatprep.subr.mxu0 0.0
        %5510 = vmatpush1.msra.mxu0 0.0
        %5511 = vmatprep.subr.mxu0 0.0
        %5512 = vmatpush1.msra.mxu0 0.0
        %5513 = vmatprep.subr.mxu0 0.0
        %5514 = vmatpush1.msra.mxu0 0.0
        %5515 = vmatprep.subr.mxu0 0.0
        %5516 = vmatpush1.msra.mxu0 0.0
        %5517 = vmatprep.subr.mxu0 0.0
        %5518 = vmatpush1.msra.mxu0 0.0
        %5519 = vmatprep.subr.mxu0 0.0
        %5520 = vmatpush1.msra.mxu0 0.0
        %5521 = vmatprep.mubr.f32.mxu0 0.0
        %v5522 = vand.u32 %v5149, 4294901760
        %v5523 = vsub.f32 %v5149, %v5522
        %5524 = vmatmul.mubr.f32.gmra.mrb[0].mxu0 %v5523
        %v5525 = vpop.f32.mrb[0].mxu0
        %v5526 = vadd.f32 %v5416, %v5525
        %v5527 = vpop.f32.mrb[0].mxu0
        %5528 = vmatprep.mubr.f32.mxu0 0.0
        %v5529 = vand.u32 %v5150, 4294901760
        %v5530 = vsub.f32 %v5150, %v5529
        %5531 = vmatmul.mubr.f32.gmra.mrb[0].mxu0 %v5530
        %v5532 = vpop.f32.mrb[0].mxu0
        %v5533 = vadd.f32 %v5422, %v5532
        %v5534 = vpop.f32.mrb[0].mxu0
        %5535 = vdwg.mxu0
        %5536 = vmatprep.subr.mxu0 0.0
        %v5537 = vand.u32 %v5151, 4294901760
        %5538 = vmatpush1.msra.mxu0 %v5537
        %5539 = vmatprep.subr.mxu0 0.0
        %v5540 = vand.u32 %v5152, 4294901760
        %5541 = vmatpush1.msra.mxu0 %v5540
        %5542 = vmatprep.subr.mxu0 0.0
        %v5543 = vand.u32 %v5153, 4294901760
        %5544 = vmatpush1.msra.mxu0 %v5543
        %5545 = vmatprep.subr.mxu0 0.0
        %v5546 = vand.u32 %v5154, 4294901760
        %5547 = vmatpush1.msra.mxu0 %v5546
        %5548 = vmatprep.subr.mxu0 0.0
        %v5549 = vand.u32 %v5155, 4294901760
        %5550 = vmatpush1.msra.mxu0 %v5549
        %5551 = vmatprep.subr.mxu0 0.0
        %v5552 = vand.u32 %v5156, 4294901760
        %5553 = vmatpush1.msra.mxu0 %v5552
        %5554 = vmatprep.subr.mxu0 0.0
        %v5555 = vand.u32 %v5157, 4294901760
        %5556 = vmatpush1.msra.mxu0 %v5555
        %5557 = vmatprep.subr.mxu0 0.0
        %v5558 = vand.u32 %v5158, 4294901760
        %5559 = vmatpush1.msra.mxu0 %v5558
        %5560 = vmatprep.subr.mxu0 0.0
        %v5561 = vand.u32 %v5159, 4294901760
        %5562 = vmatpush1.msra.mxu0 %v5561
        %5563 = vmatprep.subr.mxu0 0.0
        %v5564 = vand.u32 %v5160, 4294901760
        %5565 = vmatpush1.msra.mxu0 %v5564
        %5566 = vmatprep.subr.mxu0 0.0
        %v5567 = vand.u32 %v5161, 4294901760
        %5568 = vmatpush1.msra.mxu0 %v5567
        %5569 = vmatprep.subr.mxu0 0.0
        %v5570 = vand.u32 %v5162, 4294901760
        %5571 = vmatpush1.msra.mxu0 %v5570
        %5572 = vmatprep.subr.mxu0 0.0
        %v5573 = vand.u32 %v5163, 4294901760
        %5574 = vmatpush1.msra.mxu0 %v5573
        %5575 = vmatprep.subr.mxu0 0.0
        %v5576 = vand.u32 %v5164, 4294901760
        %5577 = vmatpush1.msra.mxu0 %v5576
        %5578 = vmatprep.subr.mxu0 0.0
        %v5579 = vand.u32 %v5165, 4294901760
        %5580 = vmatpush1.msra.mxu0 %v5579
        %5581 = vmatprep.subr.mxu0 0.0
        %v5582 = vand.u32 %v5166, 4294901760
        %5583 = vmatpush1.msra.mxu0 %v5582
        %5584 = vmatprep.subr.mxu0 0.0
        %5585 = vmatpush1.msra.mxu0 0.0
        %5586 = vmatprep.subr.mxu0 0.0
        %5587 = vmatpush1.msra.mxu0 0.0
        %5588 = vmatprep.subr.mxu0 0.0
        %5589 = vmatpush1.msra.mxu0 0.0
        %5590 = vmatprep.subr.mxu0 0.0
        %5591 = vmatpush1.msra.mxu0 0.0
        %5592 = vmatprep.subr.mxu0 0.0
        %5593 = vmatpush1.msra.mxu0 0.0
        %5594 = vmatprep.subr.mxu0 0.0
        %5595 = vmatpush1.msra.mxu0 0.0
        %5596 = vmatprep.subr.mxu0 0.0
        %5597 = vmatpush1.msra.mxu0 0.0
        %5598 = vmatprep.subr.mxu0 0.0
        %5599 = vmatpush1.msra.mxu0 0.0
        %5600 = vmatprep.subr.mxu0 0.0
        %5601 = vmatpush1.msra.mxu0 0.0
        %5602 = vmatprep.subr.mxu0 0.0
        %5603 = vmatpush1.msra.mxu0 0.0
        %5604 = vmatprep.subr.mxu0 0.0
        %5605 = vmatpush1.msra.mxu0 0.0
        %5606 = vmatprep.subr.mxu0 0.0
        %5607 = vmatpush1.msra.mxu0 0.0
        %5608 = vmatprep.subr.mxu0 0.0
        %5609 = vmatpush1.msra.mxu0 0.0
        %5610 = vmatprep.subr.mxu0 0.0
        %5611 = vmatpush1.msra.mxu0 0.0
        %5612 = vmatprep.subr.mxu0 0.0
        %5613 = vmatpush1.msra.mxu0 0.0
        %5614 = vmatprep.subr.mxu0 0.0
        %5615 = vmatpush1.msra.mxu0 0.0
        %5616 = vmatprep.mubr.f32.mxu0 0.0
        %v5617 = vand.u32 %v5149, 4294901760
        %v5618 = vsub.f32 %v5149, %v5617
        %v5619 = vand.u32 %v5618, 4294901760
        %5620 = vmatmul.mubr.f32.gmra.mrb[0].mxu0 %v5619
        %v5621 = vpop.f32.mrb[0].mxu0
        %v5622 = vadd.f32 %v5526, %v5621
        %v5623 = vpop.f32.mrb[0].mxu0
        %5624 = vmatprep.mubr.f32.mxu0 0.0
        %v5625 = vand.u32 %v5150, 4294901760
        %v5626 = vsub.f32 %v5150, %v5625
        %v5627 = vand.u32 %v5626, 4294901760
        %5628 = vmatmul.mubr.f32.gmra.mrb[0].mxu0 %v5627
        %v5629 = vpop.f32.mrb[0].mxu0
        %v5630 = vadd.f32 %v5533, %v5629
        %v5631 = vpop.f32.mrb[0].mxu0
        %5632 = vdwg.mxu0
        %5633 = vmatprep.subr.mxu0 0.0
        %v5634 = vand.u32 %v5151, 4294901760
        %v5635 = vsub.f32 %v5151, %v5634
        %v5636 = vand.u32 %v5635, 4294901760
        %5637 = vmatpush1.msra.mxu0 %v5636
        %5638 = vmatprep.subr.mxu0 0.0
        %v5639 = vand.u32 %v5152, 4294901760
        %v5640 = vsub.f32 %v5152, %v5639
        %v5641 = vand.u32 %v5640, 4294901760
        %5642 = vmatpush1.msra.mxu0 %v5641
        %5643 = vmatprep.subr.mxu0 0.0
        %v5644 = vand.u32 %v5153, 4294901760
        %v5645 = vsub.f32 %v5153, %v5644
        %v5646 = vand.u32 %v5645, 4294901760
        %5647 = vmatpush1.msra.mxu0 %v5646
        %5648 = vmatprep.subr.mxu0 0.0
        %v5649 = vand.u32 %v5154, 4294901760
        %v5650 = vsub.f32 %v5154, %v5649
        %v5651 = vand.u32 %v5650, 4294901760
        %5652 = vmatpush1.msra.mxu0 %v5651
        %5653 = vmatprep.subr.mxu0 0.0
        %v5654 = vand.u32 %v5155, 4294901760
        %v5655 = vsub.f32 %v5155, %v5654
        %v5656 = vand.u32 %v5655, 4294901760
        %5657 = vmatpush1.msra.mxu0 %v5656
        %5658 = vmatprep.subr.mxu0 0.0
        %v5659 = vand.u32 %v5156, 4294901760
        %v5660 = vsub.f32 %v5156, %v5659
        %v5661 = vand.u32 %v5660, 4294901760
        %5662 = vmatpush1.msra.mxu0 %v5661
        %5663 = vmatprep.subr.mxu0 0.0
        %v5664 = vand.u32 %v5157, 4294901760
        %v5665 = vsub.f32 %v5157, %v5664
        %v5666 = vand.u32 %v5665, 4294901760
        %5667 = vmatpush1.msra.mxu0 %v5666
        %5668 = vmatprep.subr.mxu0 0.0
        %v5669 = vand.u32 %v5158, 4294901760
        %v5670 = vsub.f32 %v5158, %v5669
        %v5671 = vand.u32 %v5670, 4294901760
        %5672 = vmatpush1.msra.mxu0 %v5671
        %5673 = vmatprep.subr.mxu0 0.0
        %v5674 = vand.u32 %v5159, 4294901760
        %v5675 = vsub.f32 %v5159, %v5674
        %v5676 = vand.u32 %v5675, 4294901760
        %5677 = vmatpush1.msra.mxu0 %v5676
        %5678 = vmatprep.subr.mxu0 0.0
        %v5679 = vand.u32 %v5160, 4294901760
        %v5680 = vsub.f32 %v5160, %v5679
        %v5681 = vand.u32 %v5680, 4294901760
        %5682 = vmatpush1.msra.mxu0 %v5681
        %5683 = vmatprep.subr.mxu0 0.0
        %v5684 = vand.u32 %v5161, 4294901760
        %v5685 = vsub.f32 %v5161, %v5684
        %v5686 = vand.u32 %v5685, 4294901760
        %5687 = vmatpush1.msra.mxu0 %v5686
        %5688 = vmatprep.subr.mxu0 0.0
        %v5689 = vand.u32 %v5162, 4294901760
        %v5690 = vsub.f32 %v5162, %v5689
        %v5691 = vand.u32 %v5690, 4294901760
        %5692 = vmatpush1.msra.mxu0 %v5691
        %5693 = vmatprep.subr.mxu0 0.0
        %v5694 = vand.u32 %v5163, 4294901760
        %v5695 = vsub.f32 %v5163, %v5694
        %v5696 = vand.u32 %v5695, 4294901760
        %5697 = vmatpush1.msra.mxu0 %v5696
        %5698 = vmatprep.subr.mxu0 0.0
        %v5699 = vand.u32 %v5164, 4294901760
        %v5700 = vsub.f32 %v5164, %v5699
        %v5701 = vand.u32 %v5700, 4294901760
        %5702 = vmatpush1.msra.mxu0 %v5701
        %5703 = vmatprep.subr.mxu0 0.0
        %v5704 = vand.u32 %v5165, 4294901760
        %v5705 = vsub.f32 %v5165, %v5704
        %v5706 = vand.u32 %v5705, 4294901760
        %5707 = vmatpush1.msra.mxu0 %v5706
        %5708 = vmatprep.subr.mxu0 0.0
        %v5709 = vand.u32 %v5166, 4294901760
        %v5710 = vsub.f32 %v5166, %v5709
        %v5711 = vand.u32 %v5710, 4294901760
        %5712 = vmatpush1.msra.mxu0 %v5711
        %5713 = vmatprep.subr.mxu0 0.0
        %5714 = vmatpush1.msra.mxu0 0.0
        %5715 = vmatprep.subr.mxu0 0.0
        %5716 = vmatpush1.msra.mxu0 0.0
        %5717 = vmatprep.subr.mxu0 0.0
        %5718 = vmatpush1.msra.mxu0 0.0
        %5719 = vmatprep.subr.mxu0 0.0
        %5720 = vmatpush1.msra.mxu0 0.0
        %5721 = vmatprep.subr.mxu0 0.0
        %5722 = vmatpush1.msra.mxu0 0.0
        %5723 = vmatprep.subr.mxu0 0.0
        %5724 = vmatpush1.msra.mxu0 0.0
        %5725 = vmatprep.subr.mxu0 0.0
        %5726 = vmatpush1.msra.mxu0 0.0
        %5727 = vmatprep.subr.mxu0 0.0
        %5728 = vmatpush1.msra.mxu0 0.0
        %5729 = vmatprep.subr.mxu0 0.0
        %5730 = vmatpush1.msra.mxu0 0.0
        %5731 = vmatprep.subr.mxu0 0.0
        %5732 = vmatpush1.msra.mxu0 0.0
        %5733 = vmatprep.subr.mxu0 0.0
        %5734 = vmatpush1.msra.mxu0 0.0
        %5735 = vmatprep.subr.mxu0 0.0
        %5736 = vmatpush1.msra.mxu0 0.0
        %5737 = vmatprep.subr.mxu0 0.0
        %5738 = vmatpush1.msra.mxu0 0.0
        %5739 = vmatprep.subr.mxu0 0.0
        %5740 = vmatpush1.msra.mxu0 0.0
        %5741 = vmatprep.subr.mxu0 0.0
        %5742 = vmatpush1.msra.mxu0 0.0
        %5743 = vmatprep.subr.mxu0 0.0
        %5744 = vmatpush1.msra.mxu0 0.0
        %5745 = vmatprep.mubr.f32.mxu0 0.0
        %v5746 = vand.u32 %v5149, 4294901760
        %5747 = vmatmul.mubr.f32.gmra.mrb[0].mxu0 %v5746
        %v5748 = vpop.f32.mrb[0].mxu0
        %v5749 = vadd.f32 %v5622, %v5748
        %v5750 = vpop.f32.mrb[0].mxu0
        %5751 = vmatprep.mubr.f32.mxu0 0.0
        %v5752 = vand.u32 %v5150, 4294901760
        %5753 = vmatmul.mubr.f32.gmra.mrb[0].mxu0 %v5752
        %v5754 = vpop.f32.mrb[0].mxu0
        %v5755 = vadd.f32 %v5630, %v5754
        %v5756 = vpop.f32.mrb[0].mxu0
        %5757 = vdwg.mxu0
        %5758 = vmatprep.subr.mxu0 0.0
        %v5759 = vand.u32 %v5151, 4294901760
        %5760 = vmatpush1.msra.mxu0 %v5759
        %5761 = vmatprep.subr.mxu0 0.0
        %v5762 = vand.u32 %v5152, 4294901760
        %5763 = vmatpush1.msra.mxu0 %v5762
        %5764 = vmatprep.subr.mxu0 0.0
        %v5765 = vand.u32 %v5153, 4294901760
        %5766 = vmatpush1.msra.mxu0 %v5765
        %5767 = vmatprep.subr.mxu0 0.0
        %v5768 = vand.u32 %v5154, 4294901760
        %5769 = vmatpush1.msra.mxu0 %v5768
        %5770 = vmatprep.subr.mxu0 0.0
        %v5771 = vand.u32 %v5155, 4294901760
        %5772 = vmatpush1.msra.mxu0 %v5771
        %5773 = vmatprep.subr.mxu0 0.0
        %v5774 = vand.u32 %v5156, 4294901760
        %5775 = vmatpush1.msra.mxu0 %v5774
        %5776 = vmatprep.subr.mxu0 0.0
        %v5777 = vand.u32 %v5157, 4294901760
        %5778 = vmatpush1.msra.mxu0 %v5777
        %5779 = vmatprep.subr.mxu0 0.0
        %v5780 = vand.u32 %v5158, 4294901760
        %5781 = vmatpush1.msra.mxu0 %v5780
        %5782 = vmatprep.subr.mxu0 0.0
        %v5783 = vand.u32 %v5159, 4294901760
        %5784 = vmatpush1.msra.mxu0 %v5783
        %5785 = vmatprep.subr.mxu0 0.0
        %v5786 = vand.u32 %v5160, 4294901760
        %5787 = vmatpush1.msra.mxu0 %v5786
        %5788 = vmatprep.subr.mxu0 0.0
        %v5789 = vand.u32 %v5161, 4294901760
        %5790 = vmatpush1.msra.mxu0 %v5789
        %5791 = vmatprep.subr.mxu0 0.0
        %v5792 = vand.u32 %v5162, 4294901760
        %5793 = vmatpush1.msra.mxu0 %v5792
        %5794 = vmatprep.subr.mxu0 0.0
        %v5795 = vand.u32 %v5163, 4294901760
        %5796 = vmatpush1.msra.mxu0 %v5795
        %5797 = vmatprep.subr.mxu0 0.0
        %v5798 = vand.u32 %v5164, 4294901760
        %5799 = vmatpush1.msra.mxu0 %v5798
        %5800 = vmatprep.subr.mxu0 0.0
        %v5801 = vand.u32 %v5165, 4294901760
        %5802 = vmatpush1.msra.mxu0 %v5801
        %5803 = vmatprep.subr.mxu0 0.0
        %v5804 = vand.u32 %v5166, 4294901760
        %5805 = vmatpush1.msra.mxu0 %v5804
        %5806 = vmatprep.subr.mxu0 0.0
        %5807 = vmatpush1.msra.mxu0 0.0
        %5808 = vmatprep.subr.mxu0 0.0
        %5809 = vmatpush1.msra.mxu0 0.0
        %5810 = vmatprep.subr.mxu0 0.0
        %5811 = vmatpush1.msra.mxu0 0.0
        %5812 = vmatprep.subr.mxu0 0.0
        %5813 = vmatpush1.msra.mxu0 0.0
        %5814 = vmatprep.subr.mxu0 0.0
        %5815 = vmatpush1.msra.mxu0 0.0
        %5816 = vmatprep.subr.mxu0 0.0
        %5817 = vmatpush1.msra.mxu0 0.0
        %5818 = vmatprep.subr.mxu0 0.0
        %5819 = vmatpush1.msra.mxu0 0.0
        %5820 = vmatprep.subr.mxu0 0.0
        %5821 = vmatpush1.msra.mxu0 0.0
        %5822 = vmatprep.subr.mxu0 0.0
        %5823 = vmatpush1.msra.mxu0 0.0
        %5824 = vmatprep.subr.mxu0 0.0
        %5825 = vmatpush1.msra.mxu0 0.0
        %5826 = vmatprep.subr.mxu0 0.0
        %5827 = vmatpush1.msra.mxu0 0.0
        %5828 = vmatprep.subr.mxu0 0.0
        %5829 = vmatpush1.msra.mxu0 0.0
        %5830 = vmatprep.subr.mxu0 0.0
        %5831 = vmatpush1.msra.mxu0 0.0
        %5832 = vmatprep.subr.mxu0 0.0
        %5833 = vmatpush1.msra.mxu0 0.0
        %5834 = vmatprep.subr.mxu0 0.0
        %5835 = vmatpush1.msra.mxu0 0.0
        %5836 = vmatprep.subr.mxu0 0.0
        %5837 = vmatpush1.msra.mxu0 0.0
        %5838 = vmatprep.mubr.f32.mxu0 0.0
        %v5839 = vand.u32 %v5149, 4294901760
        %5840 = vmatmul.mubr.f32.gmra.mrb[0].mxu0 %v5839
        %v5841 = vpop.f32.mrb[0].mxu0
        %v5842 = vadd.f32 %v5749, %v5841
        %v5843 = vpop.f32.mrb[0].mxu0
        %5844 = vmatprep.mubr.f32.mxu0 0.0
        %v5845 = vand.u32 %v5150, 4294901760
        %5846 = vmatmul.mubr.f32.gmra.mrb[0].mxu0 %v5845
        %v5847 = vpop.f32.mrb[0].mxu0
        %v5848 = vadd.f32 %v5755, %v5847
        %v5849 = vpop.f32.mrb[0].mxu0
        %5850 = vdwg.mxu0
        %v5851 = vadd.f32 %v5136, %v5842
        %v5852 = vadd.f32 %v5137, %v5848
        %v5855 = vcombine.high %v5149, %v5149
        %v5857 = vunpack.c.l.s4 1966171168
        %v5858 = vunpack.c.0.s8 %v5857
        %v5859 = vlaneseq
        %v5860 = vshrl.u32 %v5859, 7
        %v5861 = vsub.s32 %v5858, %v5860
        %v5862 = vrot.slane %v5149, %v5861
        %v5864 = vunpack.c.l.s4 1966171168
        %v5865 = vunpack.c.0.s8 %v5864
        %v5866 = vlaneseq
        %v5867 = vshrl.u32 %v5866, 7
        %v5868 = vsub.s32 %v5865, %v5867
        %v5869 = vrot.slane %v5855, %v5868
        %v5870 = vcombine.high %v5862, %v5862
        %v5871 = vcombine.high %v5869, %v5869
        %v5873 = vunpack.c.l.s4 1966171168
        %v5874 = vunpack.c.0.s8 %v5873
        %v5875 = vlaneseq
        %v5876 = vshrl.u32 %v5875, 7
        %v5877 = vsub.s32 %v5874, %v5876
        %v5878 = vrot.slane %v5862, %v5877
        %v5880 = vunpack.c.l.s4 1966171168
        %v5881 = vunpack.c.0.s8 %v5880
        %v5882 = vlaneseq
        %v5883 = vshrl.u32 %v5882, 7
        %v5884 = vsub.s32 %v5881, %v5883
        %v5885 = vrot.slane %v5869, %v5884
        %v5887 = vunpack.c.l.s4 1966171168
        %v5888 = vunpack.c.0.s8 %v5887
        %v5889 = vlaneseq
        %v5890 = vshrl.u32 %v5889, 7
        %v5891 = vsub.s32 %v5888, %v5890
        %v5892 = vrot.slane %v5870, %v5891
        %v5894 = vunpack.c.l.s4 1966171168
        %v5895 = vunpack.c.0.s8 %v5894
        %v5896 = vlaneseq
        %v5897 = vshrl.u32 %v5896, 7
        %v5898 = vsub.s32 %v5895, %v5897
        %v5899 = vrot.slane %v5871, %v5898
        %v5900 = vcombine.high %v5878, %v5878
        %v5901 = vcombine.high %v5885, %v5885
        %v5902 = vcombine.high %v5892, %v5892
        %v5903 = vcombine.high %v5899, %v5899
        %v5904 = vcombine.high %v5150, %v5150
        %v5906 = vunpack.c.l.s4 1966171168
        %v5907 = vunpack.c.0.s8 %v5906
        %v5908 = vlaneseq
        %v5909 = vshrl.u32 %v5908, 7
        %v5910 = vsub.s32 %v5907, %v5909
        %v5911 = vrot.slane %v5150, %v5910
        %v5913 = vunpack.c.l.s4 1966171168
        %v5914 = vunpack.c.0.s8 %v5913
        %v5915 = vlaneseq
        %v5916 = vshrl.u32 %v5915, 7
        %v5917 = vsub.s32 %v5914, %v5916
        %v5918 = vrot.slane %v5904, %v5917
        %v5919 = vcombine.high %v5911, %v5911
        %v5920 = vcombine.high %v5918, %v5918
        %v5922 = vunpack.c.l.s4 1966171168
        %v5923 = vunpack.c.0.s8 %v5922
        %v5924 = vlaneseq
        %v5925 = vshrl.u32 %v5924, 7
        %v5926 = vsub.s32 %v5923, %v5925
        %v5927 = vrot.slane %v5911, %v5926
        %v5929 = vunpack.c.l.s4 1966171168
        %v5930 = vunpack.c.0.s8 %v5929
        %v5931 = vlaneseq
        %v5932 = vshrl.u32 %v5931, 7
        %v5933 = vsub.s32 %v5930, %v5932
        %v5934 = vrot.slane %v5918, %v5933
        %v5936 = vunpack.c.l.s4 1966171168
        %v5937 = vunpack.c.0.s8 %v5936
        %v5938 = vlaneseq
        %v5939 = vshrl.u32 %v5938, 7
        %v5940 = vsub.s32 %v5937, %v5939
        %v5941 = vrot.slane %v5919, %v5940
        %v5943 = vunpack.c.l.s4 1966171168
        %v5944 = vunpack.c.0.s8 %v5943
        %v5945 = vlaneseq
        %v5946 = vshrl.u32 %v5945, 7
        %v5947 = vsub.s32 %v5944, %v5946
        %v5948 = vrot.slane %v5920, %v5947
        %v5949 = vcombine.high %v5927, %v5927
        %v5950 = vcombine.high %v5934, %v5934
        %v5951 = vcombine.high %v5941, %v5941
        %v5952 = vcombine.high %v5948, %v5948
        %v5953 = vld [vmem:[#allocation3] sm:$0xff]
        %v5954 = vld [vmem:[#allocation3 + $0x20] sm:$0xff]
        %v5955 = vld [vmem:[#allocation3 + $0x40] sm:$0xff]
        %v5956 = vld [vmem:[#allocation3 + $0x60] sm:$0xff]
        %v5957 = vlaneseq
        %v5958 = vshrl.u32 %v5957, 7
        %v5959 = vsub.s32 0, %v5958
        %v5960 = vrot.slane %v5878, %v5959
        %v5961 = vlaneseq
        %v5962 = vshrl.u32 %v5961, 7
        %v5963 = vsub.s32 0, %v5962
        %v5964 = vrot.slane %v5892, %v5963
        %v5965 = vlaneseq
        %v5966 = vshrl.u32 %v5965, 7
        %v5967 = vsub.s32 0, %v5966
        %v5968 = vrot.slane %v5900, %v5967
        %v5969 = vlaneseq
        %v5970 = vshrl.u32 %v5969, 7
        %v5971 = vsub.s32 0, %v5970
        %v5972 = vrot.slane %v5902, %v5971
        %v5973 = vlaneseq
        %v5974 = vshrl.u32 %v5973, 7
        %v5975 = vsub.s32 0, %v5974
        %v5976 = vrot.slane %v5885, %v5975
        %v5977 = vlaneseq
        %v5978 = vshrl.u32 %v5977, 7
        %v5979 = vsub.s32 0, %v5978
        %v5980 = vrot.slane %v5899, %v5979
        %v5981 = vlaneseq
        %v5982 = vshrl.u32 %v5981, 7
        %v5983 = vsub.s32 0, %v5982
        %v5984 = vrot.slane %v5901, %v5983
        %v5985 = vlaneseq
        %v5986 = vshrl.u32 %v5985, 7
        %v5987 = vsub.s32 0, %v5986
        %v5988 = vrot.slane %v5903, %v5987
        %v5989 = vlaneseq
        %v5990 = vshrl.u32 %v5989, 7
        %v5991 = vsub.s32 0, %v5990
        %v5992 = vrot.slane %v5927, %v5991
        %v5993 = vlaneseq
        %v5994 = vshrl.u32 %v5993, 7
        %v5995 = vsub.s32 0, %v5994
        %v5996 = vrot.slane %v5941, %v5995
        %v5997 = vlaneseq
        %v5998 = vshrl.u32 %v5997, 7
        %v5999 = vsub.s32 0, %v5998
        %v6000 = vrot.slane %v5949, %v5999
        %v6001 = vlaneseq
        %v6002 = vshrl.u32 %v6001, 7
        %v6003 = vsub.s32 0, %v6002
        %v6004 = vrot.slane %v5951, %v6003
        %v6005 = vlaneseq
        %v6006 = vshrl.u32 %v6005, 7
        %v6007 = vsub.s32 0, %v6006
        %v6008 = vrot.slane %v5934, %v6007
        %v6009 = vlaneseq
        %v6010 = vshrl.u32 %v6009, 7
        %v6011 = vsub.s32 0, %v6010
        %v6012 = vrot.slane %v5948, %v6011
        %v6013 = vlaneseq
        %v6014 = vshrl.u32 %v6013, 7
        %v6015 = vsub.s32 0, %v6014
        %v6016 = vrot.slane %v5950, %v6015
        %v6017 = vlaneseq
        %v6018 = vshrl.u32 %v6017, 7
        %v6019 = vsub.s32 0, %v6018
        %v6020 = vrot.slane %v5952, %v6019
        %v6037 = vmul.f32 %v5960, %v5953
        %v6038 = vmul.f32 %v5960, %v5954
        %v6039 = vmul.f32 %v5960, %v5955
        %v6040 = vmul.f32 %v5960, %v5956
        %v6041 = vmul.f32 %v5964, %v5953
        %v6042 = vmul.f32 %v5964, %v5954
        %v6043 = vmul.f32 %v5964, %v5955
        %v6044 = vmul.f32 %v5964, %v5956
        %v6045 = vmul.f32 %v5968, %v5953
        %v6046 = vmul.f32 %v5968, %v5954
        %v6047 = vmul.f32 %v5968, %v5955
        %v6048 = vmul.f32 %v5968, %v5956
        %v6049 = vmul.f32 %v5972, %v5953
        %v6050 = vmul.f32 %v5972, %v5954
        %v6051 = vmul.f32 %v5972, %v5955
        %v6052 = vmul.f32 %v5972, %v5956
        %v6053 = vmul.f32 %v5976, %v5953
        %v6054 = vmul.f32 %v5976, %v5954
        %v6055 = vmul.f32 %v5976, %v5955
        %v6056 = vmul.f32 %v5976, %v5956
        %v6057 = vmul.f32 %v5980, %v5953
        %v6058 = vmul.f32 %v5980, %v5954
        %v6059 = vmul.f32 %v5980, %v5955
        %v6060 = vmul.f32 %v5980, %v5956
        %v6061 = vmul.f32 %v5984, %v5953
        %v6062 = vmul.f32 %v5984, %v5954
        %v6063 = vmul.f32 %v5984, %v5955
        %v6064 = vmul.f32 %v5984, %v5956
        %v6065 = vmul.f32 %v5988, %v5953
        %v6066 = vmul.f32 %v5988, %v5954
        %v6067 = vmul.f32 %v5988, %v5955
        %v6068 = vmul.f32 %v5988, %v5956
        %v6069 = vmul.f32 %v5992, %v5953
        %v6070 = vmul.f32 %v5992, %v5954
        %v6071 = vmul.f32 %v5992, %v5955
        %v6072 = vmul.f32 %v5992, %v5956
        %v6073 = vmul.f32 %v5996, %v5953
        %v6074 = vmul.f32 %v5996, %v5954
        %v6075 = vmul.f32 %v5996, %v5955
        %v6076 = vmul.f32 %v5996, %v5956
        %v6077 = vmul.f32 %v6000, %v5953
        %v6078 = vmul.f32 %v6000, %v5954
        %v6079 = vmul.f32 %v6000, %v5955
        %v6080 = vmul.f32 %v6000, %v5956
        %v6081 = vmul.f32 %v6004, %v5953
        %v6082 = vmul.f32 %v6004, %v5954
        %v6083 = vmul.f32 %v6004, %v5955
        %v6084 = vmul.f32 %v6004, %v5956
        %v6085 = vmul.f32 %v6008, %v5953
        %v6086 = vmul.f32 %v6008, %v5954
        %v6087 = vmul.f32 %v6008, %v5955
        %v6088 = vmul.f32 %v6008, %v5956
        %v6089 = vmul.f32 %v6012, %v5953
        %v6090 = vmul.f32 %v6012, %v5954
        %v6091 = vmul.f32 %v6012, %v5955
        %v6092 = vmul.f32 %v6012, %v5956
        %v6093 = vmul.f32 %v6016, %v5953
        %v6094 = vmul.f32 %v6016, %v5954
        %v6095 = vmul.f32 %v6016, %v5955
        %v6096 = vmul.f32 %v6016, %v5956
        %v6097 = vmul.f32 %v6020, %v5953
        %v6098 = vmul.f32 %v6020, %v5954
        %v6099 = vmul.f32 %v6020, %v5955
        %v6100 = vmul.f32 %v6020, %v5956
        %6101 = vmax.xlane.f32.xlu0 %v6037
        %v6102 = vpop.xlane.xlu0 %6101
        %6103 = vmax.xlane.f32.xlu0 %v6038
        %v6104 = vpop.xlane.xlu0 %6103
        %6105 = vmax.xlane.f32.xlu0 %v6039
        %v6106 = vpop.xlane.xlu0 %6105
        %6107 = vmax.xlane.f32.xlu0 %v6040
        %v6108 = vpop.xlane.xlu0 %6107
        %6109 = vmax.xlane.f32.xlu0 %v6041
        %v6110 = vpop.xlane.xlu0 %6109
        %6111 = vmax.xlane.f32.xlu0 %v6042
        %v6112 = vpop.xlane.xlu0 %6111
        %6113 = vmax.xlane.f32.xlu0 %v6043
        %v6114 = vpop.xlane.xlu0 %6113
        %6115 = vmax.xlane.f32.xlu0 %v6044
        %v6116 = vpop.xlane.xlu0 %6115
        %6117 = vmax.xlane.f32.xlu0 %v6045
        %v6118 = vpop.xlane.xlu0 %6117
        %6119 = vmax.xlane.f32.xlu0 %v6046
        %v6120 = vpop.xlane.xlu0 %6119
        %6121 = vmax.xlane.f32.xlu0 %v6047
        %v6122 = vpop.xlane.xlu0 %6121
        %6123 = vmax.xlane.f32.xlu0 %v6048
        %v6124 = vpop.xlane.xlu0 %6123
        %6125 = vmax.xlane.f32.xlu0 %v6049
        %v6126 = vpop.xlane.xlu0 %6125
        %6127 = vmax.xlane.f32.xlu0 %v6050
        %v6128 = vpop.xlane.xlu0 %6127
        %6129 = vmax.xlane.f32.xlu0 %v6051
        %v6130 = vpop.xlane.xlu0 %6129
        %6131 = vmax.xlane.f32.xlu0 %v6052
        %v6132 = vpop.xlane.xlu0 %6131
        %6133 = vmax.xlane.f32.xlu0 %v6053
        %v6134 = vpop.xlane.xlu0 %6133
        %6135 = vmax.xlane.f32.xlu0 %v6054
        %v6136 = vpop.xlane.xlu0 %6135
        %6137 = vmax.xlane.f32.xlu0 %v6055
        %v6138 = vpop.xlane.xlu0 %6137
        %6139 = vmax.xlane.f32.xlu0 %v6056
        %v6140 = vpop.xlane.xlu0 %6139
        %6141 = vmax.xlane.f32.xlu0 %v6057
        %v6142 = vpop.xlane.xlu0 %6141
        %6143 = vmax.xlane.f32.xlu0 %v6058
        %v6144 = vpop.xlane.xlu0 %6143
        %6145 = vmax.xlane.f32.xlu0 %v6059
        %v6146 = vpop.xlane.xlu0 %6145
        %6147 = vmax.xlane.f32.xlu0 %v6060
        %v6148 = vpop.xlane.xlu0 %6147
        %6149 = vmax.xlane.f32.xlu0 %v6061
        %v6150 = vpop.xlane.xlu0 %6149
        %6151 = vmax.xlane.f32.xlu0 %v6062
        %v6152 = vpop.xlane.xlu0 %6151
        %6153 = vmax.xlane.f32.xlu0 %v6063
        %v6154 = vpop.xlane.xlu0 %6153
        %6155 = vmax.xlane.f32.xlu0 %v6064
        %v6156 = vpop.xlane.xlu0 %6155
        %6157 = vmax.xlane.f32.xlu0 %v6065
        %v6158 = vpop.xlane.xlu0 %6157
        %6159 = vmax.xlane.f32.xlu0 %v6066
        %v6160 = vpop.xlane.xlu0 %6159
        %6161 = vmax.xlane.f32.xlu0 %v6067
        %v6162 = vpop.xlane.xlu0 %6161
        %6163 = vmax.xlane.f32.xlu0 %v6068
        %v6164 = vpop.xlane.xlu0 %6163
        %6165 = vmax.xlane.f32.xlu0 %v6069
        %v6166 = vpop.xlane.xlu0 %6165
        %6167 = vmax.xlane.f32.xlu0 %v6070
        %v6168 = vpop.xlane.xlu0 %6167
        %6169 = vmax.xlane.f32.xlu0 %v6071
        %v6170 = vpop.xlane.xlu0 %6169
        %6171 = vmax.xlane.f32.xlu0 %v6072
        %v6172 = vpop.xlane.xlu0 %6171
        %6173 = vmax.xlane.f32.xlu0 %v6073
        %v6174 = vpop.xlane.xlu0 %6173
        %6175 = vmax.xlane.f32.xlu0 %v6074
        %v6176 = vpop.xlane.xlu0 %6175
        %6177 = vmax.xlane.f32.xlu0 %v6075
        %v6178 = vpop.xlane.xlu0 %6177
        %6179 = vmax.xlane.f32.xlu0 %v6076
        %v6180 = vpop.xlane.xlu0 %6179
        %6181 = vmax.xlane.f32.xlu0 %v6077
        %v6182 = vpop.xlane.xlu0 %6181
        %6183 = vmax.xlane.f32.xlu0 %v6078
        %v6184 = vpop.xlane.xlu0 %6183
        %6185 = vmax.xlane.f32.xlu0 %v6079
        %v6186 = vpop.xlane.xlu0 %6185
        %6187 = vmax.xlane.f32.xlu0 %v6080
        %v6188 = vpop.xlane.xlu0 %6187
        %6189 = vmax.xlane.f32.xlu0 %v6081
        %v6190 = vpop.xlane.xlu0 %6189
        %6191 = vmax.xlane.f32.xlu0 %v6082
        %v6192 = vpop.xlane.xlu0 %6191
        %6193 = vmax.xlane.f32.xlu0 %v6083
        %v6194 = vpop.xlane.xlu0 %6193
        %6195 = vmax.xlane.f32.xlu0 %v6084
        %v6196 = vpop.xlane.xlu0 %6195
        %6197 = vmax.xlane.f32.xlu0 %v6085
        %v6198 = vpop.xlane.xlu0 %6197
        %6199 = vmax.xlane.f32.xlu0 %v6086
        %v6200 = vpop.xlane.xlu0 %6199
        %6201 = vmax.xlane.f32.xlu0 %v6087
        %v6202 = vpop.xlane.xlu0 %6201
        %6203 = vmax.xlane.f32.xlu0 %v6088
        %v6204 = vpop.xlane.xlu0 %6203
        %6205 = vmax.xlane.f32.xlu0 %v6089
        %v6206 = vpop.xlane.xlu0 %6205
        %6207 = vmax.xlane.f32.xlu0 %v6090
        %v6208 = vpop.xlane.xlu0 %6207
        %6209 = vmax.xlane.f32.xlu0 %v6091
        %v6210 = vpop.xlane.xlu0 %6209
        %6211 = vmax.xlane.f32.xlu0 %v6092
        %v6212 = vpop.xlane.xlu0 %6211
        %6213 = vmax.xlane.f32.xlu0 %v6093
        %v6214 = vpop.xlane.xlu0 %6213
        %6215 = vmax.xlane.f32.xlu0 %v6094
        %v6216 = vpop.xlane.xlu0 %6215
        %6217 = vmax.xlane.f32.xlu0 %v6095
        %v6218 = vpop.xlane.xlu0 %6217
        %6219 = vmax.xlane.f32.xlu0 %v6096
        %v6220 = vpop.xlane.xlu0 %6219
        %6221 = vmax.xlane.f32.xlu0 %v6097
        %v6222 = vpop.xlane.xlu0 %6221
        %6223 = vmax.xlane.f32.xlu0 %v6098
        %v6224 = vpop.xlane.xlu0 %6223
        %6225 = vmax.xlane.f32.xlu0 %v6099
        %v6226 = vpop.xlane.xlu0 %6225
        %6227 = vmax.xlane.f32.xlu0 %v6100
        %v6228 = vpop.xlane.xlu0 %6227
        %v6293 = vlaneseq
        %v6294 = vand.u32 %v6293, 127
        %v6295 = vlaneseq
        %v6296 = vshrl.u32 %v6295, 7
        %v6297 = vsub.s32 %v6294, %v6296
        %v6298 = vrot.slane %v6102, %v6297
        %v6299 = vadd.s32 %v6294, 4294967288
        %v6300 = vlaneseq
        %v6301 = vshrl.u32 %v6300, 7
        %v6302 = vsub.s32 %v6299, %v6301
        %v6303 = vrot.slane %v6104, %v6302
        %vm6304 = vcmask 130112
        %v6305 = vsel %vm6304, %v6303, %v6298
        %v6306 = vadd.s32 %v6294, 4294967280
        %v6307 = vlaneseq
        %v6308 = vshrl.u32 %v6307, 7
        %v6309 = vsub.s32 %v6306, %v6308
        %v6310 = vrot.slane %v6106, %v6309
        %vm6311 = vcmask 195712
        %v6312 = vsel %vm6311, %v6310, %v6305
        %v6313 = vadd.s32 %v6294, 4294967272
        %v6314 = vlaneseq
        %v6315 = vshrl.u32 %v6314, 7
        %v6316 = vsub.s32 %v6313, %v6315
        %v6317 = vrot.slane %v6108, %v6316
        %vm6318 = vcmask 261312
        %v6319 = vsel %vm6318, %v6317, %v6312
        %v6320 = vlaneseq
        %v6321 = vshrl.u32 %v6320, 7
        %v6322 = vsub.s32 %v6294, %v6321
        %v6323 = vrot.slane %v6110, %v6322
        %v6324 = vlaneseq
        %v6325 = vshrl.u32 %v6324, 7
        %v6326 = vsub.s32 %v6299, %v6325
        %v6327 = vrot.slane %v6112, %v6326
        %v6328 = vsel %vm6304, %v6327, %v6323
        %v6329 = vlaneseq
        %v6330 = vshrl.u32 %v6329, 7
        %v6331 = vsub.s32 %v6306, %v6330
        %v6332 = vrot.slane %v6114, %v6331
        %v6333 = vsel %vm6311, %v6332, %v6328
        %v6334 = vlaneseq
        %v6335 = vshrl.u32 %v6334, 7
        %v6336 = vsub.s32 %v6313, %v6335
        %v6337 = vrot.slane %v6116, %v6336
        %v6338 = vsel %vm6318, %v6337, %v6333
        %v6339 = vlaneseq
        %v6340 = vshrl.u32 %v6339, 7
        %v6341 = vsub.s32 %v6294, %v6340
        %v6342 = vrot.slane %v6118, %v6341
        %v6343 = vlaneseq
        %v6344 = vshrl.u32 %v6343, 7
        %v6345 = vsub.s32 %v6299, %v6344
        %v6346 = vrot.slane %v6120, %v6345
        %v6347 = vsel %vm6304, %v6346, %v6342
        %v6348 = vlaneseq
        %v6349 = vshrl.u32 %v6348, 7
        %v6350 = vsub.s32 %v6306, %v6349
        %v6351 = vrot.slane %v6122, %v6350
        %v6352 = vsel %vm6311, %v6351, %v6347
        %v6353 = vlaneseq
        %v6354 = vshrl.u32 %v6353, 7
        %v6355 = vsub.s32 %v6313, %v6354
        %v6356 = vrot.slane %v6124, %v6355
        %v6357 = vsel %vm6318, %v6356, %v6352
        %v6358 = vlaneseq
        %v6359 = vshrl.u32 %v6358, 7
        %v6360 = vsub.s32 %v6294, %v6359
        %v6361 = vrot.slane %v6126, %v6360
        %v6362 = vlaneseq
        %v6363 = vshrl.u32 %v6362, 7
        %v6364 = vsub.s32 %v6299, %v6363
        %v6365 = vrot.slane %v6128, %v6364
        %v6366 = vsel %vm6304, %v6365, %v6361
        %v6367 = vlaneseq
        %v6368 = vshrl.u32 %v6367, 7
        %v6369 = vsub.s32 %v6306, %v6368
        %v6370 = vrot.slane %v6130, %v6369
        %v6371 = vsel %vm6311, %v6370, %v6366
        %v6372 = vlaneseq
        %v6373 = vshrl.u32 %v6372, 7
        %v6374 = vsub.s32 %v6313, %v6373
        %v6375 = vrot.slane %v6132, %v6374
        %v6376 = vsel %vm6318, %v6375, %v6371
        %v6377 = vlaneseq
        %v6378 = vshrl.u32 %v6377, 7
        %v6379 = vsub.s32 %v6294, %v6378
        %v6380 = vrot.slane %v6134, %v6379
        %v6381 = vlaneseq
        %v6382 = vshrl.u32 %v6381, 7
        %v6383 = vsub.s32 %v6299, %v6382
        %v6384 = vrot.slane %v6136, %v6383
        %v6385 = vsel %vm6304, %v6384, %v6380
        %v6386 = vlaneseq
        %v6387 = vshrl.u32 %v6386, 7
        %v6388 = vsub.s32 %v6306, %v6387
        %v6389 = vrot.slane %v6138, %v6388
        %v6390 = vsel %vm6311, %v6389, %v6385
        %v6391 = vlaneseq
        %v6392 = vshrl.u32 %v6391, 7
        %v6393 = vsub.s32 %v6313, %v6392
        %v6394 = vrot.slane %v6140, %v6393
        %v6395 = vsel %vm6318, %v6394, %v6390
        %v6396 = vlaneseq
        %v6397 = vshrl.u32 %v6396, 7
        %v6398 = vsub.s32 %v6294, %v6397
        %v6399 = vrot.slane %v6142, %v6398
        %v6400 = vlaneseq
        %v6401 = vshrl.u32 %v6400, 7
        %v6402 = vsub.s32 %v6299, %v6401
        %v6403 = vrot.slane %v6144, %v6402
        %v6404 = vsel %vm6304, %v6403, %v6399
        %v6405 = vlaneseq
        %v6406 = vshrl.u32 %v6405, 7
        %v6407 = vsub.s32 %v6306, %v6406
        %v6408 = vrot.slane %v6146, %v6407
        %v6409 = vsel %vm6311, %v6408, %v6404
        %v6410 = vlaneseq
        %v6411 = vshrl.u32 %v6410, 7
        %v6412 = vsub.s32 %v6313, %v6411
        %v6413 = vrot.slane %v6148, %v6412
        %v6414 = vsel %vm6318, %v6413, %v6409
        %v6415 = vlaneseq
        %v6416 = vshrl.u32 %v6415, 7
        %v6417 = vsub.s32 %v6294, %v6416
        %v6418 = vrot.slane %v6150, %v6417
        %v6419 = vlaneseq
        %v6420 = vshrl.u32 %v6419, 7
        %v6421 = vsub.s32 %v6299, %v6420
        %v6422 = vrot.slane %v6152, %v6421
        %v6423 = vsel %vm6304, %v6422, %v6418
        %v6424 = vlaneseq
        %v6425 = vshrl.u32 %v6424, 7
        %v6426 = vsub.s32 %v6306, %v6425
        %v6427 = vrot.slane %v6154, %v6426
        %v6428 = vsel %vm6311, %v6427, %v6423
        %v6429 = vlaneseq
        %v6430 = vshrl.u32 %v6429, 7
        %v6431 = vsub.s32 %v6313, %v6430
        %v6432 = vrot.slane %v6156, %v6431
        %v6433 = vsel %vm6318, %v6432, %v6428
        %v6434 = vlaneseq
        %v6435 = vshrl.u32 %v6434, 7
        %v6436 = vsub.s32 %v6294, %v6435
        %v6437 = vrot.slane %v6158, %v6436
        %v6438 = vlaneseq
        %v6439 = vshrl.u32 %v6438, 7
        %v6440 = vsub.s32 %v6299, %v6439
        %v6441 = vrot.slane %v6160, %v6440
        %v6442 = vsel %vm6304, %v6441, %v6437
        %v6443 = vlaneseq
        %v6444 = vshrl.u32 %v6443, 7
        %v6445 = vsub.s32 %v6306, %v6444
        %v6446 = vrot.slane %v6162, %v6445
        %v6447 = vsel %vm6311, %v6446, %v6442
        %v6448 = vlaneseq
        %v6449 = vshrl.u32 %v6448, 7
        %v6450 = vsub.s32 %v6313, %v6449
        %v6451 = vrot.slane %v6164, %v6450
        %v6452 = vsel %vm6318, %v6451, %v6447
        %v6453 = vlaneseq
        %v6454 = vshrl.u32 %v6453, 7
        %v6455 = vsub.s32 %v6294, %v6454
        %v6456 = vrot.slane %v6166, %v6455
        %v6457 = vlaneseq
        %v6458 = vshrl.u32 %v6457, 7
        %v6459 = vsub.s32 %v6299, %v6458
        %v6460 = vrot.slane %v6168, %v6459
        %v6461 = vsel %vm6304, %v6460, %v6456
        %v6462 = vlaneseq
        %v6463 = vshrl.u32 %v6462, 7
        %v6464 = vsub.s32 %v6306, %v6463
        %v6465 = vrot.slane %v6170, %v6464
        %v6466 = vsel %vm6311, %v6465, %v6461
        %v6467 = vlaneseq
        %v6468 = vshrl.u32 %v6467, 7
        %v6469 = vsub.s32 %v6313, %v6468
        %v6470 = vrot.slane %v6172, %v6469
        %v6471 = vsel %vm6318, %v6470, %v6466
        %v6472 = vlaneseq
        %v6473 = vshrl.u32 %v6472, 7
        %v6474 = vsub.s32 %v6294, %v6473
        %v6475 = vrot.slane %v6174, %v6474
        %v6476 = vlaneseq
        %v6477 = vshrl.u32 %v6476, 7
        %v6478 = vsub.s32 %v6299, %v6477
        %v6479 = vrot.slane %v6176, %v6478
        %v6480 = vsel %vm6304, %v6479, %v6475
        %v6481 = vlaneseq
        %v6482 = vshrl.u32 %v6481, 7
        %v6483 = vsub.s32 %v6306, %v6482
        %v6484 = vrot.slane %v6178, %v6483
        %v6485 = vsel %vm6311, %v6484, %v6480
        %v6486 = vlaneseq
        %v6487 = vshrl.u32 %v6486, 7
        %v6488 = vsub.s32 %v6313, %v6487
        %v6489 = vrot.slane %v6180, %v6488
        %v6490 = vsel %vm6318, %v6489, %v6485
        %v6491 = vlaneseq
        %v6492 = vshrl.u32 %v6491, 7
        %v6493 = vsub.s32 %v6294, %v6492
        %v6494 = vrot.slane %v6182, %v6493
        %v6495 = vlaneseq
        %v6496 = vshrl.u32 %v6495, 7
        %v6497 = vsub.s32 %v6299, %v6496
        %v6498 = vrot.slane %v6184, %v6497
        %v6499 = vsel %vm6304, %v6498, %v6494
        %v6500 = vlaneseq
        %v6501 = vshrl.u32 %v6500, 7
        %v6502 = vsub.s32 %v6306, %v6501
        %v6503 = vrot.slane %v6186, %v6502
        %v6504 = vsel %vm6311, %v6503, %v6499
        %v6505 = vlaneseq
        %v6506 = vshrl.u32 %v6505, 7
        %v6507 = vsub.s32 %v6313, %v6506
        %v6508 = vrot.slane %v6188, %v6507
        %v6509 = vsel %vm6318, %v6508, %v6504
        %v6510 = vlaneseq
        %v6511 = vshrl.u32 %v6510, 7
        %v6512 = vsub.s32 %v6294, %v6511
        %v6513 = vrot.slane %v6190, %v6512
        %v6514 = vlaneseq
        %v6515 = vshrl.u32 %v6514, 7
        %v6516 = vsub.s32 %v6299, %v6515
        %v6517 = vrot.slane %v6192, %v6516
        %v6518 = vsel %vm6304, %v6517, %v6513
        %v6519 = vlaneseq
        %v6520 = vshrl.u32 %v6519, 7
        %v6521 = vsub.s32 %v6306, %v6520
        %v6522 = vrot.slane %v6194, %v6521
        %v6523 = vsel %vm6311, %v6522, %v6518
        %v6524 = vlaneseq
        %v6525 = vshrl.u32 %v6524, 7
        %v6526 = vsub.s32 %v6313, %v6525
        %v6527 = vrot.slane %v6196, %v6526
        %v6528 = vsel %vm6318, %v6527, %v6523
        %v6529 = vlaneseq
        %v6530 = vshrl.u32 %v6529, 7
        %v6531 = vsub.s32 %v6294, %v6530
        %v6532 = vrot.slane %v6198, %v6531
        %v6533 = vlaneseq
        %v6534 = vshrl.u32 %v6533, 7
        %v6535 = vsub.s32 %v6299, %v6534
        %v6536 = vrot.slane %v6200, %v6535
        %v6537 = vsel %vm6304, %v6536, %v6532
        %v6538 = vlaneseq
        %v6539 = vshrl.u32 %v6538, 7
        %v6540 = vsub.s32 %v6306, %v6539
        %v6541 = vrot.slane %v6202, %v6540
        %v6542 = vsel %vm6311, %v6541, %v6537
        %v6543 = vlaneseq
        %v6544 = vshrl.u32 %v6543, 7
        %v6545 = vsub.s32 %v6313, %v6544
        %v6546 = vrot.slane %v6204, %v6545
        %v6547 = vsel %vm6318, %v6546, %v6542
        %v6548 = vlaneseq
        %v6549 = vshrl.u32 %v6548, 7
        %v6550 = vsub.s32 %v6294, %v6549
        %v6551 = vrot.slane %v6206, %v6550
        %v6552 = vlaneseq
        %v6553 = vshrl.u32 %v6552, 7
        %v6554 = vsub.s32 %v6299, %v6553
        %v6555 = vrot.slane %v6208, %v6554
        %v6556 = vsel %vm6304, %v6555, %v6551
        %v6557 = vlaneseq
        %v6558 = vshrl.u32 %v6557, 7
        %v6559 = vsub.s32 %v6306, %v6558
        %v6560 = vrot.slane %v6210, %v6559
        %v6561 = vsel %vm6311, %v6560, %v6556
        %v6562 = vlaneseq
        %v6563 = vshrl.u32 %v6562, 7
        %v6564 = vsub.s32 %v6313, %v6563
        %v6565 = vrot.slane %v6212, %v6564
        %v6566 = vsel %vm6318, %v6565, %v6561
        %v6567 = vlaneseq
        %v6568 = vshrl.u32 %v6567, 7
        %v6569 = vsub.s32 %v6294, %v6568
        %v6570 = vrot.slane %v6214, %v6569
        %v6571 = vlaneseq
        %v6572 = vshrl.u32 %v6571, 7
        %v6573 = vsub.s32 %v6299, %v6572
        %v6574 = vrot.slane %v6216, %v6573
        %v6575 = vsel %vm6304, %v6574, %v6570
        %v6576 = vlaneseq
        %v6577 = vshrl.u32 %v6576, 7
        %v6578 = vsub.s32 %v6306, %v6577
        %v6579 = vrot.slane %v6218, %v6578
        %v6580 = vsel %vm6311, %v6579, %v6575
        %v6581 = vlaneseq
        %v6582 = vshrl.u32 %v6581, 7
        %v6583 = vsub.s32 %v6313, %v6582
        %v6584 = vrot.slane %v6220, %v6583
        %v6585 = vsel %vm6318, %v6584, %v6580
        %v6586 = vlaneseq
        %v6587 = vshrl.u32 %v6586, 7
        %v6588 = vsub.s32 %v6294, %v6587
        %v6589 = vrot.slane %v6222, %v6588
        %v6590 = vlaneseq
        %v6591 = vshrl.u32 %v6590, 7
        %v6592 = vsub.s32 %v6299, %v6591
        %v6593 = vrot.slane %v6224, %v6592
        %v6594 = vsel %vm6304, %v6593, %v6589
        %v6595 = vlaneseq
        %v6596 = vshrl.u32 %v6595, 7
        %v6597 = vsub.s32 %v6306, %v6596
        %v6598 = vrot.slane %v6226, %v6597
        %v6599 = vsel %vm6311, %v6598, %v6594
        %v6600 = vlaneseq
        %v6601 = vshrl.u32 %v6600, 7
        %v6602 = vsub.s32 %v6313, %v6601
        %v6603 = vrot.slane %v6228, %v6602
        %v6604 = vsel %vm6318, %v6603, %v6599
        %vm6605 = vcmask 1041409
        %v6606 = vsel %vm6605, %v6338, %v6319
        %vm6607 = vcmask 1042434
        %v6608 = vsel %vm6607, %v6357, %v6606
        %vm6609 = vcmask 1043459
        %v6610 = vsel %vm6609, %v6376, %v6608
        %vm6611 = vcmask 1044484
        %v6612 = vsel %vm6611, %v6395, %v6610
        %vm6613 = vcmask 1045509
        %v6614 = vsel %vm6613, %v6414, %v6612
        %vm6615 = vcmask 1046534
        %v6616 = vsel %vm6615, %v6433, %v6614
        %vm6617 = vcmask 1047559
        %v6618 = vsel %vm6617, %v6452, %v6616
        %v6619 = vsel %vm6605, %v6490, %v6471
        %v6620 = vsel %vm6607, %v6509, %v6619
        %v6621 = vsel %vm6609, %v6528, %v6620
        %v6622 = vsel %vm6611, %v6547, %v6621
        %v6623 = vsel %vm6613, %v6566, %v6622
        %v6624 = vsel %vm6615, %v6585, %v6623
        %v6625 = vsel %vm6617, %v6604, %v6624
        %v6628 = vmax.f32 %v5138, %v6618
        %v6629 = vmax.f32 %v5139, %v6625
        %s6630 = scalar_lea.vmem %s335, 1
        %v6631 = vld [vmem:[%s6630] sm:$0x1]
        %v6632 = vlaneseq
        %v6633 = vshrl.u32 %v6632, 7
        %v6634 = vsub.s32 0, %v6633
        %v6635 = vrot.slane %v6631, %v6634
        %vm6636 = vcmp.eq.s32.totalorder %v5134, %v6635
        %vm6637 = vcmp.eq.s32.totalorder %v5135, %v6635
        %v6638 = vsel %vm6636, 1, 0
        %v6639 = vsel %vm6637, 1, 0
        %v6640 = vcvt.s32.f32 %v6638
        %v6641 = vcvt.s32.f32 %v6639
        %s6642 = scalar_lea.vmem [#allocation2], 128
        %v6643 = vld [vmem:[%s6642] sm:$0xff]
        %v6644 = vld [vmem:[%s6642 + $0x8] sm:$0xff]
        %v6645 = vld [vmem:[%s6642 + $0x10] sm:$0xff]
        %v6646 = vld [vmem:[%s6642 + $0x18] sm:$0xff]
        %v6647 = vld [vmem:[%s6642 + $0x20] sm:$0xff]
        %v6648 = vld [vmem:[%s6642 + $0x28] sm:$0xff]
        %v6649 = vld [vmem:[%s6642 + $0x30] sm:$0xff]
        %v6650 = vld [vmem:[%s6642 + $0x38] sm:$0xff]
        %v6651 = vld [vmem:[%s6642 + $0x40] sm:$0xff]
        %v6652 = vld [vmem:[%s6642 + $0x48] sm:$0xff]
        %v6653 = vld [vmem:[%s6642 + $0x50] sm:$0xff]
        %v6654 = vld [vmem:[%s6642 + $0x58] sm:$0xff]
        %v6655 = vld [vmem:[%s6642 + $0x60] sm:$0xff]
        %v6656 = vld [vmem:[%s6642 + $0x68] sm:$0xff]
        %v6657 = vld [vmem:[%s6642 + $0x70] sm:$0xff]
        %v6658 = vld [vmem:[%s6642 + $0x78] sm:$0xff]
        %6659 = vmatprep.subr.mxu0 0.0
        %v6660 = vand.u32 %v6643, 4294901760
        %6661 = vmatpush1.msra.mxu0 %v6660
        %6662 = vmatprep.subr.mxu0 0.0
        %v6663 = vand.u32 %v6644, 4294901760
        %6664 = vmatpush1.msra.mxu0 %v6663
        %6665 = vmatprep.subr.mxu0 0.0
        %v6666 = vand.u32 %v6645, 4294901760
        %6667 = vmatpush1.msra.mxu0 %v6666
        %6668 = vmatprep.subr.mxu0 0.0
        %v6669 = vand.u32 %v6646, 4294901760
        %6670 = vmatpush1.msra.mxu0 %v6669
        %6671 = vmatprep.subr.mxu0 0.0
        %v6672 = vand.u32 %v6647, 4294901760
        %6673 = vmatpush1.msra.mxu0 %v6672
        %6674 = vmatprep.subr.mxu0 0.0
        %v6675 = vand.u32 %v6648, 4294901760
        %6676 = vmatpush1.msra.mxu0 %v6675
        %6677 = vmatprep.subr.mxu0 0.0
        %v6678 = vand.u32 %v6649, 4294901760
        %6679 = vmatpush1.msra.mxu0 %v6678
        %6680 = vmatprep.subr.mxu0 0.0
        %v6681 = vand.u32 %v6650, 4294901760
        %6682 = vmatpush1.msra.mxu0 %v6681
        %6683 = vmatprep.subr.mxu0 0.0
        %v6684 = vand.u32 %v6651, 4294901760
        %6685 = vmatpush1.msra.mxu0 %v6684
        %6686 = vmatprep.subr.mxu0 0.0
        %v6687 = vand.u32 %v6652, 4294901760
        %6688 = vmatpush1.msra.mxu0 %v6687
        %6689 = vmatprep.subr.mxu0 0.0
        %v6690 = vand.u32 %v6653, 4294901760
        %6691 = vmatpush1.msra.mxu0 %v6690
        %6692 = vmatprep.subr.mxu0 0.0
        %v6693 = vand.u32 %v6654, 4294901760
        %6694 = vmatpush1.msra.mxu0 %v6693
        %6695 = vmatprep.subr.mxu0 0.0
        %v6696 = vand.u32 %v6655, 4294901760
        %6697 = vmatpush1.msra.mxu0 %v6696
        %6698 = vmatprep.subr.mxu0 0.0
        %v6699 = vand.u32 %v6656, 4294901760
        %6700 = vmatpush1.msra.mxu0 %v6699
        %6701 = vmatprep.subr.mxu0 0.0
        %v6702 = vand.u32 %v6657, 4294901760
        %6703 = vmatpush1.msra.mxu0 %v6702
        %6704 = vmatprep.subr.mxu0 0.0
        %v6705 = vand.u32 %v6658, 4294901760
        %6706 = vmatpush1.msra.mxu0 %v6705
        %6707 = vmatprep.subr.mxu0 0.0
        %6708 = vmatpush1.msra.mxu0 0.0
        %6709 = vmatprep.subr.mxu0 0.0
        %6710 = vmatpush1.msra.mxu0 0.0
        %6711 = vmatprep.subr.mxu0 0.0
        %6712 = vmatpush1.msra.mxu0 0.0
        %6713 = vmatprep.subr.mxu0 0.0
        %6714 = vmatpush1.msra.mxu0 0.0
        %6715 = vmatprep.subr.mxu0 0.0
        %6716 = vmatpush1.msra.mxu0 0.0
        %6717 = vmatprep.subr.mxu0 0.0
        %6718 = vmatpush1.msra.mxu0 0.0
        %6719 = vmatprep.subr.mxu0 0.0
        %6720 = vmatpush1.msra.mxu0 0.0
        %6721 = vmatprep.subr.mxu0 0.0
        %6722 = vmatpush1.msra.mxu0 0.0
        %6723 = vmatprep.subr.mxu0 0.0
        %6724 = vmatpush1.msra.mxu0 0.0
        %6725 = vmatprep.subr.mxu0 0.0
        %6726 = vmatpush1.msra.mxu0 0.0
        %6727 = vmatprep.subr.mxu0 0.0
        %6728 = vmatpush1.msra.mxu0 0.0
        %6729 = vmatprep.subr.mxu0 0.0
        %6730 = vmatpush1.msra.mxu0 0.0
        %6731 = vmatprep.subr.mxu0 0.0
        %6732 = vmatpush1.msra.mxu0 0.0
        %6733 = vmatprep.subr.mxu0 0.0
        %6734 = vmatpush1.msra.mxu0 0.0
        %6735 = vmatprep.subr.mxu0 0.0
        %6736 = vmatpush1.msra.mxu0 0.0
        %6737 = vmatprep.subr.mxu0 0.0
        %6738 = vmatpush1.msra.mxu0 0.0
        %6739 = vmatprep.mubr.f32.mxu0 0.0
        %v6740 = vand.u32 %v6640, 4294901760
        %v6741 = vsub.f32 %v6640, %v6740
        %v6742 = vand.u32 %v6741, 4294901760
        %v6743 = vsub.f32 %v6741, %v6742
        %v6744 = vand.u32 %v6743, 4294901760
        %6745 = vmatmul.mubr.f32.gmra.mrb[0].mxu0 %v6744
        %v6746 = vpop.f32.mrb[0].mxu0
        %v6747 = vadd.f32 0.0, %v6746
        %v6748 = vpop.f32.mrb[0].mxu0
        %6749 = vmatprep.mubr.f32.mxu0 0.0
        %v6750 = vand.u32 %v6641, 4294901760
        %v6751 = vsub.f32 %v6641, %v6750
        %v6752 = vand.u32 %v6751, 4294901760
        %v6753 = vsub.f32 %v6751, %v6752
        %v6754 = vand.u32 %v6753, 4294901760
        %6755 = vmatmul.mubr.f32.gmra.mrb[0].mxu0 %v6754
        %v6756 = vpop.f32.mrb[0].mxu0
        %v6757 = vadd.f32 0.0, %v6756
        %v6758 = vpop.f32.mrb[0].mxu0
        %6759 = vdwg.mxu0
        %6760 = vmatprep.subr.mxu0 0.0
        %v6761 = vand.u32 %v6643, 4294901760
        %v6762 = vsub.f32 %v6643, %v6761
        %v6763 = vand.u32 %v6762, 4294901760
        %v6764 = vsub.f32 %v6762, %v6763
        %v6765 = vand.u32 %v6764, 4294901760
        %6766 = vmatpush1.msra.mxu0 %v6765
        %6767 = vmatprep.subr.mxu0 0.0
        %v6768 = vand.u32 %v6644, 4294901760
        %v6769 = vsub.f32 %v6644, %v6768
        %v6770 = vand.u32 %v6769, 4294901760
        %v6771 = vsub.f32 %v6769, %v6770
        %v6772 = vand.u32 %v6771, 4294901760
        %6773 = vmatpush1.msra.mxu0 %v6772
        %6774 = vmatprep.subr.mxu0 0.0
        %v6775 = vand.u32 %v6645, 4294901760
        %v6776 = vsub.f32 %v6645, %v6775
        %v6777 = vand.u32 %v6776, 4294901760
        %v6778 = vsub.f32 %v6776, %v6777
        %v6779 = vand.u32 %v6778, 4294901760
        %6780 = vmatpush1.msra.mxu0 %v6779
        %6781 = vmatprep.subr.mxu0 0.0
        %v6782 = vand.u32 %v6646, 4294901760
        %v6783 = vsub.f32 %v6646, %v6782
        %v6784 = vand.u32 %v6783, 4294901760
        %v6785 = vsub.f32 %v6783, %v6784
        %v6786 = vand.u32 %v6785, 4294901760
        %6787 = vmatpush1.msra.mxu0 %v6786
        %6788 = vmatprep.subr.mxu0 0.0
        %v6789 = vand.u32 %v6647, 4294901760
        %v6790 = vsub.f32 %v6647, %v6789
        %v6791 = vand.u32 %v6790, 4294901760
        %v6792 = vsub.f32 %v6790, %v6791
        %v6793 = vand.u32 %v6792, 4294901760
        %6794 = vmatpush1.msra.mxu0 %v6793
        %6795 = vmatprep.subr.mxu0 0.0
        %v6796 = vand.u32 %v6648, 4294901760
        %v6797 = vsub.f32 %v6648, %v6796
        %v6798 = vand.u32 %v6797, 4294901760
        %v6799 = vsub.f32 %v6797, %v6798
        %v6800 = vand.u32 %v6799, 4294901760
        %6801 = vmatpush1.msra.mxu0 %v6800
        %6802 = vmatprep.subr.mxu0 0.0
        %v6803 = vand.u32 %v6649, 4294901760
        %v6804 = vsub.f32 %v6649, %v6803
        %v6805 = vand.u32 %v6804, 4294901760
        %v6806 = vsub.f32 %v6804, %v6805
        %v6807 = vand.u32 %v6806, 4294901760
        %6808 = vmatpush1.msra.mxu0 %v6807
        %6809 = vmatprep.subr.mxu0 0.0
        %v6810 = vand.u32 %v6650, 4294901760
        %v6811 = vsub.f32 %v6650, %v6810
        %v6812 = vand.u32 %v6811, 4294901760
        %v6813 = vsub.f32 %v6811, %v6812
        %v6814 = vand.u32 %v6813, 4294901760
        %6815 = vmatpush1.msra.mxu0 %v6814
        %6816 = vmatprep.subr.mxu0 0.0
        %v6817 = vand.u32 %v6651, 4294901760
        %v6818 = vsub.f32 %v6651, %v6817
        %v6819 = vand.u32 %v6818, 4294901760
        %v6820 = vsub.f32 %v6818, %v6819
        %v6821 = vand.u32 %v6820, 4294901760
        %6822 = vmatpush1.msra.mxu0 %v6821
        %6823 = vmatprep.subr.mxu0 0.0
        %v6824 = vand.u32 %v6652, 4294901760
        %v6825 = vsub.f32 %v6652, %v6824
        %v6826 = vand.u32 %v6825, 4294901760
        %v6827 = vsub.f32 %v6825, %v6826
        %v6828 = vand.u32 %v6827, 4294901760
        %6829 = vmatpush1.msra.mxu0 %v6828
        %6830 = vmatprep.subr.mxu0 0.0
        %v6831 = vand.u32 %v6653, 4294901760
        %v6832 = vsub.f32 %v6653, %v6831
        %v6833 = vand.u32 %v6832, 4294901760
        %v6834 = vsub.f32 %v6832, %v6833
        %v6835 = vand.u32 %v6834, 4294901760
        %6836 = vmatpush1.msra.mxu0 %v6835
        %6837 = vmatprep.subr.mxu0 0.0
        %v6838 = vand.u32 %v6654, 4294901760
        %v6839 = vsub.f32 %v6654, %v6838
        %v6840 = vand.u32 %v6839, 4294901760
        %v6841 = vsub.f32 %v6839, %v6840
        %v6842 = vand.u32 %v6841, 4294901760
        %6843 = vmatpush1.msra.mxu0 %v6842
        %6844 = vmatprep.subr.mxu0 0.0
        %v6845 = vand.u32 %v6655, 4294901760
        %v6846 = vsub.f32 %v6655, %v6845
        %v6847 = vand.u32 %v6846, 4294901760
        %v6848 = vsub.f32 %v6846, %v6847
        %v6849 = vand.u32 %v6848, 4294901760
        %6850 = vmatpush1.msra.mxu0 %v6849
        %6851 = vmatprep.subr.mxu0 0.0
        %v6852 = vand.u32 %v6656, 4294901760
        %v6853 = vsub.f32 %v6656, %v6852
        %v6854 = vand.u32 %v6853, 4294901760
        %v6855 = vsub.f32 %v6853, %v6854
        %v6856 = vand.u32 %v6855, 4294901760
        %6857 = vmatpush1.msra.mxu0 %v6856
        %6858 = vmatprep.subr.mxu0 0.0
        %v6859 = vand.u32 %v6657, 4294901760
        %v6860 = vsub.f32 %v6657, %v6859
        %v6861 = vand.u32 %v6860, 4294901760
        %v6862 = vsub.f32 %v6860, %v6861
        %v6863 = vand.u32 %v6862, 4294901760
        %6864 = vmatpush1.msra.mxu0 %v6863
        %6865 = vmatprep.subr.mxu0 0.0
        %v6866 = vand.u32 %v6658, 4294901760
        %v6867 = vsub.f32 %v6658, %v6866
        %v6868 = vand.u32 %v6867, 4294901760
        %v6869 = vsub.f32 %v6867, %v6868
        %v6870 = vand.u32 %v6869, 4294901760
        %6871 = vmatpush1.msra.mxu0 %v6870
        %6872 = vmatprep.subr.mxu0 0.0
        %6873 = vmatpush1.msra.mxu0 0.0
        %6874 = vmatprep.subr.mxu0 0.0
        %6875 = vmatpush1.msra.mxu0 0.0
        %6876 = vmatprep.subr.mxu0 0.0
        %6877 = vmatpush1.msra.mxu0 0.0
        %6878 = vmatprep.subr.mxu0 0.0
        %6879 = vmatpush1.msra.mxu0 0.0
        %6880 = vmatprep.subr.mxu0 0.0
        %6881 = vmatpush1.msra.mxu0 0.0
        %6882 = vmatprep.subr.mxu0 0.0
        %6883 = vmatpush1.msra.mxu0 0.0
        %6884 = vmatprep.subr.mxu0 0.0
        %6885 = vmatpush1.msra.mxu0 0.0
        %6886 = vmatprep.subr.mxu0 0.0
        %6887 = vmatpush1.msra.mxu0 0.0
        %6888 = vmatprep.subr.mxu0 0.0
        %6889 = vmatpush1.msra.mxu0 0.0
        %6890 = vmatprep.subr.mxu0 0.0
        %6891 = vmatpush1.msra.mxu0 0.0
        %6892 = vmatprep.subr.mxu0 0.0
        %6893 = vmatpush1.msra.mxu0 0.0
        %6894 = vmatprep.subr.mxu0 0.0
        %6895 = vmatpush1.msra.mxu0 0.0
        %6896 = vmatprep.subr.mxu0 0.0
        %6897 = vmatpush1.msra.mxu0 0.0
        %6898 = vmatprep.subr.mxu0 0.0
        %6899 = vmatpush1.msra.mxu0 0.0
        %6900 = vmatprep.subr.mxu0 0.0
        %6901 = vmatpush1.msra.mxu0 0.0
        %6902 = vmatprep.subr.mxu0 0.0
        %6903 = vmatpush1.msra.mxu0 0.0
        %6904 = vmatprep.mubr.f32.mxu0 0.0
        %v6905 = vand.u32 %v6640, 4294901760
        %6906 = vmatmul.mubr.f32.gmra.mrb[0].mxu0 %v6905
        %v6907 = vpop.f32.mrb[0].mxu0
        %v6908 = vadd.f32 %v6747, %v6907
        %v6909 = vpop.f32.mrb[0].mxu0
        %6910 = vmatprep.mubr.f32.mxu0 0.0
        %v6911 = vand.u32 %v6641, 4294901760
        %6912 = vmatmul.mubr.f32.gmra.mrb[0].mxu0 %v6911
        %v6913 = vpop.f32.mrb[0].mxu0
        %v6914 = vadd.f32 %v6757, %v6913
        %v6915 = vpop.f32.mrb[0].mxu0
        %6916 = vdwg.mxu0
        %6917 = vmatprep.subr.mxu0 0.0
        %v6918 = vand.u32 %v6643, 4294901760
        %v6919 = vsub.f32 %v6643, %v6918
        %6920 = vmatpush1.msra.mxu0 %v6919
        %6921 = vmatprep.subr.mxu0 0.0
        %v6922 = vand.u32 %v6644, 4294901760
        %v6923 = vsub.f32 %v6644, %v6922
        %6924 = vmatpush1.msra.mxu0 %v6923
        %6925 = vmatprep.subr.mxu0 0.0
        %v6926 = vand.u32 %v6645, 4294901760
        %v6927 = vsub.f32 %v6645, %v6926
        %6928 = vmatpush1.msra.mxu0 %v6927
        %6929 = vmatprep.subr.mxu0 0.0
        %v6930 = vand.u32 %v6646, 4294901760
        %v6931 = vsub.f32 %v6646, %v6930
        %6932 = vmatpush1.msra.mxu0 %v6931
        %6933 = vmatprep.subr.mxu0 0.0
        %v6934 = vand.u32 %v6647, 4294901760
        %v6935 = vsub.f32 %v6647, %v6934
        %6936 = vmatpush1.msra.mxu0 %v6935
        %6937 = vmatprep.subr.mxu0 0.0
        %v6938 = vand.u32 %v6648, 4294901760
        %v6939 = vsub.f32 %v6648, %v6938
        %6940 = vmatpush1.msra.mxu0 %v6939
        %6941 = vmatprep.subr.mxu0 0.0
        %v6942 = vand.u32 %v6649, 4294901760
        %v6943 = vsub.f32 %v6649, %v6942
        %6944 = vmatpush1.msra.mxu0 %v6943
        %6945 = vmatprep.subr.mxu0 0.0
        %v6946 = vand.u32 %v6650, 4294901760
        %v6947 = vsub.f32 %v6650, %v6946
        %6948 = vmatpush1.msra.mxu0 %v6947
        %6949 = vmatprep.subr.mxu0 0.0
        %v6950 = vand.u32 %v6651, 4294901760
        %v6951 = vsub.f32 %v6651, %v6950
        %6952 = vmatpush1.msra.mxu0 %v6951
        %6953 = vmatprep.subr.mxu0 0.0
        %v6954 = vand.u32 %v6652, 4294901760
        %v6955 = vsub.f32 %v6652, %v6954
        %6956 = vmatpush1.msra.mxu0 %v6955
        %6957 = vmatprep.subr.mxu0 0.0
        %v6958 = vand.u32 %v6653, 4294901760
        %v6959 = vsub.f32 %v6653, %v6958
        %6960 = vmatpush1.msra.mxu0 %v6959
        %6961 = vmatprep.subr.mxu0 0.0
        %v6962 = vand.u32 %v6654, 4294901760
        %v6963 = vsub.f32 %v6654, %v6962
        %6964 = vmatpush1.msra.mxu0 %v6963
        %6965 = vmatprep.subr.mxu0 0.0
        %v6966 = vand.u32 %v6655, 4294901760
        %v6967 = vsub.f32 %v6655, %v6966
        %6968 = vmatpush1.msra.mxu0 %v6967
        %6969 = vmatprep.subr.mxu0 0.0
        %v6970 = vand.u32 %v6656, 4294901760
        %v6971 = vsub.f32 %v6656, %v6970
        %6972 = vmatpush1.msra.mxu0 %v6971
        %6973 = vmatprep.subr.mxu0 0.0
        %v6974 = vand.u32 %v6657, 4294901760
        %v6975 = vsub.f32 %v6657, %v6974
        %6976 = vmatpush1.msra.mxu0 %v6975
        %6977 = vmatprep.subr.mxu0 0.0
        %v6978 = vand.u32 %v6658, 4294901760
        %v6979 = vsub.f32 %v6658, %v6978
        %6980 = vmatpush1.msra.mxu0 %v6979
        %6981 = vmatprep.subr.mxu0 0.0
        %6982 = vmatpush1.msra.mxu0 0.0
        %6983 = vmatprep.subr.mxu0 0.0
        %6984 = vmatpush1.msra.mxu0 0.0
        %6985 = vmatprep.subr.mxu0 0.0
        %6986 = vmatpush1.msra.mxu0 0.0
        %6987 = vmatprep.subr.mxu0 0.0
        %6988 = vmatpush1.msra.mxu0 0.0
        %6989 = vmatprep.subr.mxu0 0.0
        %6990 = vmatpush1.msra.mxu0 0.0
        %6991 = vmatprep.subr.mxu0 0.0
        %6992 = vmatpush1.msra.mxu0 0.0
        %6993 = vmatprep.subr.mxu0 0.0
        %6994 = vmatpush1.msra.mxu0 0.0
        %6995 = vmatprep.subr.mxu0 0.0
        %6996 = vmatpush1.msra.mxu0 0.0
        %6997 = vmatprep.subr.mxu0 0.0
        %6998 = vmatpush1.msra.mxu0 0.0
        %6999 = vmatprep.subr.mxu0 0.0
        %7000 = vmatpush1.msra.mxu0 0.0
        %7001 = vmatprep.subr.mxu0 0.0
        %7002 = vmatpush1.msra.mxu0 0.0
        %7003 = vmatprep.subr.mxu0 0.0
        %7004 = vmatpush1.msra.mxu0 0.0
        %7005 = vmatprep.subr.mxu0 0.0
        %7006 = vmatpush1.msra.mxu0 0.0
        %7007 = vmatprep.subr.mxu0 0.0
        %7008 = vmatpush1.msra.mxu0 0.0
        %7009 = vmatprep.subr.mxu0 0.0
        %7010 = vmatpush1.msra.mxu0 0.0
        %7011 = vmatprep.subr.mxu0 0.0
        %7012 = vmatpush1.msra.mxu0 0.0
        %7013 = vmatprep.mubr.f32.mxu0 0.0
        %v7014 = vand.u32 %v6640, 4294901760
        %v7015 = vsub.f32 %v6640, %v7014
        %7016 = vmatmul.mubr.f32.gmra.mrb[0].mxu0 %v7015
        %v7017 = vpop.f32.mrb[0].mxu0
        %v7018 = vadd.f32 %v6908, %v7017
        %v7019 = vpop.f32.mrb[0].mxu0
        %7020 = vmatprep.mubr.f32.mxu0 0.0
        %v7021 = vand.u32 %v6641, 4294901760
        %v7022 = vsub.f32 %v6641, %v7021
        %7023 = vmatmul.mubr.f32.gmra.mrb[0].mxu0 %v7022
        %v7024 = vpop.f32.mrb[0].mxu0
        %v7025 = vadd.f32 %v6914, %v7024
        %v7026 = vpop.f32.mrb[0].mxu0
        %7027 = vdwg.mxu0
        %7028 = vmatprep.subr.mxu0 0.0
        %v7029 = vand.u32 %v6643, 4294901760
        %7030 = vmatpush1.msra.mxu0 %v7029
        %7031 = vmatprep.subr.mxu0 0.0
        %v7032 = vand.u32 %v6644, 4294901760
        %7033 = vmatpush1.msra.mxu0 %v7032
        %7034 = vmatprep.subr.mxu0 0.0
        %v7035 = vand.u32 %v6645, 4294901760
        %7036 = vmatpush1.msra.mxu0 %v7035
        %7037 = vmatprep.subr.mxu0 0.0
        %v7038 = vand.u32 %v6646, 4294901760
        %7039 = vmatpush1.msra.mxu0 %v7038
        %7040 = vmatprep.subr.mxu0 0.0
        %v7041 = vand.u32 %v6647, 4294901760
        %7042 = vmatpush1.msra.mxu0 %v7041
        %7043 = vmatprep.subr.mxu0 0.0
        %v7044 = vand.u32 %v6648, 4294901760
        %7045 = vmatpush1.msra.mxu0 %v7044
        %7046 = vmatprep.subr.mxu0 0.0
        %v7047 = vand.u32 %v6649, 4294901760
        %7048 = vmatpush1.msra.mxu0 %v7047
        %7049 = vmatprep.subr.mxu0 0.0
        %v7050 = vand.u32 %v6650, 4294901760
        %7051 = vmatpush1.msra.mxu0 %v7050
        %7052 = vmatprep.subr.mxu0 0.0
        %v7053 = vand.u32 %v6651, 4294901760
        %7054 = vmatpush1.msra.mxu0 %v7053
        %7055 = vmatprep.subr.mxu0 0.0
        %v7056 = vand.u32 %v6652, 4294901760
        %7057 = vmatpush1.msra.mxu0 %v7056
        %7058 = vmatprep.subr.mxu0 0.0
        %v7059 = vand.u32 %v6653, 4294901760
        %7060 = vmatpush1.msra.mxu0 %v7059
        %7061 = vmatprep.subr.mxu0 0.0
        %v7062 = vand.u32 %v6654, 4294901760
        %7063 = vmatpush1.msra.mxu0 %v7062
        %7064 = vmatprep.subr.mxu0 0.0
        %v7065 = vand.u32 %v6655, 4294901760
        %7066 = vmatpush1.msra.mxu0 %v7065
        %7067 = vmatprep.subr.mxu0 0.0
        %v7068 = vand.u32 %v6656, 4294901760
        %7069 = vmatpush1.msra.mxu0 %v7068
        %7070 = vmatprep.subr.mxu0 0.0
        %v7071 = vand.u32 %v6657, 4294901760
        %7072 = vmatpush1.msra.mxu0 %v7071
        %7073 = vmatprep.subr.mxu0 0.0
        %v7074 = vand.u32 %v6658, 4294901760
        %7075 = vmatpush1.msra.mxu0 %v7074
        %7076 = vmatprep.subr.mxu0 0.0
        %7077 = vmatpush1.msra.mxu0 0.0
        %7078 = vmatprep.subr.mxu0 0.0
        %7079 = vmatpush1.msra.mxu0 0.0
        %7080 = vmatprep.subr.mxu0 0.0
        %7081 = vmatpush1.msra.mxu0 0.0
        %7082 = vmatprep.subr.mxu0 0.0
        %7083 = vmatpush1.msra.mxu0 0.0
        %7084 = vmatprep.subr.mxu0 0.0
        %7085 = vmatpush1.msra.mxu0 0.0
        %7086 = vmatprep.subr.mxu0 0.0
        %7087 = vmatpush1.msra.mxu0 0.0
        %7088 = vmatprep.subr.mxu0 0.0
        %7089 = vmatpush1.msra.mxu0 0.0
        %7090 = vmatprep.subr.mxu0 0.0
        %7091 = vmatpush1.msra.mxu0 0.0
        %7092 = vmatprep.subr.mxu0 0.0
        %7093 = vmatpush1.msra.mxu0 0.0
        %7094 = vmatprep.subr.mxu0 0.0
        %7095 = vmatpush1.msra.mxu0 0.0
        %7096 = vmatprep.subr.mxu0 0.0
        %7097 = vmatpush1.msra.mxu0 0.0
        %7098 = vmatprep.subr.mxu0 0.0
        %7099 = vmatpush1.msra.mxu0 0.0
        %7100 = vmatprep.subr.mxu0 0.0
        %7101 = vmatpush1.msra.mxu0 0.0
        %7102 = vmatprep.subr.mxu0 0.0
        %7103 = vmatpush1.msra.mxu0 0.0
        %7104 = vmatprep.subr.mxu0 0.0
        %7105 = vmatpush1.msra.mxu0 0.0
        %7106 = vmatprep.subr.mxu0 0.0
        %7107 = vmatpush1.msra.mxu0 0.0
        %7108 = vmatprep.mubr.f32.mxu0 0.0
        %v7109 = vand.u32 %v6640, 4294901760
        %v7110 = vsub.f32 %v6640, %v7109
        %v7111 = vand.u32 %v7110, 4294901760
        %7112 = vmatmul.mubr.f32.gmra.mrb[0].mxu0 %v7111
        %v7113 = vpop.f32.mrb[0].mxu0
        %v7114 = vadd.f32 %v7018, %v7113
        %v7115 = vpop.f32.mrb[0].mxu0
        %7116 = vmatprep.mubr.f32.mxu0 0.0
        %v7117 = vand.u32 %v6641, 4294901760
        %v7118 = vsub.f32 %v6641, %v7117
        %v7119 = vand.u32 %v7118, 4294901760
        %7120 = vmatmul.mubr.f32.gmra.mrb[0].mxu0 %v7119
        %v7121 = vpop.f32.mrb[0].mxu0
        %v7122 = vadd.f32 %v7025, %v7121
        %v7123 = vpop.f32.mrb[0].mxu0
        %7124 = vdwg.mxu0
        %7125 = vmatprep.subr.mxu0 0.0
        %v7126 = vand.u32 %v6643, 4294901760
        %v7127 = vsub.f32 %v6643, %v7126
        %v7128 = vand.u32 %v7127, 4294901760
        %7129 = vmatpush1.msra.mxu0 %v7128
        %7130 = vmatprep.subr.mxu0 0.0
        %v7131 = vand.u32 %v6644, 4294901760
        %v7132 = vsub.f32 %v6644, %v7131
        %v7133 = vand.u32 %v7132, 4294901760
        %7134 = vmatpush1.msra.mxu0 %v7133
        %7135 = vmatprep.subr.mxu0 0.0
        %v7136 = vand.u32 %v6645, 4294901760
        %v7137 = vsub.f32 %v6645, %v7136
        %v7138 = vand.u32 %v7137, 4294901760
        %7139 = vmatpush1.msra.mxu0 %v7138
        %7140 = vmatprep.subr.mxu0 0.0
        %v7141 = vand.u32 %v6646, 4294901760
        %v7142 = vsub.f32 %v6646, %v7141
        %v7143 = vand.u32 %v7142, 4294901760
        %7144 = vmatpush1.msra.mxu0 %v7143
        %7145 = vmatprep.subr.mxu0 0.0
        %v7146 = vand.u32 %v6647, 4294901760
        %v7147 = vsub.f32 %v6647, %v7146
        %v7148 = vand.u32 %v7147, 4294901760
        %7149 = vmatpush1.msra.mxu0 %v7148
        %7150 = vmatprep.subr.mxu0 0.0
        %v7151 = vand.u32 %v6648, 4294901760
        %v7152 = vsub.f32 %v6648, %v7151
        %v7153 = vand.u32 %v7152, 4294901760
        %7154 = vmatpush1.msra.mxu0 %v7153
        %7155 = vmatprep.subr.mxu0 0.0
        %v7156 = vand.u32 %v6649, 4294901760
        %v7157 = vsub.f32 %v6649, %v7156
        %v7158 = vand.u32 %v7157, 4294901760
        %7159 = vmatpush1.msra.mxu0 %v7158
        %7160 = vmatprep.subr.mxu0 0.0
        %v7161 = vand.u32 %v6650, 4294901760
        %v7162 = vsub.f32 %v6650, %v7161
        %v7163 = vand.u32 %v7162, 4294901760
        %7164 = vmatpush1.msra.mxu0 %v7163
        %7165 = vmatprep.subr.mxu0 0.0
        %v7166 = vand.u32 %v6651, 4294901760
        %v7167 = vsub.f32 %v6651, %v7166
        %v7168 = vand.u32 %v7167, 4294901760
        %7169 = vmatpush1.msra.mxu0 %v7168
        %7170 = vmatprep.subr.mxu0 0.0
        %v7171 = vand.u32 %v6652, 4294901760
        %v7172 = vsub.f32 %v6652, %v7171
        %v7173 = vand.u32 %v7172, 4294901760
        %7174 = vmatpush1.msra.mxu0 %v7173
        %7175 = vmatprep.subr.mxu0 0.0
        %v7176 = vand.u32 %v6653, 4294901760
        %v7177 = vsub.f32 %v6653, %v7176
        %v7178 = vand.u32 %v7177, 4294901760
        %7179 = vmatpush1.msra.mxu0 %v7178
        %7180 = vmatprep.subr.mxu0 0.0
        %v7181 = vand.u32 %v6654, 4294901760
        %v7182 = vsub.f32 %v6654, %v7181
        %v7183 = vand.u32 %v7182, 4294901760
        %7184 = vmatpush1.msra.mxu0 %v7183
        %7185 = vmatprep.subr.mxu0 0.0
        %v7186 = vand.u32 %v6655, 4294901760
        %v7187 = vsub.f32 %v6655, %v7186
        %v7188 = vand.u32 %v7187, 4294901760
        %7189 = vmatpush1.msra.mxu0 %v7188
        %7190 = vmatprep.subr.mxu0 0.0
        %v7191 = vand.u32 %v6656, 4294901760
        %v7192 = vsub.f32 %v6656, %v7191
        %v7193 = vand.u32 %v7192, 4294901760
        %7194 = vmatpush1.msra.mxu0 %v7193
        %7195 = vmatprep.subr.mxu0 0.0
        %v7196 = vand.u32 %v6657, 4294901760
        %v7197 = vsub.f32 %v6657, %v7196
        %v7198 = vand.u32 %v7197, 4294901760
        %7199 = vmatpush1.msra.mxu0 %v7198
        %7200 = vmatprep.subr.mxu0 0.0
        %v7201 = vand.u32 %v6658, 4294901760
        %v7202 = vsub.f32 %v6658, %v7201
        %v7203 = vand.u32 %v7202, 4294901760
        %7204 = vmatpush1.msra.mxu0 %v7203
        %7205 = vmatprep.subr.mxu0 0.0
        %7206 = vmatpush1.msra.mxu0 0.0
        %7207 = vmatprep.subr.mxu0 0.0
        %7208 = vmatpush1.msra.mxu0 0.0
        %7209 = vmatprep.subr.mxu0 0.0
        %7210 = vmatpush1.msra.mxu0 0.0
        %7211 = vmatprep.subr.mxu0 0.0
        %7212 = vmatpush1.msra.mxu0 0.0
        %7213 = vmatprep.subr.mxu0 0.0
        %7214 = vmatpush1.msra.mxu0 0.0
        %7215 = vmatprep.subr.mxu0 0.0
        %7216 = vmatpush1.msra.mxu0 0.0
        %7217 = vmatprep.subr.mxu0 0.0
        %7218 = vmatpush1.msra.mxu0 0.0
        %7219 = vmatprep.subr.mxu0 0.0
        %7220 = vmatpush1.msra.mxu0 0.0
        %7221 = vmatprep.subr.mxu0 0.0
        %7222 = vmatpush1.msra.mxu0 0.0
        %7223 = vmatprep.subr.mxu0 0.0
        %7224 = vmatpush1.msra.mxu0 0.0
        %7225 = vmatprep.subr.mxu0 0.0
        %7226 = vmatpush1.msra.mxu0 0.0
        %7227 = vmatprep.subr.mxu0 0.0
        %7228 = vmatpush1.msra.mxu0 0.0
        %7229 = vmatprep.subr.mxu0 0.0
        %7230 = vmatpush1.msra.mxu0 0.0
        %7231 = vmatprep.subr.mxu0 0.0
        %7232 = vmatpush1.msra.mxu0 0.0
        %7233 = vmatprep.subr.mxu0 0.0
        %7234 = vmatpush1.msra.mxu0 0.0
        %7235 = vmatprep.subr.mxu0 0.0
        %7236 = vmatpush1.msra.mxu0 0.0
        %7237 = vmatprep.mubr.f32.mxu0 0.0
        %v7238 = vand.u32 %v6640, 4294901760
        %7239 = vmatmul.mubr.f32.gmra.mrb[0].mxu0 %v7238
        %v7240 = vpop.f32.mrb[0].mxu0
        %v7241 = vadd.f32 %v7114, %v7240
        %v7242 = vpop.f32.mrb[0].mxu0
        %7243 = vmatprep.mubr.f32.mxu0 0.0
        %v7244 = vand.u32 %v6641, 4294901760
        %7245 = vmatmul.mubr.f32.gmra.mrb[0].mxu0 %v7244
        %v7246 = vpop.f32.mrb[0].mxu0
        %v7247 = vadd.f32 %v7122, %v7246
        %v7248 = vpop.f32.mrb[0].mxu0
        %7249 = vdwg.mxu0
        %7250 = vmatprep.subr.mxu0 0.0
        %v7251 = vand.u32 %v6643, 4294901760
        %7252 = vmatpush1.msra.mxu0 %v7251
        %7253 = vmatprep.subr.mxu0 0.0
        %v7254 = vand.u32 %v6644, 4294901760
        %7255 = vmatpush1.msra.mxu0 %v7254
        %7256 = vmatprep.subr.mxu0 0.0
        %v7257 = vand.u32 %v6645, 4294901760
        %7258 = vmatpush1.msra.mxu0 %v7257
        %7259 = vmatprep.subr.mxu0 0.0
        %v7260 = vand.u32 %v6646, 4294901760
        %7261 = vmatpush1.msra.mxu0 %v7260
        %7262 = vmatprep.subr.mxu0 0.0
        %v7263 = vand.u32 %v6647, 4294901760
        %7264 = vmatpush1.msra.mxu0 %v7263
        %7265 = vmatprep.subr.mxu0 0.0
        %v7266 = vand.u32 %v6648, 4294901760
        %7267 = vmatpush1.msra.mxu0 %v7266
        %7268 = vmatprep.subr.mxu0 0.0
        %v7269 = vand.u32 %v6649, 4294901760
        %7270 = vmatpush1.msra.mxu0 %v7269
        %7271 = vmatprep.subr.mxu0 0.0
        %v7272 = vand.u32 %v6650, 4294901760
        %7273 = vmatpush1.msra.mxu0 %v7272
        %7274 = vmatprep.subr.mxu0 0.0
        %v7275 = vand.u32 %v6651, 4294901760
        %7276 = vmatpush1.msra.mxu0 %v7275
        %7277 = vmatprep.subr.mxu0 0.0
        %v7278 = vand.u32 %v6652, 4294901760
        %7279 = vmatpush1.msra.mxu0 %v7278
        %7280 = vmatprep.subr.mxu0 0.0
        %v7281 = vand.u32 %v6653, 4294901760
        %7282 = vmatpush1.msra.mxu0 %v7281
        %7283 = vmatprep.subr.mxu0 0.0
        %v7284 = vand.u32 %v6654, 4294901760
        %7285 = vmatpush1.msra.mxu0 %v7284
        %7286 = vmatprep.subr.mxu0 0.0
        %v7287 = vand.u32 %v6655, 4294901760
        %7288 = vmatpush1.msra.mxu0 %v7287
        %7289 = vmatprep.subr.mxu0 0.0
        %v7290 = vand.u32 %v6656, 4294901760
        %7291 = vmatpush1.msra.mxu0 %v7290
        %7292 = vmatprep.subr.mxu0 0.0
        %v7293 = vand.u32 %v6657, 4294901760
        %7294 = vmatpush1.msra.mxu0 %v7293
        %7295 = vmatprep.subr.mxu0 0.0
        %v7296 = vand.u32 %v6658, 4294901760
        %7297 = vmatpush1.msra.mxu0 %v7296
        %7298 = vmatprep.subr.mxu0 0.0
        %7299 = vmatpush1.msra.mxu0 0.0
        %7300 = vmatprep.subr.mxu0 0.0
        %7301 = vmatpush1.msra.mxu0 0.0
        %7302 = vmatprep.subr.mxu0 0.0
        %7303 = vmatpush1.msra.mxu0 0.0
        %7304 = vmatprep.subr.mxu0 0.0
        %7305 = vmatpush1.msra.mxu0 0.0
        %7306 = vmatprep.subr.mxu0 0.0
        %7307 = vmatpush1.msra.mxu0 0.0
        %7308 = vmatprep.subr.mxu0 0.0
        %7309 = vmatpush1.msra.mxu0 0.0
        %7310 = vmatprep.subr.mxu0 0.0
        %7311 = vmatpush1.msra.mxu0 0.0
        %7312 = vmatprep.subr.mxu0 0.0
        %7313 = vmatpush1.msra.mxu0 0.0
        %7314 = vmatprep.subr.mxu0 0.0
        %7315 = vmatpush1.msra.mxu0 0.0
        %7316 = vmatprep.subr.mxu0 0.0
        %7317 = vmatpush1.msra.mxu0 0.0
        %7318 = vmatprep.subr.mxu0 0.0
        %7319 = vmatpush1.msra.mxu0 0.0
        %7320 = vmatprep.subr.mxu0 0.0
        %7321 = vmatpush1.msra.mxu0 0.0
        %7322 = vmatprep.subr.mxu0 0.0
        %7323 = vmatpush1.msra.mxu0 0.0
        %7324 = vmatprep.subr.mxu0 0.0
        %7325 = vmatpush1.msra.mxu0 0.0
        %7326 = vmatprep.subr.mxu0 0.0
        %7327 = vmatpush1.msra.mxu0 0.0
        %7328 = vmatprep.subr.mxu0 0.0
        %7329 = vmatpush1.msra.mxu0 0.0
        %7330 = vmatprep.mubr.f32.mxu0 0.0
        %v7331 = vand.u32 %v6640, 4294901760
        %7332 = vmatmul.mubr.f32.gmra.mrb[0].mxu0 %v7331
        %v7333 = vpop.f32.mrb[0].mxu0
        %v7334 = vadd.f32 %v7241, %v7333
        %v7335 = vpop.f32.mrb[0].mxu0
        %7336 = vmatprep.mubr.f32.mxu0 0.0
        %v7337 = vand.u32 %v6641, 4294901760
        %7338 = vmatmul.mubr.f32.gmra.mrb[0].mxu0 %v7337
        %v7339 = vpop.f32.mrb[0].mxu0
        %v7340 = vadd.f32 %v7247, %v7339
        %v7341 = vpop.f32.mrb[0].mxu0
        %7342 = vdwg.mxu0
        %v7343 = vadd.f32 %v5851, %v7334
        %v7344 = vadd.f32 %v5852, %v7340
        %v7347 = vcombine.high %v6640, %v6640
        %v7349 = vunpack.c.l.s4 1966171168
        %v7350 = vunpack.c.0.s8 %v7349
        %v7351 = vlaneseq
        %v7352 = vshrl.u32 %v7351, 7
        %v7353 = vsub.s32 %v7350, %v7352
        %v7354 = vrot.slane %v6640, %v7353
        %v7356 = vunpack.c.l.s4 1966171168
        %v7357 = vunpack.c.0.s8 %v7356
        %v7358 = vlaneseq
        %v7359 = vshrl.u32 %v7358, 7
        %v7360 = vsub.s32 %v7357, %v7359
        %v7361 = vrot.slane %v7347, %v7360
        %v7362 = vcombine.high %v7354, %v7354
        %v7363 = vcombine.high %v7361, %v7361
        %v7365 = vunpack.c.l.s4 1966171168
        %v7366 = vunpack.c.0.s8 %v7365
        %v7367 = vlaneseq
        %v7368 = vshrl.u32 %v7367, 7
        %v7369 = vsub.s32 %v7366, %v7368
        %v7370 = vrot.slane %v7354, %v7369
        %v7372 = vunpack.c.l.s4 1966171168
        %v7373 = vunpack.c.0.s8 %v7372
        %v7374 = vlaneseq
        %v7375 = vshrl.u32 %v7374, 7
        %v7376 = vsub.s32 %v7373, %v7375
        %v7377 = vrot.slane %v7361, %v7376
        %v7379 = vunpack.c.l.s4 1966171168
        %v7380 = vunpack.c.0.s8 %v7379
        %v7381 = vlaneseq
        %v7382 = vshrl.u32 %v7381, 7
        %v7383 = vsub.s32 %v7380, %v7382
        %v7384 = vrot.slane %v7362, %v7383
        %v7386 = vunpack.c.l.s4 1966171168
        %v7387 = vunpack.c.0.s8 %v7386
        %v7388 = vlaneseq
        %v7389 = vshrl.u32 %v7388, 7
        %v7390 = vsub.s32 %v7387, %v7389
        %v7391 = vrot.slane %v7363, %v7390
        %v7392 = vcombine.high %v7370, %v7370
        %v7393 = vcombine.high %v7377, %v7377
        %v7394 = vcombine.high %v7384, %v7384
        %v7395 = vcombine.high %v7391, %v7391
        %v7396 = vcombine.high %v6641, %v6641
        %v7398 = vunpack.c.l.s4 1966171168
        %v7399 = vunpack.c.0.s8 %v7398
        %v7400 = vlaneseq
        %v7401 = vshrl.u32 %v7400, 7
        %v7402 = vsub.s32 %v7399, %v7401
        %v7403 = vrot.slane %v6641, %v7402
        %v7405 = vunpack.c.l.s4 1966171168
        %v7406 = vunpack.c.0.s8 %v7405
        %v7407 = vlaneseq
        %v7408 = vshrl.u32 %v7407, 7
        %v7409 = vsub.s32 %v7406, %v7408
        %v7410 = vrot.slane %v7396, %v7409
        %v7411 = vcombine.high %v7403, %v7403
        %v7412 = vcombine.high %v7410, %v7410
        %v7414 = vunpack.c.l.s4 1966171168
        %v7415 = vunpack.c.0.s8 %v7414
        %v7416 = vlaneseq
        %v7417 = vshrl.u32 %v7416, 7
        %v7418 = vsub.s32 %v7415, %v7417
        %v7419 = vrot.slane %v7403, %v7418
        %v7421 = vunpack.c.l.s4 1966171168
        %v7422 = vunpack.c.0.s8 %v7421
        %v7423 = vlaneseq
        %v7424 = vshrl.u32 %v7423, 7
        %v7425 = vsub.s32 %v7422, %v7424
        %v7426 = vrot.slane %v7410, %v7425
        %v7428 = vunpack.c.l.s4 1966171168
        %v7429 = vunpack.c.0.s8 %v7428
        %v7430 = vlaneseq
        %v7431 = vshrl.u32 %v7430, 7
        %v7432 = vsub.s32 %v7429, %v7431
        %v7433 = vrot.slane %v7411, %v7432
        %v7435 = vunpack.c.l.s4 1966171168
        %v7436 = vunpack.c.0.s8 %v7435
        %v7437 = vlaneseq
        %v7438 = vshrl.u32 %v7437, 7
        %v7439 = vsub.s32 %v7436, %v7438
        %v7440 = vrot.slane %v7412, %v7439
        %v7441 = vcombine.high %v7419, %v7419
        %v7442 = vcombine.high %v7426, %v7426
        %v7443 = vcombine.high %v7433, %v7433
        %v7444 = vcombine.high %v7440, %v7440
        %s7445 = scalar_lea.vmem [#allocation3], 8
        %v7446 = vld [vmem:[%s7445] sm:$0xff]
        %v7447 = vld [vmem:[%s7445 + $0x20] sm:$0xff]
        %v7448 = vld [vmem:[%s7445 + $0x40] sm:$0xff]
        %v7449 = vld [vmem:[%s7445 + $0x60] sm:$0xff]
        %v7450 = vlaneseq
        %v7451 = vshrl.u32 %v7450, 7
        %v7452 = vsub.s32 0, %v7451
        %v7453 = vrot.slane %v7370, %v7452
        %v7454 = vlaneseq
        %v7455 = vshrl.u32 %v7454, 7
        %v7456 = vsub.s32 0, %v7455
        %v7457 = vrot.slane %v7384, %v7456
        %v7458 = vlaneseq
        %v7459 = vshrl.u32 %v7458, 7
        %v7460 = vsub.s32 0, %v7459
        %v7461 = vrot.slane %v7392, %v7460
        %v7462 = vlaneseq
        %v7463 = vshrl.u32 %v7462, 7
        %v7464 = vsub.s32 0, %v7463
        %v7465 = vrot.slane %v7394, %v7464
        %v7466 = vlaneseq
        %v7467 = vshrl.u32 %v7466, 7
        %v7468 = vsub.s32 0, %v7467
        %v7469 = vrot.slane %v7377, %v7468
        %v7470 = vlaneseq
        %v7471 = vshrl.u32 %v7470, 7
        %v7472 = vsub.s32 0, %v7471
        %v7473 = vrot.slane %v7391, %v7472
        %v7474 = vlaneseq
        %v7475 = vshrl.u32 %v7474, 7
        %v7476 = vsub.s32 0, %v7475
        %v7477 = vrot.slane %v7393, %v7476
        %v7478 = vlaneseq
        %v7479 = vshrl.u32 %v7478, 7
        %v7480 = vsub.s32 0, %v7479
        %v7481 = vrot.slane %v7395, %v7480
        %v7482 = vlaneseq
        %v7483 = vshrl.u32 %v7482, 7
        %v7484 = vsub.s32 0, %v7483
        %v7485 = vrot.slane %v7419, %v7484
        %v7486 = vlaneseq
        %v7487 = vshrl.u32 %v7486, 7
        %v7488 = vsub.s32 0, %v7487
        %v7489 = vrot.slane %v7433, %v7488
        %v7490 = vlaneseq
        %v7491 = vshrl.u32 %v7490, 7
        %v7492 = vsub.s32 0, %v7491
        %v7493 = vrot.slane %v7441, %v7492
        %v7494 = vlaneseq
        %v7495 = vshrl.u32 %v7494, 7
        %v7496 = vsub.s32 0, %v7495
        %v7497 = vrot.slane %v7443, %v7496
        %v7498 = vlaneseq
        %v7499 = vshrl.u32 %v7498, 7
        %v7500 = vsub.s32 0, %v7499
        %v7501 = vrot.slane %v7426, %v7500
        %v7502 = vlaneseq
        %v7503 = vshrl.u32 %v7502, 7
        %v7504 = vsub.s32 0, %v7503
        %v7505 = vrot.slane %v7440, %v7504
        %v7506 = vlaneseq
        %v7507 = vshrl.u32 %v7506, 7
        %v7508 = vsub.s32 0, %v7507
        %v7509 = vrot.slane %v7442, %v7508
        %v7510 = vlaneseq
        %v7511 = vshrl.u32 %v7510, 7
        %v7512 = vsub.s32 0, %v7511
        %v7513 = vrot.slane %v7444, %v7512
        %v7530 = vmul.f32 %v7453, %v7446
        %v7531 = vmul.f32 %v7453, %v7447
        %v7532 = vmul.f32 %v7453, %v7448
        %v7533 = vmul.f32 %v7453, %v7449
        %v7534 = vmul.f32 %v7457, %v7446
        %v7535 = vmul.f32 %v7457, %v7447
        %v7536 = vmul.f32 %v7457, %v7448
        %v7537 = vmul.f32 %v7457, %v7449
        %v7538 = vmul.f32 %v7461, %v7446
        %v7539 = vmul.f32 %v7461, %v7447
        %v7540 = vmul.f32 %v7461, %v7448
        %v7541 = vmul.f32 %v7461, %v7449
        %v7542 = vmul.f32 %v7465, %v7446
        %v7543 = vmul.f32 %v7465, %v7447
        %v7544 = vmul.f32 %v7465, %v7448
        %v7545 = vmul.f32 %v7465, %v7449
        %v7546 = vmul.f32 %v7469, %v7446
        %v7547 = vmul.f32 %v7469, %v7447
        %v7548 = vmul.f32 %v7469, %v7448
        %v7549 = vmul.f32 %v7469, %v7449
        %v7550 = vmul.f32 %v7473, %v7446
        %v7551 = vmul.f32 %v7473, %v7447
        %v7552 = vmul.f32 %v7473, %v7448
        %v7553 = vmul.f32 %v7473, %v7449
        %v7554 = vmul.f32 %v7477, %v7446
        %v7555 = vmul.f32 %v7477, %v7447
        %v7556 = vmul.f32 %v7477, %v7448
        %v7557 = vmul.f32 %v7477, %v7449
        %v7558 = vmul.f32 %v7481, %v7446
        %v7559 = vmul.f32 %v7481, %v7447
        %v7560 = vmul.f32 %v7481, %v7448
        %v7561 = vmul.f32 %v7481, %v7449
        %v7562 = vmul.f32 %v7485, %v7446
        %v7563 = vmul.f32 %v7485, %v7447
        %v7564 = vmul.f32 %v7485, %v7448
        %v7565 = vmul.f32 %v7485, %v7449
        %v7566 = vmul.f32 %v7489, %v7446
        %v7567 = vmul.f32 %v7489, %v7447
        %v7568 = vmul.f32 %v7489, %v7448
        %v7569 = vmul.f32 %v7489, %v7449
        %v7570 = vmul.f32 %v7493, %v7446
        %v7571 = vmul.f32 %v7493, %v7447
        %v7572 = vmul.f32 %v7493, %v7448
        %v7573 = vmul.f32 %v7493, %v7449
        %v7574 = vmul.f32 %v7497, %v7446
        %v7575 = vmul.f32 %v7497, %v7447
        %v7576 = vmul.f32 %v7497, %v7448
        %v7577 = vmul.f32 %v7497, %v7449
        %v7578 = vmul.f32 %v7501, %v7446
        %v7579 = vmul.f32 %v7501, %v7447
        %v7580 = vmul.f32 %v7501, %v7448
        %v7581 = vmul.f32 %v7501, %v7449
        %v7582 = vmul.f32 %v7505, %v7446
        %v7583 = vmul.f32 %v7505, %v7447
        %v7584 = vmul.f32 %v7505, %v7448
        %v7585 = vmul.f32 %v7505, %v7449
        %v7586 = vmul.f32 %v7509, %v7446
        %v7587 = vmul.f32 %v7509, %v7447
        %v7588 = vmul.f32 %v7509, %v7448
        %v7589 = vmul.f32 %v7509, %v7449
        %v7590 = vmul.f32 %v7513, %v7446
        %v7591 = vmul.f32 %v7513, %v7447
        %v7592 = vmul.f32 %v7513, %v7448
        %v7593 = vmul.f32 %v7513, %v7449
        %7594 = vmax.xlane.f32.xlu0 %v7530
        %v7595 = vpop.xlane.xlu0 %7594
        %7596 = vmax.xlane.f32.xlu0 %v7531
        %v7597 = vpop.xlane.xlu0 %7596
        %7598 = vmax.xlane.f32.xlu0 %v7532
        %v7599 = vpop.xlane.xlu0 %7598
        %7600 = vmax.xlane.f32.xlu0 %v7533
        %v7601 = vpop.xlane.xlu0 %7600
        %7602 = vmax.xlane.f32.xlu0 %v7534
        %v7603 = vpop.xlane.xlu0 %7602
        %7604 = vmax.xlane.f32.xlu0 %v7535
        %v7605 = vpop.xlane.xlu0 %7604
        %7606 = vmax.xlane.f32.xlu0 %v7536
        %v7607 = vpop.xlane.xlu0 %7606
        %7608 = vmax.xlane.f32.xlu0 %v7537
        %v7609 = vpop.xlane.xlu0 %7608
        %7610 = vmax.xlane.f32.xlu0 %v7538
        %v7611 = vpop.xlane.xlu0 %7610
        %7612 = vmax.xlane.f32.xlu0 %v7539
        %v7613 = vpop.xlane.xlu0 %7612
        %7614 = vmax.xlane.f32.xlu0 %v7540
        %v7615 = vpop.xlane.xlu0 %7614
        %7616 = vmax.xlane.f32.xlu0 %v7541
        %v7617 = vpop.xlane.xlu0 %7616
        %7618 = vmax.xlane.f32.xlu0 %v7542
        %v7619 = vpop.xlane.xlu0 %7618
        %7620 = vmax.xlane.f32.xlu0 %v7543
        %v7621 = vpop.xlane.xlu0 %7620
        %7622 = vmax.xlane.f32.xlu0 %v7544
        %v7623 = vpop.xlane.xlu0 %7622
        %7624 = vmax.xlane.f32.xlu0 %v7545
        %v7625 = vpop.xlane.xlu0 %7624
        %7626 = vmax.xlane.f32.xlu0 %v7546
        %v7627 = vpop.xlane.xlu0 %7626
        %7628 = vmax.xlane.f32.xlu0 %v7547
        %v7629 = vpop.xlane.xlu0 %7628
        %7630 = vmax.xlane.f32.xlu0 %v7548
        %v7631 = vpop.xlane.xlu0 %7630
        %7632 = vmax.xlane.f32.xlu0 %v7549
        %v7633 = vpop.xlane.xlu0 %7632
        %7634 = vmax.xlane.f32.xlu0 %v7550
        %v7635 = vpop.xlane.xlu0 %7634
        %7636 = vmax.xlane.f32.xlu0 %v7551
        %v7637 = vpop.xlane.xlu0 %7636
        %7638 = vmax.xlane.f32.xlu0 %v7552
        %v7639 = vpop.xlane.xlu0 %7638
        %7640 = vmax.xlane.f32.xlu0 %v7553
        %v7641 = vpop.xlane.xlu0 %7640
        %7642 = vmax.xlane.f32.xlu0 %v7554
        %v7643 = vpop.xlane.xlu0 %7642
        %7644 = vmax.xlane.f32.xlu0 %v7555
        %v7645 = vpop.xlane.xlu0 %7644
        %7646 = vmax.xlane.f32.xlu0 %v7556
        %v7647 = vpop.xlane.xlu0 %7646
        %7648 = vmax.xlane.f32.xlu0 %v7557
        %v7649 = vpop.xlane.xlu0 %7648
        %7650 = vmax.xlane.f32.xlu0 %v7558
        %v7651 = vpop.xlane.xlu0 %7650
        %7652 = vmax.xlane.f32.xlu0 %v7559
        %v7653 = vpop.xlane.xlu0 %7652
        %7654 = vmax.xlane.f32.xlu0 %v7560
        %v7655 = vpop.xlane.xlu0 %7654
        %7656 = vmax.xlane.f32.xlu0 %v7561
        %v7657 = vpop.xlane.xlu0 %7656
        %7658 = vmax.xlane.f32.xlu0 %v7562
        %v7659 = vpop.xlane.xlu0 %7658
        %7660 = vmax.xlane.f32.xlu0 %v7563
        %v7661 = vpop.xlane.xlu0 %7660
        %7662 = vmax.xlane.f32.xlu0 %v7564
        %v7663 = vpop.xlane.xlu0 %7662
        %7664 = vmax.xlane.f32.xlu0 %v7565
        %v7665 = vpop.xlane.xlu0 %7664
        %7666 = vmax.xlane.f32.xlu0 %v7566
        %v7667 = vpop.xlane.xlu0 %7666
        %7668 = vmax.xlane.f32.xlu0 %v7567
        %v7669 = vpop.xlane.xlu0 %7668
        %7670 = vmax.xlane.f32.xlu0 %v7568
        %v7671 = vpop.xlane.xlu0 %7670
        %7672 = vmax.xlane.f32.xlu0 %v7569
        %v7673 = vpop.xlane.xlu0 %7672
        %7674 = vmax.xlane.f32.xlu0 %v7570
        %v7675 = vpop.xlane.xlu0 %7674
        %7676 = vmax.xlane.f32.xlu0 %v7571
        %v7677 = vpop.xlane.xlu0 %7676
        %7678 = vmax.xlane.f32.xlu0 %v7572
        %v7679 = vpop.xlane.xlu0 %7678
        %7680 = vmax.xlane.f32.xlu0 %v7573
        %v7681 = vpop.xlane.xlu0 %7680
        %7682 = vmax.xlane.f32.xlu0 %v7574
        %v7683 = vpop.xlane.xlu0 %7682
        %7684 = vmax.xlane.f32.xlu0 %v7575
        %v7685 = vpop.xlane.xlu0 %7684
        %7686 = vmax.xlane.f32.xlu0 %v7576
        %v7687 = vpop.xlane.xlu0 %7686
        %7688 = vmax.xlane.f32.xlu0 %v7577
        %v7689 = vpop.xlane.xlu0 %7688
        %7690 = vmax.xlane.f32.xlu0 %v7578
        %v7691 = vpop.xlane.xlu0 %7690
        %7692 = vmax.xlane.f32.xlu0 %v7579
        %v7693 = vpop.xlane.xlu0 %7692
        %7694 = vmax.xlane.f32.xlu0 %v7580
        %v7695 = vpop.xlane.xlu0 %7694
        %7696 = vmax.xlane.f32.xlu0 %v7581
        %v7697 = vpop.xlane.xlu0 %7696
        %7698 = vmax.xlane.f32.xlu0 %v7582
        %v7699 = vpop.xlane.xlu0 %7698
        %7700 = vmax.xlane.f32.xlu0 %v7583
        %v7701 = vpop.xlane.xlu0 %7700
        %7702 = vmax.xlane.f32.xlu0 %v7584
        %v7703 = vpop.xlane.xlu0 %7702
        %7704 = vmax.xlane.f32.xlu0 %v7585
        %v7705 = vpop.xlane.xlu0 %7704
        %7706 = vmax.xlane.f32.xlu0 %v7586
        %v7707 = vpop.xlane.xlu0 %7706
        %7708 = vmax.xlane.f32.xlu0 %v7587
        %v7709 = vpop.xlane.xlu0 %7708
        %7710 = vmax.xlane.f32.xlu0 %v7588
        %v7711 = vpop.xlane.xlu0 %7710
        %7712 = vmax.xlane.f32.xlu0 %v7589
        %v7713 = vpop.xlane.xlu0 %7712
        %7714 = vmax.xlane.f32.xlu0 %v7590
        %v7715 = vpop.xlane.xlu0 %7714
        %7716 = vmax.xlane.f32.xlu0 %v7591
        %v7717 = vpop.xlane.xlu0 %7716
        %7718 = vmax.xlane.f32.xlu0 %v7592
        %v7719 = vpop.xlane.xlu0 %7718
        %7720 = vmax.xlane.f32.xlu0 %v7593
        %v7721 = vpop.xlane.xlu0 %7720
        %v7786 = vlaneseq
        %v7787 = vshrl.u32 %v7786, 7
        %v7788 = vsub.s32 %v6294, %v7787
        %v7789 = vrot.slane %v7595, %v7788
        %v7790 = vlaneseq
        %v7791 = vshrl.u32 %v7790, 7
        %v7792 = vsub.s32 %v6299, %v7791
        %v7793 = vrot.slane %v7597, %v7792
        %v7794 = vsel %vm6304, %v7793, %v7789
        %v7795 = vlaneseq
        %v7796 = vshrl.u32 %v7795, 7
        %v7797 = vsub.s32 %v6306, %v7796
        %v7798 = vrot.slane %v7599, %v7797
        %v7799 = vsel %vm6311, %v7798, %v7794
        %v7800 = vlaneseq
        %v7801 = vshrl.u32 %v7800, 7
        %v7802 = vsub.s32 %v6313, %v7801
        %v7803 = vrot.slane %v7601, %v7802
        %v7804 = vsel %vm6318, %v7803, %v7799
        %v7805 = vlaneseq
        %v7806 = vshrl.u32 %v7805, 7
        %v7807 = vsub.s32 %v6294, %v7806
        %v7808 = vrot.slane %v7603, %v7807
        %v7809 = vlaneseq
        %v7810 = vshrl.u32 %v7809, 7
        %v7811 = vsub.s32 %v6299, %v7810
        %v7812 = vrot.slane %v7605, %v7811
        %v7813 = vsel %vm6304, %v7812, %v7808
        %v7814 = vlaneseq
        %v7815 = vshrl.u32 %v7814, 7
        %v7816 = vsub.s32 %v6306, %v7815
        %v7817 = vrot.slane %v7607, %v7816
        %v7818 = vsel %vm6311, %v7817, %v7813
        %v7819 = vlaneseq
        %v7820 = vshrl.u32 %v7819, 7
        %v7821 = vsub.s32 %v6313, %v7820
        %v7822 = vrot.slane %v7609, %v7821
        %v7823 = vsel %vm6318, %v7822, %v7818
        %v7824 = vlaneseq
        %v7825 = vshrl.u32 %v7824, 7
        %v7826 = vsub.s32 %v6294, %v7825
        %v7827 = vrot.slane %v7611, %v7826
        %v7828 = vlaneseq
        %v7829 = vshrl.u32 %v7828, 7
        %v7830 = vsub.s32 %v6299, %v7829
        %v7831 = vrot.slane %v7613, %v7830
        %v7832 = vsel %vm6304, %v7831, %v7827
        %v7833 = vlaneseq
        %v7834 = vshrl.u32 %v7833, 7
        %v7835 = vsub.s32 %v6306, %v7834
        %v7836 = vrot.slane %v7615, %v7835
        %v7837 = vsel %vm6311, %v7836, %v7832
        %v7838 = vlaneseq
        %v7839 = vshrl.u32 %v7838, 7
        %v7840 = vsub.s32 %v6313, %v7839
        %v7841 = vrot.slane %v7617, %v7840
        %v7842 = vsel %vm6318, %v7841, %v7837
        %v7843 = vlaneseq
        %v7844 = vshrl.u32 %v7843, 7
        %v7845 = vsub.s32 %v6294, %v7844
        %v7846 = vrot.slane %v7619, %v7845
        %v7847 = vlaneseq
        %v7848 = vshrl.u32 %v7847, 7
        %v7849 = vsub.s32 %v6299, %v7848
        %v7850 = vrot.slane %v7621, %v7849
        %v7851 = vsel %vm6304, %v7850, %v7846
        %v7852 = vlaneseq
        %v7853 = vshrl.u32 %v7852, 7
        %v7854 = vsub.s32 %v6306, %v7853
        %v7855 = vrot.slane %v7623, %v7854
        %v7856 = vsel %vm6311, %v7855, %v7851
        %v7857 = vlaneseq
        %v7858 = vshrl.u32 %v7857, 7
        %v7859 = vsub.s32 %v6313, %v7858
        %v7860 = vrot.slane %v7625, %v7859
        %v7861 = vsel %vm6318, %v7860, %v7856
        %v7862 = vlaneseq
        %v7863 = vshrl.u32 %v7862, 7
        %v7864 = vsub.s32 %v6294, %v7863
        %v7865 = vrot.slane %v7627, %v7864
        %v7866 = vlaneseq
        %v7867 = vshrl.u32 %v7866, 7
        %v7868 = vsub.s32 %v6299, %v7867
        %v7869 = vrot.slane %v7629, %v7868
        %v7870 = vsel %vm6304, %v7869, %v7865
        %v7871 = vlaneseq
        %v7872 = vshrl.u32 %v7871, 7
        %v7873 = vsub.s32 %v6306, %v7872
        %v7874 = vrot.slane %v7631, %v7873
        %v7875 = vsel %vm6311, %v7874, %v7870
        %v7876 = vlaneseq
        %v7877 = vshrl.u32 %v7876, 7
        %v7878 = vsub.s32 %v6313, %v7877
        %v7879 = vrot.slane %v7633, %v7878
        %v7880 = vsel %vm6318, %v7879, %v7875
        %v7881 = vlaneseq
        %v7882 = vshrl.u32 %v7881, 7
        %v7883 = vsub.s32 %v6294, %v7882
        %v7884 = vrot.slane %v7635, %v7883
        %v7885 = vlaneseq
        %v7886 = vshrl.u32 %v7885, 7
        %v7887 = vsub.s32 %v6299, %v7886
        %v7888 = vrot.slane %v7637, %v7887
        %v7889 = vsel %vm6304, %v7888, %v7884
        %v7890 = vlaneseq
        %v7891 = vshrl.u32 %v7890, 7
        %v7892 = vsub.s32 %v6306, %v7891
        %v7893 = vrot.slane %v7639, %v7892
        %v7894 = vsel %vm6311, %v7893, %v7889
        %v7895 = vlaneseq
        %v7896 = vshrl.u32 %v7895, 7
        %v7897 = vsub.s32 %v6313, %v7896
        %v7898 = vrot.slane %v7641, %v7897
        %v7899 = vsel %vm6318, %v7898, %v7894
        %v7900 = vlaneseq
        %v7901 = vshrl.u32 %v7900, 7
        %v7902 = vsub.s32 %v6294, %v7901
        %v7903 = vrot.slane %v7643, %v7902
        %v7904 = vlaneseq
        %v7905 = vshrl.u32 %v7904, 7
        %v7906 = vsub.s32 %v6299, %v7905
        %v7907 = vrot.slane %v7645, %v7906
        %v7908 = vsel %vm6304, %v7907, %v7903
        %v7909 = vlaneseq
        %v7910 = vshrl.u32 %v7909, 7
        %v7911 = vsub.s32 %v6306, %v7910
        %v7912 = vrot.slane %v7647, %v7911
        %v7913 = vsel %vm6311, %v7912, %v7908
        %v7914 = vlaneseq
        %v7915 = vshrl.u32 %v7914, 7
        %v7916 = vsub.s32 %v6313, %v7915
        %v7917 = vrot.slane %v7649, %v7916
        %v7918 = vsel %vm6318, %v7917, %v7913
        %v7919 = vlaneseq
        %v7920 = vshrl.u32 %v7919, 7
        %v7921 = vsub.s32 %v6294, %v7920
        %v7922 = vrot.slane %v7651, %v7921
        %v7923 = vlaneseq
        %v7924 = vshrl.u32 %v7923, 7
        %v7925 = vsub.s32 %v6299, %v7924
        %v7926 = vrot.slane %v7653, %v7925
        %v7927 = vsel %vm6304, %v7926, %v7922
        %v7928 = vlaneseq
        %v7929 = vshrl.u32 %v7928, 7
        %v7930 = vsub.s32 %v6306, %v7929
        %v7931 = vrot.slane %v7655, %v7930
        %v7932 = vsel %vm6311, %v7931, %v7927
        %v7933 = vlaneseq
        %v7934 = vshrl.u32 %v7933, 7
        %v7935 = vsub.s32 %v6313, %v7934
        %v7936 = vrot.slane %v7657, %v7935
        %v7937 = vsel %vm6318, %v7936, %v7932
        %v7938 = vlaneseq
        %v7939 = vshrl.u32 %v7938, 7
        %v7940 = vsub.s32 %v6294, %v7939
        %v7941 = vrot.slane %v7659, %v7940
        %v7942 = vlaneseq
        %v7943 = vshrl.u32 %v7942, 7
        %v7944 = vsub.s32 %v6299, %v7943
        %v7945 = vrot.slane %v7661, %v7944
        %v7946 = vsel %vm6304, %v7945, %v7941
        %v7947 = vlaneseq
        %v7948 = vshrl.u32 %v7947, 7
        %v7949 = vsub.s32 %v6306, %v7948
        %v7950 = vrot.slane %v7663, %v7949
        %v7951 = vsel %vm6311, %v7950, %v7946
        %v7952 = vlaneseq
        %v7953 = vshrl.u32 %v7952, 7
        %v7954 = vsub.s32 %v6313, %v7953
        %v7955 = vrot.slane %v7665, %v7954
        %v7956 = vsel %vm6318, %v7955, %v7951
        %v7957 = vlaneseq
        %v7958 = vshrl.u32 %v7957, 7
        %v7959 = vsub.s32 %v6294, %v7958
        %v7960 = vrot.slane %v7667, %v7959
        %v7961 = vlaneseq
        %v7962 = vshrl.u32 %v7961, 7
        %v7963 = vsub.s32 %v6299, %v7962
        %v7964 = vrot.slane %v7669, %v7963
        %v7965 = vsel %vm6304, %v7964, %v7960
        %v7966 = vlaneseq
        %v7967 = vshrl.u32 %v7966, 7
        %v7968 = vsub.s32 %v6306, %v7967
        %v7969 = vrot.slane %v7671, %v7968
        %v7970 = vsel %vm6311, %v7969, %v7965
        %v7971 = vlaneseq
        %v7972 = vshrl.u32 %v7971, 7
        %v7973 = vsub.s32 %v6313, %v7972
        %v7974 = vrot.slane %v7673, %v7973
        %v7975 = vsel %vm6318, %v7974, %v7970
        %v7976 = vlaneseq
        %v7977 = vshrl.u32 %v7976, 7
        %v7978 = vsub.s32 %v6294, %v7977
        %v7979 = vrot.slane %v7675, %v7978
        %v7980 = vlaneseq
        %v7981 = vshrl.u32 %v7980, 7
        %v7982 = vsub.s32 %v6299, %v7981
        %v7983 = vrot.slane %v7677, %v7982
        %v7984 = vsel %vm6304, %v7983, %v7979
        %v7985 = vlaneseq
        %v7986 = vshrl.u32 %v7985, 7
        %v7987 = vsub.s32 %v6306, %v7986
        %v7988 = vrot.slane %v7679, %v7987
        %v7989 = vsel %vm6311, %v7988, %v7984
        %v7990 = vlaneseq
        %v7991 = vshrl.u32 %v7990, 7
        %v7992 = vsub.s32 %v6313, %v7991
        %v7993 = vrot.slane %v7681, %v7992
        %v7994 = vsel %vm6318, %v7993, %v7989
        %v7995 = vlaneseq
        %v7996 = vshrl.u32 %v7995, 7
        %v7997 = vsub.s32 %v6294, %v7996
        %v7998 = vrot.slane %v7683, %v7997
        %v7999 = vlaneseq
        %v8000 = vshrl.u32 %v7999, 7
        %v8001 = vsub.s32 %v6299, %v8000
        %v8002 = vrot.slane %v7685, %v8001
        %v8003 = vsel %vm6304, %v8002, %v7998
        %v8004 = vlaneseq
        %v8005 = vshrl.u32 %v8004, 7
        %v8006 = vsub.s32 %v6306, %v8005
        %v8007 = vrot.slane %v7687, %v8006
        %v8008 = vsel %vm6311, %v8007, %v8003
        %v8009 = vlaneseq
        %v8010 = vshrl.u32 %v8009, 7
        %v8011 = vsub.s32 %v6313, %v8010
        %v8012 = vrot.slane %v7689, %v8011
        %v8013 = vsel %vm6318, %v8012, %v8008
        %v8014 = vlaneseq
        %v8015 = vshrl.u32 %v8014, 7
        %v8016 = vsub.s32 %v6294, %v8015
        %v8017 = vrot.slane %v7691, %v8016
        %v8018 = vlaneseq
        %v8019 = vshrl.u32 %v8018, 7
        %v8020 = vsub.s32 %v6299, %v8019
        %v8021 = vrot.slane %v7693, %v8020
        %v8022 = vsel %vm6304, %v8021, %v8017
        %v8023 = vlaneseq
        %v8024 = vshrl.u32 %v8023, 7
        %v8025 = vsub.s32 %v6306, %v8024
        %v8026 = vrot.slane %v7695, %v8025
        %v8027 = vsel %vm6311, %v8026, %v8022
        %v8028 = vlaneseq
        %v8029 = vshrl.u32 %v8028, 7
        %v8030 = vsub.s32 %v6313, %v8029
        %v8031 = vrot.slane %v7697, %v8030
        %v8032 = vsel %vm6318, %v8031, %v8027
        %v8033 = vlaneseq
        %v8034 = vshrl.u32 %v8033, 7
        %v8035 = vsub.s32 %v6294, %v8034
        %v8036 = vrot.slane %v7699, %v8035
        %v8037 = vlaneseq
        %v8038 = vshrl.u32 %v8037, 7
        %v8039 = vsub.s32 %v6299, %v8038
        %v8040 = vrot.slane %v7701, %v8039
        %v8041 = vsel %vm6304, %v8040, %v8036
        %v8042 = vlaneseq
        %v8043 = vshrl.u32 %v8042, 7
        %v8044 = vsub.s32 %v6306, %v8043
        %v8045 = vrot.slane %v7703, %v8044
        %v8046 = vsel %vm6311, %v8045, %v8041
        %v8047 = vlaneseq
        %v8048 = vshrl.u32 %v8047, 7
        %v8049 = vsub.s32 %v6313, %v8048
        %v8050 = vrot.slane %v7705, %v8049
        %v8051 = vsel %vm6318, %v8050, %v8046
        %v8052 = vlaneseq
        %v8053 = vshrl.u32 %v8052, 7
        %v8054 = vsub.s32 %v6294, %v8053
        %v8055 = vrot.slane %v7707, %v8054
        %v8056 = vlaneseq
        %v8057 = vshrl.u32 %v8056, 7
        %v8058 = vsub.s32 %v6299, %v8057
        %v8059 = vrot.slane %v7709, %v8058
        %v8060 = vsel %vm6304, %v8059, %v8055
        %v8061 = vlaneseq
        %v8062 = vshrl.u32 %v8061, 7
        %v8063 = vsub.s32 %v6306, %v8062
        %v8064 = vrot.slane %v7711, %v8063
        %v8065 = vsel %vm6311, %v8064, %v8060
        %v8066 = vlaneseq
        %v8067 = vshrl.u32 %v8066, 7
        %v8068 = vsub.s32 %v6313, %v8067
        %v8069 = vrot.slane %v7713, %v8068
        %v8070 = vsel %vm6318, %v8069, %v8065
        %v8071 = vlaneseq
        %v8072 = vshrl.u32 %v8071, 7
        %v8073 = vsub.s32 %v6294, %v8072
        %v8074 = vrot.slane %v7715, %v8073
        %v8075 = vlaneseq
        %v8076 = vshrl.u32 %v8075, 7
        %v8077 = vsub.s32 %v6299, %v8076
        %v8078 = vrot.slane %v7717, %v8077
        %v8079 = vsel %vm6304, %v8078, %v8074
        %v8080 = vlaneseq
        %v8081 = vshrl.u32 %v8080, 7
        %v8082 = vsub.s32 %v6306, %v8081
        %v8083 = vrot.slane %v7719, %v8082
        %v8084 = vsel %vm6311, %v8083, %v8079
        %v8085 = vlaneseq
        %v8086 = vshrl.u32 %v8085, 7
        %v8087 = vsub.s32 %v6313, %v8086
        %v8088 = vrot.slane %v7721, %v8087
        %v8089 = vsel %vm6318, %v8088, %v8084
        %v8090 = vsel %vm6605, %v7823, %v7804
        %v8091 = vsel %vm6607, %v7842, %v8090
        %v8092 = vsel %vm6609, %v7861, %v8091
        %v8093 = vsel %vm6611, %v7880, %v8092
        %v8094 = vsel %vm6613, %v7899, %v8093
        %v8095 = vsel %vm6615, %v7918, %v8094
        %v8096 = vsel %vm6617, %v7937, %v8095
        %v8097 = vsel %vm6605, %v7975, %v7956
        %v8098 = vsel %vm6607, %v7994, %v8097
        %v8099 = vsel %vm6609, %v8013, %v8098
        %v8100 = vsel %vm6611, %v8032, %v8099
        %v8101 = vsel %vm6613, %v8051, %v8100
        %v8102 = vsel %vm6615, %v8070, %v8101
        %v8103 = vsel %vm6617, %v8089, %v8102
        %v8106 = vmax.f32 %v6628, %v8096
        %v8107 = vmax.f32 %v6629, %v8103
        %s8108 = scalar_lea.vmem %s335, 2
        %v8109 = vld [vmem:[%s8108] sm:$0x1]
        %v8110 = vlaneseq
        %v8111 = vshrl.u32 %v8110, 7
        %v8112 = vsub.s32 0, %v8111
        %v8113 = vrot.slane %v8109, %v8112
        %vm8114 = vcmp.eq.s32.totalorder %v5134, %v8113
        %vm8115 = vcmp.eq.s32.totalorder %v5135, %v8113
        %v8116 = vsel %vm8114, 1, 0
        %v8117 = vsel %vm8115, 1, 0
        %v8118 = vcvt.s32.f32 %v8116
        %v8119 = vcvt.s32.f32 %v8117
        %s8120 = scalar_lea.vmem [#allocation2], 256
        %v8121 = vld [vmem:[%s8120] sm:$0xff]
        %v8122 = vld [vmem:[%s8120 + $0x8] sm:$0xff]
        %v8123 = vld [vmem:[%s8120 + $0x10] sm:$0xff]
        %v8124 = vld [vmem:[%s8120 + $0x18] sm:$0xff]
        %v8125 = vld [vmem:[%s8120 + $0x20] sm:$0xff]
        %v8126 = vld [vmem:[%s8120 + $0x28] sm:$0xff]
        %v8127 = vld [vmem:[%s8120 + $0x30] sm:$0xff]
        %v8128 = vld [vmem:[%s8120 + $0x38] sm:$0xff]
        %v8129 = vld [vmem:[%s8120 + $0x40] sm:$0xff]
        %v8130 = vld [vmem:[%s8120 + $0x48] sm:$0xff]
        %v8131 = vld [vmem:[%s8120 + $0x50] sm:$0xff]
        %v8132 = vld [vmem:[%s8120 + $0x58] sm:$0xff]
        %v8133 = vld [vmem:[%s8120 + $0x60] sm:$0xff]
        %v8134 = vld [vmem:[%s8120 + $0x68] sm:$0xff]
        %v8135 = vld [vmem:[%s8120 + $0x70] sm:$0xff]
        %v8136 = vld [vmem:[%s8120 + $0x78] sm:$0xff]
        %8137 = vmatprep.subr.mxu0 0.0
        %v8138 = vand.u32 %v8121, 4294901760
        %8139 = vmatpush1.msra.mxu0 %v8138
        %8140 = vmatprep.subr.mxu0 0.0
        %v8141 = vand.u32 %v8122, 4294901760
        %8142 = vmatpush1.msra.mxu0 %v8141
        %8143 = vmatprep.subr.mxu0 0.0
        %v8144 = vand.u32 %v8123, 4294901760
        %8145 = vmatpush1.msra.mxu0 %v8144
        %8146 = vmatprep.subr.mxu0 0.0
        %v8147 = vand.u32 %v8124, 4294901760
        %8148 = vmatpush1.msra.mxu0 %v8147
        %8149 = vmatprep.subr.mxu0 0.0
        %v8150 = vand.u32 %v8125, 4294901760
        %8151 = vmatpush1.msra.mxu0 %v8150
        %8152 = vmatprep.subr.mxu0 0.0
        %v8153 = vand.u32 %v8126, 4294901760
        %8154 = vmatpush1.msra.mxu0 %v8153
        %8155 = vmatprep.subr.mxu0 0.0
        %v8156 = vand.u32 %v8127, 4294901760
        %8157 = vmatpush1.msra.mxu0 %v8156
        %8158 = vmatprep.subr.mxu0 0.0
        %v8159 = vand.u32 %v8128, 4294901760
        %8160 = vmatpush1.msra.mxu0 %v8159
        %8161 = vmatprep.subr.mxu0 0.0
        %v8162 = vand.u32 %v8129, 4294901760
        %8163 = vmatpush1.msra.mxu0 %v8162
        %8164 = vmatprep.subr.mxu0 0.0
        %v8165 = vand.u32 %v8130, 4294901760
        %8166 = vmatpush1.msra.mxu0 %v8165
        %8167 = vmatprep.subr.mxu0 0.0
        %v8168 = vand.u32 %v8131, 4294901760
        %8169 = vmatpush1.msra.mxu0 %v8168
        %8170 = vmatprep.subr.mxu0 0.0
        %v8171 = vand.u32 %v8132, 4294901760
        %8172 = vmatpush1.msra.mxu0 %v8171
        %8173 = vmatprep.subr.mxu0 0.0
        %v8174 = vand.u32 %v8133, 4294901760
        %8175 = vmatpush1.msra.mxu0 %v8174
        %8176 = vmatprep.subr.mxu0 0.0
        %v8177 = vand.u32 %v8134, 4294901760
        %8178 = vmatpush1.msra.mxu0 %v8177
        %8179 = vmatprep.subr.mxu0 0.0
        %v8180 = vand.u32 %v8135, 4294901760
        %8181 = vmatpush1.msra.mxu0 %v8180
        %8182 = vmatprep.subr.mxu0 0.0
        %v8183 = vand.u32 %v8136, 4294901760
        %8184 = vmatpush1.msra.mxu0 %v8183
        %8185 = vmatprep.subr.mxu0 0.0
        %8186 = vmatpush1.msra.mxu0 0.0
        %8187 = vmatprep.subr.mxu0 0.0
        %8188 = vmatpush1.msra.mxu0 0.0
        %8189 = vmatprep.subr.mxu0 0.0
        %8190 = vmatpush1.msra.mxu0 0.0
        %8191 = vmatprep.subr.mxu0 0.0
        %8192 = vmatpush1.msra.mxu0 0.0
        %8193 = vmatprep.subr.mxu0 0.0
        %8194 = vmatpush1.msra.mxu0 0.0
        %8195 = vmatprep.subr.mxu0 0.0
        %8196 = vmatpush1.msra.mxu0 0.0
        %8197 = vmatprep.subr.mxu0 0.0
        %8198 = vmatpush1.msra.mxu0 0.0
        %8199 = vmatprep.subr.mxu0 0.0
        %8200 = vmatpush1.msra.mxu0 0.0
        %8201 = vmatprep.subr.mxu0 0.0
        %8202 = vmatpush1.msra.mxu0 0.0
        %8203 = vmatprep.subr.mxu0 0.0
        %8204 = vmatpush1.msra.mxu0 0.0
        %8205 = vmatprep.subr.mxu0 0.0
        %8206 = vmatpush1.msra.mxu0 0.0
        %8207 = vmatprep.subr.mxu0 0.0
        %8208 = vmatpush1.msra.mxu0 0.0
        %8209 = vmatprep.subr.mxu0 0.0
        %8210 = vmatpush1.msra.mxu0 0.0
        %8211 = vmatprep.subr.mxu0 0.0
        %8212 = vmatpush1.msra.mxu0 0.0
        %8213 = vmatprep.subr.mxu0 0.0
        %8214 = vmatpush1.msra.mxu0 0.0
        %8215 = vmatprep.subr.mxu0 0.0
        %8216 = vmatpush1.msra.mxu0 0.0
        %8217 = vmatprep.mubr.f32.mxu0 0.0
        %v8218 = vand.u32 %v8118, 4294901760
        %v8219 = vsub.f32 %v8118, %v8218
        %v8220 = vand.u32 %v8219, 4294901760
        %v8221 = vsub.f32 %v8219, %v8220
        %v8222 = vand.u32 %v8221, 4294901760
        %8223 = vmatmul.mubr.f32.gmra.mrb[0].mxu0 %v8222
        %v8224 = vpop.f32.mrb[0].mxu0
        %v8225 = vadd.f32 0.0, %v8224
        %v8226 = vpop.f32.mrb[0].mxu0
        %8227 = vmatprep.mubr.f32.mxu0 0.0
        %v8228 = vand.u32 %v8119, 4294901760
        %v8229 = vsub.f32 %v8119, %v8228
        %v8230 = vand.u32 %v8229, 4294901760
        %v8231 = vsub.f32 %v8229, %v8230
        %v8232 = vand.u32 %v8231, 4294901760
        %8233 = vmatmul.mubr.f32.gmra.mrb[0].mxu0 %v8232
        %v8234 = vpop.f32.mrb[0].mxu0
        %v8235 = vadd.f32 0.0, %v8234
        %v8236 = vpop.f32.mrb[0].mxu0
        %8237 = vdwg.mxu0
        %8238 = vmatprep.subr.mxu0 0.0
        %v8239 = vand.u32 %v8121, 4294901760
        %v8240 = vsub.f32 %v8121, %v8239
        %v8241 = vand.u32 %v8240, 4294901760
        %v8242 = vsub.f32 %v8240, %v8241
        %v8243 = vand.u32 %v8242, 4294901760
        %8244 = vmatpush1.msra.mxu0 %v8243
        %8245 = vmatprep.subr.mxu0 0.0
        %v8246 = vand.u32 %v8122, 4294901760
        %v8247 = vsub.f32 %v8122, %v8246
        %v8248 = vand.u32 %v8247, 4294901760
        %v8249 = vsub.f32 %v8247, %v8248
        %v8250 = vand.u32 %v8249, 4294901760
        %8251 = vmatpush1.msra.mxu0 %v8250
        %8252 = vmatprep.subr.mxu0 0.0
        %v8253 = vand.u32 %v8123, 4294901760
        %v8254 = vsub.f32 %v8123, %v8253
        %v8255 = vand.u32 %v8254, 4294901760
        %v8256 = vsub.f32 %v8254, %v8255
        %v8257 = vand.u32 %v8256, 4294901760
        %8258 = vmatpush1.msra.mxu0 %v8257
        %8259 = vmatprep.subr.mxu0 0.0
        %v8260 = vand.u32 %v8124, 4294901760
        %v8261 = vsub.f32 %v8124, %v8260
        %v8262 = vand.u32 %v8261, 4294901760
        %v8263 = vsub.f32 %v8261, %v8262
        %v8264 = vand.u32 %v8263, 4294901760
        %8265 = vmatpush1.msra.mxu0 %v8264
        %8266 = vmatprep.subr.mxu0 0.0
        %v8267 = vand.u32 %v8125, 4294901760
        %v8268 = vsub.f32 %v8125, %v8267
        %v8269 = vand.u32 %v8268, 4294901760
        %v8270 = vsub.f32 %v8268, %v8269
        %v8271 = vand.u32 %v8270, 4294901760
        %8272 = vmatpush1.msra.mxu0 %v8271
        %8273 = vmatprep.subr.mxu0 0.0
        %v8274 = vand.u32 %v8126, 4294901760
        %v8275 = vsub.f32 %v8126, %v8274
        %v8276 = vand.u32 %v8275, 4294901760
        %v8277 = vsub.f32 %v8275, %v8276
        %v8278 = vand.u32 %v8277, 4294901760
        %8279 = vmatpush1.msra.mxu0 %v8278
        %8280 = vmatprep.subr.mxu0 0.0
        %v8281 = vand.u32 %v8127, 4294901760
        %v8282 = vsub.f32 %v8127, %v8281
        %v8283 = vand.u32 %v8282, 4294901760
        %v8284 = vsub.f32 %v8282, %v8283
        %v8285 = vand.u32 %v8284, 4294901760
        %8286 = vmatpush1.msra.mxu0 %v8285
        %8287 = vmatprep.subr.mxu0 0.0
        %v8288 = vand.u32 %v8128, 4294901760
        %v8289 = vsub.f32 %v8128, %v8288
        %v8290 = vand.u32 %v8289, 4294901760
        %v8291 = vsub.f32 %v8289, %v8290
        %v8292 = vand.u32 %v8291, 4294901760
        %8293 = vmatpush1.msra.mxu0 %v8292
        %8294 = vmatprep.subr.mxu0 0.0
        %v8295 = vand.u32 %v8129, 4294901760
        %v8296 = vsub.f32 %v8129, %v8295
        %v8297 = vand.u32 %v8296, 4294901760
        %v8298 = vsub.f32 %v8296, %v8297
        %v8299 = vand.u32 %v8298, 4294901760
        %8300 = vmatpush1.msra.mxu0 %v8299
        %8301 = vmatprep.subr.mxu0 0.0
        %v8302 = vand.u32 %v8130, 4294901760
        %v8303 = vsub.f32 %v8130, %v8302
        %v8304 = vand.u32 %v8303, 4294901760
        %v8305 = vsub.f32 %v8303, %v8304
        %v8306 = vand.u32 %v8305, 4294901760
        %8307 = vmatpush1.msra.mxu0 %v8306
        %8308 = vmatprep.subr.mxu0 0.0
        %v8309 = vand.u32 %v8131, 4294901760
        %v8310 = vsub.f32 %v8131, %v8309
        %v8311 = vand.u32 %v8310, 4294901760
        %v8312 = vsub.f32 %v8310, %v8311
        %v8313 = vand.u32 %v8312, 4294901760
        %8314 = vmatpush1.msra.mxu0 %v8313
        %8315 = vmatprep.subr.mxu0 0.0
        %v8316 = vand.u32 %v8132, 4294901760
        %v8317 = vsub.f32 %v8132, %v8316
        %v8318 = vand.u32 %v8317, 4294901760
        %v8319 = vsub.f32 %v8317, %v8318
        %v8320 = vand.u32 %v8319, 4294901760
        %8321 = vmatpush1.msra.mxu0 %v8320
        %8322 = vmatprep.subr.mxu0 0.0
        %v8323 = vand.u32 %v8133, 4294901760
        %v8324 = vsub.f32 %v8133, %v8323
        %v8325 = vand.u32 %v8324, 4294901760
        %v8326 = vsub.f32 %v8324, %v8325
        %v8327 = vand.u32 %v8326, 4294901760
        %8328 = vmatpush1.msra.mxu0 %v8327
        %8329 = vmatprep.subr.mxu0 0.0
        %v8330 = vand.u32 %v8134, 4294901760
        %v8331 = vsub.f32 %v8134, %v8330
        %v8332 = vand.u32 %v8331, 4294901760
        %v8333 = vsub.f32 %v8331, %v8332
        %v8334 = vand.u32 %v8333, 4294901760
        %8335 = vmatpush1.msra.mxu0 %v8334
        %8336 = vmatprep.subr.mxu0 0.0
        %v8337 = vand.u32 %v8135, 4294901760
        %v8338 = vsub.f32 %v8135, %v8337
        %v8339 = vand.u32 %v8338, 4294901760
        %v8340 = vsub.f32 %v8338, %v8339
        %v8341 = vand.u32 %v8340, 4294901760
        %8342 = vmatpush1.msra.mxu0 %v8341
        %8343 = vmatprep.subr.mxu0 0.0
        %v8344 = vand.u32 %v8136, 4294901760
        %v8345 = vsub.f32 %v8136, %v8344
        %v8346 = vand.u32 %v8345, 4294901760
        %v8347 = vsub.f32 %v8345, %v8346
        %v8348 = vand.u32 %v8347, 4294901760
        %8349 = vmatpush1.msra.mxu0 %v8348
        %8350 = vmatprep.subr.mxu0 0.0
        %8351 = vmatpush1.msra.mxu0 0.0
        %8352 = vmatprep.subr.mxu0 0.0
        %8353 = vmatpush1.msra.mxu0 0.0
        %8354 = vmatprep.subr.mxu0 0.0
        %8355 = vmatpush1.msra.mxu0 0.0
        %8356 = vmatprep.subr.mxu0 0.0
        %8357 = vmatpush1.msra.mxu0 0.0
        %8358 = vmatprep.subr.mxu0 0.0
        %8359 = vmatpush1.msra.mxu0 0.0
        %8360 = vmatprep.subr.mxu0 0.0
        %8361 = vmatpush1.msra.mxu0 0.0
        %8362 = vmatprep.subr.mxu0 0.0
        %8363 = vmatpush1.msra.mxu0 0.0
        %8364 = vmatprep.subr.mxu0 0.0
        %8365 = vmatpush1.msra.mxu0 0.0
        %8366 = vmatprep.subr.mxu0 0.0
        %8367 = vmatpush1.msra.mxu0 0.0
        %8368 = vmatprep.subr.mxu0 0.0
        %8369 = vmatpush1.msra.mxu0 0.0
        %8370 = vmatprep.subr.mxu0 0.0
        %8371 = vmatpush1.msra.mxu0 0.0
        %8372 = vmatprep.subr.mxu0 0.0
        %8373 = vmatpush1.msra.mxu0 0.0
        %8374 = vmatprep.subr.mxu0 0.0
        %8375 = vmatpush1.msra.mxu0 0.0
        %8376 = vmatprep.subr.mxu0 0.0
        %8377 = vmatpush1.msra.mxu0 0.0
        %8378 = vmatprep.subr.mxu0 0.0
        %8379 = vmatpush1.msra.mxu0 0.0
        %8380 = vmatprep.subr.mxu0 0.0
        %8381 = vmatpush1.msra.mxu0 0.0
        %8382 = vmatprep.mubr.f32.mxu0 0.0
        %v8383 = vand.u32 %v8118, 4294901760
        %8384 = vmatmul.mubr.f32.gmra.mrb[0].mxu0 %v8383
        %v8385 = vpop.f32.mrb[0].mxu0
        %v8386 = vadd.f32 %v8225, %v8385
        %v8387 = vpop.f32.mrb[0].mxu0
        %8388 = vmatprep.mubr.f32.mxu0 0.0
        %v8389 = vand.u32 %v8119, 4294901760
        %8390 = vmatmul.mubr.f32.gmra.mrb[0].mxu0 %v8389
        %v8391 = vpop.f32.mrb[0].mxu0
        %v8392 = vadd.f32 %v8235, %v8391
        %v8393 = vpop.f32.mrb[0].mxu0
        %8394 = vdwg.mxu0
        %8395 = vmatprep.subr.mxu0 0.0
        %v8396 = vand.u32 %v8121, 4294901760
        %v8397 = vsub.f32 %v8121, %v8396
        %8398 = vmatpush1.msra.mxu0 %v8397
        %8399 = vmatprep.subr.mxu0 0.0
        %v8400 = vand.u32 %v8122, 4294901760
        %v8401 = vsub.f32 %v8122, %v8400
        %8402 = vmatpush1.msra.mxu0 %v8401
        %8403 = vmatprep.subr.mxu0 0.0
        %v8404 = vand.u32 %v8123, 4294901760
        %v8405 = vsub.f32 %v8123, %v8404
        %8406 = vmatpush1.msra.mxu0 %v8405
        %8407 = vmatprep.subr.mxu0 0.0
        %v8408 = vand.u32 %v8124, 4294901760
        %v8409 = vsub.f32 %v8124, %v8408
        %8410 = vmatpush1.msra.mxu0 %v8409
        %8411 = vmatprep.subr.mxu0 0.0
        %v8412 = vand.u32 %v8125, 4294901760
        %v8413 = vsub.f32 %v8125, %v8412
        %8414 = vmatpush1.msra.mxu0 %v8413
        %8415 = vmatprep.subr.mxu0 0.0
        %v8416 = vand.u32 %v8126, 4294901760
        %v8417 = vsub.f32 %v8126, %v8416
        %8418 = vmatpush1.msra.mxu0 %v8417
        %8419 = vmatprep.subr.mxu0 0.0
        %v8420 = vand.u32 %v8127, 4294901760
        %v8421 = vsub.f32 %v8127, %v8420
        %8422 = vmatpush1.msra.mxu0 %v8421
        %8423 = vmatprep.subr.mxu0 0.0
        %v8424 = vand.u32 %v8128, 4294901760
        %v8425 = vsub.f32 %v8128, %v8424
        %8426 = vmatpush1.msra.mxu0 %v8425
        %8427 = vmatprep.subr.mxu0 0.0
        %v8428 = vand.u32 %v8129, 4294901760
        %v8429 = vsub.f32 %v8129, %v8428
        %8430 = vmatpush1.msra.mxu0 %v8429
        %8431 = vmatprep.subr.mxu0 0.0
        %v8432 = vand.u32 %v8130, 4294901760
        %v8433 = vsub.f32 %v8130, %v8432
        %8434 = vmatpush1.msra.mxu0 %v8433
        %8435 = vmatprep.subr.mxu0 0.0
        %v8436 = vand.u32 %v8131, 4294901760
        %v8437 = vsub.f32 %v8131, %v8436
        %8438 = vmatpush1.msra.mxu0 %v8437
        %8439 = vmatprep.subr.mxu0 0.0
        %v8440 = vand.u32 %v8132, 4294901760
        %v8441 = vsub.f32 %v8132, %v8440
        %8442 = vmatpush1.msra.mxu0 %v8441
        %8443 = vmatprep.subr.mxu0 0.0
        %v8444 = vand.u32 %v8133, 4294901760
        %v8445 = vsub.f32 %v8133, %v8444
        %8446 = vmatpush1.msra.mxu0 %v8445
        %8447 = vmatprep.subr.mxu0 0.0
        %v8448 = vand.u32 %v8134, 4294901760
        %v8449 = vsub.f32 %v8134, %v8448
        %8450 = vmatpush1.msra.mxu0 %v8449
        %8451 = vmatprep.subr.mxu0 0.0
        %v8452 = vand.u32 %v8135, 4294901760
        %v8453 = vsub.f32 %v8135, %v8452
        %8454 = vmatpush1.msra.mxu0 %v8453
        %8455 = vmatprep.subr.mxu0 0.0
        %v8456 = vand.u32 %v8136, 4294901760
        %v8457 = vsub.f32 %v8136, %v8456
        %8458 = vmatpush1.msra.mxu0 %v8457
        %8459 = vmatprep.subr.mxu0 0.0
        %8460 = vmatpush1.msra.mxu0 0.0
        %8461 = vmatprep.subr.mxu0 0.0
        %8462 = vmatpush1.msra.mxu0 0.0
        %8463 = vmatprep.subr.mxu0 0.0
        %8464 = vmatpush1.msra.mxu0 0.0
        %8465 = vmatprep.subr.mxu0 0.0
        %8466 = vmatpush1.msra.mxu0 0.0
        %8467 = vmatprep.subr.mxu0 0.0
        %8468 = vmatpush1.msra.mxu0 0.0
        %8469 = vmatprep.subr.mxu0 0.0
        %8470 = vmatpush1.msra.mxu0 0.0
        %8471 = vmatprep.subr.mxu0 0.0
        %8472 = vmatpush1.msra.mxu0 0.0
        %8473 = vmatprep.subr.mxu0 0.0
        %8474 = vmatpush1.msra.mxu0 0.0
        %8475 = vmatprep.subr.mxu0 0.0
        %8476 = vmatpush1.msra.mxu0 0.0
        %8477 = vmatprep.subr.mxu0 0.0
        %8478 = vmatpush1.msra.mxu0 0.0
        %8479 = vmatprep.subr.mxu0 0.0
        %8480 = vmatpush1.msra.mxu0 0.0
        %8481 = vmatprep.subr.mxu0 0.0
        %8482 = vmatpush1.msra.mxu0 0.0
        %8483 = vmatprep.subr.mxu0 0.0
        %8484 = vmatpush1.msra.mxu0 0.0
        %8485 = vmatprep.subr.mxu0 0.0
        %8486 = vmatpush1.msra.mxu0 0.0
        %8487 = vmatprep.subr.mxu0 0.0
        %8488 = vmatpush1.msra.mxu0 0.0
        %8489 = vmatprep.subr.mxu0 0.0
        %8490 = vmatpush1.msra.mxu0 0.0
        %8491 = vmatprep.mubr.f32.mxu0 0.0
        %v8492 = vand.u32 %v8118, 4294901760
        %v8493 = vsub.f32 %v8118, %v8492
        %8494 = vmatmul.mubr.f32.gmra.mrb[0].mxu0 %v8493
        %v8495 = vpop.f32.mrb[0].mxu0
        %v8496 = vadd.f32 %v8386, %v8495
        %v8497 = vpop.f32.mrb[0].mxu0
        %8498 = vmatprep.mubr.f32.mxu0 0.0
        %v8499 = vand.u32 %v8119, 4294901760
        %v8500 = vsub.f32 %v8119, %v8499
        %8501 = vmatmul.mubr.f32.gmra.mrb[0].mxu0 %v8500
        %v8502 = vpop.f32.mrb[0].mxu0
        %v8503 = vadd.f32 %v8392, %v8502
        %v8504 = vpop.f32.mrb[0].mxu0
        %8505 = vdwg.mxu0
        %8506 = vmatprep.subr.mxu0 0.0
        %v8507 = vand.u32 %v8121, 4294901760
        %8508 = vmatpush1.msra.mxu0 %v8507
        %8509 = vmatprep.subr.mxu0 0.0
        %v8510 = vand.u32 %v8122, 4294901760
        %8511 = vmatpush1.msra.mxu0 %v8510
        %8512 = vmatprep.subr.mxu0 0.0
        %v8513 = vand.u32 %v8123, 4294901760
        %8514 = vmatpush1.msra.mxu0 %v8513
        %8515 = vmatprep.subr.mxu0 0.0
        %v8516 = vand.u32 %v8124, 4294901760
        %8517 = vmatpush1.msra.mxu0 %v8516
        %8518 = vmatprep.subr.mxu0 0.0
        %v8519 = vand.u32 %v8125, 4294901760
        %8520 = vmatpush1.msra.mxu0 %v8519
        %8521 = vmatprep.subr.mxu0 0.0
        %v8522 = vand.u32 %v8126, 4294901760
        %8523 = vmatpush1.msra.mxu0 %v8522
        %8524 = vmatprep.subr.mxu0 0.0
        %v8525 = vand.u32 %v8127, 4294901760
        %8526 = vmatpush1.msra.mxu0 %v8525
        %8527 = vmatprep.subr.mxu0 0.0
        %v8528 = vand.u32 %v8128, 4294901760
        %8529 = vmatpush1.msra.mxu0 %v8528
        %8530 = vmatprep.subr.mxu0 0.0
        %v8531 = vand.u32 %v8129, 4294901760
        %8532 = vmatpush1.msra.mxu0 %v8531
        %8533 = vmatprep.subr.mxu0 0.0
        %v8534 = vand.u32 %v8130, 4294901760
        %8535 = vmatpush1.msra.mxu0 %v8534
        %8536 = vmatprep.subr.mxu0 0.0
        %v8537 = vand.u32 %v8131, 4294901760
        %8538 = vmatpush1.msra.mxu0 %v8537
        %8539 = vmatprep.subr.mxu0 0.0
        %v8540 = vand.u32 %v8132, 4294901760
        %8541 = vmatpush1.msra.mxu0 %v8540
        %8542 = vmatprep.subr.mxu0 0.0
        %v8543 = vand.u32 %v8133, 4294901760
        %8544 = vmatpush1.msra.mxu0 %v8543
        %8545 = vmatprep.subr.mxu0 0.0
        %v8546 = vand.u32 %v8134, 4294901760
        %8547 = vmatpush1.msra.mxu0 %v8546
        %8548 = vmatprep.subr.mxu0 0.0
        %v8549 = vand.u32 %v8135, 4294901760
        %8550 = vmatpush1.msra.mxu0 %v8549
        %8551 = vmatprep.subr.mxu0 0.0
        %v8552 = vand.u32 %v8136, 4294901760
        %8553 = vmatpush1.msra.mxu0 %v8552
        %8554 = vmatprep.subr.mxu0 0.0
        %8555 = vmatpush1.msra.mxu0 0.0
        %8556 = vmatprep.subr.mxu0 0.0
        %8557 = vmatpush1.msra.mxu0 0.0
        %8558 = vmatprep.subr.mxu0 0.0
        %8559 = vmatpush1.msra.mxu0 0.0
        %8560 = vmatprep.subr.mxu0 0.0
        %8561 = vmatpush1.msra.mxu0 0.0
        %8562 = vmatprep.subr.mxu0 0.0
        %8563 = vmatpush1.msra.mxu0 0.0
        %8564 = vmatprep.subr.mxu0 0.0
        %8565 = vmatpush1.msra.mxu0 0.0
        %8566 = vmatprep.subr.mxu0 0.0
        %8567 = vmatpush1.msra.mxu0 0.0
        %8568 = vmatprep.subr.mxu0 0.0
        %8569 = vmatpush1.msra.mxu0 0.0
        %8570 = vmatprep.subr.mxu0 0.0
        %8571 = vmatpush1.msra.mxu0 0.0
        %8572 = vmatprep.subr.mxu0 0.0
        %8573 = vmatpush1.msra.mxu0 0.0
        %8574 = vmatprep.subr.mxu0 0.0
        %8575 = vmatpush1.msra.mxu0 0.0
        %8576 = vmatprep.subr.mxu0 0.0
        %8577 = vmatpush1.msra.mxu0 0.0
        %8578 = vmatprep.subr.mxu0 0.0
        %8579 = vmatpush1.msra.mxu0 0.0
        %8580 = vmatprep.subr.mxu0 0.0
        %8581 = vmatpush1.msra.mxu0 0.0
        %8582 = vmatprep.subr.mxu0 0.0
        %8583 = vmatpush1.msra.mxu0 0.0
        %8584 = vmatprep.subr.mxu0 0.0
        %8585 = vmatpush1.msra.mxu0 0.0
        %8586 = vmatprep.mubr.f32.mxu0 0.0
        %v8587 = vand.u32 %v8118, 4294901760
        %v8588 = vsub.f32 %v8118, %v8587
        %v8589 = vand.u32 %v8588, 4294901760
        %8590 = vmatmul.mubr.f32.gmra.mrb[0].mxu0 %v8589
        %v8591 = vpop.f32.mrb[0].mxu0
        %v8592 = vadd.f32 %v8496, %v8591
        %v8593 = vpop.f32.mrb[0].mxu0
        %8594 = vmatprep.mubr.f32.mxu0 0.0
        %v8595 = vand.u32 %v8119, 4294901760
        %v8596 = vsub.f32 %v8119, %v8595
        %v8597 = vand.u32 %v8596, 4294901760
        %8598 = vmatmul.mubr.f32.gmra.mrb[0].mxu0 %v8597
        %v8599 = vpop.f32.mrb[0].mxu0
        %v8600 = vadd.f32 %v8503, %v8599
        %v8601 = vpop.f32.mrb[0].mxu0
        %8602 = vdwg.mxu0
        %8603 = vmatprep.subr.mxu0 0.0
        %v8604 = vand.u32 %v8121, 4294901760
        %v8605 = vsub.f32 %v8121, %v8604
        %v8606 = vand.u32 %v8605, 4294901760
        %8607 = vmatpush1.msra.mxu0 %v8606
        %8608 = vmatprep.subr.mxu0 0.0
        %v8609 = vand.u32 %v8122, 4294901760
        %v8610 = vsub.f32 %v8122, %v8609
        %v8611 = vand.u32 %v8610, 4294901760
        %8612 = vmatpush1.msra.mxu0 %v8611
        %8613 = vmatprep.subr.mxu0 0.0
        %v8614 = vand.u32 %v8123, 4294901760
        %v8615 = vsub.f32 %v8123, %v8614
        %v8616 = vand.u32 %v8615, 4294901760
        %8617 = vmatpush1.msra.mxu0 %v8616
        %8618 = vmatprep.subr.mxu0 0.0
        %v8619 = vand.u32 %v8124, 4294901760
        %v8620 = vsub.f32 %v8124, %v8619
        %v8621 = vand.u32 %v8620, 4294901760
        %8622 = vmatpush1.msra.mxu0 %v8621
        %8623 = vmatprep.subr.mxu0 0.0
        %v8624 = vand.u32 %v8125, 4294901760
        %v8625 = vsub.f32 %v8125, %v8624
        %v8626 = vand.u32 %v8625, 4294901760
        %8627 = vmatpush1.msra.mxu0 %v8626
        %8628 = vmatprep.subr.mxu0 0.0
        %v8629 = vand.u32 %v8126, 4294901760
        %v8630 = vsub.f32 %v8126, %v8629
        %v8631 = vand.u32 %v8630, 4294901760
        %8632 = vmatpush1.msra.mxu0 %v8631
        %8633 = vmatprep.subr.mxu0 0.0
        %v8634 = vand.u32 %v8127, 4294901760
        %v8635 = vsub.f32 %v8127, %v8634
        %v8636 = vand.u32 %v8635, 4294901760
        %8637 = vmatpush1.msra.mxu0 %v8636
        %8638 = vmatprep.subr.mxu0 0.0
        %v8639 = vand.u32 %v8128, 4294901760
        %v8640 = vsub.f32 %v8128, %v8639
        %v8641 = vand.u32 %v8640, 4294901760
        %8642 = vmatpush1.msra.mxu0 %v8641
        %8643 = vmatprep.subr.mxu0 0.0
        %v8644 = vand.u32 %v8129, 4294901760
        %v8645 = vsub.f32 %v8129, %v8644
        %v8646 = vand.u32 %v8645, 4294901760
        %8647 = vmatpush1.msra.mxu0 %v8646
        %8648 = vmatprep.subr.mxu0 0.0
        %v8649 = vand.u32 %v8130, 4294901760
        %v8650 = vsub.f32 %v8130, %v8649
        %v8651 = vand.u32 %v8650, 4294901760
        %8652 = vmatpush1.msra.mxu0 %v8651
        %8653 = vmatprep.subr.mxu0 0.0
        %v8654 = vand.u32 %v8131, 4294901760
        %v8655 = vsub.f32 %v8131, %v8654
        %v8656 = vand.u32 %v8655, 4294901760
        %8657 = vmatpush1.msra.mxu0 %v8656
        %8658 = vmatprep.subr.mxu0 0.0
        %v8659 = vand.u32 %v8132, 4294901760
        %v8660 = vsub.f32 %v8132, %v8659
        %v8661 = vand.u32 %v8660, 4294901760
        %8662 = vmatpush1.msra.mxu0 %v8661
        %8663 = vmatprep.subr.mxu0 0.0
        %v8664 = vand.u32 %v8133, 4294901760
        %v8665 = vsub.f32 %v8133, %v8664
        %v8666 = vand.u32 %v8665, 4294901760
        %8667 = vmatpush1.msra.mxu0 %v8666
        %8668 = vmatprep.subr.mxu0 0.0
        %v8669 = vand.u32 %v8134, 4294901760
        %v8670 = vsub.f32 %v8134, %v8669
        %v8671 = vand.u32 %v8670, 4294901760
        %8672 = vmatpush1.msra.mxu0 %v8671
        %8673 = vmatprep.subr.mxu0 0.0
        %v8674 = vand.u32 %v8135, 4294901760
        %v8675 = vsub.f32 %v8135, %v8674
        %v8676 = vand.u32 %v8675, 4294901760
        %8677 = vmatpush1.msra.mxu0 %v8676
        %8678 = vmatprep.subr.mxu0 0.0
        %v8679 = vand.u32 %v8136, 4294901760
        %v8680 = vsub.f32 %v8136, %v8679
        %v8681 = vand.u32 %v8680, 4294901760
        %8682 = vmatpush1.msra.mxu0 %v8681
        %8683 = vmatprep.subr.mxu0 0.0
        %8684 = vmatpush1.msra.mxu0 0.0
        %8685 = vmatprep.subr.mxu0 0.0
        %8686 = vmatpush1.msra.mxu0 0.0
        %8687 = vmatprep.subr.mxu0 0.0
        %8688 = vmatpush1.msra.mxu0 0.0
        %8689 = vmatprep.subr.mxu0 0.0
        %8690 = vmatpush1.msra.mxu0 0.0
        %8691 = vmatprep.subr.mxu0 0.0
        %8692 = vmatpush1.msra.mxu0 0.0
        %8693 = vmatprep.subr.mxu0 0.0
        %8694 = vmatpush1.msra.mxu0 0.0
        %8695 = vmatprep.subr.mxu0 0.0
        %8696 = vmatpush1.msra.mxu0 0.0
        %8697 = vmatprep.subr.mxu0 0.0
        %8698 = vmatpush1.msra.mxu0 0.0
        %8699 = vmatprep.subr.mxu0 0.0
        %8700 = vmatpush1.msra.mxu0 0.0
        %8701 = vmatprep.subr.mxu0 0.0
        %8702 = vmatpush1.msra.mxu0 0.0
        %8703 = vmatprep.subr.mxu0 0.0
        %8704 = vmatpush1.msra.mxu0 0.0
        %8705 = vmatprep.subr.mxu0 0.0
        %8706 = vmatpush1.msra.mxu0 0.0
        %8707 = vmatprep.subr.mxu0 0.0
        %8708 = vmatpush1.msra.mxu0 0.0
        %8709 = vmatprep.subr.mxu0 0.0
        %8710 = vmatpush1.msra.mxu0 0.0
        %8711 = vmatprep.subr.mxu0 0.0
        %8712 = vmatpush1.msra.mxu0 0.0
        %8713 = vmatprep.subr.mxu0 0.0
        %8714 = vmatpush1.msra.mxu0 0.0
        %8715 = vmatprep.mubr.f32.mxu0 0.0
        %v8716 = vand.u32 %v8118, 4294901760
        %8717 = vmatmul.mubr.f32.gmra.mrb[0].mxu0 %v8716
        %v8718 = vpop.f32.mrb[0].mxu0
        %v8719 = vadd.f32 %v8592, %v8718
        %v8720 = vpop.f32.mrb[0].mxu0
        %8721 = vmatprep.mubr.f32.mxu0 0.0
        %v8722 = vand.u32 %v8119, 4294901760
        %8723 = vmatmul.mubr.f32.gmra.mrb[0].mxu0 %v8722
        %v8724 = vpop.f32.mrb[0].mxu0
        %v8725 = vadd.f32 %v8600, %v8724
        %v8726 = vpop.f32.mrb[0].mxu0
        %8727 = vdwg.mxu0
        %8728 = vmatprep.subr.mxu0 0.0
        %v8729 = vand.u32 %v8121, 4294901760
        %8730 = vmatpush1.msra.mxu0 %v8729
        %8731 = vmatprep.subr.mxu0 0.0
        %v8732 = vand.u32 %v8122, 4294901760
        %8733 = vmatpush1.msra.mxu0 %v8732
        %8734 = vmatprep.subr.mxu0 0.0
        %v8735 = vand.u32 %v8123, 4294901760
        %8736 = vmatpush1.msra.mxu0 %v8735
        %8737 = vmatprep.subr.mxu0 0.0
        %v8738 = vand.u32 %v8124, 4294901760
        %8739 = vmatpush1.msra.mxu0 %v8738
        %8740 = vmatprep.subr.mxu0 0.0
        %v8741 = vand.u32 %v8125, 4294901760
        %8742 = vmatpush1.msra.mxu0 %v8741
        %8743 = vmatprep.subr.mxu0 0.0
        %v8744 = vand.u32 %v8126, 4294901760
        %8745 = vmatpush1.msra.mxu0 %v8744
        %8746 = vmatprep.subr.mxu0 0.0
        %v8747 = vand.u32 %v8127, 4294901760
        %8748 = vmatpush1.msra.mxu0 %v8747
        %8749 = vmatprep.subr.mxu0 0.0
        %v8750 = vand.u32 %v8128, 4294901760
        %8751 = vmatpush1.msra.mxu0 %v8750
        %8752 = vmatprep.subr.mxu0 0.0
        %v8753 = vand.u32 %v8129, 4294901760
        %8754 = vmatpush1.msra.mxu0 %v8753
        %8755 = vmatprep.subr.mxu0 0.0
        %v8756 = vand.u32 %v8130, 4294901760
        %8757 = vmatpush1.msra.mxu0 %v8756
        %8758 = vmatprep.subr.mxu0 0.0
        %v8759 = vand.u32 %v8131, 4294901760
        %8760 = vmatpush1.msra.mxu0 %v8759
        %8761 = vmatprep.subr.mxu0 0.0
        %v8762 = vand.u32 %v8132, 4294901760
        %8763 = vmatpush1.msra.mxu0 %v8762
        %8764 = vmatprep.subr.mxu0 0.0
        %v8765 = vand.u32 %v8133, 4294901760
        %8766 = vmatpush1.msra.mxu0 %v8765
        %8767 = vmatprep.subr.mxu0 0.0
        %v8768 = vand.u32 %v8134, 4294901760
        %8769 = vmatpush1.msra.mxu0 %v8768
        %8770 = vmatprep.subr.mxu0 0.0
        %v8771 = vand.u32 %v8135, 4294901760
        %8772 = vmatpush1.msra.mxu0 %v8771
        %8773 = vmatprep.subr.mxu0 0.0
        %v8774 = vand.u32 %v8136, 4294901760
        %8775 = vmatpush1.msra.mxu0 %v8774
        %8776 = vmatprep.subr.mxu0 0.0
        %8777 = vmatpush1.msra.mxu0 0.0
        %8778 = vmatprep.subr.mxu0 0.0
        %8779 = vmatpush1.msra.mxu0 0.0
        %8780 = vmatprep.subr.mxu0 0.0
        %8781 = vmatpush1.msra.mxu0 0.0
        %8782 = vmatprep.subr.mxu0 0.0
        %8783 = vmatpush1.msra.mxu0 0.0
        %8784 = vmatprep.subr.mxu0 0.0
        %8785 = vmatpush1.msra.mxu0 0.0
        %8786 = vmatprep.subr.mxu0 0.0
        %8787 = vmatpush1.msra.mxu0 0.0
        %8788 = vmatprep.subr.mxu0 0.0
        %8789 = vmatpush1.msra.mxu0 0.0
        %8790 = vmatprep.subr.mxu0 0.0
        %8791 = vmatpush1.msra.mxu0 0.0
        %8792 = vmatprep.subr.mxu0 0.0
        %8793 = vmatpush1.msra.mxu0 0.0
        %8794 = vmatprep.subr.mxu0 0.0
        %8795 = vmatpush1.msra.mxu0 0.0
        %8796 = vmatprep.subr.mxu0 0.0
        %8797 = vmatpush1.msra.mxu0 0.0
        %8798 = vmatprep.subr.mxu0 0.0
        %8799 = vmatpush1.msra.mxu0 0.0
        %8800 = vmatprep.subr.mxu0 0.0
        %8801 = vmatpush1.msra.mxu0 0.0
        %8802 = vmatprep.subr.mxu0 0.0
        %8803 = vmatpush1.msra.mxu0 0.0
        %8804 = vmatprep.subr.mxu0 0.0
        %8805 = vmatpush1.msra.mxu0 0.0
        %8806 = vmatprep.subr.mxu0 0.0
        %8807 = vmatpush1.msra.mxu0 0.0
        %8808 = vmatprep.mubr.f32.mxu0 0.0
        %v8809 = vand.u32 %v8118, 4294901760
        %8810 = vmatmul.mubr.f32.gmra.mrb[0].mxu0 %v8809
        %v8811 = vpop.f32.mrb[0].mxu0
        %v8812 = vadd.f32 %v8719, %v8811
        %v8813 = vpop.f32.mrb[0].mxu0
        %8814 = vmatprep.mubr.f32.mxu0 0.0
        %v8815 = vand.u32 %v8119, 4294901760
        %8816 = vmatmul.mubr.f32.gmra.mrb[0].mxu0 %v8815
        %v8817 = vpop.f32.mrb[0].mxu0
        %v8818 = vadd.f32 %v8725, %v8817
        %v8819 = vpop.f32.mrb[0].mxu0
        %8820 = vdwg.mxu0
        %v8821 = vadd.f32 %v7343, %v8812
        %v8822 = vadd.f32 %v7344, %v8818
        %v8825 = vcombine.high %v8118, %v8118
        %v8827 = vunpack.c.l.s4 1966171168
        %v8828 = vunpack.c.0.s8 %v8827
        %v8829 = vlaneseq
        %v8830 = vshrl.u32 %v8829, 7
        %v8831 = vsub.s32 %v8828, %v8830
        %v8832 = vrot.slane %v8118, %v8831
        %v8834 = vunpack.c.l.s4 1966171168
        %v8835 = vunpack.c.0.s8 %v8834
        %v8836 = vlaneseq
        %v8837 = vshrl.u32 %v8836, 7
        %v8838 = vsub.s32 %v8835, %v8837
        %v8839 = vrot.slane %v8825, %v8838
        %v8840 = vcombine.high %v8832, %v8832
        %v8841 = vcombine.high %v8839, %v8839
        %v8843 = vunpack.c.l.s4 1966171168
        %v8844 = vunpack.c.0.s8 %v8843
        %v8845 = vlaneseq
        %v8846 = vshrl.u32 %v8845, 7
        %v8847 = vsub.s32 %v8844, %v8846
        %v8848 = vrot.slane %v8832, %v8847
        %v8850 = vunpack.c.l.s4 1966171168
        %v8851 = vunpack.c.0.s8 %v8850
        %v8852 = vlaneseq
        %v8853 = vshrl.u32 %v8852, 7
        %v8854 = vsub.s32 %v8851, %v8853
        %v8855 = vrot.slane %v8839, %v8854
        %v8857 = vunpack.c.l.s4 1966171168
        %v8858 = vunpack.c.0.s8 %v8857
        %v8859 = vlaneseq
        %v8860 = vshrl.u32 %v8859, 7
        %v8861 = vsub.s32 %v8858, %v8860
        %v8862 = vrot.slane %v8840, %v8861
        %v8864 = vunpack.c.l.s4 1966171168
        %v8865 = vunpack.c.0.s8 %v8864
        %v8866 = vlaneseq
        %v8867 = vshrl.u32 %v8866, 7
        %v8868 = vsub.s32 %v8865, %v8867
        %v8869 = vrot.slane %v8841, %v8868
        %v8870 = vcombine.high %v8848, %v8848
        %v8871 = vcombine.high %v8855, %v8855
        %v8872 = vcombine.high %v8862, %v8862
        %v8873 = vcombine.high %v8869, %v8869
        %v8874 = vcombine.high %v8119, %v8119
        %v8876 = vunpack.c.l.s4 1966171168
        %v8877 = vunpack.c.0.s8 %v8876
        %v8878 = vlaneseq
        %v8879 = vshrl.u32 %v8878, 7
        %v8880 = vsub.s32 %v8877, %v8879
        %v8881 = vrot.slane %v8119, %v8880
        %v8883 = vunpack.c.l.s4 1966171168
        %v8884 = vunpack.c.0.s8 %v8883
        %v8885 = vlaneseq
        %v8886 = vshrl.u32 %v8885, 7
        %v8887 = vsub.s32 %v8884, %v8886
        %v8888 = vrot.slane %v8874, %v8887
        %v8889 = vcombine.high %v8881, %v8881
        %v8890 = vcombine.high %v8888, %v8888
        %v8892 = vunpack.c.l.s4 1966171168
        %v8893 = vunpack.c.0.s8 %v8892
        %v8894 = vlaneseq
        %v8895 = vshrl.u32 %v8894, 7
        %v8896 = vsub.s32 %v8893, %v8895
        %v8897 = vrot.slane %v8881, %v8896
        %v8899 = vunpack.c.l.s4 1966171168
        %v8900 = vunpack.c.0.s8 %v8899
        %v8901 = vlaneseq
        %v8902 = vshrl.u32 %v8901, 7
        %v8903 = vsub.s32 %v8900, %v8902
        %v8904 = vrot.slane %v8888, %v8903
        %v8906 = vunpack.c.l.s4 1966171168
        %v8907 = vunpack.c.0.s8 %v8906
        %v8908 = vlaneseq
        %v8909 = vshrl.u32 %v8908, 7
        %v8910 = vsub.s32 %v8907, %v8909
        %v8911 = vrot.slane %v8889, %v8910
        %v8913 = vunpack.c.l.s4 1966171168
        %v8914 = vunpack.c.0.s8 %v8913
        %v8915 = vlaneseq
        %v8916 = vshrl.u32 %v8915, 7
        %v8917 = vsub.s32 %v8914, %v8916
        %v8918 = vrot.slane %v8890, %v8917
        %v8919 = vcombine.high %v8897, %v8897
        %v8920 = vcombine.high %v8904, %v8904
        %v8921 = vcombine.high %v8911, %v8911
        %v8922 = vcombine.high %v8918, %v8918
        %s8923 = scalar_lea.vmem [#allocation3], 16
        %v8924 = vld [vmem:[%s8923] sm:$0xff]
        %v8925 = vld [vmem:[%s8923 + $0x20] sm:$0xff]
        %v8926 = vld [vmem:[%s8923 + $0x40] sm:$0xff]
        %v8927 = vld [vmem:[%s8923 + $0x60] sm:$0xff]
        %v8928 = vlaneseq
        %v8929 = vshrl.u32 %v8928, 7
        %v8930 = vsub.s32 0, %v8929
        %v8931 = vrot.slane %v8848, %v8930
        %v8932 = vlaneseq
        %v8933 = vshrl.u32 %v8932, 7
        %v8934 = vsub.s32 0, %v8933
        %v8935 = vrot.slane %v8862, %v8934
        %v8936 = vlaneseq
        %v8937 = vshrl.u32 %v8936, 7
        %v8938 = vsub.s32 0, %v8937
        %v8939 = vrot.slane %v8870, %v8938
        %v8940 = vlaneseq
        %v8941 = vshrl.u32 %v8940, 7
        %v8942 = vsub.s32 0, %v8941
        %v8943 = vrot.slane %v8872, %v8942
        %v8944 = vlaneseq
        %v8945 = vshrl.u32 %v8944, 7
        %v8946 = vsub.s32 0, %v8945
        %v8947 = vrot.slane %v8855, %v8946
        %v8948 = vlaneseq
        %v8949 = vshrl.u32 %v8948, 7
        %v8950 = vsub.s32 0, %v8949
        %v8951 = vrot.slane %v8869, %v8950
        %v8952 = vlaneseq
        %v8953 = vshrl.u32 %v8952, 7
        %v8954 = vsub.s32 0, %v8953
        %v8955 = vrot.slane %v8871, %v8954
        %v8956 = vlaneseq
        %v8957 = vshrl.u32 %v8956, 7
        %v8958 = vsub.s32 0, %v8957
        %v8959 = vrot.slane %v8873, %v8958
        %v8960 = vlaneseq
        %v8961 = vshrl.u32 %v8960, 7
        %v8962 = vsub.s32 0, %v8961
        %v8963 = vrot.slane %v8897, %v8962
        %v8964 = vlaneseq
        %v8965 = vshrl.u32 %v8964, 7
        %v8966 = vsub.s32 0, %v8965
        %v8967 = vrot.slane %v8911, %v8966
        %v8968 = vlaneseq
        %v8969 = vshrl.u32 %v8968, 7
        %v8970 = vsub.s32 0, %v8969
        %v8971 = vrot.slane %v8919, %v8970
        %v8972 = vlaneseq
        %v8973 = vshrl.u32 %v8972, 7
        %v8974 = vsub.s32 0, %v8973
        %v8975 = vrot.slane %v8921, %v8974
        %v8976 = vlaneseq
        %v8977 = vshrl.u32 %v8976, 7
        %v8978 = vsub.s32 0, %v8977
        %v8979 = vrot.slane %v8904, %v8978
        %v8980 = vlaneseq
        %v8981 = vshrl.u32 %v8980, 7
        %v8982 = vsub.s32 0, %v8981
        %v8983 = vrot.slane %v8918, %v8982
        %v8984 = vlaneseq
        %v8985 = vshrl.u32 %v8984, 7
        %v8986 = vsub.s32 0, %v8985
        %v8987 = vrot.slane %v8920, %v8986
        %v8988 = vlaneseq
        %v8989 = vshrl.u32 %v8988, 7
        %v8990 = vsub.s32 0, %v8989
        %v8991 = vrot.slane %v8922, %v8990
        %v9008 = vmul.f32 %v8931, %v8924
        %v9009 = vmul.f32 %v8931, %v8925
        %v9010 = vmul.f32 %v8931, %v8926
        %v9011 = vmul.f32 %v8931, %v8927
        %v9012 = vmul.f32 %v8935, %v8924
        %v9013 = vmul.f32 %v8935, %v8925
        %v9014 = vmul.f32 %v8935, %v8926
        %v9015 = vmul.f32 %v8935, %v8927
        %v9016 = vmul.f32 %v8939, %v8924
        %v9017 = vmul.f32 %v8939, %v8925
        %v9018 = vmul.f32 %v8939, %v8926
        %v9019 = vmul.f32 %v8939, %v8927
        %v9020 = vmul.f32 %v8943, %v8924
        %v9021 = vmul.f32 %v8943, %v8925
        %v9022 = vmul.f32 %v8943, %v8926
        %v9023 = vmul.f32 %v8943, %v8927
        %v9024 = vmul.f32 %v8947, %v8924
        %v9025 = vmul.f32 %v8947, %v8925
        %v9026 = vmul.f32 %v8947, %v8926
        %v9027 = vmul.f32 %v8947, %v8927
        %v9028 = vmul.f32 %v8951, %v8924
        %v9029 = vmul.f32 %v8951, %v8925
        %v9030 = vmul.f32 %v8951, %v8926
        %v9031 = vmul.f32 %v8951, %v8927
        %v9032 = vmul.f32 %v8955, %v8924
        %v9033 = vmul.f32 %v8955, %v8925
        %v9034 = vmul.f32 %v8955, %v8926
        %v9035 = vmul.f32 %v8955, %v8927
        %v9036 = vmul.f32 %v8959, %v8924
        %v9037 = vmul.f32 %v8959, %v8925
        %v9038 = vmul.f32 %v8959, %v8926
        %v9039 = vmul.f32 %v8959, %v8927
        %v9040 = vmul.f32 %v8963, %v8924
        %v9041 = vmul.f32 %v8963, %v8925
        %v9042 = vmul.f32 %v8963, %v8926
        %v9043 = vmul.f32 %v8963, %v8927
        %v9044 = vmul.f32 %v8967, %v8924
        %v9045 = vmul.f32 %v8967, %v8925
        %v9046 = vmul.f32 %v8967, %v8926
        %v9047 = vmul.f32 %v8967, %v8927
        %v9048 = vmul.f32 %v8971, %v8924
        %v9049 = vmul.f32 %v8971, %v8925
        %v9050 = vmul.f32 %v8971, %v8926
        %v9051 = vmul.f32 %v8971, %v8927
        %v9052 = vmul.f32 %v8975, %v8924
        %v9053 = vmul.f32 %v8975, %v8925
        %v9054 = vmul.f32 %v8975, %v8926
        %v9055 = vmul.f32 %v8975, %v8927
        %v9056 = vmul.f32 %v8979, %v8924
        %v9057 = vmul.f32 %v8979, %v8925
        %v9058 = vmul.f32 %v8979, %v8926
        %v9059 = vmul.f32 %v8979, %v8927
        %v9060 = vmul.f32 %v8983, %v8924
        %v9061 = vmul.f32 %v8983, %v8925
        %v9062 = vmul.f32 %v8983, %v8926
        %v9063 = vmul.f32 %v8983, %v8927
        %v9064 = vmul.f32 %v8987, %v8924
        %v9065 = vmul.f32 %v8987, %v8925
        %v9066 = vmul.f32 %v8987, %v8926
        %v9067 = vmul.f32 %v8987, %v8927
        %v9068 = vmul.f32 %v8991, %v8924
        %v9069 = vmul.f32 %v8991, %v8925
        %v9070 = vmul.f32 %v8991, %v8926
        %v9071 = vmul.f32 %v8991, %v8927
        %9072 = vmax.xlane.f32.xlu0 %v9008
        %v9073 = vpop.xlane.xlu0 %9072
        %9074 = vmax.xlane.f32.xlu0 %v9009
        %v9075 = vpop.xlane.xlu0 %9074
        %9076 = vmax.xlane.f32.xlu0 %v9010
        %v9077 = vpop.xlane.xlu0 %9076
        %9078 = vmax.xlane.f32.xlu0 %v9011
        %v9079 = vpop.xlane.xlu0 %9078
        %9080 = vmax.xlane.f32.xlu0 %v9012
        %v9081 = vpop.xlane.xlu0 %9080
        %9082 = vmax.xlane.f32.xlu0 %v9013
        %v9083 = vpop.xlane.xlu0 %9082
        %9084 = vmax.xlane.f32.xlu0 %v9014
        %v9085 = vpop.xlane.xlu0 %9084
        %9086 = vmax.xlane.f32.xlu0 %v9015
        %v9087 = vpop.xlane.xlu0 %9086
        %9088 = vmax.xlane.f32.xlu0 %v9016
        %v9089 = vpop.xlane.xlu0 %9088
        %9090 = vmax.xlane.f32.xlu0 %v9017
        %v9091 = vpop.xlane.xlu0 %9090
        %9092 = vmax.xlane.f32.xlu0 %v9018
        %v9093 = vpop.xlane.xlu0 %9092
        %9094 = vmax.xlane.f32.xlu0 %v9019
        %v9095 = vpop.xlane.xlu0 %9094
        %9096 = vmax.xlane.f32.xlu0 %v9020
        %v9097 = vpop.xlane.xlu0 %9096
        %9098 = vmax.xlane.f32.xlu0 %v9021
        %v9099 = vpop.xlane.xlu0 %9098
        %9100 = vmax.xlane.f32.xlu0 %v9022
        %v9101 = vpop.xlane.xlu0 %9100
        %9102 = vmax.xlane.f32.xlu0 %v9023
        %v9103 = vpop.xlane.xlu0 %9102
        %9104 = vmax.xlane.f32.xlu0 %v9024
        %v9105 = vpop.xlane.xlu0 %9104
        %9106 = vmax.xlane.f32.xlu0 %v9025
        %v9107 = vpop.xlane.xlu0 %9106
        %9108 = vmax.xlane.f32.xlu0 %v9026
        %v9109 = vpop.xlane.xlu0 %9108
        %9110 = vmax.xlane.f32.xlu0 %v9027
        %v9111 = vpop.xlane.xlu0 %9110
        %9112 = vmax.xlane.f32.xlu0 %v9028
        %v9113 = vpop.xlane.xlu0 %9112
        %9114 = vmax.xlane.f32.xlu0 %v9029
        %v9115 = vpop.xlane.xlu0 %9114
        %9116 = vmax.xlane.f32.xlu0 %v9030
        %v9117 = vpop.xlane.xlu0 %9116
        %9118 = vmax.xlane.f32.xlu0 %v9031
        %v9119 = vpop.xlane.xlu0 %9118
        %9120 = vmax.xlane.f32.xlu0 %v9032
        %v9121 = vpop.xlane.xlu0 %9120
        %9122 = vmax.xlane.f32.xlu0 %v9033
        %v9123 = vpop.xlane.xlu0 %9122
        %9124 = vmax.xlane.f32.xlu0 %v9034
        %v9125 = vpop.xlane.xlu0 %9124
        %9126 = vmax.xlane.f32.xlu0 %v9035
        %v9127 = vpop.xlane.xlu0 %9126
        %9128 = vmax.xlane.f32.xlu0 %v9036
        %v9129 = vpop.xlane.xlu0 %9128
        %9130 = vmax.xlane.f32.xlu0 %v9037
        %v9131 = vpop.xlane.xlu0 %9130
        %9132 = vmax.xlane.f32.xlu0 %v9038
        %v9133 = vpop.xlane.xlu0 %9132
        %9134 = vmax.xlane.f32.xlu0 %v9039
        %v9135 = vpop.xlane.xlu0 %9134
        %9136 = vmax.xlane.f32.xlu0 %v9040
        %v9137 = vpop.xlane.xlu0 %9136
        %9138 = vmax.xlane.f32.xlu0 %v9041
        %v9139 = vpop.xlane.xlu0 %9138
        %9140 = vmax.xlane.f32.xlu0 %v9042
        %v9141 = vpop.xlane.xlu0 %9140
        %9142 = vmax.xlane.f32.xlu0 %v9043
        %v9143 = vpop.xlane.xlu0 %9142
        %9144 = vmax.xlane.f32.xlu0 %v9044
        %v9145 = vpop.xlane.xlu0 %9144
        %9146 = vmax.xlane.f32.xlu0 %v9045
        %v9147 = vpop.xlane.xlu0 %9146
        %9148 = vmax.xlane.f32.xlu0 %v9046
        %v9149 = vpop.xlane.xlu0 %9148
        %9150 = vmax.xlane.f32.xlu0 %v9047
        %v9151 = vpop.xlane.xlu0 %9150
        %9152 = vmax.xlane.f32.xlu0 %v9048
        %v9153 = vpop.xlane.xlu0 %9152
        %9154 = vmax.xlane.f32.xlu0 %v9049
        %v9155 = vpop.xlane.xlu0 %9154
        %9156 = vmax.xlane.f32.xlu0 %v9050
        %v9157 = vpop.xlane.xlu0 %9156
        %9158 = vmax.xlane.f32.xlu0 %v9051
        %v9159 = vpop.xlane.xlu0 %9158
        %9160 = vmax.xlane.f32.xlu0 %v9052
        %v9161 = vpop.xlane.xlu0 %9160
        %9162 = vmax.xlane.f32.xlu0 %v9053
        %v9163 = vpop.xlane.xlu0 %9162
        %9164 = vmax.xlane.f32.xlu0 %v9054
        %v9165 = vpop.xlane.xlu0 %9164
        %9166 = vmax.xlane.f32.xlu0 %v9055
        %v9167 = vpop.xlane.xlu0 %9166
        %9168 = vmax.xlane.f32.xlu0 %v9056
        %v9169 = vpop.xlane.xlu0 %9168
        %9170 = vmax.xlane.f32.xlu0 %v9057
        %v9171 = vpop.xlane.xlu0 %9170
        %9172 = vmax.xlane.f32.xlu0 %v9058
        %v9173 = vpop.xlane.xlu0 %9172
        %9174 = vmax.xlane.f32.xlu0 %v9059
        %v9175 = vpop.xlane.xlu0 %9174
        %9176 = vmax.xlane.f32.xlu0 %v9060
        %v9177 = vpop.xlane.xlu0 %9176
        %9178 = vmax.xlane.f32.xlu0 %v9061
        %v9179 = vpop.xlane.xlu0 %9178
        %9180 = vmax.xlane.f32.xlu0 %v9062
        %v9181 = vpop.xlane.xlu0 %9180
        %9182 = vmax.xlane.f32.xlu0 %v9063
        %v9183 = vpop.xlane.xlu0 %9182
        %9184 = vmax.xlane.f32.xlu0 %v9064
        %v9185 = vpop.xlane.xlu0 %9184
        %9186 = vmax.xlane.f32.xlu0 %v9065
        %v9187 = vpop.xlane.xlu0 %9186
        %9188 = vmax.xlane.f32.xlu0 %v9066
        %v9189 = vpop.xlane.xlu0 %9188
        %9190 = vmax.xlane.f32.xlu0 %v9067
        %v9191 = vpop.xlane.xlu0 %9190
        %9192 = vmax.xlane.f32.xlu0 %v9068
        %v9193 = vpop.xlane.xlu0 %9192
        %9194 = vmax.xlane.f32.xlu0 %v9069
        %v9195 = vpop.xlane.xlu0 %9194
        %9196 = vmax.xlane.f32.xlu0 %v9070
        %v9197 = vpop.xlane.xlu0 %9196
        %9198 = vmax.xlane.f32.xlu0 %v9071
        %v9199 = vpop.xlane.xlu0 %9198
        %v9264 = vlaneseq
        %v9265 = vshrl.u32 %v9264, 7
        %v9266 = vsub.s32 %v6294, %v9265
        %v9267 = vrot.slane %v9073, %v9266
        %v9268 = vlaneseq
        %v9269 = vshrl.u32 %v9268, 7
        %v9270 = vsub.s32 %v6299, %v9269
        %v9271 = vrot.slane %v9075, %v9270
        %v9272 = vsel %vm6304, %v9271, %v9267
        %v9273 = vlaneseq
        %v9274 = vshrl.u32 %v9273, 7
        %v9275 = vsub.s32 %v6306, %v9274
        %v9276 = vrot.slane %v9077, %v9275
        %v9277 = vsel %vm6311, %v9276, %v9272
        %v9278 = vlaneseq
        %v9279 = vshrl.u32 %v9278, 7
        %v9280 = vsub.s32 %v6313, %v9279
        %v9281 = vrot.slane %v9079, %v9280
        %v9282 = vsel %vm6318, %v9281, %v9277
        %v9283 = vlaneseq
        %v9284 = vshrl.u32 %v9283, 7
        %v9285 = vsub.s32 %v6294, %v9284
        %v9286 = vrot.slane %v9081, %v9285
        %v9287 = vlaneseq
        %v9288 = vshrl.u32 %v9287, 7
        %v9289 = vsub.s32 %v6299, %v9288
        %v9290 = vrot.slane %v9083, %v9289
        %v9291 = vsel %vm6304, %v9290, %v9286
        %v9292 = vlaneseq
        %v9293 = vshrl.u32 %v9292, 7
        %v9294 = vsub.s32 %v6306, %v9293
        %v9295 = vrot.slane %v9085, %v9294
        %v9296 = vsel %vm6311, %v9295, %v9291
        %v9297 = vlaneseq
        %v9298 = vshrl.u32 %v9297, 7
        %v9299 = vsub.s32 %v6313, %v9298
        %v9300 = vrot.slane %v9087, %v9299
        %v9301 = vsel %vm6318, %v9300, %v9296
        %v9302 = vlaneseq
        %v9303 = vshrl.u32 %v9302, 7
        %v9304 = vsub.s32 %v6294, %v9303
        %v9305 = vrot.slane %v9089, %v9304
        %v9306 = vlaneseq
        %v9307 = vshrl.u32 %v9306, 7
        %v9308 = vsub.s32 %v6299, %v9307
        %v9309 = vrot.slane %v9091, %v9308
        %v9310 = vsel %vm6304, %v9309, %v9305
        %v9311 = vlaneseq
        %v9312 = vshrl.u32 %v9311, 7
        %v9313 = vsub.s32 %v6306, %v9312
        %v9314 = vrot.slane %v9093, %v9313
        %v9315 = vsel %vm6311, %v9314, %v9310
        %v9316 = vlaneseq
        %v9317 = vshrl.u32 %v9316, 7
        %v9318 = vsub.s32 %v6313, %v9317
        %v9319 = vrot.slane %v9095, %v9318
        %v9320 = vsel %vm6318, %v9319, %v9315
        %v9321 = vlaneseq
        %v9322 = vshrl.u32 %v9321, 7
        %v9323 = vsub.s32 %v6294, %v9322
        %v9324 = vrot.slane %v9097, %v9323
        %v9325 = vlaneseq
        %v9326 = vshrl.u32 %v9325, 7
        %v9327 = vsub.s32 %v6299, %v9326
        %v9328 = vrot.slane %v9099, %v9327
        %v9329 = vsel %vm6304, %v9328, %v9324
        %v9330 = vlaneseq
        %v9331 = vshrl.u32 %v9330, 7
        %v9332 = vsub.s32 %v6306, %v9331
        %v9333 = vrot.slane %v9101, %v9332
        %v9334 = vsel %vm6311, %v9333, %v9329
        %v9335 = vlaneseq
        %v9336 = vshrl.u32 %v9335, 7
        %v9337 = vsub.s32 %v6313, %v9336
        %v9338 = vrot.slane %v9103, %v9337
        %v9339 = vsel %vm6318, %v9338, %v9334
        %v9340 = vlaneseq
        %v9341 = vshrl.u32 %v9340, 7
        %v9342 = vsub.s32 %v6294, %v9341
        %v9343 = vrot.slane %v9105, %v9342
        %v9344 = vlaneseq
        %v9345 = vshrl.u32 %v9344, 7
        %v9346 = vsub.s32 %v6299, %v9345
        %v9347 = vrot.slane %v9107, %v9346
        %v9348 = vsel %vm6304, %v9347, %v9343
        %v9349 = vlaneseq
        %v9350 = vshrl.u32 %v9349, 7
        %v9351 = vsub.s32 %v6306, %v9350
        %v9352 = vrot.slane %v9109, %v9351
        %v9353 = vsel %vm6311, %v9352, %v9348
        %v9354 = vlaneseq
        %v9355 = vshrl.u32 %v9354, 7
        %v9356 = vsub.s32 %v6313, %v9355
        %v9357 = vrot.slane %v9111, %v9356
        %v9358 = vsel %vm6318, %v9357, %v9353
        %v9359 = vlaneseq
        %v9360 = vshrl.u32 %v9359, 7
        %v9361 = vsub.s32 %v6294, %v9360
        %v9362 = vrot.slane %v9113, %v9361
        %v9363 = vlaneseq
        %v9364 = vshrl.u32 %v9363, 7
        %v9365 = vsub.s32 %v6299, %v9364
        %v9366 = vrot.slane %v9115, %v9365
        %v9367 = vsel %vm6304, %v9366, %v9362
        %v9368 = vlaneseq
        %v9369 = vshrl.u32 %v9368, 7
        %v9370 = vsub.s32 %v6306, %v9369
        %v9371 = vrot.slane %v9117, %v9370
        %v9372 = vsel %vm6311, %v9371, %v9367
        %v9373 = vlaneseq
        %v9374 = vshrl.u32 %v9373, 7
        %v9375 = vsub.s32 %v6313, %v9374
        %v9376 = vrot.slane %v9119, %v9375
        %v9377 = vsel %vm6318, %v9376, %v9372
        %v9378 = vlaneseq
        %v9379 = vshrl.u32 %v9378, 7
        %v9380 = vsub.s32 %v6294, %v9379
        %v9381 = vrot.slane %v9121, %v9380
        %v9382 = vlaneseq
        %v9383 = vshrl.u32 %v9382, 7
        %v9384 = vsub.s32 %v6299, %v9383
        %v9385 = vrot.slane %v9123, %v9384
        %v9386 = vsel %vm6304, %v9385, %v9381
        %v9387 = vlaneseq
        %v9388 = vshrl.u32 %v9387, 7
        %v9389 = vsub.s32 %v6306, %v9388
        %v9390 = vrot.slane %v9125, %v9389
        %v9391 = vsel %vm6311, %v9390, %v9386
        %v9392 = vlaneseq
        %v9393 = vshrl.u32 %v9392, 7
        %v9394 = vsub.s32 %v6313, %v9393
        %v9395 = vrot.slane %v9127, %v9394
        %v9396 = vsel %vm6318, %v9395, %v9391
        %v9397 = vlaneseq
        %v9398 = vshrl.u32 %v9397, 7
        %v9399 = vsub.s32 %v6294, %v9398
        %v9400 = vrot.slane %v9129, %v9399
        %v9401 = vlaneseq
        %v9402 = vshrl.u32 %v9401, 7
        %v9403 = vsub.s32 %v6299, %v9402
        %v9404 = vrot.slane %v9131, %v9403
        %v9405 = vsel %vm6304, %v9404, %v9400
        %v9406 = vlaneseq
        %v9407 = vshrl.u32 %v9406, 7
        %v9408 = vsub.s32 %v6306, %v9407
        %v9409 = vrot.slane %v9133, %v9408
        %v9410 = vsel %vm6311, %v9409, %v9405
        %v9411 = vlaneseq
        %v9412 = vshrl.u32 %v9411, 7
        %v9413 = vsub.s32 %v6313, %v9412
        %v9414 = vrot.slane %v9135, %v9413
        %v9415 = vsel %vm6318, %v9414, %v9410
        %v9416 = vlaneseq
        %v9417 = vshrl.u32 %v9416, 7
        %v9418 = vsub.s32 %v6294, %v9417
        %v9419 = vrot.slane %v9137, %v9418
        %v9420 = vlaneseq
        %v9421 = vshrl.u32 %v9420, 7
        %v9422 = vsub.s32 %v6299, %v9421
        %v9423 = vrot.slane %v9139, %v9422
        %v9424 = vsel %vm6304, %v9423, %v9419
        %v9425 = vlaneseq
        %v9426 = vshrl.u32 %v9425, 7
        %v9427 = vsub.s32 %v6306, %v9426
        %v9428 = vrot.slane %v9141, %v9427
        %v9429 = vsel %vm6311, %v9428, %v9424
        %v9430 = vlaneseq
        %v9431 = vshrl.u32 %v9430, 7
        %v9432 = vsub.s32 %v6313, %v9431
        %v9433 = vrot.slane %v9143, %v9432
        %v9434 = vsel %vm6318, %v9433, %v9429
        %v9435 = vlaneseq
        %v9436 = vshrl.u32 %v9435, 7
        %v9437 = vsub.s32 %v6294, %v9436
        %v9438 = vrot.slane %v9145, %v9437
        %v9439 = vlaneseq
        %v9440 = vshrl.u32 %v9439, 7
        %v9441 = vsub.s32 %v6299, %v9440
        %v9442 = vrot.slane %v9147, %v9441
        %v9443 = vsel %vm6304, %v9442, %v9438
        %v9444 = vlaneseq
        %v9445 = vshrl.u32 %v9444, 7
        %v9446 = vsub.s32 %v6306, %v9445
        %v9447 = vrot.slane %v9149, %v9446
        %v9448 = vsel %vm6311, %v9447, %v9443
        %v9449 = vlaneseq
        %v9450 = vshrl.u32 %v9449, 7
        %v9451 = vsub.s32 %v6313, %v9450
        %v9452 = vrot.slane %v9151, %v9451
        %v9453 = vsel %vm6318, %v9452, %v9448
        %v9454 = vlaneseq
        %v9455 = vshrl.u32 %v9454, 7
        %v9456 = vsub.s32 %v6294, %v9455
        %v9457 = vrot.slane %v9153, %v9456
        %v9458 = vlaneseq
        %v9459 = vshrl.u32 %v9458, 7
        %v9460 = vsub.s32 %v6299, %v9459
        %v9461 = vrot.slane %v9155, %v9460
        %v9462 = vsel %vm6304, %v9461, %v9457
        %v9463 = vlaneseq
        %v9464 = vshrl.u32 %v9463, 7
        %v9465 = vsub.s32 %v6306, %v9464
        %v9466 = vrot.slane %v9157, %v9465
        %v9467 = vsel %vm6311, %v9466, %v9462
        %v9468 = vlaneseq
        %v9469 = vshrl.u32 %v9468, 7
        %v9470 = vsub.s32 %v6313, %v9469
        %v9471 = vrot.slane %v9159, %v9470
        %v9472 = vsel %vm6318, %v9471, %v9467
        %v9473 = vlaneseq
        %v9474 = vshrl.u32 %v9473, 7
        %v9475 = vsub.s32 %v6294, %v9474
        %v9476 = vrot.slane %v9161, %v9475
        %v9477 = vlaneseq
        %v9478 = vshrl.u32 %v9477, 7
        %v9479 = vsub.s32 %v6299, %v9478
        %v9480 = vrot.slane %v9163, %v9479
        %v9481 = vsel %vm6304, %v9480, %v9476
        %v9482 = vlaneseq
        %v9483 = vshrl.u32 %v9482, 7
        %v9484 = vsub.s32 %v6306, %v9483
        %v9485 = vrot.slane %v9165, %v9484
        %v9486 = vsel %vm6311, %v9485, %v9481
        %v9487 = vlaneseq
        %v9488 = vshrl.u32 %v9487, 7
        %v9489 = vsub.s32 %v6313, %v9488
        %v9490 = vrot.slane %v9167, %v9489
        %v9491 = vsel %vm6318, %v9490, %v9486
        %v9492 = vlaneseq
        %v9493 = vshrl.u32 %v9492, 7
        %v9494 = vsub.s32 %v6294, %v9493
        %v9495 = vrot.slane %v9169, %v9494
        %v9496 = vlaneseq
        %v9497 = vshrl.u32 %v9496, 7
        %v9498 = vsub.s32 %v6299, %v9497
        %v9499 = vrot.slane %v9171, %v9498
        %v9500 = vsel %vm6304, %v9499, %v9495
        %v9501 = vlaneseq
        %v9502 = vshrl.u32 %v9501, 7
        %v9503 = vsub.s32 %v6306, %v9502
        %v9504 = vrot.slane %v9173, %v9503
        %v9505 = vsel %vm6311, %v9504, %v9500
        %v9506 = vlaneseq
        %v9507 = vshrl.u32 %v9506, 7
        %v9508 = vsub.s32 %v6313, %v9507
        %v9509 = vrot.slane %v9175, %v9508
        %v9510 = vsel %vm6318, %v9509, %v9505
        %v9511 = vlaneseq
        %v9512 = vshrl.u32 %v9511, 7
        %v9513 = vsub.s32 %v6294, %v9512
        %v9514 = vrot.slane %v9177, %v9513
        %v9515 = vlaneseq
        %v9516 = vshrl.u32 %v9515, 7
        %v9517 = vsub.s32 %v6299, %v9516
        %v9518 = vrot.slane %v9179, %v9517
        %v9519 = vsel %vm6304, %v9518, %v9514
        %v9520 = vlaneseq
        %v9521 = vshrl.u32 %v9520, 7
        %v9522 = vsub.s32 %v6306, %v9521
        %v9523 = vrot.slane %v9181, %v9522
        %v9524 = vsel %vm6311, %v9523, %v9519
        %v9525 = vlaneseq
        %v9526 = vshrl.u32 %v9525, 7
        %v9527 = vsub.s32 %v6313, %v9526
        %v9528 = vrot.slane %v9183, %v9527
        %v9529 = vsel %vm6318, %v9528, %v9524
        %v9530 = vlaneseq
        %v9531 = vshrl.u32 %v9530, 7
        %v9532 = vsub.s32 %v6294, %v9531
        %v9533 = vrot.slane %v9185, %v9532
        %v9534 = vlaneseq
        %v9535 = vshrl.u32 %v9534, 7
        %v9536 = vsub.s32 %v6299, %v9535
        %v9537 = vrot.slane %v9187, %v9536
        %v9538 = vsel %vm6304, %v9537, %v9533
        %v9539 = vlaneseq
        %v9540 = vshrl.u32 %v9539, 7
        %v9541 = vsub.s32 %v6306, %v9540
        %v9542 = vrot.slane %v9189, %v9541
        %v9543 = vsel %vm6311, %v9542, %v9538
        %v9544 = vlaneseq
        %v9545 = vshrl.u32 %v9544, 7
        %v9546 = vsub.s32 %v6313, %v9545
        %v9547 = vrot.slane %v9191, %v9546
        %v9548 = vsel %vm6318, %v9547, %v9543
        %v9549 = vlaneseq
        %v9550 = vshrl.u32 %v9549, 7
        %v9551 = vsub.s32 %v6294, %v9550
        %v9552 = vrot.slane %v9193, %v9551
        %v9553 = vlaneseq
        %v9554 = vshrl.u32 %v9553, 7
        %v9555 = vsub.s32 %v6299, %v9554
        %v9556 = vrot.slane %v9195, %v9555
        %v9557 = vsel %vm6304, %v9556, %v9552
        %v9558 = vlaneseq
        %v9559 = vshrl.u32 %v9558, 7
        %v9560 = vsub.s32 %v6306, %v9559
        %v9561 = vrot.slane %v9197, %v9560
        %v9562 = vsel %vm6311, %v9561, %v9557
        %v9563 = vlaneseq
        %v9564 = vshrl.u32 %v9563, 7
        %v9565 = vsub.s32 %v6313, %v9564
        %v9566 = vrot.slane %v9199, %v9565
        %v9567 = vsel %vm6318, %v9566, %v9562
        %v9568 = vsel %vm6605, %v9301, %v9282
        %v9569 = vsel %vm6607, %v9320, %v9568
        %v9570 = vsel %vm6609, %v9339, %v9569
        %v9571 = vsel %vm6611, %v9358, %v9570
        %v9572 = vsel %vm6613, %v9377, %v9571
        %v9573 = vsel %vm6615, %v9396, %v9572
        %v9574 = vsel %vm6617, %v9415, %v9573
        %v9575 = vsel %vm6605, %v9453, %v9434
        %v9576 = vsel %vm6607, %v9472, %v9575
        %v9577 = vsel %vm6609, %v9491, %v9576
        %v9578 = vsel %vm6611, %v9510, %v9577
        %v9579 = vsel %vm6613, %v9529, %v9578
        %v9580 = vsel %vm6615, %v9548, %v9579
        %v9581 = vsel %vm6617, %v9567, %v9580
        %v9584 = vmax.f32 %v8106, %v9574
        %v9585 = vmax.f32 %v8107, %v9581
        %s9586 = scalar_lea.vmem %s335, 3
        %v9587 = vld [vmem:[%s9586] sm:$0x1]
        %v9588 = vlaneseq
        %v9589 = vshrl.u32 %v9588, 7
        %v9590 = vsub.s32 0, %v9589
        %v9591 = vrot.slane %v9587, %v9590
        %vm9592 = vcmp.eq.s32.totalorder %v5134, %v9591
        %vm9593 = vcmp.eq.s32.totalorder %v5135, %v9591
        %v9594 = vsel %vm9592, 1, 0
        %v9595 = vsel %vm9593, 1, 0
        %v9596 = vcvt.s32.f32 %v9594
        %v9597 = vcvt.s32.f32 %v9595
        %s9598 = scalar_lea.vmem [#allocation2], 384
        %v9599 = vld [vmem:[%s9598] sm:$0xff]
        %v9600 = vld [vmem:[%s9598 + $0x8] sm:$0xff]
        %v9601 = vld [vmem:[%s9598 + $0x10] sm:$0xff]
        %v9602 = vld [vmem:[%s9598 + $0x18] sm:$0xff]
        %v9603 = vld [vmem:[%s9598 + $0x20] sm:$0xff]
        %v9604 = vld [vmem:[%s9598 + $0x28] sm:$0xff]
        %v9605 = vld [vmem:[%s9598 + $0x30] sm:$0xff]
        %v9606 = vld [vmem:[%s9598 + $0x38] sm:$0xff]
        %v9607 = vld [vmem:[%s9598 + $0x40] sm:$0xff]
        %v9608 = vld [vmem:[%s9598 + $0x48] sm:$0xff]
        %v9609 = vld [vmem:[%s9598 + $0x50] sm:$0xff]
        %v9610 = vld [vmem:[%s9598 + $0x58] sm:$0xff]
        %v9611 = vld [vmem:[%s9598 + $0x60] sm:$0xff]
        %v9612 = vld [vmem:[%s9598 + $0x68] sm:$0xff]
        %v9613 = vld [vmem:[%s9598 + $0x70] sm:$0xff]
        %v9614 = vld [vmem:[%s9598 + $0x78] sm:$0xff]
        %9615 = vmatprep.subr.mxu0 0.0
        %v9616 = vand.u32 %v9599, 4294901760
        %9617 = vmatpush1.msra.mxu0 %v9616
        %9618 = vmatprep.subr.mxu0 0.0
        %v9619 = vand.u32 %v9600, 4294901760
        %9620 = vmatpush1.msra.mxu0 %v9619
        %9621 = vmatprep.subr.mxu0 0.0
        %v9622 = vand.u32 %v9601, 4294901760
        %9623 = vmatpush1.msra.mxu0 %v9622
        %9624 = vmatprep.subr.mxu0 0.0
        %v9625 = vand.u32 %v9602, 4294901760
        %9626 = vmatpush1.msra.mxu0 %v9625
        %9627 = vmatprep.subr.mxu0 0.0
        %v9628 = vand.u32 %v9603, 4294901760
        %9629 = vmatpush1.msra.mxu0 %v9628
        %9630 = vmatprep.subr.mxu0 0.0
        %v9631 = vand.u32 %v9604, 4294901760
        %9632 = vmatpush1.msra.mxu0 %v9631
        %9633 = vmatprep.subr.mxu0 0.0
        %v9634 = vand.u32 %v9605, 4294901760
        %9635 = vmatpush1.msra.mxu0 %v9634
        %9636 = vmatprep.subr.mxu0 0.0
        %v9637 = vand.u32 %v9606, 4294901760
        %9638 = vmatpush1.msra.mxu0 %v9637
        %9639 = vmatprep.subr.mxu0 0.0
        %v9640 = vand.u32 %v9607, 4294901760
        %9641 = vmatpush1.msra.mxu0 %v9640
        %9642 = vmatprep.subr.mxu0 0.0
        %v9643 = vand.u32 %v9608, 4294901760
        %9644 = vmatpush1.msra.mxu0 %v9643
        %9645 = vmatprep.subr.mxu0 0.0
        %v9646 = vand.u32 %v9609, 4294901760
        %9647 = vmatpush1.msra.mxu0 %v9646
        %9648 = vmatprep.subr.mxu0 0.0
        %v9649 = vand.u32 %v9610, 4294901760
        %9650 = vmatpush1.msra.mxu0 %v9649
        %9651 = vmatprep.subr.mxu0 0.0
        %v9652 = vand.u32 %v9611, 4294901760
        %9653 = vmatpush1.msra.mxu0 %v9652
        %9654 = vmatprep.subr.mxu0 0.0
        %v9655 = vand.u32 %v9612, 4294901760
        %9656 = vmatpush1.msra.mxu0 %v9655
        %9657 = vmatprep.subr.mxu0 0.0
        %v9658 = vand.u32 %v9613, 4294901760
        %9659 = vmatpush1.msra.mxu0 %v9658
        %9660 = vmatprep.subr.mxu0 0.0
        %v9661 = vand.u32 %v9614, 4294901760
        %9662 = vmatpush1.msra.mxu0 %v9661
        %9663 = vmatprep.subr.mxu0 0.0
        %9664 = vmatpush1.msra.mxu0 0.0
        %9665 = vmatprep.subr.mxu0 0.0
        %9666 = vmatpush1.msra.mxu0 0.0
        %9667 = vmatprep.subr.mxu0 0.0
        %9668 = vmatpush1.msra.mxu0 0.0
        %9669 = vmatprep.subr.mxu0 0.0
        %9670 = vmatpush1.msra.mxu0 0.0
        %9671 = vmatprep.subr.mxu0 0.0
        %9672 = vmatpush1.msra.mxu0 0.0
        %9673 = vmatprep.subr.mxu0 0.0
        %9674 = vmatpush1.msra.mxu0 0.0
        %9675 = vmatprep.subr.mxu0 0.0
        %9676 = vmatpush1.msra.mxu0 0.0
        %9677 = vmatprep.subr.mxu0 0.0
        %9678 = vmatpush1.msra.mxu0 0.0
        %9679 = vmatprep.subr.mxu0 0.0
        %9680 = vmatpush1.msra.mxu0 0.0
        %9681 = vmatprep.subr.mxu0 0.0
        %9682 = vmatpush1.msra.mxu0 0.0
        %9683 = vmatprep.subr.mxu0 0.0
        %9684 = vmatpush1.msra.mxu0 0.0
        %9685 = vmatprep.subr.mxu0 0.0
        %9686 = vmatpush1.msra.mxu0 0.0
        %9687 = vmatprep.subr.mxu0 0.0
        %9688 = vmatpush1.msra.mxu0 0.0
        %9689 = vmatprep.subr.mxu0 0.0
        %9690 = vmatpush1.msra.mxu0 0.0
        %9691 = vmatprep.subr.mxu0 0.0
        %9692 = vmatpush1.msra.mxu0 0.0
        %9693 = vmatprep.subr.mxu0 0.0
        %9694 = vmatpush1.msra.mxu0 0.0
        %9695 = vmatprep.mubr.f32.mxu0 0.0
        %v9696 = vand.u32 %v9596, 4294901760
        %v9697 = vsub.f32 %v9596, %v9696
        %v9698 = vand.u32 %v9697, 4294901760
        %v9699 = vsub.f32 %v9697, %v9698
        %v9700 = vand.u32 %v9699, 4294901760
        %9701 = vmatmul.mubr.f32.gmra.mrb[0].mxu0 %v9700
        %v9702 = vpop.f32.mrb[0].mxu0
        %v9703 = vadd.f32 0.0, %v9702
        %v9704 = vpop.f32.mrb[0].mxu0
        %9705 = vmatprep.mubr.f32.mxu0 0.0
        %v9706 = vand.u32 %v9597, 4294901760
        %v9707 = vsub.f32 %v9597, %v9706
        %v9708 = vand.u32 %v9707, 4294901760
        %v9709 = vsub.f32 %v9707, %v9708
        %v9710 = vand.u32 %v9709, 4294901760
        %9711 = vmatmul.mubr.f32.gmra.mrb[0].mxu0 %v9710
        %v9712 = vpop.f32.mrb[0].mxu0
        %v9713 = vadd.f32 0.0, %v9712
        %v9714 = vpop.f32.mrb[0].mxu0
        %9715 = vdwg.mxu0
        %9716 = vmatprep.subr.mxu0 0.0
        %v9717 = vand.u32 %v9599, 4294901760
        %v9718 = vsub.f32 %v9599, %v9717
        %v9719 = vand.u32 %v9718, 4294901760
        %v9720 = vsub.f32 %v9718, %v9719
        %v9721 = vand.u32 %v9720, 4294901760
        %9722 = vmatpush1.msra.mxu0 %v9721
        %9723 = vmatprep.subr.mxu0 0.0
        %v9724 = vand.u32 %v9600, 4294901760
        %v9725 = vsub.f32 %v9600, %v9724
        %v9726 = vand.u32 %v9725, 4294901760
        %v9727 = vsub.f32 %v9725, %v9726
        %v9728 = vand.u32 %v9727, 4294901760
        %9729 = vmatpush1.msra.mxu0 %v9728
        %9730 = vmatprep.subr.mxu0 0.0
        %v9731 = vand.u32 %v9601, 4294901760
        %v9732 = vsub.f32 %v9601, %v9731
        %v9733 = vand.u32 %v9732, 4294901760
        %v9734 = vsub.f32 %v9732, %v9733
        %v9735 = vand.u32 %v9734, 4294901760
        %9736 = vmatpush1.msra.mxu0 %v9735
        %9737 = vmatprep.subr.mxu0 0.0
        %v9738 = vand.u32 %v9602, 4294901760
        %v9739 = vsub.f32 %v9602, %v9738
        %v9740 = vand.u32 %v9739, 4294901760
        %v9741 = vsub.f32 %v9739, %v9740
        %v9742 = vand.u32 %v9741, 4294901760
        %9743 = vmatpush1.msra.mxu0 %v9742
        %9744 = vmatprep.subr.mxu0 0.0
        %v9745 = vand.u32 %v9603, 4294901760
        %v9746 = vsub.f32 %v9603, %v9745
        %v9747 = vand.u32 %v9746, 4294901760
        %v9748 = vsub.f32 %v9746, %v9747
        %v9749 = vand.u32 %v9748, 4294901760
        %9750 = vmatpush1.msra.mxu0 %v9749
        %9751 = vmatprep.subr.mxu0 0.0
        %v9752 = vand.u32 %v9604, 4294901760
        %v9753 = vsub.f32 %v9604, %v9752
        %v9754 = vand.u32 %v9753, 4294901760
        %v9755 = vsub.f32 %v9753, %v9754
        %v9756 = vand.u32 %v9755, 4294901760
        %9757 = vmatpush1.msra.mxu0 %v9756
        %9758 = vmatprep.subr.mxu0 0.0
        %v9759 = vand.u32 %v9605, 4294901760
        %v9760 = vsub.f32 %v9605, %v9759
        %v9761 = vand.u32 %v9760, 4294901760
        %v9762 = vsub.f32 %v9760, %v9761
        %v9763 = vand.u32 %v9762, 4294901760
        %9764 = vmatpush1.msra.mxu0 %v9763
        %9765 = vmatprep.subr.mxu0 0.0
        %v9766 = vand.u32 %v9606, 4294901760
        %v9767 = vsub.f32 %v9606, %v9766
        %v9768 = vand.u32 %v9767, 4294901760
        %v9769 = vsub.f32 %v9767, %v9768
        %v9770 = vand.u32 %v9769, 4294901760
        %9771 = vmatpush1.msra.mxu0 %v9770
        %9772 = vmatprep.subr.mxu0 0.0
        %v9773 = vand.u32 %v9607, 4294901760
        %v9774 = vsub.f32 %v9607, %v9773
        %v9775 = vand.u32 %v9774, 4294901760
        %v9776 = vsub.f32 %v9774, %v9775
        %v9777 = vand.u32 %v9776, 4294901760
        %9778 = vmatpush1.msra.mxu0 %v9777
        %9779 = vmatprep.subr.mxu0 0.0
        %v9780 = vand.u32 %v9608, 4294901760
        %v9781 = vsub.f32 %v9608, %v9780
        %v9782 = vand.u32 %v9781, 4294901760
        %v9783 = vsub.f32 %v9781, %v9782
        %v9784 = vand.u32 %v9783, 4294901760
        %9785 = vmatpush1.msra.mxu0 %v9784
        %9786 = vmatprep.subr.mxu0 0.0
        %v9787 = vand.u32 %v9609, 4294901760
        %v9788 = vsub.f32 %v9609, %v9787
        %v9789 = vand.u32 %v9788, 4294901760
        %v9790 = vsub.f32 %v9788, %v9789
        %v9791 = vand.u32 %v9790, 4294901760
        %9792 = vmatpush1.msra.mxu0 %v9791
        %9793 = vmatprep.subr.mxu0 0.0
        %v9794 = vand.u32 %v9610, 4294901760
        %v9795 = vsub.f32 %v9610, %v9794
        %v9796 = vand.u32 %v9795, 4294901760
        %v9797 = vsub.f32 %v9795, %v9796
        %v9798 = vand.u32 %v9797, 4294901760
        %9799 = vmatpush1.msra.mxu0 %v9798
        %9800 = vmatprep.subr.mxu0 0.0
        %v9801 = vand.u32 %v9611, 4294901760
        %v9802 = vsub.f32 %v9611, %v9801
        %v9803 = vand.u32 %v9802, 4294901760
        %v9804 = vsub.f32 %v9802, %v9803
        %v9805 = vand.u32 %v9804, 4294901760
        %9806 = vmatpush1.msra.mxu0 %v9805
        %9807 = vmatprep.subr.mxu0 0.0
        %v9808 = vand.u32 %v9612, 4294901760
        %v9809 = vsub.f32 %v9612, %v9808
        %v9810 = vand.u32 %v9809, 4294901760
        %v9811 = vsub.f32 %v9809, %v9810
        %v9812 = vand.u32 %v9811, 4294901760
        %9813 = vmatpush1.msra.mxu0 %v9812
        %9814 = vmatprep.subr.mxu0 0.0
        %v9815 = vand.u32 %v9613, 4294901760
        %v9816 = vsub.f32 %v9613, %v9815
        %v9817 = vand.u32 %v9816, 4294901760
        %v9818 = vsub.f32 %v9816, %v9817
        %v9819 = vand.u32 %v9818, 4294901760
        %9820 = vmatpush1.msra.mxu0 %v9819
        %9821 = vmatprep.subr.mxu0 0.0
        %v9822 = vand.u32 %v9614, 4294901760
        %v9823 = vsub.f32 %v9614, %v9822
        %v9824 = vand.u32 %v9823, 4294901760
        %v9825 = vsub.f32 %v9823, %v9824
        %v9826 = vand.u32 %v9825, 4294901760
        %9827 = vmatpush1.msra.mxu0 %v9826
        %9828 = vmatprep.subr.mxu0 0.0
        %9829 = vmatpush1.msra.mxu0 0.0
        %9830 = vmatprep.subr.mxu0 0.0
        %9831 = vmatpush1.msra.mxu0 0.0
        %9832 = vmatprep.subr.mxu0 0.0
        %9833 = vmatpush1.msra.mxu0 0.0
        %9834 = vmatprep.subr.mxu0 0.0
        %9835 = vmatpush1.msra.mxu0 0.0
        %9836 = vmatprep.subr.mxu0 0.0
        %9837 = vmatpush1.msra.mxu0 0.0
        %9838 = vmatprep.subr.mxu0 0.0
        %9839 = vmatpush1.msra.mxu0 0.0
        %9840 = vmatprep.subr.mxu0 0.0
        %9841 = vmatpush1.msra.mxu0 0.0
        %9842 = vmatprep.subr.mxu0 0.0
        %9843 = vmatpush1.msra.mxu0 0.0
        %9844 = vmatprep.subr.mxu0 0.0
        %9845 = vmatpush1.msra.mxu0 0.0
        %9846 = vmatprep.subr.mxu0 0.0
        %9847 = vmatpush1.msra.mxu0 0.0
        %9848 = vmatprep.subr.mxu0 0.0
        %9849 = vmatpush1.msra.mxu0 0.0
        %9850 = vmatprep.subr.mxu0 0.0
        %9851 = vmatpush1.msra.mxu0 0.0
        %9852 = vmatprep.subr.mxu0 0.0
        %9853 = vmatpush1.msra.mxu0 0.0
        %9854 = vmatprep.subr.mxu0 0.0
        %9855 = vmatpush1.msra.mxu0 0.0
        %9856 = vmatprep.subr.mxu0 0.0
        %9857 = vmatpush1.msra.mxu0 0.0
        %9858 = vmatprep.subr.mxu0 0.0
        %9859 = vmatpush1.msra.mxu0 0.0
        %9860 = vmatprep.mubr.f32.mxu0 0.0
        %v9861 = vand.u32 %v9596, 4294901760
        %9862 = vmatmul.mubr.f32.gmra.mrb[0].mxu0 %v9861
        %v9863 = vpop.f32.mrb[0].mxu0
        %v9864 = vadd.f32 %v9703, %v9863
        %v9865 = vpop.f32.mrb[0].mxu0
        %9866 = vmatprep.mubr.f32.mxu0 0.0
        %v9867 = vand.u32 %v9597, 4294901760
        %9868 = vmatmul.mubr.f32.gmra.mrb[0].mxu0 %v9867
        %v9869 = vpop.f32.mrb[0].mxu0
        %v9870 = vadd.f32 %v9713, %v9869
        %v9871 = vpop.f32.mrb[0].mxu0
        %9872 = vdwg.mxu0
        %9873 = vmatprep.subr.mxu0 0.0
        %v9874 = vand.u32 %v9599, 4294901760
        %v9875 = vsub.f32 %v9599, %v9874
        %9876 = vmatpush1.msra.mxu0 %v9875
        %9877 = vmatprep.subr.mxu0 0.0
        %v9878 = vand.u32 %v9600, 4294901760
        %v9879 = vsub.f32 %v9600, %v9878
        %9880 = vmatpush1.msra.mxu0 %v9879
        %9881 = vmatprep.subr.mxu0 0.0
        %v9882 = vand.u32 %v9601, 4294901760
        %v9883 = vsub.f32 %v9601, %v9882
        %9884 = vmatpush1.msra.mxu0 %v9883
        %9885 = vmatprep.subr.mxu0 0.0
        %v9886 = vand.u32 %v9602, 4294901760
        %v9887 = vsub.f32 %v9602, %v9886
        %9888 = vmatpush1.msra.mxu0 %v9887
        %9889 = vmatprep.subr.mxu0 0.0
        %v9890 = vand.u32 %v9603, 4294901760
        %v9891 = vsub.f32 %v9603, %v9890
        %9892 = vmatpush1.msra.mxu0 %v9891
        %9893 = vmatprep.subr.mxu0 0.0
        %v9894 = vand.u32 %v9604, 4294901760
        %v9895 = vsub.f32 %v9604, %v9894
        %9896 = vmatpush1.msra.mxu0 %v9895
        %9897 = vmatprep.subr.mxu0 0.0
        %v9898 = vand.u32 %v9605, 4294901760
        %v9899 = vsub.f32 %v9605, %v9898
        %9900 = vmatpush1.msra.mxu0 %v9899
        %9901 = vmatprep.subr.mxu0 0.0
        %v9902 = vand.u32 %v9606, 4294901760
        %v9903 = vsub.f32 %v9606, %v9902
        %9904 = vmatpush1.msra.mxu0 %v9903
        %9905 = vmatprep.subr.mxu0 0.0
        %v9906 = vand.u32 %v9607, 4294901760
        %v9907 = vsub.f32 %v9607, %v9906
        %9908 = vmatpush1.msra.mxu0 %v9907
        %9909 = vmatprep.subr.mxu0 0.0
        %v9910 = vand.u32 %v9608, 4294901760
        %v9911 = vsub.f32 %v9608, %v9910
        %9912 = vmatpush1.msra.mxu0 %v9911
        %9913 = vmatprep.subr.mxu0 0.0
        %v9914 = vand.u32 %v9609, 4294901760
        %v9915 = vsub.f32 %v9609, %v9914
        %9916 = vmatpush1.msra.mxu0 %v9915
        %9917 = vmatprep.subr.mxu0 0.0
        %v9918 = vand.u32 %v9610, 4294901760
        %v9919 = vsub.f32 %v9610, %v9918
        %9920 = vmatpush1.msra.mxu0 %v9919
        %9921 = vmatprep.subr.mxu0 0.0
        %v9922 = vand.u32 %v9611, 4294901760
        %v9923 = vsub.f32 %v9611, %v9922
        %9924 = vmatpush1.msra.mxu0 %v9923
        %9925 = vmatprep.subr.mxu0 0.0
        %v9926 = vand.u32 %v9612, 4294901760
        %v9927 = vsub.f32 %v9612, %v9926
        %9928 = vmatpush1.msra.mxu0 %v9927
        %9929 = vmatprep.subr.mxu0 0.0
        %v9930 = vand.u32 %v9613, 4294901760
        %v9931 = vsub.f32 %v9613, %v9930
        %9932 = vmatpush1.msra.mxu0 %v9931
        %9933 = vmatprep.subr.mxu0 0.0
        %v9934 = vand.u32 %v9614, 4294901760
        %v9935 = vsub.f32 %v9614, %v9934
        %9936 = vmatpush1.msra.mxu0 %v9935
        %9937 = vmatprep.subr.mxu0 0.0
        %9938 = vmatpush1.msra.mxu0 0.0
        %9939 = vmatprep.subr.mxu0 0.0
        %9940 = vmatpush1.msra.mxu0 0.0
        %9941 = vmatprep.subr.mxu0 0.0
        %9942 = vmatpush1.msra.mxu0 0.0
        %9943 = vmatprep.subr.mxu0 0.0
        %9944 = vmatpush1.msra.mxu0 0.0
        %9945 = vmatprep.subr.mxu0 0.0
        %9946 = vmatpush1.msra.mxu0 0.0
        %9947 = vmatprep.subr.mxu0 0.0
        %9948 = vmatpush1.msra.mxu0 0.0
        %9949 = vmatprep.subr.mxu0 0.0
        %9950 = vmatpush1.msra.mxu0 0.0
        %9951 = vmatprep.subr.mxu0 0.0
        %9952 = vmatpush1.msra.mxu0 0.0
        %9953 = vmatprep.subr.mxu0 0.0
        %9954 = vmatpush1.msra.mxu0 0.0
        %9955 = vmatprep.subr.mxu0 0.0
        %9956 = vmatpush1.msra.mxu0 0.0
        %9957 = vmatprep.subr.mxu0 0.0
        %9958 = vmatpush1.msra.mxu0 0.0
        %9959 = vmatprep.subr.mxu0 0.0
        %9960 = vmatpush1.msra.mxu0 0.0
        %9961 = vmatprep.subr.mxu0 0.0
        %9962 = vmatpush1.msra.mxu0 0.0
        %9963 = vmatprep.subr.mxu0 0.0
        %9964 = vmatpush1.msra.mxu0 0.0
        %9965 = vmatprep.subr.mxu0 0.0
        %9966 = vmatpush1.msra.mxu0 0.0
        %9967 = vmatprep.subr.mxu0 0.0
        %9968 = vmatpush1.msra.mxu0 0.0
        %9969 = vmatprep.mubr.f32.mxu0 0.0
        %v9970 = vand.u32 %v9596, 4294901760
        %v9971 = vsub.f32 %v9596, %v9970
        %9972 = vmatmul.mubr.f32.gmra.mrb[0].mxu0 %v9971
        %v9973 = vpop.f32.mrb[0].mxu0
        %v9974 = vadd.f32 %v9864, %v9973
        %v9975 = vpop.f32.mrb[0].mxu0
        %9976 = vmatprep.mubr.f32.mxu0 0.0
        %v9977 = vand.u32 %v9597, 4294901760
        %v9978 = vsub.f32 %v9597, %v9977
        %9979 = vmatmul.mubr.f32.gmra.mrb[0].mxu0 %v9978
        %v9980 = vpop.f32.mrb[0].mxu0
        %v9981 = vadd.f32 %v9870, %v9980
        %v9982 = vpop.f32.mrb[0].mxu0
        %9983 = vdwg.mxu0
        %9984 = vmatprep.subr.mxu0 0.0
        %v9985 = vand.u32 %v9599, 4294901760
        %9986 = vmatpush1.msra.mxu0 %v9985
        %9987 = vmatprep.subr.mxu0 0.0
        %v9988 = vand.u32 %v9600, 4294901760
        %9989 = vmatpush1.msra.mxu0 %v9988
        %9990 = vmatprep.subr.mxu0 0.0
        %v9991 = vand.u32 %v9601, 4294901760
        %9992 = vmatpush1.msra.mxu0 %v9991
        %9993 = vmatprep.subr.mxu0 0.0
        %v9994 = vand.u32 %v9602, 4294901760
        %9995 = vmatpush1.msra.mxu0 %v9994
        %9996 = vmatprep.subr.mxu0 0.0
        %v9997 = vand.u32 %v9603, 4294901760
        %9998 = vmatpush1.msra.mxu0 %v9997
        %9999 = vmatprep.subr.mxu0 0.0
        %v10000 = vand.u32 %v9604, 4294901760
        %10001 = vmatpush1.msra.mxu0 %v10000
        %10002 = vmatprep.subr.mxu0 0.0
        %v10003 = vand.u32 %v9605, 4294901760
        %10004 = vmatpush1.msra.mxu0 %v10003
        %10005 = vmatprep.subr.mxu0 0.0
        %v10006 = vand.u32 %v9606, 4294901760
        %10007 = vmatpush1.msra.mxu0 %v10006
        %10008 = vmatprep.subr.mxu0 0.0
        %v10009 = vand.u32 %v9607, 4294901760
        %10010 = vmatpush1.msra.mxu0 %v10009
        %10011 = vmatprep.subr.mxu0 0.0
        %v10012 = vand.u32 %v9608, 4294901760
        %10013 = vmatpush1.msra.mxu0 %v10012
        %10014 = vmatprep.subr.mxu0 0.0
        %v10015 = vand.u32 %v9609, 4294901760
        %10016 = vmatpush1.msra.mxu0 %v10015
        %10017 = vmatprep.subr.mxu0 0.0
        %v10018 = vand.u32 %v9610, 4294901760
        %10019 = vmatpush1.msra.mxu0 %v10018
        %10020 = vmatprep.subr.mxu0 0.0
        %v10021 = vand.u32 %v9611, 4294901760
        %10022 = vmatpush1.msra.mxu0 %v10021
        %10023 = vmatprep.subr.mxu0 0.0
        %v10024 = vand.u32 %v9612, 4294901760
        %10025 = vmatpush1.msra.mxu0 %v10024
        %10026 = vmatprep.subr.mxu0 0.0
        %v10027 = vand.u32 %v9613, 4294901760
        %10028 = vmatpush1.msra.mxu0 %v10027
        %10029 = vmatprep.subr.mxu0 0.0
        %v10030 = vand.u32 %v9614, 4294901760
        %10031 = vmatpush1.msra.mxu0 %v10030
        %10032 = vmatprep.subr.mxu0 0.0
        %10033 = vmatpush1.msra.mxu0 0.0
        %10034 = vmatprep.subr.mxu0 0.0
        %10035 = vmatpush1.msra.mxu0 0.0
        %10036 = vmatprep.subr.mxu0 0.0
        %10037 = vmatpush1.msra.mxu0 0.0
        %10038 = vmatprep.subr.mxu0 0.0
        %10039 = vmatpush1.msra.mxu0 0.0
        %10040 = vmatprep.subr.mxu0 0.0
        %10041 = vmatpush1.msra.mxu0 0.0
        %10042 = vmatprep.subr.mxu0 0.0
        %10043 = vmatpush1.msra.mxu0 0.0
        %10044 = vmatprep.subr.mxu0 0.0
        %10045 = vmatpush1.msra.mxu0 0.0
        %10046 = vmatprep.subr.mxu0 0.0
        %10047 = vmatpush1.msra.mxu0 0.0
        %10048 = vmatprep.subr.mxu0 0.0
        %10049 = vmatpush1.msra.mxu0 0.0
        %10050 = vmatprep.subr.mxu0 0.0
        %10051 = vmatpush1.msra.mxu0 0.0
        %10052 = vmatprep.subr.mxu0 0.0
        %10053 = vmatpush1.msra.mxu0 0.0
        %10054 = vmatprep.subr.mxu0 0.0
        %10055 = vmatpush1.msra.mxu0 0.0
        %10056 = vmatprep.subr.mxu0 0.0
        %10057 = vmatpush1.msra.mxu0 0.0
        %10058 = vmatprep.subr.mxu0 0.0
        %10059 = vmatpush1.msra.mxu0 0.0
        %10060 = vmatprep.subr.mxu0 0.0
        %10061 = vmatpush1.msra.mxu0 0.0
        %10062 = vmatprep.subr.mxu0 0.0
        %10063 = vmatpush1.msra.mxu0 0.0
        %10064 = vmatprep.mubr.f32.mxu0 0.0
        %v10065 = vand.u32 %v9596, 4294901760
        %v10066 = vsub.f32 %v9596, %v10065
        %v10067 = vand.u32 %v10066, 4294901760
        %10068 = vmatmul.mubr.f32.gmra.mrb[0].mxu0 %v10067
        %v10069 = vpop.f32.mrb[0].mxu0
        %v10070 = vadd.f32 %v9974, %v10069
        %v10071 = vpop.f32.mrb[0].mxu0
        %10072 = vmatprep.mubr.f32.mxu0 0.0
        %v10073 = vand.u32 %v9597, 4294901760
        %v10074 = vsub.f32 %v9597, %v10073
        %v10075 = vand.u32 %v10074, 4294901760
        %10076 = vmatmul.mubr.f32.gmra.mrb[0].mxu0 %v10075
        %v10077 = vpop.f32.mrb[0].mxu0
        %v10078 = vadd.f32 %v9981, %v10077
        %v10079 = vpop.f32.mrb[0].mxu0
        %10080 = vdwg.mxu0
        %10081 = vmatprep.subr.mxu0 0.0
        %v10082 = vand.u32 %v9599, 4294901760
        %v10083 = vsub.f32 %v9599, %v10082
        %v10084 = vand.u32 %v10083, 4294901760
        %10085 = vmatpush1.msra.mxu0 %v10084
        %10086 = vmatprep.subr.mxu0 0.0
        %v10087 = vand.u32 %v9600, 4294901760
        %v10088 = vsub.f32 %v9600, %v10087
        %v10089 = vand.u32 %v10088, 4294901760
        %10090 = vmatpush1.msra.mxu0 %v10089
        %10091 = vmatprep.subr.mxu0 0.0
        %v10092 = vand.u32 %v9601, 4294901760
        %v10093 = vsub.f32 %v9601, %v10092
        %v10094 = vand.u32 %v10093, 4294901760
        %10095 = vmatpush1.msra.mxu0 %v10094
        %10096 = vmatprep.subr.mxu0 0.0
        %v10097 = vand.u32 %v9602, 4294901760
        %v10098 = vsub.f32 %v9602, %v10097
        %v10099 = vand.u32 %v10098, 4294901760
        %10100 = vmatpush1.msra.mxu0 %v10099
        %10101 = vmatprep.subr.mxu0 0.0
        %v10102 = vand.u32 %v9603, 4294901760
        %v10103 = vsub.f32 %v9603, %v10102
        %v10104 = vand.u32 %v10103, 4294901760
        %10105 = vmatpush1.msra.mxu0 %v10104
        %10106 = vmatprep.subr.mxu0 0.0
        %v10107 = vand.u32 %v9604, 4294901760
        %v10108 = vsub.f32 %v9604, %v10107
        %v10109 = vand.u32 %v10108, 4294901760
        %10110 = vmatpush1.msra.mxu0 %v10109
        %10111 = vmatprep.subr.mxu0 0.0
        %v10112 = vand.u32 %v9605, 4294901760
        %v10113 = vsub.f32 %v9605, %v10112
        %v10114 = vand.u32 %v10113, 4294901760
        %10115 = vmatpush1.msra.mxu0 %v10114
        %10116 = vmatprep.subr.mxu0 0.0
        %v10117 = vand.u32 %v9606, 4294901760
        %v10118 = vsub.f32 %v9606, %v10117
        %v10119 = vand.u32 %v10118, 4294901760
        %10120 = vmatpush1.msra.mxu0 %v10119
        %10121 = vmatprep.subr.mxu0 0.0
        %v10122 = vand.u32 %v9607, 4294901760
        %v10123 = vsub.f32 %v9607, %v10122
        %v10124 = vand.u32 %v10123, 4294901760
        %10125 = vmatpush1.msra.mxu0 %v10124
        %10126 = vmatprep.subr.mxu0 0.0
        %v10127 = vand.u32 %v9608, 4294901760
        %v10128 = vsub.f32 %v9608, %v10127
        %v10129 = vand.u32 %v10128, 4294901760
        %10130 = vmatpush1.msra.mxu0 %v10129
        %10131 = vmatprep.subr.mxu0 0.0
        %v10132 = vand.u32 %v9609, 4294901760
        %v10133 = vsub.f32 %v9609, %v10132
        %v10134 = vand.u32 %v10133, 4294901760
        %10135 = vmatpush1.msra.mxu0 %v10134
        %10136 = vmatprep.subr.mxu0 0.0
        %v10137 = vand.u32 %v9610, 4294901760
        %v10138 = vsub.f32 %v9610, %v10137
        %v10139 = vand.u32 %v10138, 4294901760
        %10140 = vmatpush1.msra.mxu0 %v10139
        %10141 = vmatprep.subr.mxu0 0.0
        %v10142 = vand.u32 %v9611, 4294901760
        %v10143 = vsub.f32 %v9611, %v10142
        %v10144 = vand.u32 %v10143, 4294901760
        %10145 = vmatpush1.msra.mxu0 %v10144
        %10146 = vmatprep.subr.mxu0 0.0
        %v10147 = vand.u32 %v9612, 4294901760
        %v10148 = vsub.f32 %v9612, %v10147
        %v10149 = vand.u32 %v10148, 4294901760
        %10150 = vmatpush1.msra.mxu0 %v10149
        %10151 = vmatprep.subr.mxu0 0.0
        %v10152 = vand.u32 %v9613, 4294901760
        %v10153 = vsub.f32 %v9613, %v10152
        %v10154 = vand.u32 %v10153, 4294901760
        %10155 = vmatpush1.msra.mxu0 %v10154
        %10156 = vmatprep.subr.mxu0 0.0
        %v10157 = vand.u32 %v9614, 4294901760
        %v10158 = vsub.f32 %v9614, %v10157
        %v10159 = vand.u32 %v10158, 4294901760
        %10160 = vmatpush1.msra.mxu0 %v10159
        %10161 = vmatprep.subr.mxu0 0.0
        %10162 = vmatpush1.msra.mxu0 0.0
        %10163 = vmatprep.subr.mxu0 0.0
        %10164 = vmatpush1.msra.mxu0 0.0
        %10165 = vmatprep.subr.mxu0 0.0
        %10166 = vmatpush1.msra.mxu0 0.0
        %10167 = vmatprep.subr.mxu0 0.0
        %10168 = vmatpush1.msra.mxu0 0.0
        %10169 = vmatprep.subr.mxu0 0.0
        %10170 = vmatpush1.msra.mxu0 0.0
        %10171 = vmatprep.subr.mxu0 0.0
        %10172 = vmatpush1.msra.mxu0 0.0
        %10173 = vmatprep.subr.mxu0 0.0
        %10174 = vmatpush1.msra.mxu0 0.0
        %10175 = vmatprep.subr.mxu0 0.0
        %10176 = vmatpush1.msra.mxu0 0.0
        %10177 = vmatprep.subr.mxu0 0.0
        %10178 = vmatpush1.msra.mxu0 0.0
        %10179 = vmatprep.subr.mxu0 0.0
        %10180 = vmatpush1.msra.mxu0 0.0
        %10181 = vmatprep.subr.mxu0 0.0
        %10182 = vmatpush1.msra.mxu0 0.0
        %10183 = vmatprep.subr.mxu0 0.0
        %10184 = vmatpush1.msra.mxu0 0.0
        %10185 = vmatprep.subr.mxu0 0.0
        %10186 = vmatpush1.msra.mxu0 0.0
        %10187 = vmatprep.subr.mxu0 0.0
        %10188 = vmatpush1.msra.mxu0 0.0
        %10189 = vmatprep.subr.mxu0 0.0
        %10190 = vmatpush1.msra.mxu0 0.0
        %10191 = vmatprep.subr.mxu0 0.0
        %10192 = vmatpush1.msra.mxu0 0.0
        %10193 = vmatprep.mubr.f32.mxu0 0.0
        %v10194 = vand.u32 %v9596, 4294901760
        %10195 = vmatmul.mubr.f32.gmra.mrb[0].mxu0 %v10194
        %v10196 = vpop.f32.mrb[0].mxu0
        %v10197 = vadd.f32 %v10070, %v10196
        %v10198 = vpop.f32.mrb[0].mxu0
        %10199 = vmatprep.mubr.f32.mxu0 0.0
        %v10200 = vand.u32 %v9597, 4294901760
        %10201 = vmatmul.mubr.f32.gmra.mrb[0].mxu0 %v10200
        %v10202 = vpop.f32.mrb[0].mxu0
        %v10203 = vadd.f32 %v10078, %v10202
        %v10204 = vpop.f32.mrb[0].mxu0
        %10205 = vdwg.mxu0
        %10206 = vmatprep.subr.mxu0 0.0
        %v10207 = vand.u32 %v9599, 4294901760
        %10208 = vmatpush1.msra.mxu0 %v10207
        %10209 = vmatprep.subr.mxu0 0.0
        %v10210 = vand.u32 %v9600, 4294901760
        %10211 = vmatpush1.msra.mxu0 %v10210
        %10212 = vmatprep.subr.mxu0 0.0
        %v10213 = vand.u32 %v9601, 4294901760
        %10214 = vmatpush1.msra.mxu0 %v10213
        %10215 = vmatprep.subr.mxu0 0.0
        %v10216 = vand.u32 %v9602, 4294901760
        %10217 = vmatpush1.msra.mxu0 %v10216
        %10218 = vmatprep.subr.mxu0 0.0
        %v10219 = vand.u32 %v9603, 4294901760
        %10220 = vmatpush1.msra.mxu0 %v10219
        %10221 = vmatprep.subr.mxu0 0.0
        %v10222 = vand.u32 %v9604, 4294901760
        %10223 = vmatpush1.msra.mxu0 %v10222
        %10224 = vmatprep.subr.mxu0 0.0
        %v10225 = vand.u32 %v9605, 4294901760
        %10226 = vmatpush1.msra.mxu0 %v10225
        %10227 = vmatprep.subr.mxu0 0.0
        %v10228 = vand.u32 %v9606, 4294901760
        %10229 = vmatpush1.msra.mxu0 %v10228
        %10230 = vmatprep.subr.mxu0 0.0
        %v10231 = vand.u32 %v9607, 4294901760
        %10232 = vmatpush1.msra.mxu0 %v10231
        %10233 = vmatprep.subr.mxu0 0.0
        %v10234 = vand.u32 %v9608, 4294901760
        %10235 = vmatpush1.msra.mxu0 %v10234
        %10236 = vmatprep.subr.mxu0 0.0
        %v10237 = vand.u32 %v9609, 4294901760
        %10238 = vmatpush1.msra.mxu0 %v10237
        %10239 = vmatprep.subr.mxu0 0.0
        %v10240 = vand.u32 %v9610, 4294901760
        %10241 = vmatpush1.msra.mxu0 %v10240
        %10242 = vmatprep.subr.mxu0 0.0
        %v10243 = vand.u32 %v9611, 4294901760
        %10244 = vmatpush1.msra.mxu0 %v10243
        %10245 = vmatprep.subr.mxu0 0.0
        %v10246 = vand.u32 %v9612, 4294901760
        %10247 = vmatpush1.msra.mxu0 %v10246
        %10248 = vmatprep.subr.mxu0 0.0
        %v10249 = vand.u32 %v9613, 4294901760
        %10250 = vmatpush1.msra.mxu0 %v10249
        %10251 = vmatprep.subr.mxu0 0.0
        %v10252 = vand.u32 %v9614, 4294901760
        %10253 = vmatpush1.msra.mxu0 %v10252
        %10254 = vmatprep.subr.mxu0 0.0
        %10255 = vmatpush1.msra.mxu0 0.0
        %10256 = vmatprep.subr.mxu0 0.0
        %10257 = vmatpush1.msra.mxu0 0.0
        %10258 = vmatprep.subr.mxu0 0.0
        %10259 = vmatpush1.msra.mxu0 0.0
        %10260 = vmatprep.subr.mxu0 0.0
        %10261 = vmatpush1.msra.mxu0 0.0
        %10262 = vmatprep.subr.mxu0 0.0
        %10263 = vmatpush1.msra.mxu0 0.0
        %10264 = vmatprep.subr.mxu0 0.0
        %10265 = vmatpush1.msra.mxu0 0.0
        %10266 = vmatprep.subr.mxu0 0.0
        %10267 = vmatpush1.msra.mxu0 0.0
        %10268 = vmatprep.subr.mxu0 0.0
        %10269 = vmatpush1.msra.mxu0 0.0
        %10270 = vmatprep.subr.mxu0 0.0
        %10271 = vmatpush1.msra.mxu0 0.0
        %10272 = vmatprep.subr.mxu0 0.0
        %10273 = vmatpush1.msra.mxu0 0.0
        %10274 = vmatprep.subr.mxu0 0.0
        %10275 = vmatpush1.msra.mxu0 0.0
        %10276 = vmatprep.subr.mxu0 0.0
        %10277 = vmatpush1.msra.mxu0 0.0
        %10278 = vmatprep.subr.mxu0 0.0
        %10279 = vmatpush1.msra.mxu0 0.0
        %10280 = vmatprep.subr.mxu0 0.0
        %10281 = vmatpush1.msra.mxu0 0.0
        %10282 = vmatprep.subr.mxu0 0.0
        %10283 = vmatpush1.msra.mxu0 0.0
        %10284 = vmatprep.subr.mxu0 0.0
        %10285 = vmatpush1.msra.mxu0 0.0
        %10286 = vmatprep.mubr.f32.mxu0 0.0
        %v10287 = vand.u32 %v9596, 4294901760
        %10288 = vmatmul.mubr.f32.gmra.mrb[0].mxu0 %v10287
        %v10289 = vpop.f32.mrb[0].mxu0
        %v10290 = vadd.f32 %v10197, %v10289
        %v10291 = vpop.f32.mrb[0].mxu0
        %10292 = vmatprep.mubr.f32.mxu0 0.0
        %v10293 = vand.u32 %v9597, 4294901760
        %10294 = vmatmul.mubr.f32.gmra.mrb[0].mxu0 %v10293
        %v10295 = vpop.f32.mrb[0].mxu0
        %v10296 = vadd.f32 %v10203, %v10295
        %v10297 = vpop.f32.mrb[0].mxu0
        %10298 = vdwg.mxu0
        %v10299 = vadd.f32 %v8821, %v10290
        %v10300 = vadd.f32 %v8822, %v10296
        %v10303 = vcombine.high %v9596, %v9596
        %v10305 = vunpack.c.l.s4 1966171168
        %v10306 = vunpack.c.0.s8 %v10305
        %v10307 = vlaneseq
        %v10308 = vshrl.u32 %v10307, 7
        %v10309 = vsub.s32 %v10306, %v10308
        %v10310 = vrot.slane %v9596, %v10309
        %v10312 = vunpack.c.l.s4 1966171168
        %v10313 = vunpack.c.0.s8 %v10312
        %v10314 = vlaneseq
        %v10315 = vshrl.u32 %v10314, 7
        %v10316 = vsub.s32 %v10313, %v10315
        %v10317 = vrot.slane %v10303, %v10316
        %v10318 = vcombine.high %v10310, %v10310
        %v10319 = vcombine.high %v10317, %v10317
        %v10321 = vunpack.c.l.s4 1966171168
        %v10322 = vunpack.c.0.s8 %v10321
        %v10323 = vlaneseq
        %v10324 = vshrl.u32 %v10323, 7
        %v10325 = vsub.s32 %v10322, %v10324
        %v10326 = vrot.slane %v10310, %v10325
        %v10328 = vunpack.c.l.s4 1966171168
        %v10329 = vunpack.c.0.s8 %v10328
        %v10330 = vlaneseq
        %v10331 = vshrl.u32 %v10330, 7
        %v10332 = vsub.s32 %v10329, %v10331
        %v10333 = vrot.slane %v10317, %v10332
        %v10335 = vunpack.c.l.s4 1966171168
        %v10336 = vunpack.c.0.s8 %v10335
        %v10337 = vlaneseq
        %v10338 = vshrl.u32 %v10337, 7
        %v10339 = vsub.s32 %v10336, %v10338
        %v10340 = vrot.slane %v10318, %v10339
        %v10342 = vunpack.c.l.s4 1966171168
        %v10343 = vunpack.c.0.s8 %v10342
        %v10344 = vlaneseq
        %v10345 = vshrl.u32 %v10344, 7
        %v10346 = vsub.s32 %v10343, %v10345
        %v10347 = vrot.slane %v10319, %v10346
        %v10348 = vcombine.high %v10326, %v10326
        %v10349 = vcombine.high %v10333, %v10333
        %v10350 = vcombine.high %v10340, %v10340
        %v10351 = vcombine.high %v10347, %v10347
        %v10352 = vcombine.high %v9597, %v9597
        %v10354 = vunpack.c.l.s4 1966171168
        %v10355 = vunpack.c.0.s8 %v10354
        %v10356 = vlaneseq
        %v10357 = vshrl.u32 %v10356, 7
        %v10358 = vsub.s32 %v10355, %v10357
        %v10359 = vrot.slane %v9597, %v10358
        %v10361 = vunpack.c.l.s4 1966171168
        %v10362 = vunpack.c.0.s8 %v10361
        %v10363 = vlaneseq
        %v10364 = vshrl.u32 %v10363, 7
        %v10365 = vsub.s32 %v10362, %v10364
        %v10366 = vrot.slane %v10352, %v10365
        %v10367 = vcombine.high %v10359, %v10359
        %v10368 = vcombine.high %v10366, %v10366
        %v10370 = vunpack.c.l.s4 1966171168
        %v10371 = vunpack.c.0.s8 %v10370
        %v10372 = vlaneseq
        %v10373 = vshrl.u32 %v10372, 7
        %v10374 = vsub.s32 %v10371, %v10373
        %v10375 = vrot.slane %v10359, %v10374
        %v10377 = vunpack.c.l.s4 1966171168
        %v10378 = vunpack.c.0.s8 %v10377
        %v10379 = vlaneseq
        %v10380 = vshrl.u32 %v10379, 7
        %v10381 = vsub.s32 %v10378, %v10380
        %v10382 = vrot.slane %v10366, %v10381
        %v10384 = vunpack.c.l.s4 1966171168
        %v10385 = vunpack.c.0.s8 %v10384
        %v10386 = vlaneseq
        %v10387 = vshrl.u32 %v10386, 7
        %v10388 = vsub.s32 %v10385, %v10387
        %v10389 = vrot.slane %v10367, %v10388
        %v10391 = vunpack.c.l.s4 1966171168
        %v10392 = vunpack.c.0.s8 %v10391
        %v10393 = vlaneseq
        %v10394 = vshrl.u32 %v10393, 7
        %v10395 = vsub.s32 %v10392, %v10394
        %v10396 = vrot.slane %v10368, %v10395
        %v10397 = vcombine.high %v10375, %v10375
        %v10398 = vcombine.high %v10382, %v10382
        %v10399 = vcombine.high %v10389, %v10389
        %v10400 = vcombine.high %v10396, %v10396
        %s10401 = scalar_lea.vmem [#allocation3], 24
        %v10402 = vld [vmem:[%s10401] sm:$0xff]
        %v10403 = vld [vmem:[%s10401 + $0x20] sm:$0xff]
        %v10404 = vld [vmem:[%s10401 + $0x40] sm:$0xff]
        %v10405 = vld [vmem:[%s10401 + $0x60] sm:$0xff]
        %v10406 = vlaneseq
        %v10407 = vshrl.u32 %v10406, 7
        %v10408 = vsub.s32 0, %v10407
        %v10409 = vrot.slane %v10326, %v10408
        %v10410 = vlaneseq
        %v10411 = vshrl.u32 %v10410, 7
        %v10412 = vsub.s32 0, %v10411
        %v10413 = vrot.slane %v10340, %v10412
        %v10414 = vlaneseq
        %v10415 = vshrl.u32 %v10414, 7
        %v10416 = vsub.s32 0, %v10415
        %v10417 = vrot.slane %v10348, %v10416
        %v10418 = vlaneseq
        %v10419 = vshrl.u32 %v10418, 7
        %v10420 = vsub.s32 0, %v10419
        %v10421 = vrot.slane %v10350, %v10420
        %v10422 = vlaneseq
        %v10423 = vshrl.u32 %v10422, 7
        %v10424 = vsub.s32 0, %v10423
        %v10425 = vrot.slane %v10333, %v10424
        %v10426 = vlaneseq
        %v10427 = vshrl.u32 %v10426, 7
        %v10428 = vsub.s32 0, %v10427
        %v10429 = vrot.slane %v10347, %v10428
        %v10430 = vlaneseq
        %v10431 = vshrl.u32 %v10430, 7
        %v10432 = vsub.s32 0, %v10431
        %v10433 = vrot.slane %v10349, %v10432
        %v10434 = vlaneseq
        %v10435 = vshrl.u32 %v10434, 7
        %v10436 = vsub.s32 0, %v10435
        %v10437 = vrot.slane %v10351, %v10436
        %v10438 = vlaneseq
        %v10439 = vshrl.u32 %v10438, 7
        %v10440 = vsub.s32 0, %v10439
        %v10441 = vrot.slane %v10375, %v10440
        %v10442 = vlaneseq
        %v10443 = vshrl.u32 %v10442, 7
        %v10444 = vsub.s32 0, %v10443
        %v10445 = vrot.slane %v10389, %v10444
        %v10446 = vlaneseq
        %v10447 = vshrl.u32 %v10446, 7
        %v10448 = vsub.s32 0, %v10447
        %v10449 = vrot.slane %v10397, %v10448
        %v10450 = vlaneseq
        %v10451 = vshrl.u32 %v10450, 7
        %v10452 = vsub.s32 0, %v10451
        %v10453 = vrot.slane %v10399, %v10452
        %v10454 = vlaneseq
        %v10455 = vshrl.u32 %v10454, 7
        %v10456 = vsub.s32 0, %v10455
        %v10457 = vrot.slane %v10382, %v10456
        %v10458 = vlaneseq
        %v10459 = vshrl.u32 %v10458, 7
        %v10460 = vsub.s32 0, %v10459
        %v10461 = vrot.slane %v10396, %v10460
        %v10462 = vlaneseq
        %v10463 = vshrl.u32 %v10462, 7
        %v10464 = vsub.s32 0, %v10463
        %v10465 = vrot.slane %v10398, %v10464
        %v10466 = vlaneseq
        %v10467 = vshrl.u32 %v10466, 7
        %v10468 = vsub.s32 0, %v10467
        %v10469 = vrot.slane %v10400, %v10468
        %v10486 = vmul.f32 %v10409, %v10402
        %v10487 = vmul.f32 %v10409, %v10403
        %v10488 = vmul.f32 %v10409, %v10404
        %v10489 = vmul.f32 %v10409, %v10405
        %v10490 = vmul.f32 %v10413, %v10402
        %v10491 = vmul.f32 %v10413, %v10403
        %v10492 = vmul.f32 %v10413, %v10404
        %v10493 = vmul.f32 %v10413, %v10405
        %v10494 = vmul.f32 %v10417, %v10402
        %v10495 = vmul.f32 %v10417, %v10403
        %v10496 = vmul.f32 %v10417, %v10404
        %v10497 = vmul.f32 %v10417, %v10405
        %v10498 = vmul.f32 %v10421, %v10402
        %v10499 = vmul.f32 %v10421, %v10403
        %v10500 = vmul.f32 %v10421, %v10404
        %v10501 = vmul.f32 %v10421, %v10405
        %v10502 = vmul.f32 %v10425, %v10402
        %v10503 = vmul.f32 %v10425, %v10403
        %v10504 = vmul.f32 %v10425, %v10404
        %v10505 = vmul.f32 %v10425, %v10405
        %v10506 = vmul.f32 %v10429, %v10402
        %v10507 = vmul.f32 %v10429, %v10403
        %v10508 = vmul.f32 %v10429, %v10404
        %v10509 = vmul.f32 %v10429, %v10405
        %v10510 = vmul.f32 %v10433, %v10402
        %v10511 = vmul.f32 %v10433, %v10403
        %v10512 = vmul.f32 %v10433, %v10404
        %v10513 = vmul.f32 %v10433, %v10405
        %v10514 = vmul.f32 %v10437, %v10402
        %v10515 = vmul.f32 %v10437, %v10403
        %v10516 = vmul.f32 %v10437, %v10404
        %v10517 = vmul.f32 %v10437, %v10405
        %v10518 = vmul.f32 %v10441, %v10402
        %v10519 = vmul.f32 %v10441, %v10403
        %v10520 = vmul.f32 %v10441, %v10404
        %v10521 = vmul.f32 %v10441, %v10405
        %v10522 = vmul.f32 %v10445, %v10402
        %v10523 = vmul.f32 %v10445, %v10403
        %v10524 = vmul.f32 %v10445, %v10404
        %v10525 = vmul.f32 %v10445, %v10405
        %v10526 = vmul.f32 %v10449, %v10402
        %v10527 = vmul.f32 %v10449, %v10403
        %v10528 = vmul.f32 %v10449, %v10404
        %v10529 = vmul.f32 %v10449, %v10405
        %v10530 = vmul.f32 %v10453, %v10402
        %v10531 = vmul.f32 %v10453, %v10403
        %v10532 = vmul.f32 %v10453, %v10404
        %v10533 = vmul.f32 %v10453, %v10405
        %v10534 = vmul.f32 %v10457, %v10402
        %v10535 = vmul.f32 %v10457, %v10403
        %v10536 = vmul.f32 %v10457, %v10404
        %v10537 = vmul.f32 %v10457, %v10405
        %v10538 = vmul.f32 %v10461, %v10402
        %v10539 = vmul.f32 %v10461, %v10403
        %v10540 = vmul.f32 %v10461, %v10404
        %v10541 = vmul.f32 %v10461, %v10405
        %v10542 = vmul.f32 %v10465, %v10402
        %v10543 = vmul.f32 %v10465, %v10403
        %v10544 = vmul.f32 %v10465, %v10404
        %v10545 = vmul.f32 %v10465, %v10405
        %v10546 = vmul.f32 %v10469, %v10402
        %v10547 = vmul.f32 %v10469, %v10403
        %v10548 = vmul.f32 %v10469, %v10404
        %v10549 = vmul.f32 %v10469, %v10405
        %10550 = vmax.xlane.f32.xlu0 %v10486
        %v10551 = vpop.xlane.xlu0 %10550
        %10552 = vmax.xlane.f32.xlu0 %v10487
        %v10553 = vpop.xlane.xlu0 %10552
        %10554 = vmax.xlane.f32.xlu0 %v10488
        %v10555 = vpop.xlane.xlu0 %10554
        %10556 = vmax.xlane.f32.xlu0 %v10489
        %v10557 = vpop.xlane.xlu0 %10556
        %10558 = vmax.xlane.f32.xlu0 %v10490
        %v10559 = vpop.xlane.xlu0 %10558
        %10560 = vmax.xlane.f32.xlu0 %v10491
        %v10561 = vpop.xlane.xlu0 %10560
        %10562 = vmax.xlane.f32.xlu0 %v10492
        %v10563 = vpop.xlane.xlu0 %10562
        %10564 = vmax.xlane.f32.xlu0 %v10493
        %v10565 = vpop.xlane.xlu0 %10564
        %10566 = vmax.xlane.f32.xlu0 %v10494
        %v10567 = vpop.xlane.xlu0 %10566
        %10568 = vmax.xlane.f32.xlu0 %v10495
        %v10569 = vpop.xlane.xlu0 %10568
        %10570 = vmax.xlane.f32.xlu0 %v10496
        %v10571 = vpop.xlane.xlu0 %10570
        %10572 = vmax.xlane.f32.xlu0 %v10497
        %v10573 = vpop.xlane.xlu0 %10572
        %10574 = vmax.xlane.f32.xlu0 %v10498
        %v10575 = vpop.xlane.xlu0 %10574
        %10576 = vmax.xlane.f32.xlu0 %v10499
        %v10577 = vpop.xlane.xlu0 %10576
        %10578 = vmax.xlane.f32.xlu0 %v10500
        %v10579 = vpop.xlane.xlu0 %10578
        %10580 = vmax.xlane.f32.xlu0 %v10501
        %v10581 = vpop.xlane.xlu0 %10580
        %10582 = vmax.xlane.f32.xlu0 %v10502
        %v10583 = vpop.xlane.xlu0 %10582
        %10584 = vmax.xlane.f32.xlu0 %v10503
        %v10585 = vpop.xlane.xlu0 %10584
        %10586 = vmax.xlane.f32.xlu0 %v10504
        %v10587 = vpop.xlane.xlu0 %10586
        %10588 = vmax.xlane.f32.xlu0 %v10505
        %v10589 = vpop.xlane.xlu0 %10588
        %10590 = vmax.xlane.f32.xlu0 %v10506
        %v10591 = vpop.xlane.xlu0 %10590
        %10592 = vmax.xlane.f32.xlu0 %v10507
        %v10593 = vpop.xlane.xlu0 %10592
        %10594 = vmax.xlane.f32.xlu0 %v10508
        %v10595 = vpop.xlane.xlu0 %10594
        %10596 = vmax.xlane.f32.xlu0 %v10509
        %v10597 = vpop.xlane.xlu0 %10596
        %10598 = vmax.xlane.f32.xlu0 %v10510
        %v10599 = vpop.xlane.xlu0 %10598
        %10600 = vmax.xlane.f32.xlu0 %v10511
        %v10601 = vpop.xlane.xlu0 %10600
        %10602 = vmax.xlane.f32.xlu0 %v10512
        %v10603 = vpop.xlane.xlu0 %10602
        %10604 = vmax.xlane.f32.xlu0 %v10513
        %v10605 = vpop.xlane.xlu0 %10604
        %10606 = vmax.xlane.f32.xlu0 %v10514
        %v10607 = vpop.xlane.xlu0 %10606
        %10608 = vmax.xlane.f32.xlu0 %v10515
        %v10609 = vpop.xlane.xlu0 %10608
        %10610 = vmax.xlane.f32.xlu0 %v10516
        %v10611 = vpop.xlane.xlu0 %10610
        %10612 = vmax.xlane.f32.xlu0 %v10517
        %v10613 = vpop.xlane.xlu0 %10612
        %10614 = vmax.xlane.f32.xlu0 %v10518
        %v10615 = vpop.xlane.xlu0 %10614
        %10616 = vmax.xlane.f32.xlu0 %v10519
        %v10617 = vpop.xlane.xlu0 %10616
        %10618 = vmax.xlane.f32.xlu0 %v10520
        %v10619 = vpop.xlane.xlu0 %10618
        %10620 = vmax.xlane.f32.xlu0 %v10521
        %v10621 = vpop.xlane.xlu0 %10620
        %10622 = vmax.xlane.f32.xlu0 %v10522
        %v10623 = vpop.xlane.xlu0 %10622
        %10624 = vmax.xlane.f32.xlu0 %v10523
        %v10625 = vpop.xlane.xlu0 %10624
        %10626 = vmax.xlane.f32.xlu0 %v10524
        %v10627 = vpop.xlane.xlu0 %10626
        %10628 = vmax.xlane.f32.xlu0 %v10525
        %v10629 = vpop.xlane.xlu0 %10628
        %10630 = vmax.xlane.f32.xlu0 %v10526
        %v10631 = vpop.xlane.xlu0 %10630
        %10632 = vmax.xlane.f32.xlu0 %v10527
        %v10633 = vpop.xlane.xlu0 %10632
        %10634 = vmax.xlane.f32.xlu0 %v10528
        %v10635 = vpop.xlane.xlu0 %10634
        %10636 = vmax.xlane.f32.xlu0 %v10529
        %v10637 = vpop.xlane.xlu0 %10636
        %10638 = vmax.xlane.f32.xlu0 %v10530
        %v10639 = vpop.xlane.xlu0 %10638
        %10640 = vmax.xlane.f32.xlu0 %v10531
        %v10641 = vpop.xlane.xlu0 %10640
        %10642 = vmax.xlane.f32.xlu0 %v10532
        %v10643 = vpop.xlane.xlu0 %10642
        %10644 = vmax.xlane.f32.xlu0 %v10533
        %v10645 = vpop.xlane.xlu0 %10644
        %10646 = vmax.xlane.f32.xlu0 %v10534
        %v10647 = vpop.xlane.xlu0 %10646
        %10648 = vmax.xlane.f32.xlu0 %v10535
        %v10649 = vpop.xlane.xlu0 %10648
        %10650 = vmax.xlane.f32.xlu0 %v10536
        %v10651 = vpop.xlane.xlu0 %10650
        %10652 = vmax.xlane.f32.xlu0 %v10537
        %v10653 = vpop.xlane.xlu0 %10652
        %10654 = vmax.xlane.f32.xlu0 %v10538
        %v10655 = vpop.xlane.xlu0 %10654
        %10656 = vmax.xlane.f32.xlu0 %v10539
        %v10657 = vpop.xlane.xlu0 %10656
        %10658 = vmax.xlane.f32.xlu0 %v10540
        %v10659 = vpop.xlane.xlu0 %10658
        %10660 = vmax.xlane.f32.xlu0 %v10541
        %v10661 = vpop.xlane.xlu0 %10660
        %10662 = vmax.xlane.f32.xlu0 %v10542
        %v10663 = vpop.xlane.xlu0 %10662
        %10664 = vmax.xlane.f32.xlu0 %v10543
        %v10665 = vpop.xlane.xlu0 %10664
        %10666 = vmax.xlane.f32.xlu0 %v10544
        %v10667 = vpop.xlane.xlu0 %10666
        %10668 = vmax.xlane.f32.xlu0 %v10545
        %v10669 = vpop.xlane.xlu0 %10668
        %10670 = vmax.xlane.f32.xlu0 %v10546
        %v10671 = vpop.xlane.xlu0 %10670
        %10672 = vmax.xlane.f32.xlu0 %v10547
        %v10673 = vpop.xlane.xlu0 %10672
        %10674 = vmax.xlane.f32.xlu0 %v10548
        %v10675 = vpop.xlane.xlu0 %10674
        %10676 = vmax.xlane.f32.xlu0 %v10549
        %v10677 = vpop.xlane.xlu0 %10676
        %v10742 = vlaneseq
        %v10743 = vshrl.u32 %v10742, 7
        %v10744 = vsub.s32 %v6294, %v10743
        %v10745 = vrot.slane %v10551, %v10744
        %v10746 = vlaneseq
        %v10747 = vshrl.u32 %v10746, 7
        %v10748 = vsub.s32 %v6299, %v10747
        %v10749 = vrot.slane %v10553, %v10748
        %v10750 = vsel %vm6304, %v10749, %v10745
        %v10751 = vlaneseq
        %v10752 = vshrl.u32 %v10751, 7
        %v10753 = vsub.s32 %v6306, %v10752
        %v10754 = vrot.slane %v10555, %v10753
        %v10755 = vsel %vm6311, %v10754, %v10750
        %v10756 = vlaneseq
        %v10757 = vshrl.u32 %v10756, 7
        %v10758 = vsub.s32 %v6313, %v10757
        %v10759 = vrot.slane %v10557, %v10758
        %v10760 = vsel %vm6318, %v10759, %v10755
        %v10761 = vlaneseq
        %v10762 = vshrl.u32 %v10761, 7
        %v10763 = vsub.s32 %v6294, %v10762
        %v10764 = vrot.slane %v10559, %v10763
        %v10765 = vlaneseq
        %v10766 = vshrl.u32 %v10765, 7
        %v10767 = vsub.s32 %v6299, %v10766
        %v10768 = vrot.slane %v10561, %v10767
        %v10769 = vsel %vm6304, %v10768, %v10764
        %v10770 = vlaneseq
        %v10771 = vshrl.u32 %v10770, 7
        %v10772 = vsub.s32 %v6306, %v10771
        %v10773 = vrot.slane %v10563, %v10772
        %v10774 = vsel %vm6311, %v10773, %v10769
        %v10775 = vlaneseq
        %v10776 = vshrl.u32 %v10775, 7
        %v10777 = vsub.s32 %v6313, %v10776
        %v10778 = vrot.slane %v10565, %v10777
        %v10779 = vsel %vm6318, %v10778, %v10774
        %v10780 = vlaneseq
        %v10781 = vshrl.u32 %v10780, 7
        %v10782 = vsub.s32 %v6294, %v10781
        %v10783 = vrot.slane %v10567, %v10782
        %v10784 = vlaneseq
        %v10785 = vshrl.u32 %v10784, 7
        %v10786 = vsub.s32 %v6299, %v10785
        %v10787 = vrot.slane %v10569, %v10786
        %v10788 = vsel %vm6304, %v10787, %v10783
        %v10789 = vlaneseq
        %v10790 = vshrl.u32 %v10789, 7
        %v10791 = vsub.s32 %v6306, %v10790
        %v10792 = vrot.slane %v10571, %v10791
        %v10793 = vsel %vm6311, %v10792, %v10788
        %v10794 = vlaneseq
        %v10795 = vshrl.u32 %v10794, 7
        %v10796 = vsub.s32 %v6313, %v10795
        %v10797 = vrot.slane %v10573, %v10796
        %v10798 = vsel %vm6318, %v10797, %v10793
        %v10799 = vlaneseq
        %v10800 = vshrl.u32 %v10799, 7
        %v10801 = vsub.s32 %v6294, %v10800
        %v10802 = vrot.slane %v10575, %v10801
        %v10803 = vlaneseq
        %v10804 = vshrl.u32 %v10803, 7
        %v10805 = vsub.s32 %v6299, %v10804
        %v10806 = vrot.slane %v10577, %v10805
        %v10807 = vsel %vm6304, %v10806, %v10802
        %v10808 = vlaneseq
        %v10809 = vshrl.u32 %v10808, 7
        %v10810 = vsub.s32 %v6306, %v10809
        %v10811 = vrot.slane %v10579, %v10810
        %v10812 = vsel %vm6311, %v10811, %v10807
        %v10813 = vlaneseq
        %v10814 = vshrl.u32 %v10813, 7
        %v10815 = vsub.s32 %v6313, %v10814
        %v10816 = vrot.slane %v10581, %v10815
        %v10817 = vsel %vm6318, %v10816, %v10812
        %v10818 = vlaneseq
        %v10819 = vshrl.u32 %v10818, 7
        %v10820 = vsub.s32 %v6294, %v10819
        %v10821 = vrot.slane %v10583, %v10820
        %v10822 = vlaneseq
        %v10823 = vshrl.u32 %v10822, 7
        %v10824 = vsub.s32 %v6299, %v10823
        %v10825 = vrot.slane %v10585, %v10824
        %v10826 = vsel %vm6304, %v10825, %v10821
        %v10827 = vlaneseq
        %v10828 = vshrl.u32 %v10827, 7
        %v10829 = vsub.s32 %v6306, %v10828
        %v10830 = vrot.slane %v10587, %v10829
        %v10831 = vsel %vm6311, %v10830, %v10826
        %v10832 = vlaneseq
        %v10833 = vshrl.u32 %v10832, 7
        %v10834 = vsub.s32 %v6313, %v10833
        %v10835 = vrot.slane %v10589, %v10834
        %v10836 = vsel %vm6318, %v10835, %v10831
        %v10837 = vlaneseq
        %v10838 = vshrl.u32 %v10837, 7
        %v10839 = vsub.s32 %v6294, %v10838
        %v10840 = vrot.slane %v10591, %v10839
        %v10841 = vlaneseq
        %v10842 = vshrl.u32 %v10841, 7
        %v10843 = vsub.s32 %v6299, %v10842
        %v10844 = vrot.slane %v10593, %v10843
        %v10845 = vsel %vm6304, %v10844, %v10840
        %v10846 = vlaneseq
        %v10847 = vshrl.u32 %v10846, 7
        %v10848 = vsub.s32 %v6306, %v10847
        %v10849 = vrot.slane %v10595, %v10848
        %v10850 = vsel %vm6311, %v10849, %v10845
        %v10851 = vlaneseq
        %v10852 = vshrl.u32 %v10851, 7
        %v10853 = vsub.s32 %v6313, %v10852
        %v10854 = vrot.slane %v10597, %v10853
        %v10855 = vsel %vm6318, %v10854, %v10850
        %v10856 = vlaneseq
        %v10857 = vshrl.u32 %v10856, 7
        %v10858 = vsub.s32 %v6294, %v10857
        %v10859 = vrot.slane %v10599, %v10858
        %v10860 = vlaneseq
        %v10861 = vshrl.u32 %v10860, 7
        %v10862 = vsub.s32 %v6299, %v10861
        %v10863 = vrot.slane %v10601, %v10862
        %v10864 = vsel %vm6304, %v10863, %v10859
        %v10865 = vlaneseq
        %v10866 = vshrl.u32 %v10865, 7
        %v10867 = vsub.s32 %v6306, %v10866
        %v10868 = vrot.slane %v10603, %v10867
        %v10869 = vsel %vm6311, %v10868, %v10864
        %v10870 = vlaneseq
        %v10871 = vshrl.u32 %v10870, 7
        %v10872 = vsub.s32 %v6313, %v10871
        %v10873 = vrot.slane %v10605, %v10872
        %v10874 = vsel %vm6318, %v10873, %v10869
        %v10875 = vlaneseq
        %v10876 = vshrl.u32 %v10875, 7
        %v10877 = vsub.s32 %v6294, %v10876
        %v10878 = vrot.slane %v10607, %v10877
        %v10879 = vlaneseq
        %v10880 = vshrl.u32 %v10879, 7
        %v10881 = vsub.s32 %v6299, %v10880
        %v10882 = vrot.slane %v10609, %v10881
        %v10883 = vsel %vm6304, %v10882, %v10878
        %v10884 = vlaneseq
        %v10885 = vshrl.u32 %v10884, 7
        %v10886 = vsub.s32 %v6306, %v10885
        %v10887 = vrot.slane %v10611, %v10886
        %v10888 = vsel %vm6311, %v10887, %v10883
        %v10889 = vlaneseq
        %v10890 = vshrl.u32 %v10889, 7
        %v10891 = vsub.s32 %v6313, %v10890
        %v10892 = vrot.slane %v10613, %v10891
        %v10893 = vsel %vm6318, %v10892, %v10888
        %v10894 = vlaneseq
        %v10895 = vshrl.u32 %v10894, 7
        %v10896 = vsub.s32 %v6294, %v10895
        %v10897 = vrot.slane %v10615, %v10896
        %v10898 = vlaneseq
        %v10899 = vshrl.u32 %v10898, 7
        %v10900 = vsub.s32 %v6299, %v10899
        %v10901 = vrot.slane %v10617, %v10900
        %v10902 = vsel %vm6304, %v10901, %v10897
        %v10903 = vlaneseq
        %v10904 = vshrl.u32 %v10903, 7
        %v10905 = vsub.s32 %v6306, %v10904
        %v10906 = vrot.slane %v10619, %v10905
        %v10907 = vsel %vm6311, %v10906, %v10902
        %v10908 = vlaneseq
        %v10909 = vshrl.u32 %v10908, 7
        %v10910 = vsub.s32 %v6313, %v10909
        %v10911 = vrot.slane %v10621, %v10910
        %v10912 = vsel %vm6318, %v10911, %v10907
        %v10913 = vlaneseq
        %v10914 = vshrl.u32 %v10913, 7
        %v10915 = vsub.s32 %v6294, %v10914
        %v10916 = vrot.slane %v10623, %v10915
        %v10917 = vlaneseq
        %v10918 = vshrl.u32 %v10917, 7
        %v10919 = vsub.s32 %v6299, %v10918
        %v10920 = vrot.slane %v10625, %v10919
        %v10921 = vsel %vm6304, %v10920, %v10916
        %v10922 = vlaneseq
        %v10923 = vshrl.u32 %v10922, 7
        %v10924 = vsub.s32 %v6306, %v10923
        %v10925 = vrot.slane %v10627, %v10924
        %v10926 = vsel %vm6311, %v10925, %v10921
        %v10927 = vlaneseq
        %v10928 = vshrl.u32 %v10927, 7
        %v10929 = vsub.s32 %v6313, %v10928
        %v10930 = vrot.slane %v10629, %v10929
        %v10931 = vsel %vm6318, %v10930, %v10926
        %v10932 = vlaneseq
        %v10933 = vshrl.u32 %v10932, 7
        %v10934 = vsub.s32 %v6294, %v10933
        %v10935 = vrot.slane %v10631, %v10934
        %v10936 = vlaneseq
        %v10937 = vshrl.u32 %v10936, 7
        %v10938 = vsub.s32 %v6299, %v10937
        %v10939 = vrot.slane %v10633, %v10938
        %v10940 = vsel %vm6304, %v10939, %v10935
        %v10941 = vlaneseq
        %v10942 = vshrl.u32 %v10941, 7
        %v10943 = vsub.s32 %v6306, %v10942
        %v10944 = vrot.slane %v10635, %v10943
        %v10945 = vsel %vm6311, %v10944, %v10940
        %v10946 = vlaneseq
        %v10947 = vshrl.u32 %v10946, 7
        %v10948 = vsub.s32 %v6313, %v10947
        %v10949 = vrot.slane %v10637, %v10948
        %v10950 = vsel %vm6318, %v10949, %v10945
        %v10951 = vlaneseq
        %v10952 = vshrl.u32 %v10951, 7
        %v10953 = vsub.s32 %v6294, %v10952
        %v10954 = vrot.slane %v10639, %v10953
        %v10955 = vlaneseq
        %v10956 = vshrl.u32 %v10955, 7
        %v10957 = vsub.s32 %v6299, %v10956
        %v10958 = vrot.slane %v10641, %v10957
        %v10959 = vsel %vm6304, %v10958, %v10954
        %v10960 = vlaneseq
        %v10961 = vshrl.u32 %v10960, 7
        %v10962 = vsub.s32 %v6306, %v10961
        %v10963 = vrot.slane %v10643, %v10962
        %v10964 = vsel %vm6311, %v10963, %v10959
        %v10965 = vlaneseq
        %v10966 = vshrl.u32 %v10965, 7
        %v10967 = vsub.s32 %v6313, %v10966
        %v10968 = vrot.slane %v10645, %v10967
        %v10969 = vsel %vm6318, %v10968, %v10964
        %v10970 = vlaneseq
        %v10971 = vshrl.u32 %v10970, 7
        %v10972 = vsub.s32 %v6294, %v10971
        %v10973 = vrot.slane %v10647, %v10972
        %v10974 = vlaneseq
        %v10975 = vshrl.u32 %v10974, 7
        %v10976 = vsub.s32 %v6299, %v10975
        %v10977 = vrot.slane %v10649, %v10976
        %v10978 = vsel %vm6304, %v10977, %v10973
        %v10979 = vlaneseq
        %v10980 = vshrl.u32 %v10979, 7
        %v10981 = vsub.s32 %v6306, %v10980
        %v10982 = vrot.slane %v10651, %v10981
        %v10983 = vsel %vm6311, %v10982, %v10978
        %v10984 = vlaneseq
        %v10985 = vshrl.u32 %v10984, 7
        %v10986 = vsub.s32 %v6313, %v10985
        %v10987 = vrot.slane %v10653, %v10986
        %v10988 = vsel %vm6318, %v10987, %v10983
        %v10989 = vlaneseq
        %v10990 = vshrl.u32 %v10989, 7
        %v10991 = vsub.s32 %v6294, %v10990
        %v10992 = vrot.slane %v10655, %v10991
        %v10993 = vlaneseq
        %v10994 = vshrl.u32 %v10993, 7
        %v10995 = vsub.s32 %v6299, %v10994
        %v10996 = vrot.slane %v10657, %v10995
        %v10997 = vsel %vm6304, %v10996, %v10992
        %v10998 = vlaneseq
        %v10999 = vshrl.u32 %v10998, 7
        %v11000 = vsub.s32 %v6306, %v10999
        %v11001 = vrot.slane %v10659, %v11000
        %v11002 = vsel %vm6311, %v11001, %v10997
        %v11003 = vlaneseq
        %v11004 = vshrl.u32 %v11003, 7
        %v11005 = vsub.s32 %v6313, %v11004
        %v11006 = vrot.slane %v10661, %v11005
        %v11007 = vsel %vm6318, %v11006, %v11002
        %v11008 = vlaneseq
        %v11009 = vshrl.u32 %v11008, 7
        %v11010 = vsub.s32 %v6294, %v11009
        %v11011 = vrot.slane %v10663, %v11010
        %v11012 = vlaneseq
        %v11013 = vshrl.u32 %v11012, 7
        %v11014 = vsub.s32 %v6299, %v11013
        %v11015 = vrot.slane %v10665, %v11014
        %v11016 = vsel %vm6304, %v11015, %v11011
        %v11017 = vlaneseq
        %v11018 = vshrl.u32 %v11017, 7
        %v11019 = vsub.s32 %v6306, %v11018
        %v11020 = vrot.slane %v10667, %v11019
        %v11021 = vsel %vm6311, %v11020, %v11016
        %v11022 = vlaneseq
        %v11023 = vshrl.u32 %v11022, 7
        %v11024 = vsub.s32 %v6313, %v11023
        %v11025 = vrot.slane %v10669, %v11024
        %v11026 = vsel %vm6318, %v11025, %v11021
        %v11027 = vlaneseq
        %v11028 = vshrl.u32 %v11027, 7
        %v11029 = vsub.s32 %v6294, %v11028
        %v11030 = vrot.slane %v10671, %v11029
        %v11031 = vlaneseq
        %v11032 = vshrl.u32 %v11031, 7
        %v11033 = vsub.s32 %v6299, %v11032
        %v11034 = vrot.slane %v10673, %v11033
        %v11035 = vsel %vm6304, %v11034, %v11030
        %v11036 = vlaneseq
        %v11037 = vshrl.u32 %v11036, 7
        %v11038 = vsub.s32 %v6306, %v11037
        %v11039 = vrot.slane %v10675, %v11038
        %v11040 = vsel %vm6311, %v11039, %v11035
        %v11041 = vlaneseq
        %v11042 = vshrl.u32 %v11041, 7
        %v11043 = vsub.s32 %v6313, %v11042
        %v11044 = vrot.slane %v10677, %v11043
        %v11045 = vsel %vm6318, %v11044, %v11040
        %v11046 = vsel %vm6605, %v10779, %v10760
        %v11047 = vsel %vm6607, %v10798, %v11046
        %v11048 = vsel %vm6609, %v10817, %v11047
        %v11049 = vsel %vm6611, %v10836, %v11048
        %v11050 = vsel %vm6613, %v10855, %v11049
        %v11051 = vsel %vm6615, %v10874, %v11050
        %v11052 = vsel %vm6617, %v10893, %v11051
        %v11053 = vsel %vm6605, %v10931, %v10912
        %v11054 = vsel %vm6607, %v10950, %v11053
        %v11055 = vsel %vm6609, %v10969, %v11054
        %v11056 = vsel %vm6611, %v10988, %v11055
        %v11057 = vsel %vm6613, %v11007, %v11056
        %v11058 = vsel %vm6615, %v11026, %v11057
        %v11059 = vsel %vm6617, %v11045, %v11058
        %v11062 = vmax.f32 %v9584, %v11052
        %v11063 = vmax.f32 %v9585, %v11059
        %vm11064 = vcmask 269312
        %11065 = vst.msk [vmem:[%s322] sm:$0xff] %vm11064, %v10299
        %11066 = vst.msk [vmem:[%s322 + $0x8] sm:$0xff] %vm11064, %v10300
        %11067 = vst.msk [vmem:[%s329] sm:$0xff] %vm499, %v11062
        %11068 = vst.msk [vmem:[%s329 + $0x8] sm:$0xff] %vm499, %v11063
        %s11069 = sand.u32 %s189, 1
        %s11070 = scalar_lea.sflag [#allocation5], %s11069
        %s11071 = sand.u32 %s189, 1
        %s11072 = smul.addr %s11071, 16
        %s11073 = scalar_lea.vmem [#allocation4], %s11072
        %s11074 = sand.u32 %s215, 1
        %s11075 = scalar_lea.sflag [#allocation7], %s11074
        %s11076 = sand.u32 %s215, 1
        %s11077 = smul.addr %s11076, 16
        %s11078 = scalar_lea.vmem [#allocation6], %s11077
        // Predicated region
        $region49: #{tpu_custom_call.1} parent=43 // pred_check
          %p11079 = pneg %p199
        $region50: #{tpu_custom_call.1} parent=43 // pred_check_branch
          %11081 = sbr.rel (%p11079) target = $region52
        $region51: #{tpu_custom_call.1} parent=43 // pred_region
          %s11083 = ssub.s32 256, 256
          %11084 = vsyncadd %s11070, %s11083
          %s11085 = smul.addr %s29, 2
          %s11086 = smul.addr %s11085, 128
          %s11087 = scalar_lea.hbm %s6, %s11086
          %s11088 = sshll.u32 %s11073, 4
          %s11089 = int_to_ptr.vmem [resolvable:$true] %s11088
          %11094 = dma.vmem_to_hbm [thread:$0]  %s11089, 256, %s11087, %s11070, 128, 128, 8
        $region52: #{tpu_custom_call.1} parent=43 // pred_fallthru
          _
        // Predicated region
        $region53: #{tpu_custom_call.1} parent=43 // pred_check
          %p11095 = pneg %p225
        $region54: #{tpu_custom_call.1} parent=43 // pred_check_branch
          %11097 = sbr.rel (%p11095) target = $region56
        $region55: #{tpu_custom_call.1} parent=43 // pred_region
          %s11099 = ssub.s32 256, 256
          %11100 = vsyncadd %s11075, %s11099
          %s11101 = smul.addr %s29, 2
          %s11102 = smul.addr %s11101, 128
          %s11103 = scalar_lea.hbm %s7, %s11102
          %s11104 = sshll.u32 %s11078, 4
          %s11105 = int_to_ptr.vmem [resolvable:$true] %s11104
          %11110 = dma.vmem_to_hbm [thread:$0]  %s11105, 256, %s11103, %s11075, 128, 128, 8
        $region56: #{tpu_custom_call.1} parent=43 // pred_fallthru
          _
      $region44: #{tpu_custom_call.1} parent=5 // pred_fallthru
        _
      %p11111 = scmp.le.s32.totalorder 2, %s20
      // Predicated region
      $region57: #{tpu_custom_call.1} parent=5 // pred_check
        %p11112 = pneg %p11111
      $region58: #{tpu_custom_call.1} parent=5 // pred_check_branch
        %11114 = sbr.rel (%p11112) target = $region60
      $region59: #{tpu_custom_call.1} parent=5 // pred_region
        %s11115 = ssub.s32 %s20, 2
        // Predicated region
        $region61: #{tpu_custom_call.1} parent=59 // pred_check
          %p11116 = pneg %p205
        $region62: #{tpu_custom_call.1} parent=59 // pred_check_branch
          %11118 = sbr.rel (%p11116) target = $region64
        $region63: #{tpu_custom_call.1} parent=59 // pred_region
          %s11119 = sand.u32 %s190, 1
          %s11120 = scalar_lea.sflag [#allocation5], %s11119
          %s11121 = sand.u32 %s190, 1
          %s11122 = smul.addr %s11121, 16
          %s11123 = scalar_lea.vmem [#allocation4], %s11122
          %11124 = dma.done %s11120, 256
        $region64: #{tpu_custom_call.1} parent=59 // pred_fallthru
          _
        // Predicated region
        $region65: #{tpu_custom_call.1} parent=59 // pred_check
          %p11125 = pneg %p231
        $region66: #{tpu_custom_call.1} parent=59 // pred_check_branch
          %11127 = sbr.rel (%p11125) target = $region68
        $region67: #{tpu_custom_call.1} parent=59 // pred_region
          %s11128 = sand.u32 %s216, 1
          %s11129 = scalar_lea.sflag [#allocation7], %s11128
          %s11130 = sand.u32 %s216, 1
          %s11131 = smul.addr %s11130, 16
          %s11132 = scalar_lea.vmem [#allocation6], %s11131
          %11133 = dma.done %s11129, 256
        $region68: #{tpu_custom_call.1} parent=59 // pred_fallthru
          _
      $region60: #{tpu_custom_call.1} parent=5 // pred_fallthru
        _
    $region6: #{tpu_custom_call.1} parent=1 // loop_footer
      %s24 = sadd.s32 1, %s20
    $region7: #{tpu_custom_call.1} parent=1 // loop_footer_branch
      %19 = sbr.rel target = $region3
    $region8: #{tpu_custom_call.1} parent=1 // loop_exit
      _
    %11134 = vsyncpa [#allocation5], 1
    %s11135 = scalar_lea.sflag [#allocation5], 1
    %11136 = vsyncpa %s11135, 1
    %11137 = vsyncpa [#allocation7], 1
    %s11138 = scalar_lea.sflag [#allocation7], 1
    %11139 = vsyncpa %s11138, 1

</llo_original>
